<compile_context>
chip_gen: v7x
topology: tpu7x:2x2x1
jax: 0.10.0
libtpu: 0.0.40
codegen_flags: <defaults>
</compile_context>

<pallas_src>
import functools

import jax
import jax.numpy as jnp
from jax import lax
from jax.experimental import pallas as pl
from jax.experimental.pallas import tpu as pltpu

REPR_DIM = 256
C_IN, C_OUT, KH, KW = 2, 32, 4, 4
STRIDE, PAD = 2, 1
H_IN = W_IN = 64            # forced by Linear(32*32*32, repr_dim)
H_OUT = W_OUT = 32
BN_EPS = 1e-5

PACK = 4                    # spatial positions packed per lane-dense row
LANES = PACK * C_OUT        # 128


def _largest_divisor(total, candidates):
    for c in candidates:
        if total % c == 0:
            return c
    return total


# --------------------------------------------------------------------------
# Kernel A1: conv-as-matmul per patch-row tile + global per-channel sum/sumsq.
#   p_ref    : (TR, 128) bf16  4 spatial positions x 32 im2col cols per row
#   w_ref    : (128, 128) bf16 block-diag(conv_w_2d x 4)
#   y_ref    : (TR, 128) bf16  conv output tile (pre-BN)
#   stats_ref: (2, 128) f32    grid-resident accumulator: row0=sum, row1=sumsq,
#                              each already summed over the 4 lane groups.
# NOTE: conv bias is intentionally omitted -- it cancels under train-mode BN.
# --------------------------------------------------------------------------
def conv_stats_kernel(p_ref, w_ref, y_ref, stats_ref):
    @pl.when(pl.program_id(0) == 0)
    def _():
        stats_ref[...] = jnp.zeros_like(stats_ref)

    y = jnp.dot(p_ref[...], w_ref[...], preferred_element_type=jnp.float32)
    y_ref[...] = y.astype(y_ref.dtype)

    def lane_group_total(v):  # (1,128): sum the 4 channel groups, stays tiled x4
        return (v + pltpu.roll(v, 32, 1) + pltpu.roll(v, 64, 1)
                + pltpu.roll(v, 96, 1))

    s = lane_group_total(jnp.sum(y, axis=0, keepdims=True))
    sq = lane_group_total(jnp.sum(y * y, axis=0, keepdims=True))
    stats_ref[0:1, :] = stats_ref[0:1, :] + s
    stats_ref[1:2, :] = stats_ref[1:2, :] + sq


# --------------------------------------------------------------------------
# Kernel A2: per-tile BatchNorm (global batch stats) + ReLU, bf16 out.
# --------------------------------------------------------------------------
def bn_relu_kernel(y_ref, stats_ref, g_ref, bt_ref, o_ref, *, n_total):
    inv_n = 1.0 / n_total
    mean = stats_ref[0:1, :] * inv_n
    var = stats_ref[1:2, :] * inv_n - mean * mean
    scale = g_ref[...] * lax.rsqrt(var + BN_EPS)
    shift = bt_ref[...] - mean * scale
    z = y_ref[...].astype(jnp.float32) * scale + shift
    o_ref[...] = jnp.maximum(z, 0.0).astype(o_ref.dtype)


def conv_bn_relu(patches4, w_big, gamma4, beta4):
    r = patches4.shape[0]                       # B*T*Ho*Wo / 4, multiple of 256
    tr = _largest_divisor(r, (1024, 512, 256))
    num_r = r // tr
    n_total = float(r * PACK)                   # rows of the logical (N, 32) act

    const = lambda i: (0, 0)
    tile = pl.BlockSpec((tr, LANES), lambda i: (i, 0))

    y, stats = pl.pallas_call(
        conv_stats_kernel,
        grid=(num_r,),
        in_specs=[tile, pl.BlockSpec((LANES, LANES), const)],
        out_specs=[tile, pl.BlockSpec((2, LANES), const)],
        out_shape=(jax.ShapeDtypeStruct((r, LANES), jnp.bfloat16),
                   jax.ShapeDtypeStruct((2, LANES), jnp.float32)),
        compiler_params=pltpu.CompilerParams(
            dimension_semantics=("arbitrary",)),   # stats accumulate over grid
    )(patches4, w_big)

    vec = pl.BlockSpec((1, LANES), const)
    return pl.pallas_call(
        functools.partial(bn_relu_kernel, n_total=n_total),
        grid=(num_r,),
        in_specs=[tile, pl.BlockSpec((2, LANES), const), vec, vec],
        out_specs=tile,
        out_shape=jax.ShapeDtypeStruct((r, LANES), jnp.bfloat16),
        compiler_params=pltpu.CompilerParams(
            dimension_semantics=("parallel",)),
    )(y, stats, gamma4, beta4)


# --------------------------------------------------------------------------
# Kernel B: Linear(32768 -> 256).  bf16 weight + bf16 activation stream,
# big K tiles (reduction axis last), M tiled with "parallel" semantics,
# accumulator lives in the f32 output block and is initialized with the bias.
# --------------------------------------------------------------------------
TK = 8192   # 32768/8192 = 4 weight DMAs of (8192, 256) bf16 = 4 MiB each


def linear_kernel(x_ref, w_ref, b_ref, o_ref):
    @pl.when(pl.program_id(1) == 0)
    def _():
        o_ref[...] = jnp.broadcast_to(b_ref[...], o_ref.shape)

    o_ref[...] += jnp.dot(x_ref[...], w_ref[...],
                          preferred_element_type=jnp.float32)


def linear(flat, w, b):
    m, k_dim = flat.shape
    _, n = w.shape
    assert k_dim % TK == 0, (k_dim, TK)   # avoid silently dropping a K tail
    assert n % 128 == 0, n
    nk = k_dim // TK
    tm = _largest_divisor(m, (256, 128, 64, 32, 16, 8))
    return pl.pallas_call(
        linear_kernel,
        grid=(m // tm, nk),
        in_specs=[
            pl.BlockSpec((tm, TK), lambda i, k: (i, k)),
            pl.BlockSpec((TK, n), lambda i, k: (k, 0)),
            pl.BlockSpec((1, n), lambda i, k: (0, 0)),
        ],
        out_specs=pl.BlockSpec((tm, n), lambda i, k: (i, 0)),
        out_shape=jax.ShapeDtypeStruct((m, n), jnp.float32),
        compiler_params=pltpu.CompilerParams(
            dimension_semantics=("parallel", "arbitrary")),
    )(flat, w, b.reshape(1, n))


# --------------------------------------------------------------------------
# Glue: im2col for the stride-2 4x4 conv, emitting lane-dense (R, 128) bf16
#       patches in (b, ho, wo) row order with columns ordered (kh, kw, c_in).
# TODO(synk): fold im2col into kernel A (DMA the padded NHWC frame per tile
#             and assemble the 128-wide rows in VMEM) to avoid materializing
#             the ~4x-expanded patch array in HBM.
# --------------------------------------------------------------------------
def im2col(x):  # x: (B, C_IN, 64, 64) NCHW
    b = x.shape[0]
    xp = jnp.pad(x.astype(jnp.bfloat16),
                 ((0, 0), (0, 0), (PAD, PAD), (PAD, PAD)))
    xp = xp.transpose(0, 2, 3, 1)                     # NHWC (B, 66, 66, C_IN)
    cols = [xp[:, kh:kh + STRIDE * H_OUT:STRIDE,
                  kw:kw + STRIDE * W_OUT:STRIDE, :]
            for kh in range(KH) for kw in range(KW)]  # each (B, Ho, Wo, C_IN)
    p = jnp.concatenate(cols, axis=-1)                # (B, Ho, Wo, KH*KW*C_IN)
    return p.reshape(b * H_OUT * W_OUT // PACK, PACK * KH * KW * C_IN)


# --------------------------------------------------------------------------
# Parameter construction (deterministic, PyTorch-shaped, then kernel layout)
# --------------------------------------------------------------------------
def init_params(key):
    k1, k3, k4, k5, k6 = jax.random.split(key, 5)
    conv_w = 0.1 * jax.random.normal(k1, (C_OUT, C_IN, KH, KW), jnp.float32)
    # conv bias omitted entirely: it cancels exactly under train-mode BatchNorm.
    bn_gamma = 1.0 + 0.1 * jax.random.normal(k3, (C_OUT,), jnp.float32)
    bn_beta = 0.1 * jax.random.normal(k4, (C_OUT,), jnp.float32)
    lin_w = 0.01 * jax.random.normal(k5, (REPR_DIM, C_OUT * H_OUT * W_OUT),
                                     jnp.float32)     # PyTorch (out, in) layout
    lin_b = 0.1 * jax.random.normal(k6, (REPR_DIM,), jnp.float32)

    # conv weight -> (KH*KW*C_IN, C_OUT) matching im2col column order (kh,kw,cin)
    w_r = conv_w.transpose(2, 3, 1, 0).reshape(KH * KW * C_IN, C_OUT)
    # block-diag x4: one (TR,128)@(128,128) matmul covers 4 spatial positions/row
    w_big = jnp.kron(jnp.eye(PACK, dtype=jnp.float32), w_r)       # (128, 128)
    gamma4 = jnp.tile(bn_gamma, PACK).reshape(1, LANES)
    beta4 = jnp.tile(bn_beta, PACK).reshape(1, LANES)

    # linear weight: PyTorch flattens NCHW (c,h,w); our flatten is NHWC (h,w,c)
    lin_w_perm = (lin_w.reshape(REPR_DIM, C_OUT, H_OUT, W_OUT)
                  .transpose(0, 2, 3, 1)
                  .reshape(REPR_DIM, H_OUT * W_OUT * C_OUT).T)    # (32768, 256)
    # bf16 weights/activations halve the dominant HBM streams (~1e-2 rel err).
    return dict(w_big=w_big.astype(jnp.bfloat16), gamma4=gamma4, beta4=beta4,
                lin_w=lin_w_perm.astype(jnp.bfloat16), lin_b=lin_b)


# --------------------------------------------------------------------------
# Forward pass (mirrors SimpleEncoder.forward, incl. the 5-D branch)
# --------------------------------------------------------------------------
def _encode(x4, params):
    patches = im2col(x4)                                          # (B*256,128) bf16
    act = conv_bn_relu(patches, params["w_big"],
                       params["gamma4"], params["beta4"])         # (B*256,128) bf16
    flat = act.reshape(x4.shape[0], H_OUT * W_OUT * C_OUT)        # NHWC flatten
    return linear(flat, params["lin_w"], params["lin_b"])         # (B, 256) f32


@jax.jit
def simple_encoder_forward(x, params):
    if x.ndim == 5:
        b, t = x.shape[:2]
        out = _encode(x.reshape(b * t, *x.shape[2:]), params)
        return out.reshape(b, t, -1)
    return _encode(x, params)


if __name__ == "__main__":
    key = jax.random.PRNGKey(0)
    kx, kp = jax.random.split(key)
    params = init_params(kp)

    # input must be (B, 2, 64, 64): Linear(32*32*32, ...) pins the spatial size.
    x = jax.random.normal(kx, (2, C_IN, H_IN, W_IN), jnp.float32)
    out = jax.block_until_ready(simple_encoder_forward(x, params))
    assert out.shape == (2, REPR_DIM), out.shape
    assert out.dtype == jnp.float32

    # 5-D (B, T, C, H, W) branch
    x5 = jax.random.normal(kx, (1, 2, C_IN, H_IN, W_IN), jnp.float32)
    out5 = jax.block_until_ready(simple_encoder_forward(x5, params))
    assert out5.shape == (1, 2, REPR_DIM), out5.shape

    print("KERNEL_OK")
</pallas_src>

<mosaic_0001>
module attributes {stable_mosaic.version = 11 : i64} {
  func.func @conv_stats_kernel(%arg0: i32, %arg1: memref<512x128xbf16, #tpu.memory_space<vmem>>, %arg2: memref<128x128xbf16, #tpu.memory_space<vmem>>, %arg3: memref<512x128xbf16, #tpu.memory_space<vmem>>, %arg4: memref<2x128xf32, #tpu.memory_space<vmem>>) attributes {dimension_semantics = [#tpu.dimension_semantics<arbitrary>], iteration_bounds = array<i64: 1>, scalar_prefetch = 0 : i64, scratch_operands = 0 : i64, tpu.core_type = #tpu.core_type<tc>, window_params = [{transform_indices = @transform_0, window_bounds = array<i64: 512, 128>}, {pipeline_mode = #tpu.pipeline_mode<synchronous>, transform_indices = @transform_1, window_bounds = array<i64: 128, 128>}, {transform_indices = @transform_2, window_bounds = array<i64: 512, 128>}, {pipeline_mode = #tpu.pipeline_mode<synchronous>, transform_indices = @transform_3, window_bounds = array<i64: 2, 128>}]} {
    %c0_i32 = arith.constant 0 : i32
    %0 = arith.cmpi eq, %arg0, %c0_i32 : i32
    %1 = arith.extui %0 : i1 to i32
    %c0_i32_0 = arith.constant 0 : i32
    %2 = arith.cmpi ne, %1, %c0_i32_0 : i32
    scf.if %2 {
      %cst_18 = arith.constant 0.000000e+00 : f32
      %31 = vector.broadcast %cst_18 : f32 to vector<2x128xf32>
      %c0_19 = arith.constant 0 : index
      %c0_20 = arith.constant 0 : index
      %32 = vector.load %arg4[%c0_19, %c0_20] : memref<2x128xf32, #tpu.memory_space<vmem>>, vector<2x128xf32>
      tpu.vector_store %arg4[%c0_19, %c0_20], %31 {strides = array<i32>} : memref<2x128xf32, #tpu.memory_space<vmem>>, vector<2x128xf32>,
    } else {
    }
    %c0 = arith.constant 0 : index
    %c0_1 = arith.constant 0 : index
    %3 = vector.load %arg1[%c0, %c0_1] : memref<512x128xbf16, #tpu.memory_space<vmem>>, vector<512x128xbf16>
    %c0_2 = arith.constant 0 : index
    %c0_3 = arith.constant 0 : index
    %4 = vector.load %arg2[%c0_2, %c0_3] : memref<128x128xbf16, #tpu.memory_space<vmem>>, vector<128x128xbf16>
    %cst = arith.constant dense<0.000000e+00> : vector<512x128xf32>
    %5 = tpu.matmul %3, %4, %cst {dimension_numbers = #tpu.dot_dimension_numbers<[1], [0], [0], [1], [0, 0, 1, 1], [], []>} : vector<512x128xbf16>, vector<128x128xbf16>, vector<512x128xf32> -> vector<512x128xf32>
    %6 = arith.truncf %5 : vector<512x128xf32> to vector<512x128xbf16>
    %c0_4 = arith.constant 0 : index
    %c0_5 = arith.constant 0 : index
    %7 = vector.load %arg3[%c0_4, %c0_5] : memref<512x128xbf16, #tpu.memory_space<vmem>>, vector<512x128xbf16>
    tpu.vector_store %arg3[%c0_4, %c0_5], %6 {strides = array<i32>} : memref<512x128xbf16, #tpu.memory_space<vmem>>, vector<512x128xbf16>,
    %cst_6 = arith.constant dense<0.000000e+00> : vector<128xf32>
    %8 = vector.multi_reduction <add>, %5, %cst_6 [0] : vector<512x128xf32> to vector<128xf32>
    %9 = vector.shape_cast %8 : vector<128xf32> to vector<1x128xf32>
    %c32_i32 = arith.constant 32 : i32
    %10 = tpu.dynamic_rotate %9 by %c32_i32 dim 1 : vector<1x128xf32>, i32 -> vector<1x128xf32>
    %11 = arith.addf %9, %10 : vector<1x128xf32>
    %c64_i32 = arith.constant 64 : i32
    %12 = tpu.dynamic_rotate %9 by %c64_i32 dim 1 : vector<1x128xf32>, i32 -> vector<1x128xf32>
    %13 = arith.addf %11, %12 : vector<1x128xf32>
    %c96_i32 = arith.constant 96 : i32
    %14 = tpu.dynamic_rotate %9 by %c96_i32 dim 1 : vector<1x128xf32>, i32 -> vector<1x128xf32>
    %15 = arith.addf %13, %14 : vector<1x128xf32>
    %16 = arith.mulf %5, %5 : vector<512x128xf32>
    %cst_7 = arith.constant dense<0.000000e+00> : vector<128xf32>
    %17 = vector.multi_reduction <add>, %16, %cst_7 [0] : vector<512x128xf32> to vector<128xf32>
    %18 = vector.shape_cast %17 : vector<128xf32> to vector<1x128xf32>
    %c32_i32_8 = arith.constant 32 : i32
    %19 = tpu.dynamic_rotate %18 by %c32_i32_8 dim 1 : vector<1x128xf32>, i32 -> vector<1x128xf32>
    %20 = arith.addf %18, %19 : vector<1x128xf32>
    %c64_i32_9 = arith.constant 64 : i32
    %21 = tpu.dynamic_rotate %18 by %c64_i32_9 dim 1 : vector<1x128xf32>, i32 -> vector<1x128xf32>
    %22 = arith.addf %20, %21 : vector<1x128xf32>
    %c96_i32_10 = arith.constant 96 : i32
    %23 = tpu.dynamic_rotate %18 by %c96_i32_10 dim 1 : vector<1x128xf32>, i32 -> vector<1x128xf32>
    %24 = arith.addf %22, %23 : vector<1x128xf32>
    %c0_11 = arith.constant 0 : index
    %c0_12 = arith.constant 0 : index
    %25 = vector.load %arg4[%c0_11, %c0_12] : memref<2x128xf32, #tpu.memory_space<vmem>>, vector<1x128xf32>
    %26 = arith.addf %25, %15 : vector<1x128xf32>
    %c0_13 = arith.constant 0 : index
    %c0_14 = arith.constant 0 : index
    %27 = vector.load %arg4[%c0_13, %c0_14] : memref<2x128xf32, #tpu.memory_space<vmem>>, vector<1x128xf32>
    tpu.vector_store %arg4[%c0_13, %c0_14], %26 {strides = array<i32>} : memref<2x128xf32, #tpu.memory_space<vmem>>, vector<1x128xf32>,
    %c1 = arith.constant 1 : index
    %c0_15 = arith.constant 0 : index
    %28 = vector.load %arg4[%c1, %c0_15] : memref<2x128xf32, #tpu.memory_space<vmem>>, vector<1x128xf32>
    %29 = arith.addf %28, %24 : vector<1x128xf32>
    %c1_16 = arith.constant 1 : index
    %c0_17 = arith.constant 0 : index
    %30 = vector.load %arg4[%c1_16, %c0_17] : memref<2x128xf32, #tpu.memory_space<vmem>>, vector<1x128xf32>
    tpu.vector_store %arg4[%c1_16, %c0_17], %29 {strides = array<i32>} : memref<2x128xf32, #tpu.memory_space<vmem>>, vector<1x128xf32>,
    return
  }
  func.func @transform_0(%arg0: i32) -> (i32, i32) {
    %c0_i32 = arith.constant 0 : i32
    %c0_i32_0 = arith.constant 0 : i32
    return %arg0, %c0_i32 : i32, i32
  }
  func.func @transform_1(%arg0: i32) -> (i32, i32) {
    %c0_i32 = arith.constant 0 : i32
    %c0_i32_0 = arith.constant 0 : i32
    %c0_i32_1 = arith.constant 0 : i32
    return %c0_i32, %c0_i32_0 : i32, i32
  }
  func.func @transform_2(%arg0: i32) -> (i32, i32) {
    %c0_i32 = arith.constant 0 : i32
    %c0_i32_0 = arith.constant 0 : i32
    return %arg0, %c0_i32 : i32, i32
  }
  func.func @transform_3(%arg0: i32) -> (i32, i32) {
    %c0_i32 = arith.constant 0 : i32
    %c0_i32_0 = arith.constant 0 : i32
    %c0_i32_1 = arith.constant 0 : i32
    return %c0_i32, %c0_i32_0 : i32, i32
  }
}

module attributes {stable_mosaic.version = 11 : i64} {
  func.func @bn_relu_kernel(%arg0: i32, %arg1: memref<512x128xbf16, #tpu.memory_space<vmem>>, %arg2: memref<2x128xf32, #tpu.memory_space<vmem>>, %arg3: memref<1x128xf32, #tpu.memory_space<vmem>>, %arg4: memref<1x128xf32, #tpu.memory_space<vmem>>, %arg5: memref<512x128xbf16, #tpu.memory_space<vmem>>) attributes {dimension_semantics = [#tpu.dimension_semantics<parallel>], iteration_bounds = array<i64: 1>, scalar_prefetch = 0 : i64, scratch_operands = 0 : i64, tpu.core_type = #tpu.core_type<tc>, window_params = [{transform_indices = @transform_0, window_bounds = array<i64: 512, 128>}, {pipeline_mode = #tpu.pipeline_mode<synchronous>, transform_indices = @transform_1, window_bounds = array<i64: 2, 128>}, {pipeline_mode = #tpu.pipeline_mode<synchronous>, transform_indices = @transform_2, window_bounds = array<i64: 1, 128>}, {pipeline_mode = #tpu.pipeline_mode<synchronous>, transform_indices = @transform_3, window_bounds = array<i64: 1, 128>}, {transform_indices = @transform_4, window_bounds = array<i64: 512, 128>}]} {
    %c0 = arith.constant 0 : index
    %c0_0 = arith.constant 0 : index
    %0 = vector.load %arg2[%c0, %c0_0] : memref<2x128xf32, #tpu.memory_space<vmem>>, vector<1x128xf32>
    %cst = arith.constant 4.8828125E-4 : f32
    %1 = vector.broadcast %cst : f32 to vector<1x128xf32>
    %2 = arith.mulf %0, %1 : vector<1x128xf32>
    %c1 = arith.constant 1 : index
    %c0_1 = arith.constant 0 : index
    %3 = vector.load %arg2[%c1, %c0_1] : memref<2x128xf32, #tpu.memory_space<vmem>>, vector<1x128xf32>
    %cst_2 = arith.constant 4.8828125E-4 : f32
    %4 = vector.broadcast %cst_2 : f32 to vector<1x128xf32>
    %5 = arith.mulf %3, %4 : vector<1x128xf32>
    %6 = arith.mulf %2, %2 : vector<1x128xf32>
    %7 = arith.subf %5, %6 : vector<1x128xf32>
    %c0_3 = arith.constant 0 : index
    %c0_4 = arith.constant 0 : index
    %8 = vector.load %arg3[%c0_3, %c0_4] : memref<1x128xf32, #tpu.memory_space<vmem>>, vector<1x128xf32>
    %cst_5 = arith.constant 9.99999974E-6 : f32
    %9 = vector.broadcast %cst_5 : f32 to vector<1x128xf32>
    %10 = arith.addf %7, %9 : vector<1x128xf32>
    %11 = math.rsqrt %10 : vector<1x128xf32>
    %12 = arith.mulf %8, %11 : vector<1x128xf32>
    %c0_6 = arith.constant 0 : index
    %c0_7 = arith.constant 0 : index
    %13 = vector.load %arg4[%c0_6, %c0_7] : memref<1x128xf32, #tpu.memory_space<vmem>>, vector<1x128xf32>
    %14 = arith.mulf %2, %12 : vector<1x128xf32>
    %15 = arith.subf %13, %14 : vector<1x128xf32>
    %c0_8 = arith.constant 0 : index
    %c0_9 = arith.constant 0 : index
    %16 = vector.load %arg1[%c0_8, %c0_9] : memref<512x128xbf16, #tpu.memory_space<vmem>>, vector<512x128xbf16>
    %17 = arith.extf %16 : vector<512x128xbf16> to vector<512x128xf32>
    %18 = vector.broadcast %12 : vector<1x128xf32> to vector<512x128xf32>
    %19 = arith.mulf %17, %18 : vector<512x128xf32>
    %20 = vector.broadcast %15 : vector<1x128xf32> to vector<512x128xf32>
    %21 = arith.addf %19, %20 : vector<512x128xf32>
    %cst_10 = arith.constant 0.000000e+00 : f32
    %22 = vector.broadcast %cst_10 : f32 to vector<512x128xf32>
    %23 = arith.maximumf %21, %22 : vector<512x128xf32>
    %24 = arith.truncf %23 : vector<512x128xf32> to vector<512x128xbf16>
    %c0_11 = arith.constant 0 : index
    %c0_12 = arith.constant 0 : index
    %25 = vector.load %arg5[%c0_11, %c0_12] : memref<512x128xbf16, #tpu.memory_space<vmem>>, vector<512x128xbf16>
    tpu.vector_store %arg5[%c0_11, %c0_12], %24 {strides = array<i32>} : memref<512x128xbf16, #tpu.memory_space<vmem>>, vector<512x128xbf16>,
    return
  }
  func.func @transform_0(%arg0: i32) -> (i32, i32) {
    %c0_i32 = arith.constant 0 : i32
    %c0_i32_0 = arith.constant 0 : i32
    return %arg0, %c0_i32 : i32, i32
  }
  func.func @transform_1(%arg0: i32) -> (i32, i32) {
    %c0_i32 = arith.constant 0 : i32
    %c0_i32_0 = arith.constant 0 : i32
    %c0_i32_1 = arith.constant 0 : i32
    return %c0_i32, %c0_i32_0 : i32, i32
  }
  func.func @transform_2(%arg0: i32) -> (i32, i32) {
    %c0_i32 = arith.constant 0 : i32
    %c0_i32_0 = arith.constant 0 : i32
    %c0_i32_1 = arith.constant 0 : i32
    return %c0_i32, %c0_i32_0 : i32, i32
  }
  func.func @transform_3(%arg0: i32) -> (i32, i32) {
    %c0_i32 = arith.constant 0 : i32
    %c0_i32_0 = arith.constant 0 : i32
    %c0_i32_1 = arith.constant 0 : i32
    return %c0_i32, %c0_i32_0 : i32, i32
  }
  func.func @transform_4(%arg0: i32) -> (i32, i32) {
    %c0_i32 = arith.constant 0 : i32
    %c0_i32_0 = arith.constant 0 : i32
    return %arg0, %c0_i32 : i32, i32
  }
}

module attributes {stable_mosaic.version = 11 : i64} {
  func.func @linear_kernel(%arg0: i32, %arg1: i32, %arg2: memref<2x8192xbf16, #tpu.memory_space<vmem>>, %arg3: memref<8192x256xbf16, #tpu.memory_space<vmem>>, %arg4: memref<1x256xf32, #tpu.memory_space<vmem>>, %arg5: memref<2x256xf32, #tpu.memory_space<vmem>>) attributes {dimension_semantics = [#tpu.dimension_semantics<parallel>, #tpu.dimension_semantics<arbitrary>], iteration_bounds = array<i64: 1, 4>, scalar_prefetch = 0 : i64, scratch_operands = 0 : i64, tpu.core_type = #tpu.core_type<tc>, window_params = [{transform_indices = @transform_0, window_bounds = array<i64: 2, 8192>}, {transform_indices = @transform_1, window_bounds = array<i64: 8192, 256>}, {pipeline_mode = #tpu.pipeline_mode<synchronous>, transform_indices = @transform_2, window_bounds = array<i64: 1, 256>}, {transform_indices = @transform_3, window_bounds = array<i64: 2, 256>}]} {
    %c0_i32 = arith.constant 0 : i32
    %0 = arith.cmpi eq, %arg1, %c0_i32 : i32
    %1 = arith.extui %0 : i1 to i32
    %c0_i32_0 = arith.constant 0 : i32
    %2 = arith.cmpi ne, %1, %c0_i32_0 : i32
    scf.if %2 {
      %c0_8 = arith.constant 0 : index
      %c0_9 = arith.constant 0 : index
      %9 = vector.load %arg4[%c0_8, %c0_9] : memref<1x256xf32, #tpu.memory_space<vmem>>, vector<1x256xf32>
      %10 = vector.shape_cast %9 : vector<1x256xf32> to vector<1x256xf32>
      %11 = vector.broadcast %10 : vector<1x256xf32> to vector<2x256xf32>
      %c0_10 = arith.constant 0 : index
      %c0_11 = arith.constant 0 : index
      %12 = vector.load %arg5[%c0_10, %c0_11] : memref<2x256xf32, #tpu.memory_space<vmem>>, vector<2x256xf32>
      tpu.vector_store %arg5[%c0_10, %c0_11], %11 {strides = array<i32>} : memref<2x256xf32, #tpu.memory_space<vmem>>, vector<2x256xf32>,
    } else {
    }
    %c0 = arith.constant 0 : index
    %c0_1 = arith.constant 0 : index
    %3 = vector.load %arg5[%c0, %c0_1] : memref<2x256xf32, #tpu.memory_space<vmem>>, vector<2x256xf32>
    %c0_2 = arith.constant 0 : index
    %c0_3 = arith.constant 0 : index
    %4 = vector.load %arg2[%c0_2, %c0_3] : memref<2x8192xbf16, #tpu.memory_space<vmem>>, vector<2x8192xbf16>
    %c0_4 = arith.constant 0 : index
    %c0_5 = arith.constant 0 : index
    %5 = vector.load %arg3[%c0_4, %c0_5] : memref<8192x256xbf16, #tpu.memory_space<vmem>>, vector<8192x256xbf16>
    %cst = arith.constant dense<0.000000e+00> : vector<2x256xf32>
    %6 = tpu.matmul %4, %5, %cst {dimension_numbers = #tpu.dot_dimension_numbers<[1], [0], [0], [1], [0, 0, 1, 1], [], []>} : vector<2x8192xbf16>, vector<8192x256xbf16>, vector<2x256xf32> -> vector<2x256xf32>
    %7 = arith.addf %3, %6 : vector<2x256xf32>
    %c0_6 = arith.constant 0 : index
    %c0_7 = arith.constant 0 : index
    %8 = vector.load %arg5[%c0_6, %c0_7] : memref<2x256xf32, #tpu.memory_space<vmem>>, vector<2x256xf32>
    tpu.vector_store %arg5[%c0_6, %c0_7], %7 {strides = array<i32>} : memref<2x256xf32, #tpu.memory_space<vmem>>, vector<2x256xf32>,
    return
  }
  func.func @transform_0(%arg0: i32, %arg1: i32) -> (i32, i32) {
    %c0_i32 = arith.constant 0 : i32
    return %arg0, %arg1 : i32, i32
  }
  func.func @transform_1(%arg0: i32, %arg1: i32) -> (i32, i32) {
    %c0_i32 = arith.constant 0 : i32
    %c0_i32_0 = arith.constant 0 : i32
    return %arg1, %c0_i32 : i32, i32
  }
  func.func @transform_2(%arg0: i32, %arg1: i32) -> (i32, i32) {
    %c0_i32 = arith.constant 0 : i32
    %c0_i32_0 = arith.constant 0 : i32
    %c0_i32_1 = arith.constant 0 : i32
    return %c0_i32, %c0_i32_0 : i32, i32
  }
  func.func @transform_3(%arg0: i32, %arg1: i32) -> (i32, i32) {
    %c0_i32 = arith.constant 0 : i32
    %c0_i32_0 = arith.constant 0 : i32
    return %arg0, %c0_i32 : i32, i32
  }
}

</mosaic_0001>

<llo_original>
// kernel: simple_encoder_forward.4
$region0: #{simple_encoder_forward.4}
  #allocation0 [shape = 'u32[]', space=smem, size = 0x4, offset = 0x4, fixed_abs, tag = 'smem constant byte address 0x4 - core index']
  #allocation1 [shape = 'u32[144,128]{1,0:T(1,128)}', space=vmem, size = 0x12000, scoped, tag = 'internal scratch']
  %s0 = inlined_call_operand.vmem [shape: bf16[512,128], index: 0, kind: input, shape index: {}]
  %s1 = inlined_call_operand.vmem [shape: f32[2,128], index: 1, kind: input, shape index: {}]
  %s2 = inlined_call_operand.hbm [shape: f32[1,128], index: 2, kind: input, shape index: {}]
  %s3 = inlined_call_operand.hbm [shape: f32[1,128], index: 3, kind: input, shape index: {}]
  %s4 = inlined_call_operand.vmem [shape: bf16[512,128], index: 4, kind: output, shape index: {}]
  %s5 = sld [smem:[#allocation0]]
  $region34: #{simple_encoder_forward.4} parent=0
    _
  %s7 = ssub.s32 1, %s5
  %s8 = scalar_select 0, %s7, %s5
  $region1: #{simple_encoder_forward.4} parent=0
    #allocation2 [shape = 'u8[512]{0}', space=vmem, size = 0x400, scoped, tag = 'input window, operand 2, single buffered']
    #allocation3 [shape = 's32[1]{0}', space=sflag, size = 0x4, scoped, tag = 'scoped memory for simple_encoder_forward.4']
    #allocation4 [shape = 'u8[512]{0}', space=vmem, size = 0x400, scoped, tag = 'input window, operand 3, single buffered']
    #allocation5 [shape = 's32[1]{0}', space=sflag, size = 0x4, scoped, tag = 'scoped memory for simple_encoder_forward.4']
    %9 = vsyncpa [#allocation3], 0
    %10 = vsyncpa [#allocation5], 0
    // Predicated region
    $region2: #{simple_encoder_forward.4} parent=1 // pred_check
      _
    $region3: #{simple_encoder_forward.4} parent=1 // pred_check_branch
      %12 = sbr.rel (0) target = $region5
    $region4: #{simple_encoder_forward.4} parent=1 // pred_region
      _
    $region5: #{simple_encoder_forward.4} parent=1 // pred_fallthru
      _
    // Predicated region
    $region6: #{simple_encoder_forward.4} parent=1 // pred_check
      _
    $region7: #{simple_encoder_forward.4} parent=1 // pred_check_branch
      %14 = sbr.rel (0) target = $region9
    $region8: #{simple_encoder_forward.4} parent=1 // pred_region
      _
    $region9: #{simple_encoder_forward.4} parent=1 // pred_fallthru
      _
    // Predicated region
    $region10: #{simple_encoder_forward.4} parent=1 // pred_check
      _
    $region11: #{simple_encoder_forward.4} parent=1 // pred_check_branch
      %16 = sbr.rel (0) target = $region13
    $region12: #{simple_encoder_forward.4} parent=1 // pred_region
      %s18 = ssub.s32 16, 16
      %19 = vsyncadd [#allocation3], %s18
      %s21 = sshll.u32 [#allocation2], 4
      %s22 = int_to_ptr.vmem [resolvable:$true] %s21
      %24 = dma.hbm_to_vmem [thread:$0]  %s2, 16, %s22, [#allocation3]
    $region13: #{simple_encoder_forward.4} parent=1 // pred_fallthru
      _
    // Predicated region
    $region14: #{simple_encoder_forward.4} parent=1 // pred_check
      _
    $region15: #{simple_encoder_forward.4} parent=1 // pred_check_branch
      %26 = sbr.rel (0) target = $region17
    $region16: #{simple_encoder_forward.4} parent=1 // pred_region
      %s28 = ssub.s32 16, 16
      %29 = vsyncadd [#allocation5], %s28
      %s31 = sshll.u32 [#allocation4], 4
      %s32 = int_to_ptr.vmem [resolvable:$true] %s31
      %34 = dma.hbm_to_vmem [thread:$0]  %s3, 16, %s32, [#allocation5]
    $region17: #{simple_encoder_forward.4} parent=1 // pred_fallthru
      _
    // Predicated region
    $region18: #{simple_encoder_forward.4} parent=1 // pred_check
      _
    $region19: #{simple_encoder_forward.4} parent=1 // pred_check_branch
      %36 = sbr.rel (0) target = $region21
    $region20: #{simple_encoder_forward.4} parent=1 // pred_region
      %37 = dma.done [#allocation3], 16
    $region21: #{simple_encoder_forward.4} parent=1 // pred_fallthru
      _
    // Predicated region
    $region22: #{simple_encoder_forward.4} parent=1 // pred_check
      _
    $region23: #{simple_encoder_forward.4} parent=1 // pred_check_branch
      %39 = sbr.rel (0) target = $region25
    $region24: #{simple_encoder_forward.4} parent=1 // pred_region
      %40 = dma.done [#allocation5], 16
    $region25: #{simple_encoder_forward.4} parent=1 // pred_fallthru
      _
    %v41 = vld [vmem:[%s1] sm:$0x1]
    %v42 = vmul.f32 %v41, 0.00048828125
    %v43 = vld [vmem:[%s1 + $0x1] sm:$0x1]
    %v44 = vmul.f32 %v43, 0.00048828125
    %v45 = vmul.f32 %v42, %v42
    %v46 = vsub.f32 %v44, %v45
    %v47 = vld [vmem:[#allocation2] sm:$0x1]
    %v48 = vadd.f32 %v46, 1e-05
    %v49 = vrsqrt.pop %v48
    %v50 = vmul.f32 %v47, %v49
    %v51 = vld [vmem:[#allocation4] sm:$0x1]
    %v52 = vmul.f32 %v42, %v50
    %v53 = vsub.f32 %v51, %v52
    %v54 = vld [vmem:[%s0] sm:$0xf]
    %v55 = vld [vmem:[%s0 + $0x4] sm:$0xf]
    %v56 = vld [vmem:[%s0 + $0x8] sm:$0xf]
    %v57 = vld [vmem:[%s0 + $0xc] sm:$0xf]
    %v58 = vld [vmem:[%s0 + $0x10] sm:$0xf]
    %v59 = vld [vmem:[%s0 + $0x14] sm:$0xf]
    %v60 = vld [vmem:[%s0 + $0x18] sm:$0xf]
    %v61 = vld [vmem:[%s0 + $0x1c] sm:$0xf]
    %v62 = vld [vmem:[%s0 + $0x20] sm:$0xf]
    %v63 = vld [vmem:[%s0 + $0x24] sm:$0xf]
    %v64 = vld [vmem:[%s0 + $0x28] sm:$0xf]
    %v65 = vld [vmem:[%s0 + $0x2c] sm:$0xf]
    %v66 = vld [vmem:[%s0 + $0x30] sm:$0xf]
    %v67 = vld [vmem:[%s0 + $0x34] sm:$0xf]
    %v68 = vld [vmem:[%s0 + $0x38] sm:$0xf]
    %v69 = vld [vmem:[%s0 + $0x3c] sm:$0xf]
    %v70 = vld [vmem:[%s0 + $0x40] sm:$0xf]
    %v71 = vld [vmem:[%s0 + $0x44] sm:$0xf]
    %v72 = vld [vmem:[%s0 + $0x48] sm:$0xf]
    %v73 = vld [vmem:[%s0 + $0x4c] sm:$0xf]
    %v74 = vld [vmem:[%s0 + $0x50] sm:$0xf]
    %v75 = vld [vmem:[%s0 + $0x54] sm:$0xf]
    %v76 = vld [vmem:[%s0 + $0x58] sm:$0xf]
    %v77 = vld [vmem:[%s0 + $0x5c] sm:$0xf]
    %v78 = vld [vmem:[%s0 + $0x60] sm:$0xf]
    %v79 = vld [vmem:[%s0 + $0x64] sm:$0xf]
    %v80 = vld [vmem:[%s0 + $0x68] sm:$0xf]
    %v81 = vld [vmem:[%s0 + $0x6c] sm:$0xf]
    %v82 = vld [vmem:[%s0 + $0x70] sm:$0xf]
    %v83 = vld [vmem:[%s0 + $0x74] sm:$0xf]
    %v84 = vld [vmem:[%s0 + $0x78] sm:$0xf]
    %v85 = vld [vmem:[%s0 + $0x7c] sm:$0xf]
    %v86 = vld [vmem:[%s0 + $0x80] sm:$0xf]
    %v87 = vld [vmem:[%s0 + $0x84] sm:$0xf]
    %v88 = vld [vmem:[%s0 + $0x88] sm:$0xf]
    %v89 = vld [vmem:[%s0 + $0x8c] sm:$0xf]
    %v90 = vld [vmem:[%s0 + $0x90] sm:$0xf]
    %v91 = vld [vmem:[%s0 + $0x94] sm:$0xf]
    %v92 = vld [vmem:[%s0 + $0x98] sm:$0xf]
    %v93 = vld [vmem:[%s0 + $0x9c] sm:$0xf]
    %v94 = vld [vmem:[%s0 + $0xa0] sm:$0xf]
    %v95 = vld [vmem:[%s0 + $0xa4] sm:$0xf]
    %v96 = vld [vmem:[%s0 + $0xa8] sm:$0xf]
    %v97 = vld [vmem:[%s0 + $0xac] sm:$0xf]
    %v98 = vld [vmem:[%s0 + $0xb0] sm:$0xf]
    %v99 = vld [vmem:[%s0 + $0xb4] sm:$0xf]
    %v100 = vld [vmem:[%s0 + $0xb8] sm:$0xf]
    %v101 = vld [vmem:[%s0 + $0xbc] sm:$0xf]
    %v102 = vld [vmem:[%s0 + $0xc0] sm:$0xf]
    %v103 = vld [vmem:[%s0 + $0xc4] sm:$0xf]
    %v104 = vld [vmem:[%s0 + $0xc8] sm:$0xf]
    %v105 = vld [vmem:[%s0 + $0xcc] sm:$0xf]
    %v106 = vld [vmem:[%s0 + $0xd0] sm:$0xf]
    %v107 = vld [vmem:[%s0 + $0xd4] sm:$0xf]
    %v108 = vld [vmem:[%s0 + $0xd8] sm:$0xf]
    %v109 = vld [vmem:[%s0 + $0xdc] sm:$0xf]
    %v110 = vld [vmem:[%s0 + $0xe0] sm:$0xf]
    %v111 = vld [vmem:[%s0 + $0xe4] sm:$0xf]
    %v112 = vld [vmem:[%s0 + $0xe8] sm:$0xf]
    %v113 = vld [vmem:[%s0 + $0xec] sm:$0xf]
    %v114 = vld [vmem:[%s0 + $0xf0] sm:$0xf]
    %v115 = vld [vmem:[%s0 + $0xf4] sm:$0xf]
    %v116 = vld [vmem:[%s0 + $0xf8] sm:$0xf]
    %v117 = vld [vmem:[%s0 + $0xfc] sm:$0xf]
    %v118 = vunpack.c.l.bf16 %v54
    %v119 = vunpack.c.l.bf16 %v55
    %v120 = vunpack.c.l.bf16 %v56
    %v121 = vunpack.c.l.bf16 %v57
    %v122 = vunpack.c.l.bf16 %v58
    %v123 = vunpack.c.l.bf16 %v59
    %v124 = vunpack.c.l.bf16 %v60
    %v125 = vunpack.c.l.bf16 %v61
    %v126 = vunpack.c.l.bf16 %v62
    %v127 = vunpack.c.l.bf16 %v63
    %v128 = vunpack.c.l.bf16 %v64
    %v129 = vunpack.c.l.bf16 %v65
    %v130 = vunpack.c.l.bf16 %v66
    %v131 = vunpack.c.l.bf16 %v67
    %v132 = vunpack.c.l.bf16 %v68
    %v133 = vunpack.c.l.bf16 %v69
    %v134 = vunpack.c.l.bf16 %v70
    %v135 = vunpack.c.l.bf16 %v71
    %v136 = vunpack.c.l.bf16 %v72
    %v137 = vunpack.c.l.bf16 %v73
    %v138 = vunpack.c.l.bf16 %v74
    %v139 = vunpack.c.l.bf16 %v75
    %v140 = vunpack.c.l.bf16 %v76
    %v141 = vunpack.c.l.bf16 %v77
    %v142 = vunpack.c.l.bf16 %v78
    %v143 = vunpack.c.l.bf16 %v79
    %v144 = vunpack.c.l.bf16 %v80
    %v145 = vunpack.c.l.bf16 %v81
    %v146 = vunpack.c.l.bf16 %v82
    %v147 = vunpack.c.l.bf16 %v83
    %v148 = vunpack.c.l.bf16 %v84
    %v149 = vunpack.c.l.bf16 %v85
    %v150 = vunpack.c.l.bf16 %v86
    %v151 = vunpack.c.l.bf16 %v87
    %v152 = vunpack.c.l.bf16 %v88
    %v153 = vunpack.c.l.bf16 %v89
    %v154 = vunpack.c.l.bf16 %v90
    %v155 = vunpack.c.l.bf16 %v91
    %v156 = vunpack.c.l.bf16 %v92
    %v157 = vunpack.c.l.bf16 %v93
    %v158 = vunpack.c.l.bf16 %v94
    %v159 = vunpack.c.l.bf16 %v95
    %v160 = vunpack.c.l.bf16 %v96
    %v161 = vunpack.c.l.bf16 %v97
    %v162 = vunpack.c.l.bf16 %v98
    %v163 = vunpack.c.l.bf16 %v99
    %v164 = vunpack.c.l.bf16 %v100
    %v165 = vunpack.c.l.bf16 %v101
    %v166 = vunpack.c.l.bf16 %v102
    %v167 = vunpack.c.l.bf16 %v103
    %v168 = vunpack.c.l.bf16 %v104
    %v169 = vunpack.c.l.bf16 %v105
    %v170 = vunpack.c.l.bf16 %v106
    %v171 = vunpack.c.l.bf16 %v107
    %v172 = vunpack.c.l.bf16 %v108
    %v173 = vunpack.c.l.bf16 %v109
    %v174 = vunpack.c.l.bf16 %v110
    %v175 = vunpack.c.l.bf16 %v111
    %v176 = vunpack.c.l.bf16 %v112
    %v177 = vunpack.c.l.bf16 %v113
    %v178 = vunpack.c.l.bf16 %v114
    %v179 = vunpack.c.l.bf16 %v115
    %v180 = vunpack.c.l.bf16 %v116
    %v181 = vunpack.c.l.bf16 %v117
    %v183 = vlaneseq
    %v184 = vshrl.u32 %v183, 7
    %v185 = vsub.s32 0, %v184
    %v186 = vrot.slane %v50, %v185
    %v188 = vmul.f32 %v118, %v186
    %v189 = vmul.f32 %v119, %v186
    %v190 = vmul.f32 %v120, %v186
    %v191 = vmul.f32 %v121, %v186
    %v192 = vmul.f32 %v122, %v186
    %v193 = vmul.f32 %v123, %v186
    %v194 = vmul.f32 %v124, %v186
    %v195 = vmul.f32 %v125, %v186
    %v196 = vmul.f32 %v126, %v186
    %v197 = vmul.f32 %v127, %v186
    %v198 = vmul.f32 %v128, %v186
    %v199 = vmul.f32 %v129, %v186
    %v200 = vmul.f32 %v130, %v186
    %v201 = vmul.f32 %v131, %v186
    %v202 = vmul.f32 %v132, %v186
    %v203 = vmul.f32 %v133, %v186
    %v204 = vmul.f32 %v134, %v186
    %v205 = vmul.f32 %v135, %v186
    %v206 = vmul.f32 %v136, %v186
    %v207 = vmul.f32 %v137, %v186
    %v208 = vmul.f32 %v138, %v186
    %v209 = vmul.f32 %v139, %v186
    %v210 = vmul.f32 %v140, %v186
    %v211 = vmul.f32 %v141, %v186
    %v212 = vmul.f32 %v142, %v186
    %v213 = vmul.f32 %v143, %v186
    %v214 = vmul.f32 %v144, %v186
    %v215 = vmul.f32 %v145, %v186
    %v216 = vmul.f32 %v146, %v186
    %v217 = vmul.f32 %v147, %v186
    %v218 = vmul.f32 %v148, %v186
    %v219 = vmul.f32 %v149, %v186
    %v220 = vmul.f32 %v150, %v186
    %v221 = vmul.f32 %v151, %v186
    %v222 = vmul.f32 %v152, %v186
    %v223 = vmul.f32 %v153, %v186
    %v224 = vmul.f32 %v154, %v186
    %v225 = vmul.f32 %v155, %v186
    %v226 = vmul.f32 %v156, %v186
    %v227 = vmul.f32 %v157, %v186
    %v228 = vmul.f32 %v158, %v186
    %v229 = vmul.f32 %v159, %v186
    %v230 = vmul.f32 %v160, %v186
    %v231 = vmul.f32 %v161, %v186
    %v232 = vmul.f32 %v162, %v186
    %v233 = vmul.f32 %v163, %v186
    %v234 = vmul.f32 %v164, %v186
    %v235 = vmul.f32 %v165, %v186
    %v236 = vmul.f32 %v166, %v186
    %v237 = vmul.f32 %v167, %v186
    %v238 = vmul.f32 %v168, %v186
    %v239 = vmul.f32 %v169, %v186
    %v240 = vmul.f32 %v170, %v186
    %v241 = vmul.f32 %v171, %v186
    %v242 = vmul.f32 %v172, %v186
    %v243 = vmul.f32 %v173, %v186
    %v244 = vmul.f32 %v174, %v186
    %v245 = vmul.f32 %v175, %v186
    %v246 = vmul.f32 %v176, %v186
    %v247 = vmul.f32 %v177, %v186
    %v248 = vmul.f32 %v178, %v186
    %v249 = vmul.f32 %v179, %v186
    %v250 = vmul.f32 %v180, %v186
    %v251 = vmul.f32 %v181, %v186
    %v253 = vlaneseq
    %v254 = vshrl.u32 %v253, 7
    %v255 = vsub.s32 0, %v254
    %v256 = vrot.slane %v53, %v255
    %v258 = vadd.f32 %v188, %v256
    %v259 = vadd.f32 %v189, %v256
    %v260 = vadd.f32 %v190, %v256
    %v261 = vadd.f32 %v191, %v256
    %v262 = vadd.f32 %v192, %v256
    %v263 = vadd.f32 %v193, %v256
    %v264 = vadd.f32 %v194, %v256
    %v265 = vadd.f32 %v195, %v256
    %v266 = vadd.f32 %v196, %v256
    %v267 = vadd.f32 %v197, %v256
    %v268 = vadd.f32 %v198, %v256
    %v269 = vadd.f32 %v199, %v256
    %v270 = vadd.f32 %v200, %v256
    %v271 = vadd.f32 %v201, %v256
    %v272 = vadd.f32 %v202, %v256
    %v273 = vadd.f32 %v203, %v256
    %v274 = vadd.f32 %v204, %v256
    %v275 = vadd.f32 %v205, %v256
    %v276 = vadd.f32 %v206, %v256
    %v277 = vadd.f32 %v207, %v256
    %v278 = vadd.f32 %v208, %v256
    %v279 = vadd.f32 %v209, %v256
    %v280 = vadd.f32 %v210, %v256
    %v281 = vadd.f32 %v211, %v256
    %v282 = vadd.f32 %v212, %v256
    %v283 = vadd.f32 %v213, %v256
    %v284 = vadd.f32 %v214, %v256
    %v285 = vadd.f32 %v215, %v256
    %v286 = vadd.f32 %v216, %v256
    %v287 = vadd.f32 %v217, %v256
    %v288 = vadd.f32 %v218, %v256
    %v289 = vadd.f32 %v219, %v256
    %v290 = vadd.f32 %v220, %v256
    %v291 = vadd.f32 %v221, %v256
    %v292 = vadd.f32 %v222, %v256
    %v293 = vadd.f32 %v223, %v256
    %v294 = vadd.f32 %v224, %v256
    %v295 = vadd.f32 %v225, %v256
    %v296 = vadd.f32 %v226, %v256
    %v297 = vadd.f32 %v227, %v256
    %v298 = vadd.f32 %v228, %v256
    %v299 = vadd.f32 %v229, %v256
    %v300 = vadd.f32 %v230, %v256
    %v301 = vadd.f32 %v231, %v256
    %v302 = vadd.f32 %v232, %v256
    %v303 = vadd.f32 %v233, %v256
    %v304 = vadd.f32 %v234, %v256
    %v305 = vadd.f32 %v235, %v256
    %v306 = vadd.f32 %v236, %v256
    %v307 = vadd.f32 %v237, %v256
    %v308 = vadd.f32 %v238, %v256
    %v309 = vadd.f32 %v239, %v256
    %v310 = vadd.f32 %v240, %v256
    %v311 = vadd.f32 %v241, %v256
    %v312 = vadd.f32 %v242, %v256
    %v313 = vadd.f32 %v243, %v256
    %v314 = vadd.f32 %v244, %v256
    %v315 = vadd.f32 %v245, %v256
    %v316 = vadd.f32 %v246, %v256
    %v317 = vadd.f32 %v247, %v256
    %v318 = vadd.f32 %v248, %v256
    %v319 = vadd.f32 %v249, %v256
    %v320 = vadd.f32 %v250, %v256
    %v321 = vadd.f32 %v251, %v256
    %v322 = vmax.f32 %v258, 0.0
    %v323 = vmax.f32 %v259, 0.0
    %v324 = vmax.f32 %v260, 0.0
    %v325 = vmax.f32 %v261, 0.0
    %v326 = vmax.f32 %v262, 0.0
    %v327 = vmax.f32 %v263, 0.0
    %v328 = vmax.f32 %v264, 0.0
    %v329 = vmax.f32 %v265, 0.0
    %v330 = vmax.f32 %v266, 0.0
    %v331 = vmax.f32 %v267, 0.0
    %v332 = vmax.f32 %v268, 0.0
    %v333 = vmax.f32 %v269, 0.0
    %v334 = vmax.f32 %v270, 0.0
    %v335 = vmax.f32 %v271, 0.0
    %v336 = vmax.f32 %v272, 0.0
    %v337 = vmax.f32 %v273, 0.0
    %v338 = vmax.f32 %v274, 0.0
    %v339 = vmax.f32 %v275, 0.0
    %v340 = vmax.f32 %v276, 0.0
    %v341 = vmax.f32 %v277, 0.0
    %v342 = vmax.f32 %v278, 0.0
    %v343 = vmax.f32 %v279, 0.0
    %v344 = vmax.f32 %v280, 0.0
    %v345 = vmax.f32 %v281, 0.0
    %v346 = vmax.f32 %v282, 0.0
    %v347 = vmax.f32 %v283, 0.0
    %v348 = vmax.f32 %v284, 0.0
    %v349 = vmax.f32 %v285, 0.0
    %v350 = vmax.f32 %v286, 0.0
    %v351 = vmax.f32 %v287, 0.0
    %v352 = vmax.f32 %v288, 0.0
    %v353 = vmax.f32 %v289, 0.0
    %v354 = vmax.f32 %v290, 0.0
    %v355 = vmax.f32 %v291, 0.0
    %v356 = vmax.f32 %v292, 0.0
    %v357 = vmax.f32 %v293, 0.0
    %v358 = vmax.f32 %v294, 0.0
    %v359 = vmax.f32 %v295, 0.0
    %v360 = vmax.f32 %v296, 0.0
    %v361 = vmax.f32 %v297, 0.0
    %v362 = vmax.f32 %v298, 0.0
    %v363 = vmax.f32 %v299, 0.0
    %v364 = vmax.f32 %v300, 0.0
    %v365 = vmax.f32 %v301, 0.0
    %v366 = vmax.f32 %v302, 0.0
    %v367 = vmax.f32 %v303, 0.0
    %v368 = vmax.f32 %v304, 0.0
    %v369 = vmax.f32 %v305, 0.0
    %v370 = vmax.f32 %v306, 0.0
    %v371 = vmax.f32 %v307, 0.0
    %v372 = vmax.f32 %v308, 0.0
    %v373 = vmax.f32 %v309, 0.0
    %v374 = vmax.f32 %v310, 0.0
    %v375 = vmax.f32 %v311, 0.0
    %v376 = vmax.f32 %v312, 0.0
    %v377 = vmax.f32 %v313, 0.0
    %v378 = vmax.f32 %v314, 0.0
    %v379 = vmax.f32 %v315, 0.0
    %v380 = vmax.f32 %v316, 0.0
    %v381 = vmax.f32 %v317, 0.0
    %v382 = vmax.f32 %v318, 0.0
    %v383 = vmax.f32 %v319, 0.0
    %v384 = vmax.f32 %v320, 0.0
    %v385 = vmax.f32 %v321, 0.0
    %v386 = vpack.c.bf16 %v323, %v322
    %v387 = vpack.c.bf16 %v325, %v324
    %v388 = vpack.c.bf16 %v327, %v326
    %v389 = vpack.c.bf16 %v329, %v328
    %v390 = vpack.c.bf16 %v331, %v330
    %v391 = vpack.c.bf16 %v333, %v332
    %v392 = vpack.c.bf16 %v335, %v334
    %v393 = vpack.c.bf16 %v337, %v336
    %v394 = vpack.c.bf16 %v339, %v338
    %v395 = vpack.c.bf16 %v341, %v340
    %v396 = vpack.c.bf16 %v343, %v342
    %v397 = vpack.c.bf16 %v345, %v344
    %v398 = vpack.c.bf16 %v347, %v346
    %v399 = vpack.c.bf16 %v349, %v348
    %v400 = vpack.c.bf16 %v351, %v350
    %v401 = vpack.c.bf16 %v353, %v352
    %v402 = vpack.c.bf16 %v355, %v354
    %v403 = vpack.c.bf16 %v357, %v356
    %v404 = vpack.c.bf16 %v359, %v358
    %v405 = vpack.c.bf16 %v361, %v360
    %v406 = vpack.c.bf16 %v363, %v362
    %v407 = vpack.c.bf16 %v365, %v364
    %v408 = vpack.c.bf16 %v367, %v366
    %v409 = vpack.c.bf16 %v369, %v368
    %v410 = vpack.c.bf16 %v371, %v370
    %v411 = vpack.c.bf16 %v373, %v372
    %v412 = vpack.c.bf16 %v375, %v374
    %v413 = vpack.c.bf16 %v377, %v376
    %v414 = vpack.c.bf16 %v379, %v378
    %v415 = vpack.c.bf16 %v381, %v380
    %v416 = vpack.c.bf16 %v383, %v382
    %v417 = vpack.c.bf16 %v385, %v384
    %v450 = vunpack.c.l.b16 %v386
    %v451 = vunpack.c.h.b16 %v386
    %v452 = vunpack.c.l.b16 %v387
    %v453 = vunpack.c.h.b16 %v387
    %v454 = vunpack.c.l.b16 %v388
    %v455 = vunpack.c.h.b16 %v388
    %v456 = vunpack.c.l.b16 %v389
    %v457 = vunpack.c.h.b16 %v389
    %v458 = vunpack.c.l.b16 %v390
    %v459 = vunpack.c.h.b16 %v390
    %v460 = vunpack.c.l.b16 %v391
    %v461 = vunpack.c.h.b16 %v391
    %v462 = vunpack.c.l.b16 %v392
    %v463 = vunpack.c.h.b16 %v392
    %v464 = vunpack.c.l.b16 %v393
    %v465 = vunpack.c.h.b16 %v393
    %v466 = vunpack.c.l.b16 %v394
    %v467 = vunpack.c.h.b16 %v394
    %v468 = vunpack.c.l.b16 %v395
    %v469 = vunpack.c.h.b16 %v395
    %v470 = vunpack.c.l.b16 %v396
    %v471 = vunpack.c.h.b16 %v396
    %v472 = vunpack.c.l.b16 %v397
    %v473 = vunpack.c.h.b16 %v397
    %v474 = vunpack.c.l.b16 %v398
    %v475 = vunpack.c.h.b16 %v398
    %v476 = vunpack.c.l.b16 %v399
    %v477 = vunpack.c.h.b16 %v399
    %v478 = vunpack.c.l.b16 %v400
    %v479 = vunpack.c.h.b16 %v400
    %v480 = vunpack.c.l.b16 %v401
    %v481 = vunpack.c.h.b16 %v401
    %v482 = vunpack.c.l.b16 %v402
    %v483 = vunpack.c.h.b16 %v402
    %v484 = vunpack.c.l.b16 %v403
    %v485 = vunpack.c.h.b16 %v403
    %v486 = vunpack.c.l.b16 %v404
    %v487 = vunpack.c.h.b16 %v404
    %v488 = vunpack.c.l.b16 %v405
    %v489 = vunpack.c.h.b16 %v405
    %v490 = vunpack.c.l.b16 %v406
    %v491 = vunpack.c.h.b16 %v406
    %v492 = vunpack.c.l.b16 %v407
    %v493 = vunpack.c.h.b16 %v407
    %v494 = vunpack.c.l.b16 %v408
    %v495 = vunpack.c.h.b16 %v408
    %v496 = vunpack.c.l.b16 %v409
    %v497 = vunpack.c.h.b16 %v409
    %v498 = vunpack.c.l.b16 %v410
    %v499 = vunpack.c.h.b16 %v410
    %v500 = vunpack.c.l.b16 %v411
    %v501 = vunpack.c.h.b16 %v411
    %v502 = vunpack.c.l.b16 %v412
    %v503 = vunpack.c.h.b16 %v412
    %v504 = vunpack.c.l.b16 %v413
    %v505 = vunpack.c.h.b16 %v413
    %v506 = vunpack.c.l.b16 %v414
    %v507 = vunpack.c.h.b16 %v414
    %v508 = vunpack.c.l.b16 %v415
    %v509 = vunpack.c.h.b16 %v415
    %v510 = vunpack.c.l.b16 %v416
    %v511 = vunpack.c.h.b16 %v416
    %v512 = vunpack.c.l.b16 %v417
    %v513 = vunpack.c.h.b16 %v417
    %v514 = vpack.c.b16 %v450, %v450
    %v515 = vpack.c.b16 %v451, %v451
    %v516 = vpack.c.b16 %v452, %v452
    %v517 = vpack.c.b16 %v453, %v453
    %v518 = vpack.c.b16 %v454, %v454
    %v519 = vpack.c.b16 %v455, %v455
    %v520 = vpack.c.b16 %v456, %v456
    %v521 = vpack.c.b16 %v457, %v457
    %v522 = vpack.c.b16 %v458, %v458
    %v523 = vpack.c.b16 %v459, %v459
    %v524 = vpack.c.b16 %v460, %v460
    %v525 = vpack.c.b16 %v461, %v461
    %v526 = vpack.c.b16 %v462, %v462
    %v527 = vpack.c.b16 %v463, %v463
    %v528 = vpack.c.b16 %v464, %v464
    %v529 = vpack.c.b16 %v465, %v465
    %v530 = vpack.c.b16 %v466, %v466
    %v531 = vpack.c.b16 %v467, %v467
    %v532 = vpack.c.b16 %v468, %v468
    %v533 = vpack.c.b16 %v469, %v469
    %v534 = vpack.c.b16 %v470, %v470
    %v535 = vpack.c.b16 %v471, %v471
    %v536 = vpack.c.b16 %v472, %v472
    %v537 = vpack.c.b16 %v473, %v473
    %v538 = vpack.c.b16 %v474, %v474
    %v539 = vpack.c.b16 %v475, %v475
    %v540 = vpack.c.b16 %v476, %v476
    %v541 = vpack.c.b16 %v477, %v477
    %v542 = vpack.c.b16 %v478, %v478
    %v543 = vpack.c.b16 %v479, %v479
    %v544 = vpack.c.b16 %v480, %v480
    %v545 = vpack.c.b16 %v481, %v481
    %v546 = vpack.c.b16 %v482, %v482
    %v547 = vpack.c.b16 %v483, %v483
    %v548 = vpack.c.b16 %v484, %v484
    %v549 = vpack.c.b16 %v485, %v485
    %v550 = vpack.c.b16 %v486, %v486
    %v551 = vpack.c.b16 %v487, %v487
    %v552 = vpack.c.b16 %v488, %v488
    %v553 = vpack.c.b16 %v489, %v489
    %v554 = vpack.c.b16 %v490, %v490
    %v555 = vpack.c.b16 %v491, %v491
    %v556 = vpack.c.b16 %v492, %v492
    %v557 = vpack.c.b16 %v493, %v493
    %v558 = vpack.c.b16 %v494, %v494
    %v559 = vpack.c.b16 %v495, %v495
    %v560 = vpack.c.b16 %v496, %v496
    %v561 = vpack.c.b16 %v497, %v497
    %v562 = vpack.c.b16 %v498, %v498
    %v563 = vpack.c.b16 %v499, %v499
    %v564 = vpack.c.b16 %v500, %v500
    %v565 = vpack.c.b16 %v501, %v501
    %v566 = vpack.c.b16 %v502, %v502
    %v567 = vpack.c.b16 %v503, %v503
    %v568 = vpack.c.b16 %v504, %v504
    %v569 = vpack.c.b16 %v505, %v505
    %v570 = vpack.c.b16 %v506, %v506
    %v571 = vpack.c.b16 %v507, %v507
    %v572 = vpack.c.b16 %v508, %v508
    %v573 = vpack.c.b16 %v509, %v509
    %v574 = vpack.c.b16 %v510, %v510
    %v575 = vpack.c.b16 %v511, %v511
    %v576 = vpack.c.b16 %v512, %v512
    %v577 = vpack.c.b16 %v513, %v513
    %642 = vst [vmem:[%s4] sm:$0xf] %v514
    %643 = vst [vmem:[%s4 + $0x4] sm:$0xf] %v515
    %644 = vst [vmem:[%s4 + $0x8] sm:$0xf] %v516
    %645 = vst [vmem:[%s4 + $0xc] sm:$0xf] %v517
    %646 = vst [vmem:[%s4 + $0x10] sm:$0xf] %v518
    %647 = vst [vmem:[%s4 + $0x14] sm:$0xf] %v519
    %648 = vst [vmem:[%s4 + $0x18] sm:$0xf] %v520
    %649 = vst [vmem:[%s4 + $0x1c] sm:$0xf] %v521
    %650 = vst [vmem:[%s4 + $0x20] sm:$0xf] %v522
    %651 = vst [vmem:[%s4 + $0x24] sm:$0xf] %v523
    %652 = vst [vmem:[%s4 + $0x28] sm:$0xf] %v524
    %653 = vst [vmem:[%s4 + $0x2c] sm:$0xf] %v525
    %654 = vst [vmem:[%s4 + $0x30] sm:$0xf] %v526
    %655 = vst [vmem:[%s4 + $0x34] sm:$0xf] %v527
    %656 = vst [vmem:[%s4 + $0x38] sm:$0xf] %v528
    %657 = vst [vmem:[%s4 + $0x3c] sm:$0xf] %v529
    %658 = vst [vmem:[%s4 + $0x40] sm:$0xf] %v530
    %659 = vst [vmem:[%s4 + $0x44] sm:$0xf] %v531
    %660 = vst [vmem:[%s4 + $0x48] sm:$0xf] %v532
    %661 = vst [vmem:[%s4 + $0x4c] sm:$0xf] %v533
    %662 = vst [vmem:[%s4 + $0x50] sm:$0xf] %v534
    %663 = vst [vmem:[%s4 + $0x54] sm:$0xf] %v535
    %664 = vst [vmem:[%s4 + $0x58] sm:$0xf] %v536
    %665 = vst [vmem:[%s4 + $0x5c] sm:$0xf] %v537
    %666 = vst [vmem:[%s4 + $0x60] sm:$0xf] %v538
    %667 = vst [vmem:[%s4 + $0x64] sm:$0xf] %v539
    %668 = vst [vmem:[%s4 + $0x68] sm:$0xf] %v540
    %669 = vst [vmem:[%s4 + $0x6c] sm:$0xf] %v541
    %670 = vst [vmem:[%s4 + $0x70] sm:$0xf] %v542
    %671 = vst [vmem:[%s4 + $0x74] sm:$0xf] %v543
    %672 = vst [vmem:[%s4 + $0x78] sm:$0xf] %v544
    %673 = vst [vmem:[%s4 + $0x7c] sm:$0xf] %v545
    %674 = vst [vmem:[%s4 + $0x80] sm:$0xf] %v546
    %675 = vst [vmem:[%s4 + $0x84] sm:$0xf] %v547
    %676 = vst [vmem:[%s4 + $0x88] sm:$0xf] %v548
    %677 = vst [vmem:[%s4 + $0x8c] sm:$0xf] %v549
    %678 = vst [vmem:[%s4 + $0x90] sm:$0xf] %v550
    %679 = vst [vmem:[%s4 + $0x94] sm:$0xf] %v551
    %680 = vst [vmem:[%s4 + $0x98] sm:$0xf] %v552
    %681 = vst [vmem:[%s4 + $0x9c] sm:$0xf] %v553
    %682 = vst [vmem:[%s4 + $0xa0] sm:$0xf] %v554
    %683 = vst [vmem:[%s4 + $0xa4] sm:$0xf] %v555
    %684 = vst [vmem:[%s4 + $0xa8] sm:$0xf] %v556
    %685 = vst [vmem:[%s4 + $0xac] sm:$0xf] %v557
    %686 = vst [vmem:[%s4 + $0xb0] sm:$0xf] %v558
    %687 = vst [vmem:[%s4 + $0xb4] sm:$0xf] %v559
    %688 = vst [vmem:[%s4 + $0xb8] sm:$0xf] %v560
    %689 = vst [vmem:[%s4 + $0xbc] sm:$0xf] %v561
    %690 = vst [vmem:[%s4 + $0xc0] sm:$0xf] %v562
    %691 = vst [vmem:[%s4 + $0xc4] sm:$0xf] %v563
    %692 = vst [vmem:[%s4 + $0xc8] sm:$0xf] %v564
    %693 = vst [vmem:[%s4 + $0xcc] sm:$0xf] %v565
    %694 = vst [vmem:[%s4 + $0xd0] sm:$0xf] %v566
    %695 = vst [vmem:[%s4 + $0xd4] sm:$0xf] %v567
    %696 = vst [vmem:[%s4 + $0xd8] sm:$0xf] %v568
    %697 = vst [vmem:[%s4 + $0xdc] sm:$0xf] %v569
    %698 = vst [vmem:[%s4 + $0xe0] sm:$0xf] %v570
    %699 = vst [vmem:[%s4 + $0xe4] sm:$0xf] %v571
    %700 = vst [vmem:[%s4 + $0xe8] sm:$0xf] %v572
    %701 = vst [vmem:[%s4 + $0xec] sm:$0xf] %v573
    %702 = vst [vmem:[%s4 + $0xf0] sm:$0xf] %v574
    %703 = vst [vmem:[%s4 + $0xf4] sm:$0xf] %v575
    %704 = vst [vmem:[%s4 + $0xf8] sm:$0xf] %v576
    %705 = vst [vmem:[%s4 + $0xfc] sm:$0xf] %v577
    // Predicated region
    $region26: #{simple_encoder_forward.4} parent=1 // pred_check
      _
    $region27: #{simple_encoder_forward.4} parent=1 // pred_check_branch
      %707 = sbr.rel (0) target = $region29
    $region28: #{simple_encoder_forward.4} parent=1 // pred_region
      _
    $region29: #{simple_encoder_forward.4} parent=1 // pred_fallthru
      _
    // Predicated region
    $region30: #{simple_encoder_forward.4} parent=1 // pred_check
      _
    $region31: #{simple_encoder_forward.4} parent=1 // pred_check_branch
      %709 = sbr.rel (0) target = $region33
    $region32: #{simple_encoder_forward.4} parent=1 // pred_region
      _
    $region33: #{simple_encoder_forward.4} parent=1 // pred_fallthru
      _
    %710 = vsyncpa [#allocation3], 1
    %711 = vsyncpa [#allocation5], 1

// kernel: simple_encoder_forward.3
$region0: #{simple_encoder_forward.3}
  #allocation0 [shape = 'u32[]', space=smem, size = 0x4, offset = 0x4, fixed_abs, tag = 'smem constant byte address 0x4 - core index']
  #allocation1 [shape = 'u32[144,128]{1,0:T(1,128)}', space=vmem, size = 0x12000, scoped, tag = 'internal scratch']
  %s0 = inlined_call_operand.vmem [shape: bf16[512,128], index: 0, kind: input, shape index: {}]
  %s1 = inlined_call_operand.hbm [shape: bf16[128,128], index: 1, kind: input, shape index: {}]
  %s2 = inlined_call_operand.vmem [shape: bf16[512,128], index: 2, kind: output, shape index: {0}]
  %s3 = inlined_call_operand.vmem [shape: f32[2,128], index: 3, kind: output, shape index: {1}]
  %4 = xla_tuple %s2, %s3
  %s5 = sld [smem:[#allocation0]]
  $region34: #{simple_encoder_forward.3} parent=0
    _
  %s7 = ssub.s32 1, %s5
  %s8 = scalar_select 0, %s7, %s5
  $region1: #{simple_encoder_forward.3} parent=0
    #allocation2 [shape = 'u8[32768]{0}', space=vmem, size = 0x8000, scoped, tag = 'input window, operand 1, single buffered']
    #allocation3 [shape = 's32[1]{0}', space=sflag, size = 0x4, scoped, tag = 'scoped memory for simple_encoder_forward.3']
    %9 = vsyncpa [#allocation3], 0
    // Predicated region
    $region2: #{simple_encoder_forward.3} parent=1 // pred_check
      _
    $region3: #{simple_encoder_forward.3} parent=1 // pred_check_branch
      %11 = sbr.rel (0) target = $region5
    $region4: #{simple_encoder_forward.3} parent=1 // pred_region
      _
    $region5: #{simple_encoder_forward.3} parent=1 // pred_fallthru
      _
    // Predicated region
    $region6: #{simple_encoder_forward.3} parent=1 // pred_check
      _
    $region7: #{simple_encoder_forward.3} parent=1 // pred_check_branch
      %13 = sbr.rel (0) target = $region9
    $region8: #{simple_encoder_forward.3} parent=1 // pred_region
      %s15 = ssub.s32 1024, 1024
      %16 = vsyncadd [#allocation3], %s15
      %s17 = sshll.u32 [#allocation2], 4
      %s18 = int_to_ptr.vmem [resolvable:$true] %s17
      %23 = dma.hbm_to_vmem [thread:$0]  %s1, 1024, %s18, [#allocation3], 64, 64, 4
    $region9: #{simple_encoder_forward.3} parent=1 // pred_fallthru
      _
    // Predicated region
    $region10: #{simple_encoder_forward.3} parent=1 // pred_check
      _
    $region11: #{simple_encoder_forward.3} parent=1 // pred_check_branch
      %25 = sbr.rel (0) target = $region13
    $region12: #{simple_encoder_forward.3} parent=1 // pred_region
      %26 = dma.done [#allocation3], 1024
    $region13: #{simple_encoder_forward.3} parent=1 // pred_fallthru
      _
    %p28 = scmp.eq.s32.totalorder 0, 0
    // Predicated region
    $region14: #{simple_encoder_forward.3} parent=1 // pred_check
      %p29 = pneg %p28
    $region15: #{simple_encoder_forward.3} parent=1 // pred_check_branch
      %31 = sbr.rel (%p29) target = $region17
    $region16: #{simple_encoder_forward.3} parent=1 // pred_region
      %32 = vst [vmem:[%s3] sm:$0x3] 0.0
    $region17: #{simple_encoder_forward.3} parent=1 // pred_fallthru
      _
    %v33 = vld [vmem:[%s0] sm:$0xf]
    %v34 = vld [vmem:[%s0 + $0x4] sm:$0xf]
    %v35 = vld [vmem:[%s0 + $0x8] sm:$0xf]
    %v36 = vld [vmem:[%s0 + $0xc] sm:$0xf]
    %v37 = vld [vmem:[%s0 + $0x10] sm:$0xf]
    %v38 = vld [vmem:[%s0 + $0x14] sm:$0xf]
    %v39 = vld [vmem:[%s0 + $0x18] sm:$0xf]
    %v40 = vld [vmem:[%s0 + $0x1c] sm:$0xf]
    %v41 = vld [vmem:[%s0 + $0x20] sm:$0xf]
    %v42 = vld [vmem:[%s0 + $0x24] sm:$0xf]
    %v43 = vld [vmem:[%s0 + $0x28] sm:$0xf]
    %v44 = vld [vmem:[%s0 + $0x2c] sm:$0xf]
    %v45 = vld [vmem:[%s0 + $0x30] sm:$0xf]
    %v46 = vld [vmem:[%s0 + $0x34] sm:$0xf]
    %v47 = vld [vmem:[%s0 + $0x38] sm:$0xf]
    %v48 = vld [vmem:[%s0 + $0x3c] sm:$0xf]
    %v49 = vld [vmem:[%s0 + $0x40] sm:$0xf]
    %v50 = vld [vmem:[%s0 + $0x44] sm:$0xf]
    %v51 = vld [vmem:[%s0 + $0x48] sm:$0xf]
    %v52 = vld [vmem:[%s0 + $0x4c] sm:$0xf]
    %v53 = vld [vmem:[%s0 + $0x50] sm:$0xf]
    %v54 = vld [vmem:[%s0 + $0x54] sm:$0xf]
    %v55 = vld [vmem:[%s0 + $0x58] sm:$0xf]
    %v56 = vld [vmem:[%s0 + $0x5c] sm:$0xf]
    %v57 = vld [vmem:[%s0 + $0x60] sm:$0xf]
    %v58 = vld [vmem:[%s0 + $0x64] sm:$0xf]
    %v59 = vld [vmem:[%s0 + $0x68] sm:$0xf]
    %v60 = vld [vmem:[%s0 + $0x6c] sm:$0xf]
    %v61 = vld [vmem:[%s0 + $0x70] sm:$0xf]
    %v62 = vld [vmem:[%s0 + $0x74] sm:$0xf]
    %v63 = vld [vmem:[%s0 + $0x78] sm:$0xf]
    %v64 = vld [vmem:[%s0 + $0x7c] sm:$0xf]
    %v65 = vld [vmem:[%s0 + $0x80] sm:$0xf]
    %v66 = vld [vmem:[%s0 + $0x84] sm:$0xf]
    %v67 = vld [vmem:[%s0 + $0x88] sm:$0xf]
    %v68 = vld [vmem:[%s0 + $0x8c] sm:$0xf]
    %v69 = vld [vmem:[%s0 + $0x90] sm:$0xf]
    %v70 = vld [vmem:[%s0 + $0x94] sm:$0xf]
    %v71 = vld [vmem:[%s0 + $0x98] sm:$0xf]
    %v72 = vld [vmem:[%s0 + $0x9c] sm:$0xf]
    %v73 = vld [vmem:[%s0 + $0xa0] sm:$0xf]
    %v74 = vld [vmem:[%s0 + $0xa4] sm:$0xf]
    %v75 = vld [vmem:[%s0 + $0xa8] sm:$0xf]
    %v76 = vld [vmem:[%s0 + $0xac] sm:$0xf]
    %v77 = vld [vmem:[%s0 + $0xb0] sm:$0xf]
    %v78 = vld [vmem:[%s0 + $0xb4] sm:$0xf]
    %v79 = vld [vmem:[%s0 + $0xb8] sm:$0xf]
    %v80 = vld [vmem:[%s0 + $0xbc] sm:$0xf]
    %v81 = vld [vmem:[%s0 + $0xc0] sm:$0xf]
    %v82 = vld [vmem:[%s0 + $0xc4] sm:$0xf]
    %v83 = vld [vmem:[%s0 + $0xc8] sm:$0xf]
    %v84 = vld [vmem:[%s0 + $0xcc] sm:$0xf]
    %v85 = vld [vmem:[%s0 + $0xd0] sm:$0xf]
    %v86 = vld [vmem:[%s0 + $0xd4] sm:$0xf]
    %v87 = vld [vmem:[%s0 + $0xd8] sm:$0xf]
    %v88 = vld [vmem:[%s0 + $0xdc] sm:$0xf]
    %v89 = vld [vmem:[%s0 + $0xe0] sm:$0xf]
    %v90 = vld [vmem:[%s0 + $0xe4] sm:$0xf]
    %v91 = vld [vmem:[%s0 + $0xe8] sm:$0xf]
    %v92 = vld [vmem:[%s0 + $0xec] sm:$0xf]
    %v93 = vld [vmem:[%s0 + $0xf0] sm:$0xf]
    %v94 = vld [vmem:[%s0 + $0xf4] sm:$0xf]
    %v95 = vld [vmem:[%s0 + $0xf8] sm:$0xf]
    %v96 = vld [vmem:[%s0 + $0xfc] sm:$0xf]
    %v97 = vld [vmem:[#allocation2] sm:$0xf]
    %v98 = vld [vmem:[#allocation2 + $0x4] sm:$0xf]
    %v99 = vld [vmem:[#allocation2 + $0x8] sm:$0xf]
    %v100 = vld [vmem:[#allocation2 + $0xc] sm:$0xf]
    %v101 = vld [vmem:[#allocation2 + $0x10] sm:$0xf]
    %v102 = vld [vmem:[#allocation2 + $0x14] sm:$0xf]
    %v103 = vld [vmem:[#allocation2 + $0x18] sm:$0xf]
    %v104 = vld [vmem:[#allocation2 + $0x1c] sm:$0xf]
    %v105 = vld [vmem:[#allocation2 + $0x20] sm:$0xf]
    %v106 = vld [vmem:[#allocation2 + $0x24] sm:$0xf]
    %v107 = vld [vmem:[#allocation2 + $0x28] sm:$0xf]
    %v108 = vld [vmem:[#allocation2 + $0x2c] sm:$0xf]
    %v109 = vld [vmem:[#allocation2 + $0x30] sm:$0xf]
    %v110 = vld [vmem:[#allocation2 + $0x34] sm:$0xf]
    %v111 = vld [vmem:[#allocation2 + $0x38] sm:$0xf]
    %v112 = vld [vmem:[#allocation2 + $0x3c] sm:$0xf]
    %v177 = vunpack.c.l.b16 %v33
    %v178 = vunpack.c.l.b16 %v34
    %v179 = vunpack.c.l.b16 %v35
    %v180 = vunpack.c.l.b16 %v36
    %v181 = vunpack.c.l.b16 %v37
    %v182 = vunpack.c.l.b16 %v38
    %v183 = vunpack.c.l.b16 %v39
    %v184 = vunpack.c.l.b16 %v40
    %v185 = vunpack.c.l.b16 %v41
    %v186 = vunpack.c.l.b16 %v42
    %v187 = vunpack.c.l.b16 %v43
    %v188 = vunpack.c.l.b16 %v44
    %v189 = vunpack.c.l.b16 %v45
    %v190 = vunpack.c.l.b16 %v46
    %v191 = vunpack.c.l.b16 %v47
    %v192 = vunpack.c.l.b16 %v48
    %v193 = vunpack.c.l.b16 %v49
    %v194 = vunpack.c.l.b16 %v50
    %v195 = vunpack.c.l.b16 %v51
    %v196 = vunpack.c.l.b16 %v52
    %v197 = vunpack.c.l.b16 %v53
    %v198 = vunpack.c.l.b16 %v54
    %v199 = vunpack.c.l.b16 %v55
    %v200 = vunpack.c.l.b16 %v56
    %v201 = vunpack.c.l.b16 %v57
    %v202 = vunpack.c.l.b16 %v58
    %v203 = vunpack.c.l.b16 %v59
    %v204 = vunpack.c.l.b16 %v60
    %v205 = vunpack.c.l.b16 %v61
    %v206 = vunpack.c.l.b16 %v62
    %v207 = vunpack.c.l.b16 %v63
    %v208 = vunpack.c.l.b16 %v64
    %v209 = vunpack.c.l.b16 %v65
    %v210 = vunpack.c.l.b16 %v66
    %v211 = vunpack.c.l.b16 %v67
    %v212 = vunpack.c.l.b16 %v68
    %v213 = vunpack.c.l.b16 %v69
    %v214 = vunpack.c.l.b16 %v70
    %v215 = vunpack.c.l.b16 %v71
    %v216 = vunpack.c.l.b16 %v72
    %v217 = vunpack.c.l.b16 %v73
    %v218 = vunpack.c.l.b16 %v74
    %v219 = vunpack.c.l.b16 %v75
    %v220 = vunpack.c.l.b16 %v76
    %v221 = vunpack.c.l.b16 %v77
    %v222 = vunpack.c.l.b16 %v78
    %v223 = vunpack.c.l.b16 %v79
    %v224 = vunpack.c.l.b16 %v80
    %v225 = vunpack.c.l.b16 %v81
    %v226 = vunpack.c.l.b16 %v82
    %v227 = vunpack.c.l.b16 %v83
    %v228 = vunpack.c.l.b16 %v84
    %v229 = vunpack.c.l.b16 %v85
    %v230 = vunpack.c.l.b16 %v86
    %v231 = vunpack.c.l.b16 %v87
    %v232 = vunpack.c.l.b16 %v88
    %v233 = vunpack.c.l.b16 %v89
    %v234 = vunpack.c.l.b16 %v90
    %v235 = vunpack.c.l.b16 %v91
    %v236 = vunpack.c.l.b16 %v92
    %v237 = vunpack.c.l.b16 %v93
    %v238 = vunpack.c.l.b16 %v94
    %v239 = vunpack.c.l.b16 %v95
    %v240 = vunpack.c.l.b16 %v96
    %v241 = vpack.c.b16 %v178, %v177
    %v242 = vpack.c.b16 %v180, %v179
    %v243 = vpack.c.b16 %v182, %v181
    %v244 = vpack.c.b16 %v184, %v183
    %v245 = vpack.c.b16 %v186, %v185
    %v246 = vpack.c.b16 %v188, %v187
    %v247 = vpack.c.b16 %v190, %v189
    %v248 = vpack.c.b16 %v192, %v191
    %v249 = vpack.c.b16 %v194, %v193
    %v250 = vpack.c.b16 %v196, %v195
    %v251 = vpack.c.b16 %v198, %v197
    %v252 = vpack.c.b16 %v200, %v199
    %v253 = vpack.c.b16 %v202, %v201
    %v254 = vpack.c.b16 %v204, %v203
    %v255 = vpack.c.b16 %v206, %v205
    %v256 = vpack.c.b16 %v208, %v207
    %v257 = vpack.c.b16 %v210, %v209
    %v258 = vpack.c.b16 %v212, %v211
    %v259 = vpack.c.b16 %v214, %v213
    %v260 = vpack.c.b16 %v216, %v215
    %v261 = vpack.c.b16 %v218, %v217
    %v262 = vpack.c.b16 %v220, %v219
    %v263 = vpack.c.b16 %v222, %v221
    %v264 = vpack.c.b16 %v224, %v223
    %v265 = vpack.c.b16 %v226, %v225
    %v266 = vpack.c.b16 %v228, %v227
    %v267 = vpack.c.b16 %v230, %v229
    %v268 = vpack.c.b16 %v232, %v231
    %v269 = vpack.c.b16 %v234, %v233
    %v270 = vpack.c.b16 %v236, %v235
    %v271 = vpack.c.b16 %v238, %v237
    %v272 = vpack.c.b16 %v240, %v239
    %v321 = vunpack.c.l.b16 %v97
    %v322 = vunpack.c.l.b16 %v98
    %v323 = vunpack.c.l.b16 %v99
    %v324 = vunpack.c.l.b16 %v100
    %v325 = vunpack.c.l.b16 %v101
    %v326 = vunpack.c.l.b16 %v102
    %v327 = vunpack.c.l.b16 %v103
    %v328 = vunpack.c.l.b16 %v104
    %v329 = vunpack.c.l.b16 %v105
    %v330 = vunpack.c.l.b16 %v106
    %v331 = vunpack.c.l.b16 %v107
    %v332 = vunpack.c.l.b16 %v108
    %v333 = vunpack.c.l.b16 %v109
    %v334 = vunpack.c.l.b16 %v110
    %v335 = vunpack.c.l.b16 %v111
    %v336 = vunpack.c.l.b16 %v112
    %v337 = vpack.c.b16 %v322, %v321
    %v338 = vpack.c.b16 %v324, %v323
    %v339 = vpack.c.b16 %v326, %v325
    %v340 = vpack.c.b16 %v328, %v327
    %v341 = vpack.c.b16 %v330, %v329
    %v342 = vpack.c.b16 %v332, %v331
    %v343 = vpack.c.b16 %v334, %v333
    %v344 = vpack.c.b16 %v336, %v335
    %353 = vmatprep.subr.bf16.mxu0 0
    %354 = vmatpush1.bf16.msra.mxu0 %v337
    %355 = vmatprep.subr.bf16.mxu0 0
    %356 = vmatpush1.bf16.msra.mxu0 %v338
    %357 = vmatprep.subr.bf16.mxu0 0
    %358 = vmatpush1.bf16.msra.mxu0 %v339
    %359 = vmatprep.subr.bf16.mxu0 0
    %360 = vmatpush1.bf16.msra.mxu0 %v340
    %361 = vmatprep.subr.bf16.mxu0 0
    %362 = vmatpush1.bf16.msra.mxu0 %v341
    %363 = vmatprep.subr.bf16.mxu0 0
    %364 = vmatpush1.bf16.msra.mxu0 %v342
    %365 = vmatprep.subr.bf16.mxu0 0
    %366 = vmatpush1.bf16.msra.mxu0 %v343
    %367 = vmatprep.subr.bf16.mxu0 0
    %368 = vmatpush1.bf16.msra.mxu0 %v344
    %369 = vmatprep.subr.bf16.mxu0 0
    %370 = vmatpush1.bf16.msra.mxu0 0
    %371 = vmatprep.subr.bf16.mxu0 0
    %372 = vmatpush1.bf16.msra.mxu0 0
    %373 = vmatprep.subr.bf16.mxu0 0
    %374 = vmatpush1.bf16.msra.mxu0 0
    %375 = vmatprep.subr.bf16.mxu0 0
    %376 = vmatpush1.bf16.msra.mxu0 0
    %377 = vmatprep.subr.bf16.mxu0 0
    %378 = vmatpush1.bf16.msra.mxu0 0
    %379 = vmatprep.subr.bf16.mxu0 0
    %380 = vmatpush1.bf16.msra.mxu0 0
    %381 = vmatprep.subr.bf16.mxu0 0
    %382 = vmatpush1.bf16.msra.mxu0 0
    %383 = vmatprep.subr.bf16.mxu0 0
    %384 = vmatpush1.bf16.msra.mxu0 0
    %385 = vmatprep.mubr.bf16.mxu0 0
    %386 = vmatmul.mubr.bf16.gmra.mrb[0].mxu0 %v241
    %v387 = vpop.f32.mrb[0].mxu0
    %v388 = vadd.f32 0.0, %v387
    %v389 = vpop.f32.mrb[0].mxu0
    %v390 = vpop.f32.mrb[0].mxu0
    %v391 = vadd.f32 0.0, %v390
    %v392 = vpop.f32.mrb[0].mxu0
    %393 = vmatprep.mubr.bf16.mxu0 0
    %394 = vmatmul.mubr.bf16.gmra.mrb[0].mxu0 %v242
    %v395 = vpop.f32.mrb[0].mxu0
    %v396 = vadd.f32 0.0, %v395
    %v397 = vpop.f32.mrb[0].mxu0
    %v398 = vpop.f32.mrb[0].mxu0
    %v399 = vadd.f32 0.0, %v398
    %v400 = vpop.f32.mrb[0].mxu0
    %401 = vmatprep.mubr.bf16.mxu0 0
    %402 = vmatmul.mubr.bf16.gmra.mrb[0].mxu0 %v243
    %v403 = vpop.f32.mrb[0].mxu0
    %v404 = vadd.f32 0.0, %v403
    %v405 = vpop.f32.mrb[0].mxu0
    %v406 = vpop.f32.mrb[0].mxu0
    %v407 = vadd.f32 0.0, %v406
    %v408 = vpop.f32.mrb[0].mxu0
    %409 = vmatprep.mubr.bf16.mxu0 0
    %410 = vmatmul.mubr.bf16.gmra.mrb[0].mxu0 %v244
    %v411 = vpop.f32.mrb[0].mxu0
    %v412 = vadd.f32 0.0, %v411
    %v413 = vpop.f32.mrb[0].mxu0
    %v414 = vpop.f32.mrb[0].mxu0
    %v415 = vadd.f32 0.0, %v414
    %v416 = vpop.f32.mrb[0].mxu0
    %417 = vmatprep.mubr.bf16.mxu0 0
    %418 = vmatmul.mubr.bf16.gmra.mrb[0].mxu0 %v245
    %v419 = vpop.f32.mrb[0].mxu0
    %v420 = vadd.f32 0.0, %v419
    %v421 = vpop.f32.mrb[0].mxu0
    %v422 = vpop.f32.mrb[0].mxu0
    %v423 = vadd.f32 0.0, %v422
    %v424 = vpop.f32.mrb[0].mxu0
    %425 = vmatprep.mubr.bf16.mxu0 0
    %426 = vmatmul.mubr.bf16.gmra.mrb[0].mxu0 %v246
    %v427 = vpop.f32.mrb[0].mxu0
    %v428 = vadd.f32 0.0, %v427
    %v429 = vpop.f32.mrb[0].mxu0
    %v430 = vpop.f32.mrb[0].mxu0
    %v431 = vadd.f32 0.0, %v430
    %v432 = vpop.f32.mrb[0].mxu0
    %433 = vmatprep.mubr.bf16.mxu0 0
    %434 = vmatmul.mubr.bf16.gmra.mrb[0].mxu0 %v247
    %v435 = vpop.f32.mrb[0].mxu0
    %v436 = vadd.f32 0.0, %v435
    %v437 = vpop.f32.mrb[0].mxu0
    %v438 = vpop.f32.mrb[0].mxu0
    %v439 = vadd.f32 0.0, %v438
    %v440 = vpop.f32.mrb[0].mxu0
    %441 = vmatprep.mubr.bf16.mxu0 0
    %442 = vmatmul.mubr.bf16.gmra.mrb[0].mxu0 %v248
    %v443 = vpop.f32.mrb[0].mxu0
    %v444 = vadd.f32 0.0, %v443
    %v445 = vpop.f32.mrb[0].mxu0
    %v446 = vpop.f32.mrb[0].mxu0
    %v447 = vadd.f32 0.0, %v446
    %v448 = vpop.f32.mrb[0].mxu0
    %449 = vmatprep.mubr.bf16.mxu0 0
    %450 = vmatmul.mubr.bf16.gmra.mrb[0].mxu0 %v249
    %v451 = vpop.f32.mrb[0].mxu0
    %v452 = vadd.f32 0.0, %v451
    %v453 = vpop.f32.mrb[0].mxu0
    %v454 = vpop.f32.mrb[0].mxu0
    %v455 = vadd.f32 0.0, %v454
    %v456 = vpop.f32.mrb[0].mxu0
    %457 = vmatprep.mubr.bf16.mxu0 0
    %458 = vmatmul.mubr.bf16.gmra.mrb[0].mxu0 %v250
    %v459 = vpop.f32.mrb[0].mxu0
    %v460 = vadd.f32 0.0, %v459
    %v461 = vpop.f32.mrb[0].mxu0
    %v462 = vpop.f32.mrb[0].mxu0
    %v463 = vadd.f32 0.0, %v462
    %v464 = vpop.f32.mrb[0].mxu0
    %465 = vmatprep.mubr.bf16.mxu0 0
    %466 = vmatmul.mubr.bf16.gmra.mrb[0].mxu0 %v251
    %v467 = vpop.f32.mrb[0].mxu0
    %v468 = vadd.f32 0.0, %v467
    %v469 = vpop.f32.mrb[0].mxu0
    %v470 = vpop.f32.mrb[0].mxu0
    %v471 = vadd.f32 0.0, %v470
    %v472 = vpop.f32.mrb[0].mxu0
    %473 = vmatprep.mubr.bf16.mxu0 0
    %474 = vmatmul.mubr.bf16.gmra.mrb[0].mxu0 %v252
    %v475 = vpop.f32.mrb[0].mxu0
    %v476 = vadd.f32 0.0, %v475
    %v477 = vpop.f32.mrb[0].mxu0
    %v478 = vpop.f32.mrb[0].mxu0
    %v479 = vadd.f32 0.0, %v478
    %v480 = vpop.f32.mrb[0].mxu0
    %481 = vmatprep.mubr.bf16.mxu0 0
    %482 = vmatmul.mubr.bf16.gmra.mrb[0].mxu0 %v253
    %v483 = vpop.f32.mrb[0].mxu0
    %v484 = vadd.f32 0.0, %v483
    %v485 = vpop.f32.mrb[0].mxu0
    %v486 = vpop.f32.mrb[0].mxu0
    %v487 = vadd.f32 0.0, %v486
    %v488 = vpop.f32.mrb[0].mxu0
    %489 = vmatprep.mubr.bf16.mxu0 0
    %490 = vmatmul.mubr.bf16.gmra.mrb[0].mxu0 %v254
    %v491 = vpop.f32.mrb[0].mxu0
    %v492 = vadd.f32 0.0, %v491
    %v493 = vpop.f32.mrb[0].mxu0
    %v494 = vpop.f32.mrb[0].mxu0
    %v495 = vadd.f32 0.0, %v494
    %v496 = vpop.f32.mrb[0].mxu0
    %497 = vmatprep.mubr.bf16.mxu0 0
    %498 = vmatmul.mubr.bf16.gmra.mrb[0].mxu0 %v255
    %v499 = vpop.f32.mrb[0].mxu0
    %v500 = vadd.f32 0.0, %v499
    %v501 = vpop.f32.mrb[0].mxu0
    %v502 = vpop.f32.mrb[0].mxu0
    %v503 = vadd.f32 0.0, %v502
    %v504 = vpop.f32.mrb[0].mxu0
    %505 = vmatprep.mubr.bf16.mxu0 0
    %506 = vmatmul.mubr.bf16.gmra.mrb[0].mxu0 %v256
    %v507 = vpop.f32.mrb[0].mxu0
    %v508 = vadd.f32 0.0, %v507
    %v509 = vpop.f32.mrb[0].mxu0
    %v510 = vpop.f32.mrb[0].mxu0
    %v511 = vadd.f32 0.0, %v510
    %v512 = vpop.f32.mrb[0].mxu0
    %513 = vmatprep.mubr.bf16.mxu0 0
    %514 = vmatmul.mubr.bf16.gmra.mrb[0].mxu0 %v257
    %v515 = vpop.f32.mrb[0].mxu0
    %v516 = vadd.f32 0.0, %v515
    %v517 = vpop.f32.mrb[0].mxu0
    %v518 = vpop.f32.mrb[0].mxu0
    %v519 = vadd.f32 0.0, %v518
    %v520 = vpop.f32.mrb[0].mxu0
    %521 = vmatprep.mubr.bf16.mxu0 0
    %522 = vmatmul.mubr.bf16.gmra.mrb[0].mxu0 %v258
    %v523 = vpop.f32.mrb[0].mxu0
    %v524 = vadd.f32 0.0, %v523
    %v525 = vpop.f32.mrb[0].mxu0
    %v526 = vpop.f32.mrb[0].mxu0
    %v527 = vadd.f32 0.0, %v526
    %v528 = vpop.f32.mrb[0].mxu0
    %529 = vmatprep.mubr.bf16.mxu0 0
    %530 = vmatmul.mubr.bf16.gmra.mrb[0].mxu0 %v259
    %v531 = vpop.f32.mrb[0].mxu0
    %v532 = vadd.f32 0.0, %v531
    %v533 = vpop.f32.mrb[0].mxu0
    %v534 = vpop.f32.mrb[0].mxu0
    %v535 = vadd.f32 0.0, %v534
    %v536 = vpop.f32.mrb[0].mxu0
    %537 = vmatprep.mubr.bf16.mxu0 0
    %538 = vmatmul.mubr.bf16.gmra.mrb[0].mxu0 %v260
    %v539 = vpop.f32.mrb[0].mxu0
    %v540 = vadd.f32 0.0, %v539
    %v541 = vpop.f32.mrb[0].mxu0
    %v542 = vpop.f32.mrb[0].mxu0
    %v543 = vadd.f32 0.0, %v542
    %v544 = vpop.f32.mrb[0].mxu0
    %545 = vmatprep.mubr.bf16.mxu0 0
    %546 = vmatmul.mubr.bf16.gmra.mrb[0].mxu0 %v261
    %v547 = vpop.f32.mrb[0].mxu0
    %v548 = vadd.f32 0.0, %v547
    %v549 = vpop.f32.mrb[0].mxu0
    %v550 = vpop.f32.mrb[0].mxu0
    %v551 = vadd.f32 0.0, %v550
    %v552 = vpop.f32.mrb[0].mxu0
    %553 = vmatprep.mubr.bf16.mxu0 0
    %554 = vmatmul.mubr.bf16.gmra.mrb[0].mxu0 %v262
    %v555 = vpop.f32.mrb[0].mxu0
    %v556 = vadd.f32 0.0, %v555
    %v557 = vpop.f32.mrb[0].mxu0
    %v558 = vpop.f32.mrb[0].mxu0
    %v559 = vadd.f32 0.0, %v558
    %v560 = vpop.f32.mrb[0].mxu0
    %561 = vmatprep.mubr.bf16.mxu0 0
    %562 = vmatmul.mubr.bf16.gmra.mrb[0].mxu0 %v263
    %v563 = vpop.f32.mrb[0].mxu0
    %v564 = vadd.f32 0.0, %v563
    %v565 = vpop.f32.mrb[0].mxu0
    %v566 = vpop.f32.mrb[0].mxu0
    %v567 = vadd.f32 0.0, %v566
    %v568 = vpop.f32.mrb[0].mxu0
    %569 = vmatprep.mubr.bf16.mxu0 0
    %570 = vmatmul.mubr.bf16.gmra.mrb[0].mxu0 %v264
    %v571 = vpop.f32.mrb[0].mxu0
    %v572 = vadd.f32 0.0, %v571
    %v573 = vpop.f32.mrb[0].mxu0
    %v574 = vpop.f32.mrb[0].mxu0
    %v575 = vadd.f32 0.0, %v574
    %v576 = vpop.f32.mrb[0].mxu0
    %577 = vmatprep.mubr.bf16.mxu0 0
    %578 = vmatmul.mubr.bf16.gmra.mrb[0].mxu0 %v265
    %v579 = vpop.f32.mrb[0].mxu0
    %v580 = vadd.f32 0.0, %v579
    %v581 = vpop.f32.mrb[0].mxu0
    %v582 = vpop.f32.mrb[0].mxu0
    %v583 = vadd.f32 0.0, %v582
    %v584 = vpop.f32.mrb[0].mxu0
    %585 = vmatprep.mubr.bf16.mxu0 0
    %586 = vmatmul.mubr.bf16.gmra.mrb[0].mxu0 %v266
    %v587 = vpop.f32.mrb[0].mxu0
    %v588 = vadd.f32 0.0, %v587
    %v589 = vpop.f32.mrb[0].mxu0
    %v590 = vpop.f32.mrb[0].mxu0
    %v591 = vadd.f32 0.0, %v590
    %v592 = vpop.f32.mrb[0].mxu0
    %593 = vmatprep.mubr.bf16.mxu0 0
    %594 = vmatmul.mubr.bf16.gmra.mrb[0].mxu0 %v267
    %v595 = vpop.f32.mrb[0].mxu0
    %v596 = vadd.f32 0.0, %v595
    %v597 = vpop.f32.mrb[0].mxu0
    %v598 = vpop.f32.mrb[0].mxu0
    %v599 = vadd.f32 0.0, %v598
    %v600 = vpop.f32.mrb[0].mxu0
    %601 = vmatprep.mubr.bf16.mxu0 0
    %602 = vmatmul.mubr.bf16.gmra.mrb[0].mxu0 %v268
    %v603 = vpop.f32.mrb[0].mxu0
    %v604 = vadd.f32 0.0, %v603
    %v605 = vpop.f32.mrb[0].mxu0
    %v606 = vpop.f32.mrb[0].mxu0
    %v607 = vadd.f32 0.0, %v606
    %v608 = vpop.f32.mrb[0].mxu0
    %609 = vmatprep.mubr.bf16.mxu0 0
    %610 = vmatmul.mubr.bf16.gmra.mrb[0].mxu0 %v269
    %v611 = vpop.f32.mrb[0].mxu0
    %v612 = vadd.f32 0.0, %v611
    %v613 = vpop.f32.mrb[0].mxu0
    %v614 = vpop.f32.mrb[0].mxu0
    %v615 = vadd.f32 0.0, %v614
    %v616 = vpop.f32.mrb[0].mxu0
    %617 = vmatprep.mubr.bf16.mxu0 0
    %618 = vmatmul.mubr.bf16.gmra.mrb[0].mxu0 %v270
    %v619 = vpop.f32.mrb[0].mxu0
    %v620 = vadd.f32 0.0, %v619
    %v621 = vpop.f32.mrb[0].mxu0
    %v622 = vpop.f32.mrb[0].mxu0
    %v623 = vadd.f32 0.0, %v622
    %v624 = vpop.f32.mrb[0].mxu0
    %625 = vmatprep.mubr.bf16.mxu0 0
    %626 = vmatmul.mubr.bf16.gmra.mrb[0].mxu0 %v271
    %v627 = vpop.f32.mrb[0].mxu0
    %v628 = vadd.f32 0.0, %v627
    %v629 = vpop.f32.mrb[0].mxu0
    %v630 = vpop.f32.mrb[0].mxu0
    %v631 = vadd.f32 0.0, %v630
    %v632 = vpop.f32.mrb[0].mxu0
    %633 = vmatprep.mubr.bf16.mxu0 0
    %634 = vmatmul.mubr.bf16.gmra.mrb[0].mxu0 %v272
    %v635 = vpop.f32.mrb[0].mxu0
    %v636 = vadd.f32 0.0, %v635
    %v637 = vpop.f32.mrb[0].mxu0
    %v638 = vpop.f32.mrb[0].mxu0
    %v639 = vadd.f32 0.0, %v638
    %v640 = vpop.f32.mrb[0].mxu0
    %641 = vdwg.mxu0
    %v642 = vpack.c.bf16 %v391, %v388
    %v643 = vpack.c.bf16 %v399, %v396
    %v644 = vpack.c.bf16 %v407, %v404
    %v645 = vpack.c.bf16 %v415, %v412
    %v646 = vpack.c.bf16 %v423, %v420
    %v647 = vpack.c.bf16 %v431, %v428
    %v648 = vpack.c.bf16 %v439, %v436
    %v649 = vpack.c.bf16 %v447, %v444
    %v650 = vpack.c.bf16 %v455, %v452
    %v651 = vpack.c.bf16 %v463, %v460
    %v652 = vpack.c.bf16 %v471, %v468
    %v653 = vpack.c.bf16 %v479, %v476
    %v654 = vpack.c.bf16 %v487, %v484
    %v655 = vpack.c.bf16 %v495, %v492
    %v656 = vpack.c.bf16 %v503, %v500
    %v657 = vpack.c.bf16 %v511, %v508
    %v658 = vpack.c.bf16 %v519, %v516
    %v659 = vpack.c.bf16 %v527, %v524
    %v660 = vpack.c.bf16 %v535, %v532
    %v661 = vpack.c.bf16 %v543, %v540
    %v662 = vpack.c.bf16 %v551, %v548
    %v663 = vpack.c.bf16 %v559, %v556
    %v664 = vpack.c.bf16 %v567, %v564
    %v665 = vpack.c.bf16 %v575, %v572
    %v666 = vpack.c.bf16 %v583, %v580
    %v667 = vpack.c.bf16 %v591, %v588
    %v668 = vpack.c.bf16 %v599, %v596
    %v669 = vpack.c.bf16 %v607, %v604
    %v670 = vpack.c.bf16 %v615, %v612
    %v671 = vpack.c.bf16 %v623, %v620
    %v672 = vpack.c.bf16 %v631, %v628
    %v673 = vpack.c.bf16 %v639, %v636
    %v706 = vunpack.c.l.b16 %v642
    %v707 = vunpack.c.h.b16 %v642
    %v708 = vunpack.c.l.b16 %v643
    %v709 = vunpack.c.h.b16 %v643
    %v710 = vunpack.c.l.b16 %v644
    %v711 = vunpack.c.h.b16 %v644
    %v712 = vunpack.c.l.b16 %v645
    %v713 = vunpack.c.h.b16 %v645
    %v714 = vunpack.c.l.b16 %v646
    %v715 = vunpack.c.h.b16 %v646
    %v716 = vunpack.c.l.b16 %v647
    %v717 = vunpack.c.h.b16 %v647
    %v718 = vunpack.c.l.b16 %v648
    %v719 = vunpack.c.h.b16 %v648
    %v720 = vunpack.c.l.b16 %v649
    %v721 = vunpack.c.h.b16 %v649
    %v722 = vunpack.c.l.b16 %v650
    %v723 = vunpack.c.h.b16 %v650
    %v724 = vunpack.c.l.b16 %v651
    %v725 = vunpack.c.h.b16 %v651
    %v726 = vunpack.c.l.b16 %v652
    %v727 = vunpack.c.h.b16 %v652
    %v728 = vunpack.c.l.b16 %v653
    %v729 = vunpack.c.h.b16 %v653
    %v730 = vunpack.c.l.b16 %v654
    %v731 = vunpack.c.h.b16 %v654
    %v732 = vunpack.c.l.b16 %v655
    %v733 = vunpack.c.h.b16 %v655
    %v734 = vunpack.c.l.b16 %v656
    %v735 = vunpack.c.h.b16 %v656
    %v736 = vunpack.c.l.b16 %v657
    %v737 = vunpack.c.h.b16 %v657
    %v738 = vunpack.c.l.b16 %v658
    %v739 = vunpack.c.h.b16 %v658
    %v740 = vunpack.c.l.b16 %v659
    %v741 = vunpack.c.h.b16 %v659
    %v742 = vunpack.c.l.b16 %v660
    %v743 = vunpack.c.h.b16 %v660
    %v744 = vunpack.c.l.b16 %v661
    %v745 = vunpack.c.h.b16 %v661
    %v746 = vunpack.c.l.b16 %v662
    %v747 = vunpack.c.h.b16 %v662
    %v748 = vunpack.c.l.b16 %v663
    %v749 = vunpack.c.h.b16 %v663
    %v750 = vunpack.c.l.b16 %v664
    %v751 = vunpack.c.h.b16 %v664
    %v752 = vunpack.c.l.b16 %v665
    %v753 = vunpack.c.h.b16 %v665
    %v754 = vunpack.c.l.b16 %v666
    %v755 = vunpack.c.h.b16 %v666
    %v756 = vunpack.c.l.b16 %v667
    %v757 = vunpack.c.h.b16 %v667
    %v758 = vunpack.c.l.b16 %v668
    %v759 = vunpack.c.h.b16 %v668
    %v760 = vunpack.c.l.b16 %v669
    %v761 = vunpack.c.h.b16 %v669
    %v762 = vunpack.c.l.b16 %v670
    %v763 = vunpack.c.h.b16 %v670
    %v764 = vunpack.c.l.b16 %v671
    %v765 = vunpack.c.h.b16 %v671
    %v766 = vunpack.c.l.b16 %v672
    %v767 = vunpack.c.h.b16 %v672
    %v768 = vunpack.c.l.b16 %v673
    %v769 = vunpack.c.h.b16 %v673
    %v770 = vpack.c.b16 %v706, %v706
    %v771 = vpack.c.b16 %v707, %v707
    %v772 = vpack.c.b16 %v708, %v708
    %v773 = vpack.c.b16 %v709, %v709
    %v774 = vpack.c.b16 %v710, %v710
    %v775 = vpack.c.b16 %v711, %v711
    %v776 = vpack.c.b16 %v712, %v712
    %v777 = vpack.c.b16 %v713, %v713
    %v778 = vpack.c.b16 %v714, %v714
    %v779 = vpack.c.b16 %v715, %v715
    %v780 = vpack.c.b16 %v716, %v716
    %v781 = vpack.c.b16 %v717, %v717
    %v782 = vpack.c.b16 %v718, %v718
    %v783 = vpack.c.b16 %v719, %v719
    %v784 = vpack.c.b16 %v720, %v720
    %v785 = vpack.c.b16 %v721, %v721
    %v786 = vpack.c.b16 %v722, %v722
    %v787 = vpack.c.b16 %v723, %v723
    %v788 = vpack.c.b16 %v724, %v724
    %v789 = vpack.c.b16 %v725, %v725
    %v790 = vpack.c.b16 %v726, %v726
    %v791 = vpack.c.b16 %v727, %v727
    %v792 = vpack.c.b16 %v728, %v728
    %v793 = vpack.c.b16 %v729, %v729
    %v794 = vpack.c.b16 %v730, %v730
    %v795 = vpack.c.b16 %v731, %v731
    %v796 = vpack.c.b16 %v732, %v732
    %v797 = vpack.c.b16 %v733, %v733
    %v798 = vpack.c.b16 %v734, %v734
    %v799 = vpack.c.b16 %v735, %v735
    %v800 = vpack.c.b16 %v736, %v736
    %v801 = vpack.c.b16 %v737, %v737
    %v802 = vpack.c.b16 %v738, %v738
    %v803 = vpack.c.b16 %v739, %v739
    %v804 = vpack.c.b16 %v740, %v740
    %v805 = vpack.c.b16 %v741, %v741
    %v806 = vpack.c.b16 %v742, %v742
    %v807 = vpack.c.b16 %v743, %v743
    %v808 = vpack.c.b16 %v744, %v744
    %v809 = vpack.c.b16 %v745, %v745
    %v810 = vpack.c.b16 %v746, %v746
    %v811 = vpack.c.b16 %v747, %v747
    %v812 = vpack.c.b16 %v748, %v748
    %v813 = vpack.c.b16 %v749, %v749
    %v814 = vpack.c.b16 %v750, %v750
    %v815 = vpack.c.b16 %v751, %v751
    %v816 = vpack.c.b16 %v752, %v752
    %v817 = vpack.c.b16 %v753, %v753
    %v818 = vpack.c.b16 %v754, %v754
    %v819 = vpack.c.b16 %v755, %v755
    %v820 = vpack.c.b16 %v756, %v756
    %v821 = vpack.c.b16 %v757, %v757
    %v822 = vpack.c.b16 %v758, %v758
    %v823 = vpack.c.b16 %v759, %v759
    %v824 = vpack.c.b16 %v760, %v760
    %v825 = vpack.c.b16 %v761, %v761
    %v826 = vpack.c.b16 %v762, %v762
    %v827 = vpack.c.b16 %v763, %v763
    %v828 = vpack.c.b16 %v764, %v764
    %v829 = vpack.c.b16 %v765, %v765
    %v830 = vpack.c.b16 %v766, %v766
    %v831 = vpack.c.b16 %v767, %v767
    %v832 = vpack.c.b16 %v768, %v768
    %v833 = vpack.c.b16 %v769, %v769
    %898 = vst [vmem:[%s2] sm:$0xf] %v770
    %899 = vst [vmem:[%s2 + $0x4] sm:$0xf] %v771
    %900 = vst [vmem:[%s2 + $0x8] sm:$0xf] %v772
    %901 = vst [vmem:[%s2 + $0xc] sm:$0xf] %v773
    %902 = vst [vmem:[%s2 + $0x10] sm:$0xf] %v774
    %903 = vst [vmem:[%s2 + $0x14] sm:$0xf] %v775
    %904 = vst [vmem:[%s2 + $0x18] sm:$0xf] %v776
    %905 = vst [vmem:[%s2 + $0x1c] sm:$0xf] %v777
    %906 = vst [vmem:[%s2 + $0x20] sm:$0xf] %v778
    %907 = vst [vmem:[%s2 + $0x24] sm:$0xf] %v779
    %908 = vst [vmem:[%s2 + $0x28] sm:$0xf] %v780
    %909 = vst [vmem:[%s2 + $0x2c] sm:$0xf] %v781
    %910 = vst [vmem:[%s2 + $0x30] sm:$0xf] %v782
    %911 = vst [vmem:[%s2 + $0x34] sm:$0xf] %v783
    %912 = vst [vmem:[%s2 + $0x38] sm:$0xf] %v784
    %913 = vst [vmem:[%s2 + $0x3c] sm:$0xf] %v785
    %914 = vst [vmem:[%s2 + $0x40] sm:$0xf] %v786
    %915 = vst [vmem:[%s2 + $0x44] sm:$0xf] %v787
    %916 = vst [vmem:[%s2 + $0x48] sm:$0xf] %v788
    %917 = vst [vmem:[%s2 + $0x4c] sm:$0xf] %v789
    %918 = vst [vmem:[%s2 + $0x50] sm:$0xf] %v790
    %919 = vst [vmem:[%s2 + $0x54] sm:$0xf] %v791
    %920 = vst [vmem:[%s2 + $0x58] sm:$0xf] %v792
    %921 = vst [vmem:[%s2 + $0x5c] sm:$0xf] %v793
    %922 = vst [vmem:[%s2 + $0x60] sm:$0xf] %v794
    %923 = vst [vmem:[%s2 + $0x64] sm:$0xf] %v795
    %924 = vst [vmem:[%s2 + $0x68] sm:$0xf] %v796
    %925 = vst [vmem:[%s2 + $0x6c] sm:$0xf] %v797
    %926 = vst [vmem:[%s2 + $0x70] sm:$0xf] %v798
    %927 = vst [vmem:[%s2 + $0x74] sm:$0xf] %v799
    %928 = vst [vmem:[%s2 + $0x78] sm:$0xf] %v800
    %929 = vst [vmem:[%s2 + $0x7c] sm:$0xf] %v801
    %930 = vst [vmem:[%s2 + $0x80] sm:$0xf] %v802
    %931 = vst [vmem:[%s2 + $0x84] sm:$0xf] %v803
    %932 = vst [vmem:[%s2 + $0x88] sm:$0xf] %v804
    %933 = vst [vmem:[%s2 + $0x8c] sm:$0xf] %v805
    %934 = vst [vmem:[%s2 + $0x90] sm:$0xf] %v806
    %935 = vst [vmem:[%s2 + $0x94] sm:$0xf] %v807
    %936 = vst [vmem:[%s2 + $0x98] sm:$0xf] %v808
    %937 = vst [vmem:[%s2 + $0x9c] sm:$0xf] %v809
    %938 = vst [vmem:[%s2 + $0xa0] sm:$0xf] %v810
    %939 = vst [vmem:[%s2 + $0xa4] sm:$0xf] %v811
    %940 = vst [vmem:[%s2 + $0xa8] sm:$0xf] %v812
    %941 = vst [vmem:[%s2 + $0xac] sm:$0xf] %v813
    %942 = vst [vmem:[%s2 + $0xb0] sm:$0xf] %v814
    %943 = vst [vmem:[%s2 + $0xb4] sm:$0xf] %v815
    %944 = vst [vmem:[%s2 + $0xb8] sm:$0xf] %v816
    %945 = vst [vmem:[%s2 + $0xbc] sm:$0xf] %v817
    %946 = vst [vmem:[%s2 + $0xc0] sm:$0xf] %v818
    %947 = vst [vmem:[%s2 + $0xc4] sm:$0xf] %v819
    %948 = vst [vmem:[%s2 + $0xc8] sm:$0xf] %v820
    %949 = vst [vmem:[%s2 + $0xcc] sm:$0xf] %v821
    %950 = vst [vmem:[%s2 + $0xd0] sm:$0xf] %v822
    %951 = vst [vmem:[%s2 + $0xd4] sm:$0xf] %v823
    %952 = vst [vmem:[%s2 + $0xd8] sm:$0xf] %v824
    %953 = vst [vmem:[%s2 + $0xdc] sm:$0xf] %v825
    %954 = vst [vmem:[%s2 + $0xe0] sm:$0xf] %v826
    %955 = vst [vmem:[%s2 + $0xe4] sm:$0xf] %v827
    %956 = vst [vmem:[%s2 + $0xe8] sm:$0xf] %v828
    %957 = vst [vmem:[%s2 + $0xec] sm:$0xf] %v829
    %958 = vst [vmem:[%s2 + $0xf0] sm:$0xf] %v830
    %959 = vst [vmem:[%s2 + $0xf4] sm:$0xf] %v831
    %960 = vst [vmem:[%s2 + $0xf8] sm:$0xf] %v832
    %961 = vst [vmem:[%s2 + $0xfc] sm:$0xf] %v833
    %v962 = vadd.f32 %v388, %v391
    %v963 = vadd.f32 %v962, %v396
    %v964 = vadd.f32 %v963, %v399
    %v965 = vadd.f32 %v964, %v404
    %v966 = vadd.f32 %v965, %v407
    %v967 = vadd.f32 %v966, %v412
    %v968 = vadd.f32 %v967, %v415
    %v969 = vadd.f32 %v968, %v420
    %v970 = vadd.f32 %v969, %v423
    %v971 = vadd.f32 %v970, %v428
    %v972 = vadd.f32 %v971, %v431
    %v973 = vadd.f32 %v972, %v436
    %v974 = vadd.f32 %v973, %v439
    %v975 = vadd.f32 %v974, %v444
    %v976 = vadd.f32 %v975, %v447
    %v977 = vadd.f32 %v976, %v452
    %v978 = vadd.f32 %v977, %v455
    %v979 = vadd.f32 %v978, %v460
    %v980 = vadd.f32 %v979, %v463
    %v981 = vadd.f32 %v980, %v468
    %v982 = vadd.f32 %v981, %v471
    %v983 = vadd.f32 %v982, %v476
    %v984 = vadd.f32 %v983, %v479
    %v985 = vadd.f32 %v984, %v484
    %v986 = vadd.f32 %v985, %v487
    %v987 = vadd.f32 %v986, %v492
    %v988 = vadd.f32 %v987, %v495
    %v989 = vadd.f32 %v988, %v500
    %v990 = vadd.f32 %v989, %v503
    %v991 = vadd.f32 %v990, %v508
    %v992 = vadd.f32 %v991, %v511
    %v993 = vadd.f32 %v992, %v516
    %v994 = vadd.f32 %v993, %v519
    %v995 = vadd.f32 %v994, %v524
    %v996 = vadd.f32 %v995, %v527
    %v997 = vadd.f32 %v996, %v532
    %v998 = vadd.f32 %v997, %v535
    %v999 = vadd.f32 %v998, %v540
    %v1000 = vadd.f32 %v999, %v543
    %v1001 = vadd.f32 %v1000, %v548
    %v1002 = vadd.f32 %v1001, %v551
    %v1003 = vadd.f32 %v1002, %v556
    %v1004 = vadd.f32 %v1003, %v559
    %v1005 = vadd.f32 %v1004, %v564
    %v1006 = vadd.f32 %v1005, %v567
    %v1007 = vadd.f32 %v1006, %v572
    %v1008 = vadd.f32 %v1007, %v575
    %v1009 = vadd.f32 %v1008, %v580
    %v1010 = vadd.f32 %v1009, %v583
    %v1011 = vadd.f32 %v1010, %v588
    %v1012 = vadd.f32 %v1011, %v591
    %v1013 = vadd.f32 %v1012, %v596
    %v1014 = vadd.f32 %v1013, %v599
    %v1015 = vadd.f32 %v1014, %v604
    %v1016 = vadd.f32 %v1015, %v607
    %v1017 = vadd.f32 %v1016, %v612
    %v1018 = vadd.f32 %v1017, %v615
    %v1019 = vadd.f32 %v1018, %v620
    %v1020 = vadd.f32 %v1019, %v623
    %v1021 = vadd.f32 %v1020, %v628
    %v1022 = vadd.f32 %v1021, %v631
    %v1023 = vadd.f32 %v1022, %v636
    %v1024 = vadd.f32 %v1023, %v639
    %v1025 = vrot.slane %v1024, 4
    %v1026 = vadd.f32 %v1024, %v1025
    %v1027 = vrot.slane %v1026, 2
    %v1028 = vadd.f32 %v1026, %v1027
    %v1029 = vrot.slane %v1028, 1
    %v1030 = vadd.f32 %v1028, %v1029
    %1031 = vrot.lane.b32.xlu0 %v1030, 32
    %v1032 = vpop.permute.xlu0 %1031
    %v1033 = vadd.f32 %v1030, %v1032
    %1034 = vrot.lane.b32.xlu0 %v1030, 64
    %v1035 = vpop.permute.xlu0 %1034
    %v1036 = vadd.f32 %v1033, %v1035
    %1037 = vrot.lane.b32.xlu0 %v1030, 96
    %v1038 = vpop.permute.xlu0 %1037
    %v1039 = vadd.f32 %v1036, %v1038
    %v1040 = vmul.f32 %v388, %v388
    %v1041 = vmul.f32 %v391, %v391
    %v1042 = vmul.f32 %v396, %v396
    %v1043 = vmul.f32 %v399, %v399
    %v1044 = vmul.f32 %v404, %v404
    %v1045 = vmul.f32 %v407, %v407
    %v1046 = vmul.f32 %v412, %v412
    %v1047 = vmul.f32 %v415, %v415
    %v1048 = vmul.f32 %v420, %v420
    %v1049 = vmul.f32 %v423, %v423
    %v1050 = vmul.f32 %v428, %v428
    %v1051 = vmul.f32 %v431, %v431
    %v1052 = vmul.f32 %v436, %v436
    %v1053 = vmul.f32 %v439, %v439
    %v1054 = vmul.f32 %v444, %v444
    %v1055 = vmul.f32 %v447, %v447
    %v1056 = vmul.f32 %v452, %v452
    %v1057 = vmul.f32 %v455, %v455
    %v1058 = vmul.f32 %v460, %v460
    %v1059 = vmul.f32 %v463, %v463
    %v1060 = vmul.f32 %v468, %v468
    %v1061 = vmul.f32 %v471, %v471
    %v1062 = vmul.f32 %v476, %v476
    %v1063 = vmul.f32 %v479, %v479
    %v1064 = vmul.f32 %v484, %v484
    %v1065 = vmul.f32 %v487, %v487
    %v1066 = vmul.f32 %v492, %v492
    %v1067 = vmul.f32 %v495, %v495
    %v1068 = vmul.f32 %v500, %v500
    %v1069 = vmul.f32 %v503, %v503
    %v1070 = vmul.f32 %v508, %v508
    %v1071 = vmul.f32 %v511, %v511
    %v1072 = vmul.f32 %v516, %v516
    %v1073 = vmul.f32 %v519, %v519
    %v1074 = vmul.f32 %v524, %v524
    %v1075 = vmul.f32 %v527, %v527
    %v1076 = vmul.f32 %v532, %v532
    %v1077 = vmul.f32 %v535, %v535
    %v1078 = vmul.f32 %v540, %v540
    %v1079 = vmul.f32 %v543, %v543
    %v1080 = vmul.f32 %v548, %v548
    %v1081 = vmul.f32 %v551, %v551
    %v1082 = vmul.f32 %v556, %v556
    %v1083 = vmul.f32 %v559, %v559
    %v1084 = vmul.f32 %v564, %v564
    %v1085 = vmul.f32 %v567, %v567
    %v1086 = vmul.f32 %v572, %v572
    %v1087 = vmul.f32 %v575, %v575
    %v1088 = vmul.f32 %v580, %v580
    %v1089 = vmul.f32 %v583, %v583
    %v1090 = vmul.f32 %v588, %v588
    %v1091 = vmul.f32 %v591, %v591
    %v1092 = vmul.f32 %v596, %v596
    %v1093 = vmul.f32 %v599, %v599
    %v1094 = vmul.f32 %v604, %v604
    %v1095 = vmul.f32 %v607, %v607
    %v1096 = vmul.f32 %v612, %v612
    %v1097 = vmul.f32 %v615, %v615
    %v1098 = vmul.f32 %v620, %v620
    %v1099 = vmul.f32 %v623, %v623
    %v1100 = vmul.f32 %v628, %v628
    %v1101 = vmul.f32 %v631, %v631
    %v1102 = vmul.f32 %v636, %v636
    %v1103 = vmul.f32 %v639, %v639
    %v1104 = vadd.f32 %v1040, %v1041
    %v1105 = vadd.f32 %v1104, %v1042
    %v1106 = vadd.f32 %v1105, %v1043
    %v1107 = vadd.f32 %v1106, %v1044
    %v1108 = vadd.f32 %v1107, %v1045
    %v1109 = vadd.f32 %v1108, %v1046
    %v1110 = vadd.f32 %v1109, %v1047
    %v1111 = vadd.f32 %v1110, %v1048
    %v1112 = vadd.f32 %v1111, %v1049
    %v1113 = vadd.f32 %v1112, %v1050
    %v1114 = vadd.f32 %v1113, %v1051
    %v1115 = vadd.f32 %v1114, %v1052
    %v1116 = vadd.f32 %v1115, %v1053
    %v1117 = vadd.f32 %v1116, %v1054
    %v1118 = vadd.f32 %v1117, %v1055
    %v1119 = vadd.f32 %v1118, %v1056
    %v1120 = vadd.f32 %v1119, %v1057
    %v1121 = vadd.f32 %v1120, %v1058
    %v1122 = vadd.f32 %v1121, %v1059
    %v1123 = vadd.f32 %v1122, %v1060
    %v1124 = vadd.f32 %v1123, %v1061
    %v1125 = vadd.f32 %v1124, %v1062
    %v1126 = vadd.f32 %v1125, %v1063
    %v1127 = vadd.f32 %v1126, %v1064
    %v1128 = vadd.f32 %v1127, %v1065
    %v1129 = vadd.f32 %v1128, %v1066
    %v1130 = vadd.f32 %v1129, %v1067
    %v1131 = vadd.f32 %v1130, %v1068
    %v1132 = vadd.f32 %v1131, %v1069
    %v1133 = vadd.f32 %v1132, %v1070
    %v1134 = vadd.f32 %v1133, %v1071
    %v1135 = vadd.f32 %v1134, %v1072
    %v1136 = vadd.f32 %v1135, %v1073
    %v1137 = vadd.f32 %v1136, %v1074
    %v1138 = vadd.f32 %v1137, %v1075
    %v1139 = vadd.f32 %v1138, %v1076
    %v1140 = vadd.f32 %v1139, %v1077
    %v1141 = vadd.f32 %v1140, %v1078
    %v1142 = vadd.f32 %v1141, %v1079
    %v1143 = vadd.f32 %v1142, %v1080
    %v1144 = vadd.f32 %v1143, %v1081
    %v1145 = vadd.f32 %v1144, %v1082
    %v1146 = vadd.f32 %v1145, %v1083
    %v1147 = vadd.f32 %v1146, %v1084
    %v1148 = vadd.f32 %v1147, %v1085
    %v1149 = vadd.f32 %v1148, %v1086
    %v1150 = vadd.f32 %v1149, %v1087
    %v1151 = vadd.f32 %v1150, %v1088
    %v1152 = vadd.f32 %v1151, %v1089
    %v1153 = vadd.f32 %v1152, %v1090
    %v1154 = vadd.f32 %v1153, %v1091
    %v1155 = vadd.f32 %v1154, %v1092
    %v1156 = vadd.f32 %v1155, %v1093
    %v1157 = vadd.f32 %v1156, %v1094
    %v1158 = vadd.f32 %v1157, %v1095
    %v1159 = vadd.f32 %v1158, %v1096
    %v1160 = vadd.f32 %v1159, %v1097
    %v1161 = vadd.f32 %v1160, %v1098
    %v1162 = vadd.f32 %v1161, %v1099
    %v1163 = vadd.f32 %v1162, %v1100
    %v1164 = vadd.f32 %v1163, %v1101
    %v1165 = vadd.f32 %v1164, %v1102
    %v1166 = vadd.f32 %v1165, %v1103
    %v1167 = vrot.slane %v1166, 4
    %v1168 = vadd.f32 %v1166, %v1167
    %v1169 = vrot.slane %v1168, 2
    %v1170 = vadd.f32 %v1168, %v1169
    %v1171 = vrot.slane %v1170, 1
    %v1172 = vadd.f32 %v1170, %v1171
    %1173 = vrot.lane.b32.xlu0 %v1172, 32
    %v1174 = vpop.permute.xlu0 %1173
    %v1175 = vadd.f32 %v1172, %v1174
    %1176 = vrot.lane.b32.xlu0 %v1172, 64
    %v1177 = vpop.permute.xlu0 %1176
    %v1178 = vadd.f32 %v1175, %v1177
    %1179 = vrot.lane.b32.xlu0 %v1172, 96
    %v1180 = vpop.permute.xlu0 %1179
    %v1181 = vadd.f32 %v1178, %v1180
    %v1182 = vld [vmem:[%s3] sm:$0x1]
    %v1183 = vadd.f32 %v1182, %v1039
    %1184 = vst [vmem:[%s3] sm:$0x1] %v1183
    %v1185 = vld [vmem:[%s3 + $0x1] sm:$0x1]
    %v1186 = vadd.f32 %v1185, %v1181
    %1187 = vst [vmem:[%s3 + $0x1] sm:$0x1] %v1186
    // Predicated region
    $region18: #{simple_encoder_forward.3} parent=1 // pred_check
      _
    $region19: #{simple_encoder_forward.3} parent=1 // pred_check_branch
      %1189 = sbr.rel (0) target = $region21
    $region20: #{simple_encoder_forward.3} parent=1 // pred_region
      _
    $region21: #{simple_encoder_forward.3} parent=1 // pred_fallthru
      _
    // Predicated region
    $region22: #{simple_encoder_forward.3} parent=1 // pred_check
      _
    $region23: #{simple_encoder_forward.3} parent=1 // pred_check_branch
      %1191 = sbr.rel (0) target = $region25
    $region24: #{simple_encoder_forward.3} parent=1 // pred_region
      _
    $region25: #{simple_encoder_forward.3} parent=1 // pred_fallthru
      _
    // Predicated region
    $region26: #{simple_encoder_forward.3} parent=1 // pred_check
      _
    $region27: #{simple_encoder_forward.3} parent=1 // pred_check_branch
      %1193 = sbr.rel (0) target = $region29
    $region28: #{simple_encoder_forward.3} parent=1 // pred_region
      _
    $region29: #{simple_encoder_forward.3} parent=1 // pred_fallthru
      _
    // Predicated region
    $region30: #{simple_encoder_forward.3} parent=1 // pred_check
      _
    $region31: #{simple_encoder_forward.3} parent=1 // pred_check_branch
      %1195 = sbr.rel (0) target = $region33
    $region32: #{simple_encoder_forward.3} parent=1 // pred_region
      _
    $region33: #{simple_encoder_forward.3} parent=1 // pred_fallthru
      _
    %1196 = vsyncpa [#allocation3], 1

// kernel: simple_encoder_forward.5
$region0: #{simple_encoder_forward.5}
  #allocation0 [shape = 'u32[]', space=smem, size = 0x4, offset = 0x4, fixed_abs, tag = 'smem constant byte address 0x4 - core index']
  #allocation1 [shape = 'u32[144,128]{1,0:T(1,128)}', space=vmem, size = 0x12000, scoped, tag = 'internal scratch']
  %s0 = inlined_call_operand.vmem [shape: bf16[2,32768], index: 0, kind: input, shape index: {}]
  %s1 = inlined_call_operand.hbm [shape: bf16[32768,256], index: 1, kind: input, shape index: {}]
  %s2 = inlined_call_operand.hbm [shape: f32[1,256], index: 2, kind: input, shape index: {}]
  %s3 = inlined_call_operand.hbm [shape: f32[2,256], index: 3, kind: output, shape index: {}]
  %s4 = sld [smem:[#allocation0]]
  $region57: #{simple_encoder_forward.5} parent=0
    _
  %s6 = ssub.s32 1, %s4
  %s7 = scalar_select 0, %s6, %s4
  $region1: #{simple_encoder_forward.5} parent=0
    #allocation2 [shape = 'u8[8388608]{0}', space=vmem, size = 0x800000, scoped, tag = 'input window, operand 1']
    #allocation3 [shape = 's32[2]{0}', space=sflag, size = 0x8, scoped, tag = 'scoped memory for simple_encoder_forward.5']
    #allocation4 [shape = 's32[2]{0}', space=sflag, size = 0x8, scoped, tag = 'scoped memory for simple_encoder_forward.5']
    #allocation5 [shape = 'u8[1024]{0}', space=vmem, size = 0x400, scoped, tag = 'input window, operand 2, single buffered']
    #allocation6 [shape = 's32[1]{0}', space=sflag, size = 0x4, scoped, tag = 'scoped memory for simple_encoder_forward.5']
    #allocation7 [shape = 'u8[2048]{0}', space=vmem, size = 0x800, scoped, tag = 'output window, operand 0, single buffered']
    %8 = vsyncpa [#allocation3], 0
    %s9 = scalar_lea.sflag [#allocation3], 1
    %10 = vsyncpa %s9, 0
    %11 = vsyncpa [#allocation6], 0
    %12 = vsyncpa [#allocation4], 0
    loop: start=0, step=1, limit=6
    $region2: #{simple_encoder_forward.5} parent=1 // loop_pre_header
      _
    $region3: #{simple_encoder_forward.5} parent=1 // loop_header
      %s14 = sphi 0, %s18
      %p15 = scmp.ge.s32.totalorder %s14, 6
      %s21 = sphi 0, %s33
      %s22 = sphi 0, %s29
      %s23 = sphi 0, %s21
      %s24 = sphi 0, %s22
      %s25 = sphi 0, %s23
      %s26 = sphi 0, %s24
      %s38 = sphi 0, %s40
      %s41 = sphi 0, %s38
      %s42 = sphi 0, %s41
      %s58 = sphi 0, %s42
      %s64 = sphi 0, %s66
      %s67 = sphi 0, %s64
      %s68 = sphi 0, %s67
      %s84 = sphi 0, %s68
      %s88 = sphi 0, %s88
      %s90 = sphi 0, %s88
      %s91 = sphi 0, %s90
      %s105 = sphi 0, %s91
      %s111 = sphi 0, %s113
      %s114 = sphi 0, %s111
      %s115 = sphi 0, %s114
      %s131 = sphi 0, %s115
    $region4: #{simple_encoder_forward.5} parent=1 // loop_header_branch
      %17 = sbr.rel (%p15) target = $region8
    $region5: #{simple_encoder_forward.5} parent=1 // loop_body
      %s19 = ssub.s32 %s14, 1
      %s20 = ssub.s32 %s14, 2
      %s27 = sadd.s32 1, %s22
      %p28 = scmp.ge.s32.totalorder %s27, 4
      %s29 = scalar_select %p28, 0, %s27
      %s30 = sadd.s32 1, %s21
      %s31 = scalar_select %p28, %s30, %s21
      %p32 = scmp.ge.s32.totalorder %s31, 1
      %s33 = scalar_select %p32, 0, %s31
      %s34 = ssub.s32 %s21, %s33
      %s35 = ssub.s32 %s22, %s29
      %s36 = sor.u32 %s34, %s35
      %p37 = scmp.eq.s32.totalorder %s36, 0
      %s39 = sadd.s32 %s38, 1
      %s40 = scalar_select %p37, %s38, %s39
      %p43 = pneg %p37
      %p44 = scmp.eq.s32.totalorder %s14, 3
      %p45 = por %p43, %p44
      %p46 = scmp.ne.s32.totalorder %s38, %s41
      %p47 = scmp.eq.s32.totalorder %s14, 0
      %p48 = por %p46, %p47
      %p49 = scmp.ne.s32.totalorder %s38, %s41
      %p50 = scmp.eq.s32.totalorder %s19, 3
      %p51 = por %p49, %p50
      %p52 = scmp.ne.s32.totalorder %s41, %s42
      %p53 = scmp.eq.s32.totalorder %s19, 0
      %p54 = por %p52, %p53
      %p55 = scmp.ne.s32.totalorder %s41, %s42
      %p56 = scmp.eq.s32.totalorder %s20, 3
      %p57 = por %p55, %p56
      %p59 = scmp.ne.s32.totalorder %s42, %s58
      %p60 = scmp.eq.s32.totalorder %s20, 0
      %p61 = por %p59, %p60
      %s62 = ssub.s32 %s22, %s29
      %p63 = scmp.eq.s32.totalorder %s62, 0
      %s65 = sadd.s32 %s64, 1
      %s66 = scalar_select %p63, %s64, %s65
      %p69 = pneg %p63
      %p70 = scmp.eq.s32.totalorder %s14, 3
      %p71 = por %p69, %p70
      %p72 = scmp.ne.s32.totalorder %s64, %s67
      %p73 = scmp.eq.s32.totalorder %s14, 0
      %p74 = por %p72, %p73
      %p75 = scmp.ne.s32.totalorder %s64, %s67
      %p76 = scmp.eq.s32.totalorder %s19, 3
      %p77 = por %p75, %p76
      %p78 = scmp.ne.s32.totalorder %s67, %s68
      %p79 = scmp.eq.s32.totalorder %s19, 0
      %p80 = por %p78, %p79
      %p81 = scmp.ne.s32.totalorder %s67, %s68
      %p82 = scmp.eq.s32.totalorder %s20, 3
      %p83 = por %p81, %p82
      %p85 = scmp.ne.s32.totalorder %s68, %s84
      %p86 = scmp.eq.s32.totalorder %s20, 0
      %p87 = por %p85, %p86
      %s89 = sadd.s32 %s88, 1
      %p92 = scmp.eq.s32.totalorder %s14, 3
      %p93 = scmp.ne.s32.totalorder %s88, %s90
      %p94 = scmp.eq.s32.totalorder %s14, 0
      %p95 = por %p93, %p94
      %p96 = scmp.ne.s32.totalorder %s88, %s90
      %p97 = scmp.eq.s32.totalorder %s19, 3
      %p98 = por %p96, %p97
      %p99 = scmp.ne.s32.totalorder %s90, %s91
      %p100 = scmp.eq.s32.totalorder %s19, 0
      %p101 = por %p99, %p100
      %p102 = scmp.ne.s32.totalorder %s90, %s91
      %p103 = scmp.eq.s32.totalorder %s20, 3
      %p104 = por %p102, %p103
      %p106 = scmp.ne.s32.totalorder %s91, %s105
      %p107 = scmp.eq.s32.totalorder %s20, 0
      %p108 = por %p106, %p107
      %s109 = ssub.s32 %s21, %s33
      %p110 = scmp.eq.s32.totalorder %s109, 0
      %s112 = sadd.s32 %s111, 1
      %s113 = scalar_select %p110, %s111, %s112
      %p116 = pneg %p110
      %p117 = scmp.eq.s32.totalorder %s14, 3
      %p118 = por %p116, %p117
      %p119 = scmp.ne.s32.totalorder %s111, %s114
      %p120 = scmp.eq.s32.totalorder %s14, 0
      %p121 = por %p119, %p120
      %p122 = scmp.ne.s32.totalorder %s111, %s114
      %p123 = scmp.eq.s32.totalorder %s19, 3
      %p124 = por %p122, %p123
      %p125 = scmp.ne.s32.totalorder %s114, %s115
      %p126 = scmp.eq.s32.totalorder %s19, 0
      %p127 = por %p125, %p126
      %p128 = scmp.ne.s32.totalorder %s114, %s115
      %p129 = scmp.eq.s32.totalorder %s20, 3
      %p130 = por %p128, %p129
      %p132 = scmp.ne.s32.totalorder %s115, %s131
      %p133 = scmp.eq.s32.totalorder %s20, 0
      %p134 = por %p132, %p133
      %p135 = scmp.le.s32.totalorder 1, %s14
      %p136 = scmp.lt.s32.totalorder %s14, 5
      %p137 = pnand %p135, %p136
      %p138 = pneg %p137
      // Predicated region
      $region9: #{simple_encoder_forward.5} parent=5 // pred_check
        _
      $region10: #{simple_encoder_forward.5} parent=5 // pred_check_branch
        %140 = sbr.rel (%p137) target = $region12
      $region11: #{simple_encoder_forward.5} parent=5 // pred_region
        %s141 = ssub.s32 %s14, 1
        // Predicated region
        $region13: #{simple_encoder_forward.5} parent=11 // pred_check
          %p142 = pneg %p101
        $region14: #{simple_encoder_forward.5} parent=11 // pred_check_branch
          %144 = sbr.rel (%p142) target = $region16
        $region15: #{simple_encoder_forward.5} parent=11 // pred_region
          %s146 = ssub.s32 32, 32
          %147 = vsyncadd [#allocation6], %s146
          %s149 = sshll.u32 [#allocation5], 4
          %s150 = int_to_ptr.vmem [resolvable:$true] %s149
          %152 = dma.hbm_to_vmem [thread:$0]  %s2, 32, %s150, [#allocation6]
        $region16: #{simple_encoder_forward.5} parent=11 // pred_fallthru
          _
      $region12: #{simple_encoder_forward.5} parent=5 // pred_fallthru
        _
      %p153 = scmp.lt.s32.totalorder %s14, 4
      // Predicated region
      $region17: #{simple_encoder_forward.5} parent=5 // pred_check
        %p154 = pneg %p153
      $region18: #{simple_encoder_forward.5} parent=5 // pred_check_branch
        %156 = sbr.rel (%p154) target = $region20
      $region19: #{simple_encoder_forward.5} parent=5 // pred_region
        // Predicated region
        $region21: #{simple_encoder_forward.5} parent=19 // pred_check
          %p157 = pneg %p48
        $region22: #{simple_encoder_forward.5} parent=19 // pred_check_branch
          %159 = sbr.rel (%p157) target = $region24
        $region23: #{simple_encoder_forward.5} parent=19 // pred_region
          %s160 = smul.u32 64, %s22
          %p161 = scmp.lt.s32.totalorder %s21, 0
          %s162 = scalar_select %p161, %s21, 0
          %p163 = scmp.lt.s32.totalorder %s160, 255
          %s164 = scalar_select %p163, %s160, 255
          %s165 = smul.addr %s162, 256
          %s166 = sadd.s32 %s164, %s165
          %s167 = scalar_lea.vmem %s0, %s166
          %s168 = smul.u32 64, %s22
        $region24: #{simple_encoder_forward.5} parent=19 // pred_fallthru
          _
        // Predicated region
        $region25: #{simple_encoder_forward.5} parent=19 // pred_check
          %p169 = pneg %p74
        $region26: #{simple_encoder_forward.5} parent=19 // pred_check_branch
          %171 = sbr.rel (%p169) target = $region28
        $region27: #{simple_encoder_forward.5} parent=19 // pred_region
          %s172 = sand.u32 %s64, 1
          %s173 = scalar_lea.sflag [#allocation3], %s172
          %s174 = sand.u32 %s64, 1
          %s175 = smul.addr %s174, 8192
          %s176 = scalar_lea.vmem [#allocation2], %s175
          %s177 = smul.u32 1024, %s22
          %s179 = ssub.s32 131072, 131072
          %180 = vsyncadd %s173, %s179
          %s181 = smul.addr %s177, 2
          %s182 = smul.addr %s181, 64
          %s183 = scalar_lea.hbm %s1, %s182
          %s184 = sshll.u32 %s176, 4
          %s185 = int_to_ptr.vmem [resolvable:$true] %s184
          %190 = dma.hbm_to_vmem [thread:$0]  %s183, 131072, %s185, %s173, 128, 128, 8
        $region28: #{simple_encoder_forward.5} parent=19 // pred_fallthru
          _
      $region20: #{simple_encoder_forward.5} parent=5 // pred_fallthru
        _
      %p191 = scmp.le.s32.totalorder 1, %s14
      %p192 = scmp.lt.s32.totalorder %s14, 5
      %p193 = pnand %p191, %p192
      %p194 = pneg %p193
      // Predicated region
      $region29: #{simple_encoder_forward.5} parent=5 // pred_check
        _
      $region30: #{simple_encoder_forward.5} parent=5 // pred_check_branch
        %196 = sbr.rel (%p193) target = $region32
      $region31: #{simple_encoder_forward.5} parent=5 // pred_region
        %s197 = ssub.s32 %s14, 1
        %s198 = sand.u32 %s67, 1
        %s199 = scalar_lea.sflag [#allocation3], %s198
        %s200 = sand.u32 %s67, 1
        %s201 = smul.addr %s200, 8192
        %s202 = scalar_lea.vmem [#allocation2], %s201
        // Predicated region
        $region33: #{simple_encoder_forward.5} parent=31 // pred_check
          %p203 = pneg %p80
        $region34: #{simple_encoder_forward.5} parent=31 // pred_check_branch
          %205 = sbr.rel (%p203) target = $region36
        $region35: #{simple_encoder_forward.5} parent=31 // pred_region
          %206 = dma.done %s199, 131072
        $region36: #{simple_encoder_forward.5} parent=31 // pred_fallthru
          _
        // Predicated region
        $region37: #{simple_encoder_forward.5} parent=31 // pred_check
          %p207 = pneg %p101
        $region38: #{simple_encoder_forward.5} parent=31 // pred_check_branch
          %209 = sbr.rel (%p207) target = $region40
        $region39: #{simple_encoder_forward.5} parent=31 // pred_region
          %210 = dma.done [#allocation6], 32
        $region40: #{simple_encoder_forward.5} parent=31 // pred_fallthru
          _
        %s211 = smul.u32 64, %s24
        %p212 = scmp.lt.s32.totalorder %s23, 0
        %s213 = scalar_select %p212, %s23, 0
        %p214 = scmp.lt.s32.totalorder %s211, 255
        %s215 = scalar_select %p214, %s211, 255
        %s216 = smul.addr %s213, 256
        %s217 = sadd.s32 %s215, %s216
        %s218 = scalar_lea.vmem %s0, %s217
        %p219 = pneg %p54
        %p220 = pneg %p51
        %s221 = sand.u32 %s67, 1
        %s222 = scalar_lea.sflag [#allocation3], %s221
        %s223 = sand.u32 %s67, 1
        %s224 = smul.addr %s223, 8192
        %s225 = scalar_lea.vmem [#allocation2], %s224
        %p226 = pneg %p80
        %p227 = pneg %p77
        %p228 = pneg %p101
        %p229 = pneg %p98
        %p230 = pneg %p127
        %p231 = pneg %p124
        %s232 = smul.u32 64, %s24
        %p233 = scmp.lt.s32.totalorder %s23, 0
        %s234 = scalar_select %p233, %s23, 0
        %p235 = scmp.lt.s32.totalorder %s232, 255
        %s236 = scalar_select %p235, %s232, 255
        %s237 = smul.addr %s234, 256
        %s238 = sadd.s32 %s236, %s237
        %s239 = scalar_lea.vmem %s0, %s238
        %s240 = smul.u32 64, %s24
        %s241 = smul.u32 1024, %s24
        %p242 = scmp.eq.s32.totalorder %s24, 0
        // Predicated region
        $region41: #{simple_encoder_forward.5} parent=31 // pred_check
          %p243 = pneg %p242
        $region42: #{simple_encoder_forward.5} parent=31 // pred_check_branch
          %245 = sbr.rel (%p243) target = $region44
        $region43: #{simple_encoder_forward.5} parent=31 // pred_region
          %v246 = vld [vmem:[#allocation5] sm:$0x3]
          %v248 = vlaneseq
          %v249 = vshrl.u32 %v248, 7
          %v250 = vsub.s32 0, %v249
          %v251 = vrot.slane %v246, %v250
          %v252 = vlaneseq
          %v253 = vshrl.u32 %v252, 7
          %v254 = vsub.s32 1, %v253
          %v255 = vrot.slane %v246, %v254
          %v256 = vcombine.low %v251, %v255
          %v258 = vunpack.c.l.s4 1983009808
          %v259 = vunpack.c.0.s8 %v258
          %v260 = vlaneseq
          %v261 = vshrl.u32 %v260, 7
          %v262 = vsub.s32 %v259, %v261
          %v263 = vrot.slane %v256, %v262
          %265 = vst [vmem:[#allocation7] sm:$0xf] %v263
        $region44: #{simple_encoder_forward.5} parent=31 // pred_fallthru
          _
        %v266 = vld [vmem:[#allocation7] sm:$0xf]
        %v267 = vld [vmem:[%s239] sm:$0xff]
        %v268 = vld [vmem:[%s239 + $0x8] sm:$0xff]
        %v269 = vld [vmem:[%s239 + $0x10] sm:$0xff]
        %v270 = vld [vmem:[%s239 + $0x18] sm:$0xff]
        %v271 = vld [vmem:[%s239 + $0x20] sm:$0xff]
        %v272 = vld [vmem:[%s239 + $0x28] sm:$0xff]
        %v273 = vld [vmem:[%s239 + $0x30] sm:$0xff]
        %v274 = vld [vmem:[%s239 + $0x38] sm:$0xff]
        %v275 = vld [vmem:[%s202] sm:$0xff]
        %v276 = vld [vmem:[%s202 + $0x8] sm:$0xff]
        %v277 = vld [vmem:[%s202 + $0x10] sm:$0xff]
        %v278 = vld [vmem:[%s202 + $0x18] sm:$0xff]
        %v279 = vld [vmem:[%s202 + $0x20] sm:$0xff]
        %v280 = vld [vmem:[%s202 + $0x28] sm:$0xff]
        %v281 = vld [vmem:[%s202 + $0x30] sm:$0xff]
        %v282 = vld [vmem:[%s202 + $0x38] sm:$0xff]
        %v283 = vld [vmem:[%s202 + $0x40] sm:$0xff]
        %v284 = vld [vmem:[%s202 + $0x48] sm:$0xff]
        %v285 = vld [vmem:[%s202 + $0x50] sm:$0xff]
        %v286 = vld [vmem:[%s202 + $0x58] sm:$0xff]
        %v287 = vld [vmem:[%s202 + $0x60] sm:$0xff]
        %v288 = vld [vmem:[%s202 + $0x68] sm:$0xff]
        %v289 = vld [vmem:[%s202 + $0x70] sm:$0xff]
        %v290 = vld [vmem:[%s202 + $0x78] sm:$0xff]
        %v291 = vld [vmem:[%s202 + $0x80] sm:$0xff]
        %v292 = vld [vmem:[%s202 + $0x88] sm:$0xff]
        %v293 = vld [vmem:[%s202 + $0x90] sm:$0xff]
        %v294 = vld [vmem:[%s202 + $0x98] sm:$0xff]
        %v295 = vld [vmem:[%s202 + $0xa0] sm:$0xff]
        %v296 = vld [vmem:[%s202 + $0xa8] sm:$0xff]
        %v297 = vld [vmem:[%s202 + $0xb0] sm:$0xff]
        %v298 = vld [vmem:[%s202 + $0xb8] sm:$0xff]
        %v299 = vld [vmem:[%s202 + $0xc0] sm:$0xff]
        %v300 = vld [vmem:[%s202 + $0xc8] sm:$0xff]
        %v301 = vld [vmem:[%s202 + $0xd0] sm:$0xff]
        %v302 = vld [vmem:[%s202 + $0xd8] sm:$0xff]
        %v303 = vld [vmem:[%s202 + $0xe0] sm:$0xff]
        %v304 = vld [vmem:[%s202 + $0xe8] sm:$0xff]
        %v305 = vld [vmem:[%s202 + $0xf0] sm:$0xff]
        %v306 = vld [vmem:[%s202 + $0xf8] sm:$0xff]
        %v307 = vld [vmem:[%s202 + $0x100] sm:$0xff]
        %v308 = vld [vmem:[%s202 + $0x108] sm:$0xff]
        %v309 = vld [vmem:[%s202 + $0x110] sm:$0xff]
        %v310 = vld [vmem:[%s202 + $0x118] sm:$0xff]
        %v311 = vld [vmem:[%s202 + $0x120] sm:$0xff]
        %v312 = vld [vmem:[%s202 + $0x128] sm:$0xff]
        %v313 = vld [vmem:[%s202 + $0x130] sm:$0xff]
        %v314 = vld [vmem:[%s202 + $0x138] sm:$0xff]
        %v315 = vld [vmem:[%s202 + $0x140] sm:$0xff]
        %v316 = vld [vmem:[%s202 + $0x148] sm:$0xff]
        %v317 = vld [vmem:[%s202 + $0x150] sm:$0xff]
        %v318 = vld [vmem:[%s202 + $0x158] sm:$0xff]
        %v319 = vld [vmem:[%s202 + $0x160] sm:$0xff]
        %v320 = vld [vmem:[%s202 + $0x168] sm:$0xff]
        %v321 = vld [vmem:[%s202 + $0x170] sm:$0xff]
        %v322 = vld [vmem:[%s202 + $0x178] sm:$0xff]
        %v323 = vld [vmem:[%s202 + $0x180] sm:$0xff]
        %v324 = vld [vmem:[%s202 + $0x188] sm:$0xff]
        %v325 = vld [vmem:[%s202 + $0x190] sm:$0xff]
        %v326 = vld [vmem:[%s202 + $0x198] sm:$0xff]
        %v327 = vld [vmem:[%s202 + $0x1a0] sm:$0xff]
        %v328 = vld [vmem:[%s202 + $0x1a8] sm:$0xff]
        %v329 = vld [vmem:[%s202 + $0x1b0] sm:$0xff]
        %v330 = vld [vmem:[%s202 + $0x1b8] sm:$0xff]
        %v331 = vld [vmem:[%s202 + $0x1c0] sm:$0xff]
        %v332 = vld [vmem:[%s202 + $0x1c8] sm:$0xff]
        %v333 = vld [vmem:[%s202 + $0x1d0] sm:$0xff]
        %v334 = vld [vmem:[%s202 + $0x1d8] sm:$0xff]
        %v335 = vld [vmem:[%s202 + $0x1e0] sm:$0xff]
        %v336 = vld [vmem:[%s202 + $0x1e8] sm:$0xff]
        %v337 = vld [vmem:[%s202 + $0x1f0] sm:$0xff]
        %v338 = vld [vmem:[%s202 + $0x1f8] sm:$0xff]
        %v339 = vld [vmem:[%s202 + $0x200] sm:$0xff]
        %v340 = vld [vmem:[%s202 + $0x208] sm:$0xff]
        %v341 = vld [vmem:[%s202 + $0x210] sm:$0xff]
        %v342 = vld [vmem:[%s202 + $0x218] sm:$0xff]
        %v343 = vld [vmem:[%s202 + $0x220] sm:$0xff]
        %v344 = vld [vmem:[%s202 + $0x228] sm:$0xff]
        %v345 = vld [vmem:[%s202 + $0x230] sm:$0xff]
        %v346 = vld [vmem:[%s202 + $0x238] sm:$0xff]
        %v347 = vld [vmem:[%s202 + $0x240] sm:$0xff]
        %v348 = vld [vmem:[%s202 + $0x248] sm:$0xff]
        %v349 = vld [vmem:[%s202 + $0x250] sm:$0xff]
        %v350 = vld [vmem:[%s202 + $0x258] sm:$0xff]
        %v351 = vld [vmem:[%s202 + $0x260] sm:$0xff]
        %v352 = vld [vmem:[%s202 + $0x268] sm:$0xff]
        %v353 = vld [vmem:[%s202 + $0x270] sm:$0xff]
        %v354 = vld [vmem:[%s202 + $0x278] sm:$0xff]
        %v355 = vld [vmem:[%s202 + $0x280] sm:$0xff]
        %v356 = vld [vmem:[%s202 + $0x288] sm:$0xff]
        %v357 = vld [vmem:[%s202 + $0x290] sm:$0xff]
        %v358 = vld [vmem:[%s202 + $0x298] sm:$0xff]
        %v359 = vld [vmem:[%s202 + $0x2a0] sm:$0xff]
        %v360 = vld [vmem:[%s202 + $0x2a8] sm:$0xff]
        %v361 = vld [vmem:[%s202 + $0x2b0] sm:$0xff]
        %v362 = vld [vmem:[%s202 + $0x2b8] sm:$0xff]
        %v363 = vld [vmem:[%s202 + $0x2c0] sm:$0xff]
        %v364 = vld [vmem:[%s202 + $0x2c8] sm:$0xff]
        %v365 = vld [vmem:[%s202 + $0x2d0] sm:$0xff]
        %v366 = vld [vmem:[%s202 + $0x2d8] sm:$0xff]
        %v367 = vld [vmem:[%s202 + $0x2e0] sm:$0xff]
        %v368 = vld [vmem:[%s202 + $0x2e8] sm:$0xff]
        %v369 = vld [vmem:[%s202 + $0x2f0] sm:$0xff]
        %v370 = vld [vmem:[%s202 + $0x2f8] sm:$0xff]
        %v371 = vld [vmem:[%s202 + $0x300] sm:$0xff]
        %v372 = vld [vmem:[%s202 + $0x308] sm:$0xff]
        %v373 = vld [vmem:[%s202 + $0x310] sm:$0xff]
        %v374 = vld [vmem:[%s202 + $0x318] sm:$0xff]
        %v375 = vld [vmem:[%s202 + $0x320] sm:$0xff]
        %v376 = vld [vmem:[%s202 + $0x328] sm:$0xff]
        %v377 = vld [vmem:[%s202 + $0x330] sm:$0xff]
        %v378 = vld [vmem:[%s202 + $0x338] sm:$0xff]
        %v379 = vld [vmem:[%s202 + $0x340] sm:$0xff]
        %v380 = vld [vmem:[%s202 + $0x348] sm:$0xff]
        %v381 = vld [vmem:[%s202 + $0x350] sm:$0xff]
        %v382 = vld [vmem:[%s202 + $0x358] sm:$0xff]
        %v383 = vld [vmem:[%s202 + $0x360] sm:$0xff]
        %v384 = vld [vmem:[%s202 + $0x368] sm:$0xff]
        %v385 = vld [vmem:[%s202 + $0x370] sm:$0xff]
        %v386 = vld [vmem:[%s202 + $0x378] sm:$0xff]
        %v387 = vld [vmem:[%s202 + $0x380] sm:$0xff]
        %v388 = vld [vmem:[%s202 + $0x388] sm:$0xff]
        %v389 = vld [vmem:[%s202 + $0x390] sm:$0xff]
        %v390 = vld [vmem:[%s202 + $0x398] sm:$0xff]
        %v391 = vld [vmem:[%s202 + $0x3a0] sm:$0xff]
        %v392 = vld [vmem:[%s202 + $0x3a8] sm:$0xff]
        %v393 = vld [vmem:[%s202 + $0x3b0] sm:$0xff]
        %v394 = vld [vmem:[%s202 + $0x3b8] sm:$0xff]
        %v395 = vld [vmem:[%s202 + $0x3c0] sm:$0xff]
        %v396 = vld [vmem:[%s202 + $0x3c8] sm:$0xff]
        %v397 = vld [vmem:[%s202 + $0x3d0] sm:$0xff]
        %v398 = vld [vmem:[%s202 + $0x3d8] sm:$0xff]
        %v399 = vld [vmem:[%s202 + $0x3e0] sm:$0xff]
        %v400 = vld [vmem:[%s202 + $0x3e8] sm:$0xff]
        %v401 = vld [vmem:[%s202 + $0x3f0] sm:$0xff]
        %v402 = vld [vmem:[%s202 + $0x3f8] sm:$0xff]
        %v403 = vld [vmem:[%s202 + $0x400] sm:$0xff]
        %v404 = vld [vmem:[%s202 + $0x408] sm:$0xff]
        %v405 = vld [vmem:[%s202 + $0x410] sm:$0xff]
        %v406 = vld [vmem:[%s202 + $0x418] sm:$0xff]
        %v407 = vld [vmem:[%s202 + $0x420] sm:$0xff]
        %v408 = vld [vmem:[%s202 + $0x428] sm:$0xff]
        %v409 = vld [vmem:[%s202 + $0x430] sm:$0xff]
        %v410 = vld [vmem:[%s202 + $0x438] sm:$0xff]
        %v411 = vld [vmem:[%s202 + $0x440] sm:$0xff]
        %v412 = vld [vmem:[%s202 + $0x448] sm:$0xff]
        %v413 = vld [vmem:[%s202 + $0x450] sm:$0xff]
        %v414 = vld [vmem:[%s202 + $0x458] sm:$0xff]
        %v415 = vld [vmem:[%s202 + $0x460] sm:$0xff]
        %v416 = vld [vmem:[%s202 + $0x468] sm:$0xff]
        %v417 = vld [vmem:[%s202 + $0x470] sm:$0xff]
        %v418 = vld [vmem:[%s202 + $0x478] sm:$0xff]
        %v419 = vld [vmem:[%s202 + $0x480] sm:$0xff]
        %v420 = vld [vmem:[%s202 + $0x488] sm:$0xff]
        %v421 = vld [vmem:[%s202 + $0x490] sm:$0xff]
        %v422 = vld [vmem:[%s202 + $0x498] sm:$0xff]
        %v423 = vld [vmem:[%s202 + $0x4a0] sm:$0xff]
        %v424 = vld [vmem:[%s202 + $0x4a8] sm:$0xff]
        %v425 = vld [vmem:[%s202 + $0x4b0] sm:$0xff]
        %v426 = vld [vmem:[%s202 + $0x4b8] sm:$0xff]
        %v427 = vld [vmem:[%s202 + $0x4c0] sm:$0xff]
        %v428 = vld [vmem:[%s202 + $0x4c8] sm:$0xff]
        %v429 = vld [vmem:[%s202 + $0x4d0] sm:$0xff]
        %v430 = vld [vmem:[%s202 + $0x4d8] sm:$0xff]
        %v431 = vld [vmem:[%s202 + $0x4e0] sm:$0xff]
        %v432 = vld [vmem:[%s202 + $0x4e8] sm:$0xff]
        %v433 = vld [vmem:[%s202 + $0x4f0] sm:$0xff]
        %v434 = vld [vmem:[%s202 + $0x4f8] sm:$0xff]
        %v435 = vld [vmem:[%s202 + $0x500] sm:$0xff]
        %v436 = vld [vmem:[%s202 + $0x508] sm:$0xff]
        %v437 = vld [vmem:[%s202 + $0x510] sm:$0xff]
        %v438 = vld [vmem:[%s202 + $0x518] sm:$0xff]
        %v439 = vld [vmem:[%s202 + $0x520] sm:$0xff]
        %v440 = vld [vmem:[%s202 + $0x528] sm:$0xff]
        %v441 = vld [vmem:[%s202 + $0x530] sm:$0xff]
        %v442 = vld [vmem:[%s202 + $0x538] sm:$0xff]
        %v443 = vld [vmem:[%s202 + $0x540] sm:$0xff]
        %v444 = vld [vmem:[%s202 + $0x548] sm:$0xff]
        %v445 = vld [vmem:[%s202 + $0x550] sm:$0xff]
        %v446 = vld [vmem:[%s202 + $0x558] sm:$0xff]
        %v447 = vld [vmem:[%s202 + $0x560] sm:$0xff]
        %v448 = vld [vmem:[%s202 + $0x568] sm:$0xff]
        %v449 = vld [vmem:[%s202 + $0x570] sm:$0xff]
        %v450 = vld [vmem:[%s202 + $0x578] sm:$0xff]
        %v451 = vld [vmem:[%s202 + $0x580] sm:$0xff]
        %v452 = vld [vmem:[%s202 + $0x588] sm:$0xff]
        %v453 = vld [vmem:[%s202 + $0x590] sm:$0xff]
        %v454 = vld [vmem:[%s202 + $0x598] sm:$0xff]
        %v455 = vld [vmem:[%s202 + $0x5a0] sm:$0xff]
        %v456 = vld [vmem:[%s202 + $0x5a8] sm:$0xff]
        %v457 = vld [vmem:[%s202 + $0x5b0] sm:$0xff]
        %v458 = vld [vmem:[%s202 + $0x5b8] sm:$0xff]
        %v459 = vld [vmem:[%s202 + $0x5c0] sm:$0xff]
        %v460 = vld [vmem:[%s202 + $0x5c8] sm:$0xff]
        %v461 = vld [vmem:[%s202 + $0x5d0] sm:$0xff]
        %v462 = vld [vmem:[%s202 + $0x5d8] sm:$0xff]
        %v463 = vld [vmem:[%s202 + $0x5e0] sm:$0xff]
        %v464 = vld [vmem:[%s202 + $0x5e8] sm:$0xff]
        %v465 = vld [vmem:[%s202 + $0x5f0] sm:$0xff]
        %v466 = vld [vmem:[%s202 + $0x5f8] sm:$0xff]
        %v467 = vld [vmem:[%s202 + $0x600] sm:$0xff]
        %v468 = vld [vmem:[%s202 + $0x608] sm:$0xff]
        %v469 = vld [vmem:[%s202 + $0x610] sm:$0xff]
        %v470 = vld [vmem:[%s202 + $0x618] sm:$0xff]
        %v471 = vld [vmem:[%s202 + $0x620] sm:$0xff]
        %v472 = vld [vmem:[%s202 + $0x628] sm:$0xff]
        %v473 = vld [vmem:[%s202 + $0x630] sm:$0xff]
        %v474 = vld [vmem:[%s202 + $0x638] sm:$0xff]
        %v475 = vld [vmem:[%s202 + $0x640] sm:$0xff]
        %v476 = vld [vmem:[%s202 + $0x648] sm:$0xff]
        %v477 = vld [vmem:[%s202 + $0x650] sm:$0xff]
        %v478 = vld [vmem:[%s202 + $0x658] sm:$0xff]
        %v479 = vld [vmem:[%s202 + $0x660] sm:$0xff]
        %v480 = vld [vmem:[%s202 + $0x668] sm:$0xff]
        %v481 = vld [vmem:[%s202 + $0x670] sm:$0xff]
        %v482 = vld [vmem:[%s202 + $0x678] sm:$0xff]
        %v483 = vld [vmem:[%s202 + $0x680] sm:$0xff]
        %v484 = vld [vmem:[%s202 + $0x688] sm:$0xff]
        %v485 = vld [vmem:[%s202 + $0x690] sm:$0xff]
        %v486 = vld [vmem:[%s202 + $0x698] sm:$0xff]
        %v487 = vld [vmem:[%s202 + $0x6a0] sm:$0xff]
        %v488 = vld [vmem:[%s202 + $0x6a8] sm:$0xff]
        %v489 = vld [vmem:[%s202 + $0x6b0] sm:$0xff]
        %v490 = vld [vmem:[%s202 + $0x6b8] sm:$0xff]
        %v491 = vld [vmem:[%s202 + $0x6c0] sm:$0xff]
        %v492 = vld [vmem:[%s202 + $0x6c8] sm:$0xff]
        %v493 = vld [vmem:[%s202 + $0x6d0] sm:$0xff]
        %v494 = vld [vmem:[%s202 + $0x6d8] sm:$0xff]
        %v495 = vld [vmem:[%s202 + $0x6e0] sm:$0xff]
        %v496 = vld [vmem:[%s202 + $0x6e8] sm:$0xff]
        %v497 = vld [vmem:[%s202 + $0x6f0] sm:$0xff]
        %v498 = vld [vmem:[%s202 + $0x6f8] sm:$0xff]
        %v499 = vld [vmem:[%s202 + $0x700] sm:$0xff]
        %v500 = vld [vmem:[%s202 + $0x708] sm:$0xff]
        %v501 = vld [vmem:[%s202 + $0x710] sm:$0xff]
        %v502 = vld [vmem:[%s202 + $0x718] sm:$0xff]
        %v503 = vld [vmem:[%s202 + $0x720] sm:$0xff]
        %v504 = vld [vmem:[%s202 + $0x728] sm:$0xff]
        %v505 = vld [vmem:[%s202 + $0x730] sm:$0xff]
        %v506 = vld [vmem:[%s202 + $0x738] sm:$0xff]
        %v507 = vld [vmem:[%s202 + $0x740] sm:$0xff]
        %v508 = vld [vmem:[%s202 + $0x748] sm:$0xff]
        %v509 = vld [vmem:[%s202 + $0x750] sm:$0xff]
        %v510 = vld [vmem:[%s202 + $0x758] sm:$0xff]
        %v511 = vld [vmem:[%s202 + $0x760] sm:$0xff]
        %v512 = vld [vmem:[%s202 + $0x768] sm:$0xff]
        %v513 = vld [vmem:[%s202 + $0x770] sm:$0xff]
        %v514 = vld [vmem:[%s202 + $0x778] sm:$0xff]
        %v515 = vld [vmem:[%s202 + $0x780] sm:$0xff]
        %v516 = vld [vmem:[%s202 + $0x788] sm:$0xff]
        %v517 = vld [vmem:[%s202 + $0x790] sm:$0xff]
        %v518 = vld [vmem:[%s202 + $0x798] sm:$0xff]
        %v519 = vld [vmem:[%s202 + $0x7a0] sm:$0xff]
        %v520 = vld [vmem:[%s202 + $0x7a8] sm:$0xff]
        %v521 = vld [vmem:[%s202 + $0x7b0] sm:$0xff]
        %v522 = vld [vmem:[%s202 + $0x7b8] sm:$0xff]
        %v523 = vld [vmem:[%s202 + $0x7c0] sm:$0xff]
        %v524 = vld [vmem:[%s202 + $0x7c8] sm:$0xff]
        %v525 = vld [vmem:[%s202 + $0x7d0] sm:$0xff]
        %v526 = vld [vmem:[%s202 + $0x7d8] sm:$0xff]
        %v527 = vld [vmem:[%s202 + $0x7e0] sm:$0xff]
        %v528 = vld [vmem:[%s202 + $0x7e8] sm:$0xff]
        %v529 = vld [vmem:[%s202 + $0x7f0] sm:$0xff]
        %v530 = vld [vmem:[%s202 + $0x7f8] sm:$0xff]
        %v531 = vld [vmem:[%s202 + $0x800] sm:$0xff]
        %v532 = vld [vmem:[%s202 + $0x808] sm:$0xff]
        %v533 = vld [vmem:[%s202 + $0x810] sm:$0xff]
        %v534 = vld [vmem:[%s202 + $0x818] sm:$0xff]
        %v535 = vld [vmem:[%s202 + $0x820] sm:$0xff]
        %v536 = vld [vmem:[%s202 + $0x828] sm:$0xff]
        %v537 = vld [vmem:[%s202 + $0x830] sm:$0xff]
        %v538 = vld [vmem:[%s202 + $0x838] sm:$0xff]
        %v539 = vld [vmem:[%s202 + $0x840] sm:$0xff]
        %v540 = vld [vmem:[%s202 + $0x848] sm:$0xff]
        %v541 = vld [vmem:[%s202 + $0x850] sm:$0xff]
        %v542 = vld [vmem:[%s202 + $0x858] sm:$0xff]
        %v543 = vld [vmem:[%s202 + $0x860] sm:$0xff]
        %v544 = vld [vmem:[%s202 + $0x868] sm:$0xff]
        %v545 = vld [vmem:[%s202 + $0x870] sm:$0xff]
        %v546 = vld [vmem:[%s202 + $0x878] sm:$0xff]
        %v547 = vld [vmem:[%s202 + $0x880] sm:$0xff]
        %v548 = vld [vmem:[%s202 + $0x888] sm:$0xff]
        %v549 = vld [vmem:[%s202 + $0x890] sm:$0xff]
        %v550 = vld [vmem:[%s202 + $0x898] sm:$0xff]
        %v551 = vld [vmem:[%s202 + $0x8a0] sm:$0xff]
        %v552 = vld [vmem:[%s202 + $0x8a8] sm:$0xff]
        %v553 = vld [vmem:[%s202 + $0x8b0] sm:$0xff]
        %v554 = vld [vmem:[%s202 + $0x8b8] sm:$0xff]
        %v555 = vld [vmem:[%s202 + $0x8c0] sm:$0xff]
        %v556 = vld [vmem:[%s202 + $0x8c8] sm:$0xff]
        %v557 = vld [vmem:[%s202 + $0x8d0] sm:$0xff]
        %v558 = vld [vmem:[%s202 + $0x8d8] sm:$0xff]
        %v559 = vld [vmem:[%s202 + $0x8e0] sm:$0xff]
        %v560 = vld [vmem:[%s202 + $0x8e8] sm:$0xff]
        %v561 = vld [vmem:[%s202 + $0x8f0] sm:$0xff]
        %v562 = vld [vmem:[%s202 + $0x8f8] sm:$0xff]
        %v563 = vld [vmem:[%s202 + $0x900] sm:$0xff]
        %v564 = vld [vmem:[%s202 + $0x908] sm:$0xff]
        %v565 = vld [vmem:[%s202 + $0x910] sm:$0xff]
        %v566 = vld [vmem:[%s202 + $0x918] sm:$0xff]
        %v567 = vld [vmem:[%s202 + $0x920] sm:$0xff]
        %v568 = vld [vmem:[%s202 + $0x928] sm:$0xff]
        %v569 = vld [vmem:[%s202 + $0x930] sm:$0xff]
        %v570 = vld [vmem:[%s202 + $0x938] sm:$0xff]
        %v571 = vld [vmem:[%s202 + $0x940] sm:$0xff]
        %v572 = vld [vmem:[%s202 + $0x948] sm:$0xff]
        %v573 = vld [vmem:[%s202 + $0x950] sm:$0xff]
        %v574 = vld [vmem:[%s202 + $0x958] sm:$0xff]
        %v575 = vld [vmem:[%s202 + $0x960] sm:$0xff]
        %v576 = vld [vmem:[%s202 + $0x968] sm:$0xff]
        %v577 = vld [vmem:[%s202 + $0x970] sm:$0xff]
        %v578 = vld [vmem:[%s202 + $0x978] sm:$0xff]
        %v579 = vld [vmem:[%s202 + $0x980] sm:$0xff]
        %v580 = vld [vmem:[%s202 + $0x988] sm:$0xff]
        %v581 = vld [vmem:[%s202 + $0x990] sm:$0xff]
        %v582 = vld [vmem:[%s202 + $0x998] sm:$0xff]
        %v583 = vld [vmem:[%s202 + $0x9a0] sm:$0xff]
        %v584 = vld [vmem:[%s202 + $0x9a8] sm:$0xff]
        %v585 = vld [vmem:[%s202 + $0x9b0] sm:$0xff]
        %v586 = vld [vmem:[%s202 + $0x9b8] sm:$0xff]
        %v587 = vld [vmem:[%s202 + $0x9c0] sm:$0xff]
        %v588 = vld [vmem:[%s202 + $0x9c8] sm:$0xff]
        %v589 = vld [vmem:[%s202 + $0x9d0] sm:$0xff]
        %v590 = vld [vmem:[%s202 + $0x9d8] sm:$0xff]
        %v591 = vld [vmem:[%s202 + $0x9e0] sm:$0xff]
        %v592 = vld [vmem:[%s202 + $0x9e8] sm:$0xff]
        %v593 = vld [vmem:[%s202 + $0x9f0] sm:$0xff]
        %v594 = vld [vmem:[%s202 + $0x9f8] sm:$0xff]
        %v595 = vld [vmem:[%s202 + $0xa00] sm:$0xff]
        %v596 = vld [vmem:[%s202 + $0xa08] sm:$0xff]
        %v597 = vld [vmem:[%s202 + $0xa10] sm:$0xff]
        %v598 = vld [vmem:[%s202 + $0xa18] sm:$0xff]
        %v599 = vld [vmem:[%s202 + $0xa20] sm:$0xff]
        %v600 = vld [vmem:[%s202 + $0xa28] sm:$0xff]
        %v601 = vld [vmem:[%s202 + $0xa30] sm:$0xff]
        %v602 = vld [vmem:[%s202 + $0xa38] sm:$0xff]
        %v603 = vld [vmem:[%s202 + $0xa40] sm:$0xff]
        %v604 = vld [vmem:[%s202 + $0xa48] sm:$0xff]
        %v605 = vld [vmem:[%s202 + $0xa50] sm:$0xff]
        %v606 = vld [vmem:[%s202 + $0xa58] sm:$0xff]
        %v607 = vld [vmem:[%s202 + $0xa60] sm:$0xff]
        %v608 = vld [vmem:[%s202 + $0xa68] sm:$0xff]
        %v609 = vld [vmem:[%s202 + $0xa70] sm:$0xff]
        %v610 = vld [vmem:[%s202 + $0xa78] sm:$0xff]
        %v611 = vld [vmem:[%s202 + $0xa80] sm:$0xff]
        %v612 = vld [vmem:[%s202 + $0xa88] sm:$0xff]
        %v613 = vld [vmem:[%s202 + $0xa90] sm:$0xff]
        %v614 = vld [vmem:[%s202 + $0xa98] sm:$0xff]
        %v615 = vld [vmem:[%s202 + $0xaa0] sm:$0xff]
        %v616 = vld [vmem:[%s202 + $0xaa8] sm:$0xff]
        %v617 = vld [vmem:[%s202 + $0xab0] sm:$0xff]
        %v618 = vld [vmem:[%s202 + $0xab8] sm:$0xff]
        %v619 = vld [vmem:[%s202 + $0xac0] sm:$0xff]
        %v620 = vld [vmem:[%s202 + $0xac8] sm:$0xff]
        %v621 = vld [vmem:[%s202 + $0xad0] sm:$0xff]
        %v622 = vld [vmem:[%s202 + $0xad8] sm:$0xff]
        %v623 = vld [vmem:[%s202 + $0xae0] sm:$0xff]
        %v624 = vld [vmem:[%s202 + $0xae8] sm:$0xff]
        %v625 = vld [vmem:[%s202 + $0xaf0] sm:$0xff]
        %v626 = vld [vmem:[%s202 + $0xaf8] sm:$0xff]
        %v627 = vld [vmem:[%s202 + $0xb00] sm:$0xff]
        %v628 = vld [vmem:[%s202 + $0xb08] sm:$0xff]
        %v629 = vld [vmem:[%s202 + $0xb10] sm:$0xff]
        %v630 = vld [vmem:[%s202 + $0xb18] sm:$0xff]
        %v631 = vld [vmem:[%s202 + $0xb20] sm:$0xff]
        %v632 = vld [vmem:[%s202 + $0xb28] sm:$0xff]
        %v633 = vld [vmem:[%s202 + $0xb30] sm:$0xff]
        %v634 = vld [vmem:[%s202 + $0xb38] sm:$0xff]
        %v635 = vld [vmem:[%s202 + $0xb40] sm:$0xff]
        %v636 = vld [vmem:[%s202 + $0xb48] sm:$0xff]
        %v637 = vld [vmem:[%s202 + $0xb50] sm:$0xff]
        %v638 = vld [vmem:[%s202 + $0xb58] sm:$0xff]
        %v639 = vld [vmem:[%s202 + $0xb60] sm:$0xff]
        %v640 = vld [vmem:[%s202 + $0xb68] sm:$0xff]
        %v641 = vld [vmem:[%s202 + $0xb70] sm:$0xff]
        %v642 = vld [vmem:[%s202 + $0xb78] sm:$0xff]
        %v643 = vld [vmem:[%s202 + $0xb80] sm:$0xff]
        %v644 = vld [vmem:[%s202 + $0xb88] sm:$0xff]
        %v645 = vld [vmem:[%s202 + $0xb90] sm:$0xff]
        %v646 = vld [vmem:[%s202 + $0xb98] sm:$0xff]
        %v647 = vld [vmem:[%s202 + $0xba0] sm:$0xff]
        %v648 = vld [vmem:[%s202 + $0xba8] sm:$0xff]
        %v649 = vld [vmem:[%s202 + $0xbb0] sm:$0xff]
        %v650 = vld [vmem:[%s202 + $0xbb8] sm:$0xff]
        %v651 = vld [vmem:[%s202 + $0xbc0] sm:$0xff]
        %v652 = vld [vmem:[%s202 + $0xbc8] sm:$0xff]
        %v653 = vld [vmem:[%s202 + $0xbd0] sm:$0xff]
        %v654 = vld [vmem:[%s202 + $0xbd8] sm:$0xff]
        %v655 = vld [vmem:[%s202 + $0xbe0] sm:$0xff]
        %v656 = vld [vmem:[%s202 + $0xbe8] sm:$0xff]
        %v657 = vld [vmem:[%s202 + $0xbf0] sm:$0xff]
        %v658 = vld [vmem:[%s202 + $0xbf8] sm:$0xff]
        %v659 = vld [vmem:[%s202 + $0xc00] sm:$0xff]
        %v660 = vld [vmem:[%s202 + $0xc08] sm:$0xff]
        %v661 = vld [vmem:[%s202 + $0xc10] sm:$0xff]
        %v662 = vld [vmem:[%s202 + $0xc18] sm:$0xff]
        %v663 = vld [vmem:[%s202 + $0xc20] sm:$0xff]
        %v664 = vld [vmem:[%s202 + $0xc28] sm:$0xff]
        %v665 = vld [vmem:[%s202 + $0xc30] sm:$0xff]
        %v666 = vld [vmem:[%s202 + $0xc38] sm:$0xff]
        %v667 = vld [vmem:[%s202 + $0xc40] sm:$0xff]
        %v668 = vld [vmem:[%s202 + $0xc48] sm:$0xff]
        %v669 = vld [vmem:[%s202 + $0xc50] sm:$0xff]
        %v670 = vld [vmem:[%s202 + $0xc58] sm:$0xff]
        %v671 = vld [vmem:[%s202 + $0xc60] sm:$0xff]
        %v672 = vld [vmem:[%s202 + $0xc68] sm:$0xff]
        %v673 = vld [vmem:[%s202 + $0xc70] sm:$0xff]
        %v674 = vld [vmem:[%s202 + $0xc78] sm:$0xff]
        %v675 = vld [vmem:[%s202 + $0xc80] sm:$0xff]
        %v676 = vld [vmem:[%s202 + $0xc88] sm:$0xff]
        %v677 = vld [vmem:[%s202 + $0xc90] sm:$0xff]
        %v678 = vld [vmem:[%s202 + $0xc98] sm:$0xff]
        %v679 = vld [vmem:[%s202 + $0xca0] sm:$0xff]
        %v680 = vld [vmem:[%s202 + $0xca8] sm:$0xff]
        %v681 = vld [vmem:[%s202 + $0xcb0] sm:$0xff]
        %v682 = vld [vmem:[%s202 + $0xcb8] sm:$0xff]
        %v683 = vld [vmem:[%s202 + $0xcc0] sm:$0xff]
        %v684 = vld [vmem:[%s202 + $0xcc8] sm:$0xff]
        %v685 = vld [vmem:[%s202 + $0xcd0] sm:$0xff]
        %v686 = vld [vmem:[%s202 + $0xcd8] sm:$0xff]
        %v687 = vld [vmem:[%s202 + $0xce0] sm:$0xff]
        %v688 = vld [vmem:[%s202 + $0xce8] sm:$0xff]
        %v689 = vld [vmem:[%s202 + $0xcf0] sm:$0xff]
        %v690 = vld [vmem:[%s202 + $0xcf8] sm:$0xff]
        %v691 = vld [vmem:[%s202 + $0xd00] sm:$0xff]
        %v692 = vld [vmem:[%s202 + $0xd08] sm:$0xff]
        %v693 = vld [vmem:[%s202 + $0xd10] sm:$0xff]
        %v694 = vld [vmem:[%s202 + $0xd18] sm:$0xff]
        %v695 = vld [vmem:[%s202 + $0xd20] sm:$0xff]
        %v696 = vld [vmem:[%s202 + $0xd28] sm:$0xff]
        %v697 = vld [vmem:[%s202 + $0xd30] sm:$0xff]
        %v698 = vld [vmem:[%s202 + $0xd38] sm:$0xff]
        %v699 = vld [vmem:[%s202 + $0xd40] sm:$0xff]
        %v700 = vld [vmem:[%s202 + $0xd48] sm:$0xff]
        %v701 = vld [vmem:[%s202 + $0xd50] sm:$0xff]
        %v702 = vld [vmem:[%s202 + $0xd58] sm:$0xff]
        %v703 = vld [vmem:[%s202 + $0xd60] sm:$0xff]
        %v704 = vld [vmem:[%s202 + $0xd68] sm:$0xff]
        %v705 = vld [vmem:[%s202 + $0xd70] sm:$0xff]
        %v706 = vld [vmem:[%s202 + $0xd78] sm:$0xff]
        %v707 = vld [vmem:[%s202 + $0xd80] sm:$0xff]
        %v708 = vld [vmem:[%s202 + $0xd88] sm:$0xff]
        %v709 = vld [vmem:[%s202 + $0xd90] sm:$0xff]
        %v710 = vld [vmem:[%s202 + $0xd98] sm:$0xff]
        %v711 = vld [vmem:[%s202 + $0xda0] sm:$0xff]
        %v712 = vld [vmem:[%s202 + $0xda8] sm:$0xff]
        %v713 = vld [vmem:[%s202 + $0xdb0] sm:$0xff]
        %v714 = vld [vmem:[%s202 + $0xdb8] sm:$0xff]
        %v715 = vld [vmem:[%s202 + $0xdc0] sm:$0xff]
        %v716 = vld [vmem:[%s202 + $0xdc8] sm:$0xff]
        %v717 = vld [vmem:[%s202 + $0xdd0] sm:$0xff]
        %v718 = vld [vmem:[%s202 + $0xdd8] sm:$0xff]
        %v719 = vld [vmem:[%s202 + $0xde0] sm:$0xff]
        %v720 = vld [vmem:[%s202 + $0xde8] sm:$0xff]
        %v721 = vld [vmem:[%s202 + $0xdf0] sm:$0xff]
        %v722 = vld [vmem:[%s202 + $0xdf8] sm:$0xff]
        %v723 = vld [vmem:[%s202 + $0xe00] sm:$0xff]
        %v724 = vld [vmem:[%s202 + $0xe08] sm:$0xff]
        %v725 = vld [vmem:[%s202 + $0xe10] sm:$0xff]
        %v726 = vld [vmem:[%s202 + $0xe18] sm:$0xff]
        %v727 = vld [vmem:[%s202 + $0xe20] sm:$0xff]
        %v728 = vld [vmem:[%s202 + $0xe28] sm:$0xff]
        %v729 = vld [vmem:[%s202 + $0xe30] sm:$0xff]
        %v730 = vld [vmem:[%s202 + $0xe38] sm:$0xff]
        %v731 = vld [vmem:[%s202 + $0xe40] sm:$0xff]
        %v732 = vld [vmem:[%s202 + $0xe48] sm:$0xff]
        %v733 = vld [vmem:[%s202 + $0xe50] sm:$0xff]
        %v734 = vld [vmem:[%s202 + $0xe58] sm:$0xff]
        %v735 = vld [vmem:[%s202 + $0xe60] sm:$0xff]
        %v736 = vld [vmem:[%s202 + $0xe68] sm:$0xff]
        %v737 = vld [vmem:[%s202 + $0xe70] sm:$0xff]
        %v738 = vld [vmem:[%s202 + $0xe78] sm:$0xff]
        %v739 = vld [vmem:[%s202 + $0xe80] sm:$0xff]
        %v740 = vld [vmem:[%s202 + $0xe88] sm:$0xff]
        %v741 = vld [vmem:[%s202 + $0xe90] sm:$0xff]
        %v742 = vld [vmem:[%s202 + $0xe98] sm:$0xff]
        %v743 = vld [vmem:[%s202 + $0xea0] sm:$0xff]
        %v744 = vld [vmem:[%s202 + $0xea8] sm:$0xff]
        %v745 = vld [vmem:[%s202 + $0xeb0] sm:$0xff]
        %v746 = vld [vmem:[%s202 + $0xeb8] sm:$0xff]
        %v747 = vld [vmem:[%s202 + $0xec0] sm:$0xff]
        %v748 = vld [vmem:[%s202 + $0xec8] sm:$0xff]
        %v749 = vld [vmem:[%s202 + $0xed0] sm:$0xff]
        %v750 = vld [vmem:[%s202 + $0xed8] sm:$0xff]
        %v751 = vld [vmem:[%s202 + $0xee0] sm:$0xff]
        %v752 = vld [vmem:[%s202 + $0xee8] sm:$0xff]
        %v753 = vld [vmem:[%s202 + $0xef0] sm:$0xff]
        %v754 = vld [vmem:[%s202 + $0xef8] sm:$0xff]
        %v755 = vld [vmem:[%s202 + $0xf00] sm:$0xff]
        %v756 = vld [vmem:[%s202 + $0xf08] sm:$0xff]
        %v757 = vld [vmem:[%s202 + $0xf10] sm:$0xff]
        %v758 = vld [vmem:[%s202 + $0xf18] sm:$0xff]
        %v759 = vld [vmem:[%s202 + $0xf20] sm:$0xff]
        %v760 = vld [vmem:[%s202 + $0xf28] sm:$0xff]
        %v761 = vld [vmem:[%s202 + $0xf30] sm:$0xff]
        %v762 = vld [vmem:[%s202 + $0xf38] sm:$0xff]
        %v763 = vld [vmem:[%s202 + $0xf40] sm:$0xff]
        %v764 = vld [vmem:[%s202 + $0xf48] sm:$0xff]
        %v765 = vld [vmem:[%s202 + $0xf50] sm:$0xff]
        %v766 = vld [vmem:[%s202 + $0xf58] sm:$0xff]
        %v767 = vld [vmem:[%s202 + $0xf60] sm:$0xff]
        %v768 = vld [vmem:[%s202 + $0xf68] sm:$0xff]
        %v769 = vld [vmem:[%s202 + $0xf70] sm:$0xff]
        %v770 = vld [vmem:[%s202 + $0xf78] sm:$0xff]
        %v771 = vld [vmem:[%s202 + $0xf80] sm:$0xff]
        %v772 = vld [vmem:[%s202 + $0xf88] sm:$0xff]
        %v773 = vld [vmem:[%s202 + $0xf90] sm:$0xff]
        %v774 = vld [vmem:[%s202 + $0xf98] sm:$0xff]
        %v775 = vld [vmem:[%s202 + $0xfa0] sm:$0xff]
        %v776 = vld [vmem:[%s202 + $0xfa8] sm:$0xff]
        %v777 = vld [vmem:[%s202 + $0xfb0] sm:$0xff]
        %v778 = vld [vmem:[%s202 + $0xfb8] sm:$0xff]
        %v779 = vld [vmem:[%s202 + $0xfc0] sm:$0xff]
        %v780 = vld [vmem:[%s202 + $0xfc8] sm:$0xff]
        %v781 = vld [vmem:[%s202 + $0xfd0] sm:$0xff]
        %v782 = vld [vmem:[%s202 + $0xfd8] sm:$0xff]
        %v783 = vld [vmem:[%s202 + $0xfe0] sm:$0xff]
        %v784 = vld [vmem:[%s202 + $0xfe8] sm:$0xff]
        %v785 = vld [vmem:[%s202 + $0xff0] sm:$0xff]
        %v786 = vld [vmem:[%s202 + $0xff8] sm:$0xff]
        %v787 = vld [vmem:[%s202 + $0x1000] sm:$0xff]
        %v788 = vld [vmem:[%s202 + $0x1008] sm:$0xff]
        %v789 = vld [vmem:[%s202 + $0x1010] sm:$0xff]
        %v790 = vld [vmem:[%s202 + $0x1018] sm:$0xff]
        %v791 = vld [vmem:[%s202 + $0x1020] sm:$0xff]
        %v792 = vld [vmem:[%s202 + $0x1028] sm:$0xff]
        %v793 = vld [vmem:[%s202 + $0x1030] sm:$0xff]
        %v794 = vld [vmem:[%s202 + $0x1038] sm:$0xff]
        %v795 = vld [vmem:[%s202 + $0x1040] sm:$0xff]
        %v796 = vld [vmem:[%s202 + $0x1048] sm:$0xff]
        %v797 = vld [vmem:[%s202 + $0x1050] sm:$0xff]
        %v798 = vld [vmem:[%s202 + $0x1058] sm:$0xff]
        %v799 = vld [vmem:[%s202 + $0x1060] sm:$0xff]
        %v800 = vld [vmem:[%s202 + $0x1068] sm:$0xff]
        %v801 = vld [vmem:[%s202 + $0x1070] sm:$0xff]
        %v802 = vld [vmem:[%s202 + $0x1078] sm:$0xff]
        %v803 = vld [vmem:[%s202 + $0x1080] sm:$0xff]
        %v804 = vld [vmem:[%s202 + $0x1088] sm:$0xff]
        %v805 = vld [vmem:[%s202 + $0x1090] sm:$0xff]
        %v806 = vld [vmem:[%s202 + $0x1098] sm:$0xff]
        %v807 = vld [vmem:[%s202 + $0x10a0] sm:$0xff]
        %v808 = vld [vmem:[%s202 + $0x10a8] sm:$0xff]
        %v809 = vld [vmem:[%s202 + $0x10b0] sm:$0xff]
        %v810 = vld [vmem:[%s202 + $0x10b8] sm:$0xff]
        %v811 = vld [vmem:[%s202 + $0x10c0] sm:$0xff]
        %v812 = vld [vmem:[%s202 + $0x10c8] sm:$0xff]
        %v813 = vld [vmem:[%s202 + $0x10d0] sm:$0xff]
        %v814 = vld [vmem:[%s202 + $0x10d8] sm:$0xff]
        %v815 = vld [vmem:[%s202 + $0x10e0] sm:$0xff]
        %v816 = vld [vmem:[%s202 + $0x10e8] sm:$0xff]
        %v817 = vld [vmem:[%s202 + $0x10f0] sm:$0xff]
        %v818 = vld [vmem:[%s202 + $0x10f8] sm:$0xff]
        %v819 = vld [vmem:[%s202 + $0x1100] sm:$0xff]
        %v820 = vld [vmem:[%s202 + $0x1108] sm:$0xff]
        %v821 = vld [vmem:[%s202 + $0x1110] sm:$0xff]
        %v822 = vld [vmem:[%s202 + $0x1118] sm:$0xff]
        %v823 = vld [vmem:[%s202 + $0x1120] sm:$0xff]
        %v824 = vld [vmem:[%s202 + $0x1128] sm:$0xff]
        %v825 = vld [vmem:[%s202 + $0x1130] sm:$0xff]
        %v826 = vld [vmem:[%s202 + $0x1138] sm:$0xff]
        %v827 = vld [vmem:[%s202 + $0x1140] sm:$0xff]
        %v828 = vld [vmem:[%s202 + $0x1148] sm:$0xff]
        %v829 = vld [vmem:[%s202 + $0x1150] sm:$0xff]
        %v830 = vld [vmem:[%s202 + $0x1158] sm:$0xff]
        %v831 = vld [vmem:[%s202 + $0x1160] sm:$0xff]
        %v832 = vld [vmem:[%s202 + $0x1168] sm:$0xff]
        %v833 = vld [vmem:[%s202 + $0x1170] sm:$0xff]
        %v834 = vld [vmem:[%s202 + $0x1178] sm:$0xff]
        %v835 = vld [vmem:[%s202 + $0x1180] sm:$0xff]
        %v836 = vld [vmem:[%s202 + $0x1188] sm:$0xff]
        %v837 = vld [vmem:[%s202 + $0x1190] sm:$0xff]
        %v838 = vld [vmem:[%s202 + $0x1198] sm:$0xff]
        %v839 = vld [vmem:[%s202 + $0x11a0] sm:$0xff]
        %v840 = vld [vmem:[%s202 + $0x11a8] sm:$0xff]
        %v841 = vld [vmem:[%s202 + $0x11b0] sm:$0xff]
        %v842 = vld [vmem:[%s202 + $0x11b8] sm:$0xff]
        %v843 = vld [vmem:[%s202 + $0x11c0] sm:$0xff]
        %v844 = vld [vmem:[%s202 + $0x11c8] sm:$0xff]
        %v845 = vld [vmem:[%s202 + $0x11d0] sm:$0xff]
        %v846 = vld [vmem:[%s202 + $0x11d8] sm:$0xff]
        %v847 = vld [vmem:[%s202 + $0x11e0] sm:$0xff]
        %v848 = vld [vmem:[%s202 + $0x11e8] sm:$0xff]
        %v849 = vld [vmem:[%s202 + $0x11f0] sm:$0xff]
        %v850 = vld [vmem:[%s202 + $0x11f8] sm:$0xff]
        %v851 = vld [vmem:[%s202 + $0x1200] sm:$0xff]
        %v852 = vld [vmem:[%s202 + $0x1208] sm:$0xff]
        %v853 = vld [vmem:[%s202 + $0x1210] sm:$0xff]
        %v854 = vld [vmem:[%s202 + $0x1218] sm:$0xff]
        %v855 = vld [vmem:[%s202 + $0x1220] sm:$0xff]
        %v856 = vld [vmem:[%s202 + $0x1228] sm:$0xff]
        %v857 = vld [vmem:[%s202 + $0x1230] sm:$0xff]
        %v858 = vld [vmem:[%s202 + $0x1238] sm:$0xff]
        %v859 = vld [vmem:[%s202 + $0x1240] sm:$0xff]
        %v860 = vld [vmem:[%s202 + $0x1248] sm:$0xff]
        %v861 = vld [vmem:[%s202 + $0x1250] sm:$0xff]
        %v862 = vld [vmem:[%s202 + $0x1258] sm:$0xff]
        %v863 = vld [vmem:[%s202 + $0x1260] sm:$0xff]
        %v864 = vld [vmem:[%s202 + $0x1268] sm:$0xff]
        %v865 = vld [vmem:[%s202 + $0x1270] sm:$0xff]
        %v866 = vld [vmem:[%s202 + $0x1278] sm:$0xff]
        %v867 = vld [vmem:[%s202 + $0x1280] sm:$0xff]
        %v868 = vld [vmem:[%s202 + $0x1288] sm:$0xff]
        %v869 = vld [vmem:[%s202 + $0x1290] sm:$0xff]
        %v870 = vld [vmem:[%s202 + $0x1298] sm:$0xff]
        %v871 = vld [vmem:[%s202 + $0x12a0] sm:$0xff]
        %v872 = vld [vmem:[%s202 + $0x12a8] sm:$0xff]
        %v873 = vld [vmem:[%s202 + $0x12b0] sm:$0xff]
        %v874 = vld [vmem:[%s202 + $0x12b8] sm:$0xff]
        %v875 = vld [vmem:[%s202 + $0x12c0] sm:$0xff]
        %v876 = vld [vmem:[%s202 + $0x12c8] sm:$0xff]
        %v877 = vld [vmem:[%s202 + $0x12d0] sm:$0xff]
        %v878 = vld [vmem:[%s202 + $0x12d8] sm:$0xff]
        %v879 = vld [vmem:[%s202 + $0x12e0] sm:$0xff]
        %v880 = vld [vmem:[%s202 + $0x12e8] sm:$0xff]
        %v881 = vld [vmem:[%s202 + $0x12f0] sm:$0xff]
        %v882 = vld [vmem:[%s202 + $0x12f8] sm:$0xff]
        %v883 = vld [vmem:[%s202 + $0x1300] sm:$0xff]
        %v884 = vld [vmem:[%s202 + $0x1308] sm:$0xff]
        %v885 = vld [vmem:[%s202 + $0x1310] sm:$0xff]
        %v886 = vld [vmem:[%s202 + $0x1318] sm:$0xff]
        %v887 = vld [vmem:[%s202 + $0x1320] sm:$0xff]
        %v888 = vld [vmem:[%s202 + $0x1328] sm:$0xff]
        %v889 = vld [vmem:[%s202 + $0x1330] sm:$0xff]
        %v890 = vld [vmem:[%s202 + $0x1338] sm:$0xff]
        %v891 = vld [vmem:[%s202 + $0x1340] sm:$0xff]
        %v892 = vld [vmem:[%s202 + $0x1348] sm:$0xff]
        %v893 = vld [vmem:[%s202 + $0x1350] sm:$0xff]
        %v894 = vld [vmem:[%s202 + $0x1358] sm:$0xff]
        %v895 = vld [vmem:[%s202 + $0x1360] sm:$0xff]
        %v896 = vld [vmem:[%s202 + $0x1368] sm:$0xff]
        %v897 = vld [vmem:[%s202 + $0x1370] sm:$0xff]
        %v898 = vld [vmem:[%s202 + $0x1378] sm:$0xff]
        %v899 = vld [vmem:[%s202 + $0x1380] sm:$0xff]
        %v900 = vld [vmem:[%s202 + $0x1388] sm:$0xff]
        %v901 = vld [vmem:[%s202 + $0x1390] sm:$0xff]
        %v902 = vld [vmem:[%s202 + $0x1398] sm:$0xff]
        %v903 = vld [vmem:[%s202 + $0x13a0] sm:$0xff]
        %v904 = vld [vmem:[%s202 + $0x13a8] sm:$0xff]
        %v905 = vld [vmem:[%s202 + $0x13b0] sm:$0xff]
        %v906 = vld [vmem:[%s202 + $0x13b8] sm:$0xff]
        %v907 = vld [vmem:[%s202 + $0x13c0] sm:$0xff]
        %v908 = vld [vmem:[%s202 + $0x13c8] sm:$0xff]
        %v909 = vld [vmem:[%s202 + $0x13d0] sm:$0xff]
        %v910 = vld [vmem:[%s202 + $0x13d8] sm:$0xff]
        %v911 = vld [vmem:[%s202 + $0x13e0] sm:$0xff]
        %v912 = vld [vmem:[%s202 + $0x13e8] sm:$0xff]
        %v913 = vld [vmem:[%s202 + $0x13f0] sm:$0xff]
        %v914 = vld [vmem:[%s202 + $0x13f8] sm:$0xff]
        %v915 = vld [vmem:[%s202 + $0x1400] sm:$0xff]
        %v916 = vld [vmem:[%s202 + $0x1408] sm:$0xff]
        %v917 = vld [vmem:[%s202 + $0x1410] sm:$0xff]
        %v918 = vld [vmem:[%s202 + $0x1418] sm:$0xff]
        %v919 = vld [vmem:[%s202 + $0x1420] sm:$0xff]
        %v920 = vld [vmem:[%s202 + $0x1428] sm:$0xff]
        %v921 = vld [vmem:[%s202 + $0x1430] sm:$0xff]
        %v922 = vld [vmem:[%s202 + $0x1438] sm:$0xff]
        %v923 = vld [vmem:[%s202 + $0x1440] sm:$0xff]
        %v924 = vld [vmem:[%s202 + $0x1448] sm:$0xff]
        %v925 = vld [vmem:[%s202 + $0x1450] sm:$0xff]
        %v926 = vld [vmem:[%s202 + $0x1458] sm:$0xff]
        %v927 = vld [vmem:[%s202 + $0x1460] sm:$0xff]
        %v928 = vld [vmem:[%s202 + $0x1468] sm:$0xff]
        %v929 = vld [vmem:[%s202 + $0x1470] sm:$0xff]
        %v930 = vld [vmem:[%s202 + $0x1478] sm:$0xff]
        %v931 = vld [vmem:[%s202 + $0x1480] sm:$0xff]
        %v932 = vld [vmem:[%s202 + $0x1488] sm:$0xff]
        %v933 = vld [vmem:[%s202 + $0x1490] sm:$0xff]
        %v934 = vld [vmem:[%s202 + $0x1498] sm:$0xff]
        %v935 = vld [vmem:[%s202 + $0x14a0] sm:$0xff]
        %v936 = vld [vmem:[%s202 + $0x14a8] sm:$0xff]
        %v937 = vld [vmem:[%s202 + $0x14b0] sm:$0xff]
        %v938 = vld [vmem:[%s202 + $0x14b8] sm:$0xff]
        %v939 = vld [vmem:[%s202 + $0x14c0] sm:$0xff]
        %v940 = vld [vmem:[%s202 + $0x14c8] sm:$0xff]
        %v941 = vld [vmem:[%s202 + $0x14d0] sm:$0xff]
        %v942 = vld [vmem:[%s202 + $0x14d8] sm:$0xff]
        %v943 = vld [vmem:[%s202 + $0x14e0] sm:$0xff]
        %v944 = vld [vmem:[%s202 + $0x14e8] sm:$0xff]
        %v945 = vld [vmem:[%s202 + $0x14f0] sm:$0xff]
        %v946 = vld [vmem:[%s202 + $0x14f8] sm:$0xff]
        %v947 = vld [vmem:[%s202 + $0x1500] sm:$0xff]
        %v948 = vld [vmem:[%s202 + $0x1508] sm:$0xff]
        %v949 = vld [vmem:[%s202 + $0x1510] sm:$0xff]
        %v950 = vld [vmem:[%s202 + $0x1518] sm:$0xff]
        %v951 = vld [vmem:[%s202 + $0x1520] sm:$0xff]
        %v952 = vld [vmem:[%s202 + $0x1528] sm:$0xff]
        %v953 = vld [vmem:[%s202 + $0x1530] sm:$0xff]
        %v954 = vld [vmem:[%s202 + $0x1538] sm:$0xff]
        %v955 = vld [vmem:[%s202 + $0x1540] sm:$0xff]
        %v956 = vld [vmem:[%s202 + $0x1548] sm:$0xff]
        %v957 = vld [vmem:[%s202 + $0x1550] sm:$0xff]
        %v958 = vld [vmem:[%s202 + $0x1558] sm:$0xff]
        %v959 = vld [vmem:[%s202 + $0x1560] sm:$0xff]
        %v960 = vld [vmem:[%s202 + $0x1568] sm:$0xff]
        %v961 = vld [vmem:[%s202 + $0x1570] sm:$0xff]
        %v962 = vld [vmem:[%s202 + $0x1578] sm:$0xff]
        %v963 = vld [vmem:[%s202 + $0x1580] sm:$0xff]
        %v964 = vld [vmem:[%s202 + $0x1588] sm:$0xff]
        %v965 = vld [vmem:[%s202 + $0x1590] sm:$0xff]
        %v966 = vld [vmem:[%s202 + $0x1598] sm:$0xff]
        %v967 = vld [vmem:[%s202 + $0x15a0] sm:$0xff]
        %v968 = vld [vmem:[%s202 + $0x15a8] sm:$0xff]
        %v969 = vld [vmem:[%s202 + $0x15b0] sm:$0xff]
        %v970 = vld [vmem:[%s202 + $0x15b8] sm:$0xff]
        %v971 = vld [vmem:[%s202 + $0x15c0] sm:$0xff]
        %v972 = vld [vmem:[%s202 + $0x15c8] sm:$0xff]
        %v973 = vld [vmem:[%s202 + $0x15d0] sm:$0xff]
        %v974 = vld [vmem:[%s202 + $0x15d8] sm:$0xff]
        %v975 = vld [vmem:[%s202 + $0x15e0] sm:$0xff]
        %v976 = vld [vmem:[%s202 + $0x15e8] sm:$0xff]
        %v977 = vld [vmem:[%s202 + $0x15f0] sm:$0xff]
        %v978 = vld [vmem:[%s202 + $0x15f8] sm:$0xff]
        %v979 = vld [vmem:[%s202 + $0x1600] sm:$0xff]
        %v980 = vld [vmem:[%s202 + $0x1608] sm:$0xff]
        %v981 = vld [vmem:[%s202 + $0x1610] sm:$0xff]
        %v982 = vld [vmem:[%s202 + $0x1618] sm:$0xff]
        %v983 = vld [vmem:[%s202 + $0x1620] sm:$0xff]
        %v984 = vld [vmem:[%s202 + $0x1628] sm:$0xff]
        %v985 = vld [vmem:[%s202 + $0x1630] sm:$0xff]
        %v986 = vld [vmem:[%s202 + $0x1638] sm:$0xff]
        %v987 = vld [vmem:[%s202 + $0x1640] sm:$0xff]
        %v988 = vld [vmem:[%s202 + $0x1648] sm:$0xff]
        %v989 = vld [vmem:[%s202 + $0x1650] sm:$0xff]
        %v990 = vld [vmem:[%s202 + $0x1658] sm:$0xff]
        %v991 = vld [vmem:[%s202 + $0x1660] sm:$0xff]
        %v992 = vld [vmem:[%s202 + $0x1668] sm:$0xff]
        %v993 = vld [vmem:[%s202 + $0x1670] sm:$0xff]
        %v994 = vld [vmem:[%s202 + $0x1678] sm:$0xff]
        %v995 = vld [vmem:[%s202 + $0x1680] sm:$0xff]
        %v996 = vld [vmem:[%s202 + $0x1688] sm:$0xff]
        %v997 = vld [vmem:[%s202 + $0x1690] sm:$0xff]
        %v998 = vld [vmem:[%s202 + $0x1698] sm:$0xff]
        %v999 = vld [vmem:[%s202 + $0x16a0] sm:$0xff]
        %v1000 = vld [vmem:[%s202 + $0x16a8] sm:$0xff]
        %v1001 = vld [vmem:[%s202 + $0x16b0] sm:$0xff]
        %v1002 = vld [vmem:[%s202 + $0x16b8] sm:$0xff]
        %v1003 = vld [vmem:[%s202 + $0x16c0] sm:$0xff]
        %v1004 = vld [vmem:[%s202 + $0x16c8] sm:$0xff]
        %v1005 = vld [vmem:[%s202 + $0x16d0] sm:$0xff]
        %v1006 = vld [vmem:[%s202 + $0x16d8] sm:$0xff]
        %v1007 = vld [vmem:[%s202 + $0x16e0] sm:$0xff]
        %v1008 = vld [vmem:[%s202 + $0x16e8] sm:$0xff]
        %v1009 = vld [vmem:[%s202 + $0x16f0] sm:$0xff]
        %v1010 = vld [vmem:[%s202 + $0x16f8] sm:$0xff]
        %v1011 = vld [vmem:[%s202 + $0x1700] sm:$0xff]
        %v1012 = vld [vmem:[%s202 + $0x1708] sm:$0xff]
        %v1013 = vld [vmem:[%s202 + $0x1710] sm:$0xff]
        %v1014 = vld [vmem:[%s202 + $0x1718] sm:$0xff]
        %v1015 = vld [vmem:[%s202 + $0x1720] sm:$0xff]
        %v1016 = vld [vmem:[%s202 + $0x1728] sm:$0xff]
        %v1017 = vld [vmem:[%s202 + $0x1730] sm:$0xff]
        %v1018 = vld [vmem:[%s202 + $0x1738] sm:$0xff]
        %v1019 = vld [vmem:[%s202 + $0x1740] sm:$0xff]
        %v1020 = vld [vmem:[%s202 + $0x1748] sm:$0xff]
        %v1021 = vld [vmem:[%s202 + $0x1750] sm:$0xff]
        %v1022 = vld [vmem:[%s202 + $0x1758] sm:$0xff]
        %v1023 = vld [vmem:[%s202 + $0x1760] sm:$0xff]
        %v1024 = vld [vmem:[%s202 + $0x1768] sm:$0xff]
        %v1025 = vld [vmem:[%s202 + $0x1770] sm:$0xff]
        %v1026 = vld [vmem:[%s202 + $0x1778] sm:$0xff]
        %v1027 = vld [vmem:[%s202 + $0x1780] sm:$0xff]
        %v1028 = vld [vmem:[%s202 + $0x1788] sm:$0xff]
        %v1029 = vld [vmem:[%s202 + $0x1790] sm:$0xff]
        %v1030 = vld [vmem:[%s202 + $0x1798] sm:$0xff]
        %v1031 = vld [vmem:[%s202 + $0x17a0] sm:$0xff]
        %v1032 = vld [vmem:[%s202 + $0x17a8] sm:$0xff]
        %v1033 = vld [vmem:[%s202 + $0x17b0] sm:$0xff]
        %v1034 = vld [vmem:[%s202 + $0x17b8] sm:$0xff]
        %v1035 = vld [vmem:[%s202 + $0x17c0] sm:$0xff]
        %v1036 = vld [vmem:[%s202 + $0x17c8] sm:$0xff]
        %v1037 = vld [vmem:[%s202 + $0x17d0] sm:$0xff]
        %v1038 = vld [vmem:[%s202 + $0x17d8] sm:$0xff]
        %v1039 = vld [vmem:[%s202 + $0x17e0] sm:$0xff]
        %v1040 = vld [vmem:[%s202 + $0x17e8] sm:$0xff]
        %v1041 = vld [vmem:[%s202 + $0x17f0] sm:$0xff]
        %v1042 = vld [vmem:[%s202 + $0x17f8] sm:$0xff]
        %v1043 = vld [vmem:[%s202 + $0x1800] sm:$0xff]
        %v1044 = vld [vmem:[%s202 + $0x1808] sm:$0xff]
        %v1045 = vld [vmem:[%s202 + $0x1810] sm:$0xff]
        %v1046 = vld [vmem:[%s202 + $0x1818] sm:$0xff]
        %v1047 = vld [vmem:[%s202 + $0x1820] sm:$0xff]
        %v1048 = vld [vmem:[%s202 + $0x1828] sm:$0xff]
        %v1049 = vld [vmem:[%s202 + $0x1830] sm:$0xff]
        %v1050 = vld [vmem:[%s202 + $0x1838] sm:$0xff]
        %v1051 = vld [vmem:[%s202 + $0x1840] sm:$0xff]
        %v1052 = vld [vmem:[%s202 + $0x1848] sm:$0xff]
        %v1053 = vld [vmem:[%s202 + $0x1850] sm:$0xff]
        %v1054 = vld [vmem:[%s202 + $0x1858] sm:$0xff]
        %v1055 = vld [vmem:[%s202 + $0x1860] sm:$0xff]
        %v1056 = vld [vmem:[%s202 + $0x1868] sm:$0xff]
        %v1057 = vld [vmem:[%s202 + $0x1870] sm:$0xff]
        %v1058 = vld [vmem:[%s202 + $0x1878] sm:$0xff]
        %v1059 = vld [vmem:[%s202 + $0x1880] sm:$0xff]
        %v1060 = vld [vmem:[%s202 + $0x1888] sm:$0xff]
        %v1061 = vld [vmem:[%s202 + $0x1890] sm:$0xff]
        %v1062 = vld [vmem:[%s202 + $0x1898] sm:$0xff]
        %v1063 = vld [vmem:[%s202 + $0x18a0] sm:$0xff]
        %v1064 = vld [vmem:[%s202 + $0x18a8] sm:$0xff]
        %v1065 = vld [vmem:[%s202 + $0x18b0] sm:$0xff]
        %v1066 = vld [vmem:[%s202 + $0x18b8] sm:$0xff]
        %v1067 = vld [vmem:[%s202 + $0x18c0] sm:$0xff]
        %v1068 = vld [vmem:[%s202 + $0x18c8] sm:$0xff]
        %v1069 = vld [vmem:[%s202 + $0x18d0] sm:$0xff]
        %v1070 = vld [vmem:[%s202 + $0x18d8] sm:$0xff]
        %v1071 = vld [vmem:[%s202 + $0x18e0] sm:$0xff]
        %v1072 = vld [vmem:[%s202 + $0x18e8] sm:$0xff]
        %v1073 = vld [vmem:[%s202 + $0x18f0] sm:$0xff]
        %v1074 = vld [vmem:[%s202 + $0x18f8] sm:$0xff]
        %v1075 = vld [vmem:[%s202 + $0x1900] sm:$0xff]
        %v1076 = vld [vmem:[%s202 + $0x1908] sm:$0xff]
        %v1077 = vld [vmem:[%s202 + $0x1910] sm:$0xff]
        %v1078 = vld [vmem:[%s202 + $0x1918] sm:$0xff]
        %v1079 = vld [vmem:[%s202 + $0x1920] sm:$0xff]
        %v1080 = vld [vmem:[%s202 + $0x1928] sm:$0xff]
        %v1081 = vld [vmem:[%s202 + $0x1930] sm:$0xff]
        %v1082 = vld [vmem:[%s202 + $0x1938] sm:$0xff]
        %v1083 = vld [vmem:[%s202 + $0x1940] sm:$0xff]
        %v1084 = vld [vmem:[%s202 + $0x1948] sm:$0xff]
        %v1085 = vld [vmem:[%s202 + $0x1950] sm:$0xff]
        %v1086 = vld [vmem:[%s202 + $0x1958] sm:$0xff]
        %v1087 = vld [vmem:[%s202 + $0x1960] sm:$0xff]
        %v1088 = vld [vmem:[%s202 + $0x1968] sm:$0xff]
        %v1089 = vld [vmem:[%s202 + $0x1970] sm:$0xff]
        %v1090 = vld [vmem:[%s202 + $0x1978] sm:$0xff]
        %v1091 = vld [vmem:[%s202 + $0x1980] sm:$0xff]
        %v1092 = vld [vmem:[%s202 + $0x1988] sm:$0xff]
        %v1093 = vld [vmem:[%s202 + $0x1990] sm:$0xff]
        %v1094 = vld [vmem:[%s202 + $0x1998] sm:$0xff]
        %v1095 = vld [vmem:[%s202 + $0x19a0] sm:$0xff]
        %v1096 = vld [vmem:[%s202 + $0x19a8] sm:$0xff]
        %v1097 = vld [vmem:[%s202 + $0x19b0] sm:$0xff]
        %v1098 = vld [vmem:[%s202 + $0x19b8] sm:$0xff]
        %v1099 = vld [vmem:[%s202 + $0x19c0] sm:$0xff]
        %v1100 = vld [vmem:[%s202 + $0x19c8] sm:$0xff]
        %v1101 = vld [vmem:[%s202 + $0x19d0] sm:$0xff]
        %v1102 = vld [vmem:[%s202 + $0x19d8] sm:$0xff]
        %v1103 = vld [vmem:[%s202 + $0x19e0] sm:$0xff]
        %v1104 = vld [vmem:[%s202 + $0x19e8] sm:$0xff]
        %v1105 = vld [vmem:[%s202 + $0x19f0] sm:$0xff]
        %v1106 = vld [vmem:[%s202 + $0x19f8] sm:$0xff]
        %v1107 = vld [vmem:[%s202 + $0x1a00] sm:$0xff]
        %v1108 = vld [vmem:[%s202 + $0x1a08] sm:$0xff]
        %v1109 = vld [vmem:[%s202 + $0x1a10] sm:$0xff]
        %v1110 = vld [vmem:[%s202 + $0x1a18] sm:$0xff]
        %v1111 = vld [vmem:[%s202 + $0x1a20] sm:$0xff]
        %v1112 = vld [vmem:[%s202 + $0x1a28] sm:$0xff]
        %v1113 = vld [vmem:[%s202 + $0x1a30] sm:$0xff]
        %v1114 = vld [vmem:[%s202 + $0x1a38] sm:$0xff]
        %v1115 = vld [vmem:[%s202 + $0x1a40] sm:$0xff]
        %v1116 = vld [vmem:[%s202 + $0x1a48] sm:$0xff]
        %v1117 = vld [vmem:[%s202 + $0x1a50] sm:$0xff]
        %v1118 = vld [vmem:[%s202 + $0x1a58] sm:$0xff]
        %v1119 = vld [vmem:[%s202 + $0x1a60] sm:$0xff]
        %v1120 = vld [vmem:[%s202 + $0x1a68] sm:$0xff]
        %v1121 = vld [vmem:[%s202 + $0x1a70] sm:$0xff]
        %v1122 = vld [vmem:[%s202 + $0x1a78] sm:$0xff]
        %v1123 = vld [vmem:[%s202 + $0x1a80] sm:$0xff]
        %v1124 = vld [vmem:[%s202 + $0x1a88] sm:$0xff]
        %v1125 = vld [vmem:[%s202 + $0x1a90] sm:$0xff]
        %v1126 = vld [vmem:[%s202 + $0x1a98] sm:$0xff]
        %v1127 = vld [vmem:[%s202 + $0x1aa0] sm:$0xff]
        %v1128 = vld [vmem:[%s202 + $0x1aa8] sm:$0xff]
        %v1129 = vld [vmem:[%s202 + $0x1ab0] sm:$0xff]
        %v1130 = vld [vmem:[%s202 + $0x1ab8] sm:$0xff]
        %v1131 = vld [vmem:[%s202 + $0x1ac0] sm:$0xff]
        %v1132 = vld [vmem:[%s202 + $0x1ac8] sm:$0xff]
        %v1133 = vld [vmem:[%s202 + $0x1ad0] sm:$0xff]
        %v1134 = vld [vmem:[%s202 + $0x1ad8] sm:$0xff]
        %v1135 = vld [vmem:[%s202 + $0x1ae0] sm:$0xff]
        %v1136 = vld [vmem:[%s202 + $0x1ae8] sm:$0xff]
        %v1137 = vld [vmem:[%s202 + $0x1af0] sm:$0xff]
        %v1138 = vld [vmem:[%s202 + $0x1af8] sm:$0xff]
        %v1139 = vld [vmem:[%s202 + $0x1b00] sm:$0xff]
        %v1140 = vld [vmem:[%s202 + $0x1b08] sm:$0xff]
        %v1141 = vld [vmem:[%s202 + $0x1b10] sm:$0xff]
        %v1142 = vld [vmem:[%s202 + $0x1b18] sm:$0xff]
        %v1143 = vld [vmem:[%s202 + $0x1b20] sm:$0xff]
        %v1144 = vld [vmem:[%s202 + $0x1b28] sm:$0xff]
        %v1145 = vld [vmem:[%s202 + $0x1b30] sm:$0xff]
        %v1146 = vld [vmem:[%s202 + $0x1b38] sm:$0xff]
        %v1147 = vld [vmem:[%s202 + $0x1b40] sm:$0xff]
        %v1148 = vld [vmem:[%s202 + $0x1b48] sm:$0xff]
        %v1149 = vld [vmem:[%s202 + $0x1b50] sm:$0xff]
        %v1150 = vld [vmem:[%s202 + $0x1b58] sm:$0xff]
        %v1151 = vld [vmem:[%s202 + $0x1b60] sm:$0xff]
        %v1152 = vld [vmem:[%s202 + $0x1b68] sm:$0xff]
        %v1153 = vld [vmem:[%s202 + $0x1b70] sm:$0xff]
        %v1154 = vld [vmem:[%s202 + $0x1b78] sm:$0xff]
        %v1155 = vld [vmem:[%s202 + $0x1b80] sm:$0xff]
        %v1156 = vld [vmem:[%s202 + $0x1b88] sm:$0xff]
        %v1157 = vld [vmem:[%s202 + $0x1b90] sm:$0xff]
        %v1158 = vld [vmem:[%s202 + $0x1b98] sm:$0xff]
        %v1159 = vld [vmem:[%s202 + $0x1ba0] sm:$0xff]
        %v1160 = vld [vmem:[%s202 + $0x1ba8] sm:$0xff]
        %v1161 = vld [vmem:[%s202 + $0x1bb0] sm:$0xff]
        %v1162 = vld [vmem:[%s202 + $0x1bb8] sm:$0xff]
        %v1163 = vld [vmem:[%s202 + $0x1bc0] sm:$0xff]
        %v1164 = vld [vmem:[%s202 + $0x1bc8] sm:$0xff]
        %v1165 = vld [vmem:[%s202 + $0x1bd0] sm:$0xff]
        %v1166 = vld [vmem:[%s202 + $0x1bd8] sm:$0xff]
        %v1167 = vld [vmem:[%s202 + $0x1be0] sm:$0xff]
        %v1168 = vld [vmem:[%s202 + $0x1be8] sm:$0xff]
        %v1169 = vld [vmem:[%s202 + $0x1bf0] sm:$0xff]
        %v1170 = vld [vmem:[%s202 + $0x1bf8] sm:$0xff]
        %v1171 = vld [vmem:[%s202 + $0x1c00] sm:$0xff]
        %v1172 = vld [vmem:[%s202 + $0x1c08] sm:$0xff]
        %v1173 = vld [vmem:[%s202 + $0x1c10] sm:$0xff]
        %v1174 = vld [vmem:[%s202 + $0x1c18] sm:$0xff]
        %v1175 = vld [vmem:[%s202 + $0x1c20] sm:$0xff]
        %v1176 = vld [vmem:[%s202 + $0x1c28] sm:$0xff]
        %v1177 = vld [vmem:[%s202 + $0x1c30] sm:$0xff]
        %v1178 = vld [vmem:[%s202 + $0x1c38] sm:$0xff]
        %v1179 = vld [vmem:[%s202 + $0x1c40] sm:$0xff]
        %v1180 = vld [vmem:[%s202 + $0x1c48] sm:$0xff]
        %v1181 = vld [vmem:[%s202 + $0x1c50] sm:$0xff]
        %v1182 = vld [vmem:[%s202 + $0x1c58] sm:$0xff]
        %v1183 = vld [vmem:[%s202 + $0x1c60] sm:$0xff]
        %v1184 = vld [vmem:[%s202 + $0x1c68] sm:$0xff]
        %v1185 = vld [vmem:[%s202 + $0x1c70] sm:$0xff]
        %v1186 = vld [vmem:[%s202 + $0x1c78] sm:$0xff]
        %v1187 = vld [vmem:[%s202 + $0x1c80] sm:$0xff]
        %v1188 = vld [vmem:[%s202 + $0x1c88] sm:$0xff]
        %v1189 = vld [vmem:[%s202 + $0x1c90] sm:$0xff]
        %v1190 = vld [vmem:[%s202 + $0x1c98] sm:$0xff]
        %v1191 = vld [vmem:[%s202 + $0x1ca0] sm:$0xff]
        %v1192 = vld [vmem:[%s202 + $0x1ca8] sm:$0xff]
        %v1193 = vld [vmem:[%s202 + $0x1cb0] sm:$0xff]
        %v1194 = vld [vmem:[%s202 + $0x1cb8] sm:$0xff]
        %v1195 = vld [vmem:[%s202 + $0x1cc0] sm:$0xff]
        %v1196 = vld [vmem:[%s202 + $0x1cc8] sm:$0xff]
        %v1197 = vld [vmem:[%s202 + $0x1cd0] sm:$0xff]
        %v1198 = vld [vmem:[%s202 + $0x1cd8] sm:$0xff]
        %v1199 = vld [vmem:[%s202 + $0x1ce0] sm:$0xff]
        %v1200 = vld [vmem:[%s202 + $0x1ce8] sm:$0xff]
        %v1201 = vld [vmem:[%s202 + $0x1cf0] sm:$0xff]
        %v1202 = vld [vmem:[%s202 + $0x1cf8] sm:$0xff]
        %v1203 = vld [vmem:[%s202 + $0x1d00] sm:$0xff]
        %v1204 = vld [vmem:[%s202 + $0x1d08] sm:$0xff]
        %v1205 = vld [vmem:[%s202 + $0x1d10] sm:$0xff]
        %v1206 = vld [vmem:[%s202 + $0x1d18] sm:$0xff]
        %v1207 = vld [vmem:[%s202 + $0x1d20] sm:$0xff]
        %v1208 = vld [vmem:[%s202 + $0x1d28] sm:$0xff]
        %v1209 = vld [vmem:[%s202 + $0x1d30] sm:$0xff]
        %v1210 = vld [vmem:[%s202 + $0x1d38] sm:$0xff]
        %v1211 = vld [vmem:[%s202 + $0x1d40] sm:$0xff]
        %v1212 = vld [vmem:[%s202 + $0x1d48] sm:$0xff]
        %v1213 = vld [vmem:[%s202 + $0x1d50] sm:$0xff]
        %v1214 = vld [vmem:[%s202 + $0x1d58] sm:$0xff]
        %v1215 = vld [vmem:[%s202 + $0x1d60] sm:$0xff]
        %v1216 = vld [vmem:[%s202 + $0x1d68] sm:$0xff]
        %v1217 = vld [vmem:[%s202 + $0x1d70] sm:$0xff]
        %v1218 = vld [vmem:[%s202 + $0x1d78] sm:$0xff]
        %v1219 = vld [vmem:[%s202 + $0x1d80] sm:$0xff]
        %v1220 = vld [vmem:[%s202 + $0x1d88] sm:$0xff]
        %v1221 = vld [vmem:[%s202 + $0x1d90] sm:$0xff]
        %v1222 = vld [vmem:[%s202 + $0x1d98] sm:$0xff]
        %v1223 = vld [vmem:[%s202 + $0x1da0] sm:$0xff]
        %v1224 = vld [vmem:[%s202 + $0x1da8] sm:$0xff]
        %v1225 = vld [vmem:[%s202 + $0x1db0] sm:$0xff]
        %v1226 = vld [vmem:[%s202 + $0x1db8] sm:$0xff]
        %v1227 = vld [vmem:[%s202 + $0x1dc0] sm:$0xff]
        %v1228 = vld [vmem:[%s202 + $0x1dc8] sm:$0xff]
        %v1229 = vld [vmem:[%s202 + $0x1dd0] sm:$0xff]
        %v1230 = vld [vmem:[%s202 + $0x1dd8] sm:$0xff]
        %v1231 = vld [vmem:[%s202 + $0x1de0] sm:$0xff]
        %v1232 = vld [vmem:[%s202 + $0x1de8] sm:$0xff]
        %v1233 = vld [vmem:[%s202 + $0x1df0] sm:$0xff]
        %v1234 = vld [vmem:[%s202 + $0x1df8] sm:$0xff]
        %v1235 = vld [vmem:[%s202 + $0x1e00] sm:$0xff]
        %v1236 = vld [vmem:[%s202 + $0x1e08] sm:$0xff]
        %v1237 = vld [vmem:[%s202 + $0x1e10] sm:$0xff]
        %v1238 = vld [vmem:[%s202 + $0x1e18] sm:$0xff]
        %v1239 = vld [vmem:[%s202 + $0x1e20] sm:$0xff]
        %v1240 = vld [vmem:[%s202 + $0x1e28] sm:$0xff]
        %v1241 = vld [vmem:[%s202 + $0x1e30] sm:$0xff]
        %v1242 = vld [vmem:[%s202 + $0x1e38] sm:$0xff]
        %v1243 = vld [vmem:[%s202 + $0x1e40] sm:$0xff]
        %v1244 = vld [vmem:[%s202 + $0x1e48] sm:$0xff]
        %v1245 = vld [vmem:[%s202 + $0x1e50] sm:$0xff]
        %v1246 = vld [vmem:[%s202 + $0x1e58] sm:$0xff]
        %v1247 = vld [vmem:[%s202 + $0x1e60] sm:$0xff]
        %v1248 = vld [vmem:[%s202 + $0x1e68] sm:$0xff]
        %v1249 = vld [vmem:[%s202 + $0x1e70] sm:$0xff]
        %v1250 = vld [vmem:[%s202 + $0x1e78] sm:$0xff]
        %v1251 = vld [vmem:[%s202 + $0x1e80] sm:$0xff]
        %v1252 = vld [vmem:[%s202 + $0x1e88] sm:$0xff]
        %v1253 = vld [vmem:[%s202 + $0x1e90] sm:$0xff]
        %v1254 = vld [vmem:[%s202 + $0x1e98] sm:$0xff]
        %v1255 = vld [vmem:[%s202 + $0x1ea0] sm:$0xff]
        %v1256 = vld [vmem:[%s202 + $0x1ea8] sm:$0xff]
        %v1257 = vld [vmem:[%s202 + $0x1eb0] sm:$0xff]
        %v1258 = vld [vmem:[%s202 + $0x1eb8] sm:$0xff]
        %v1259 = vld [vmem:[%s202 + $0x1ec0] sm:$0xff]
        %v1260 = vld [vmem:[%s202 + $0x1ec8] sm:$0xff]
        %v1261 = vld [vmem:[%s202 + $0x1ed0] sm:$0xff]
        %v1262 = vld [vmem:[%s202 + $0x1ed8] sm:$0xff]
        %v1263 = vld [vmem:[%s202 + $0x1ee0] sm:$0xff]
        %v1264 = vld [vmem:[%s202 + $0x1ee8] sm:$0xff]
        %v1265 = vld [vmem:[%s202 + $0x1ef0] sm:$0xff]
        %v1266 = vld [vmem:[%s202 + $0x1ef8] sm:$0xff]
        %v1267 = vld [vmem:[%s202 + $0x1f00] sm:$0xff]
        %v1268 = vld [vmem:[%s202 + $0x1f08] sm:$0xff]
        %v1269 = vld [vmem:[%s202 + $0x1f10] sm:$0xff]
        %v1270 = vld [vmem:[%s202 + $0x1f18] sm:$0xff]
        %v1271 = vld [vmem:[%s202 + $0x1f20] sm:$0xff]
        %v1272 = vld [vmem:[%s202 + $0x1f28] sm:$0xff]
        %v1273 = vld [vmem:[%s202 + $0x1f30] sm:$0xff]
        %v1274 = vld [vmem:[%s202 + $0x1f38] sm:$0xff]
        %v1275 = vld [vmem:[%s202 + $0x1f40] sm:$0xff]
        %v1276 = vld [vmem:[%s202 + $0x1f48] sm:$0xff]
        %v1277 = vld [vmem:[%s202 + $0x1f50] sm:$0xff]
        %v1278 = vld [vmem:[%s202 + $0x1f58] sm:$0xff]
        %v1279 = vld [vmem:[%s202 + $0x1f60] sm:$0xff]
        %v1280 = vld [vmem:[%s202 + $0x1f68] sm:$0xff]
        %v1281 = vld [vmem:[%s202 + $0x1f70] sm:$0xff]
        %v1282 = vld [vmem:[%s202 + $0x1f78] sm:$0xff]
        %v1283 = vld [vmem:[%s202 + $0x1f80] sm:$0xff]
        %v1284 = vld [vmem:[%s202 + $0x1f88] sm:$0xff]
        %v1285 = vld [vmem:[%s202 + $0x1f90] sm:$0xff]
        %v1286 = vld [vmem:[%s202 + $0x1f98] sm:$0xff]
        %v1287 = vld [vmem:[%s202 + $0x1fa0] sm:$0xff]
        %v1288 = vld [vmem:[%s202 + $0x1fa8] sm:$0xff]
        %v1289 = vld [vmem:[%s202 + $0x1fb0] sm:$0xff]
        %v1290 = vld [vmem:[%s202 + $0x1fb8] sm:$0xff]
        %v1291 = vld [vmem:[%s202 + $0x1fc0] sm:$0xff]
        %v1292 = vld [vmem:[%s202 + $0x1fc8] sm:$0xff]
        %v1293 = vld [vmem:[%s202 + $0x1fd0] sm:$0xff]
        %v1294 = vld [vmem:[%s202 + $0x1fd8] sm:$0xff]
        %v1295 = vld [vmem:[%s202 + $0x1fe0] sm:$0xff]
        %v1296 = vld [vmem:[%s202 + $0x1fe8] sm:$0xff]
        %v1297 = vld [vmem:[%s202 + $0x1ff0] sm:$0xff]
        %v1298 = vld [vmem:[%s202 + $0x1ff8] sm:$0xff]
        %v1307 = vcombine.high %v267, %v267
        %v1309 = vunpack.c.l.s4 1966171168
        %v1310 = vunpack.c.0.s8 %v1309
        %v1311 = vlaneseq
        %v1312 = vshrl.u32 %v1311, 7
        %v1313 = vsub.s32 %v1310, %v1312
        %v1314 = vrot.slane %v267, %v1313
        %v1316 = vunpack.c.l.s4 1966171168
        %v1317 = vunpack.c.0.s8 %v1316
        %v1318 = vlaneseq
        %v1319 = vshrl.u32 %v1318, 7
        %v1320 = vsub.s32 %v1317, %v1319
        %v1321 = vrot.slane %v1307, %v1320
        %v1322 = vcombine.high %v1314, %v1314
        %v1323 = vcombine.high %v1321, %v1321
        %v1325 = vunpack.c.l.s4 1966171168
        %v1326 = vunpack.c.0.s8 %v1325
        %v1327 = vlaneseq
        %v1328 = vshrl.u32 %v1327, 7
        %v1329 = vsub.s32 %v1326, %v1328
        %v1330 = vrot.slane %v1314, %v1329
        %v1332 = vunpack.c.l.s4 1966171168
        %v1333 = vunpack.c.0.s8 %v1332
        %v1334 = vlaneseq
        %v1335 = vshrl.u32 %v1334, 7
        %v1336 = vsub.s32 %v1333, %v1335
        %v1337 = vrot.slane %v1321, %v1336
        %v1339 = vunpack.c.l.s4 1966171168
        %v1340 = vunpack.c.0.s8 %v1339
        %v1341 = vlaneseq
        %v1342 = vshrl.u32 %v1341, 7
        %v1343 = vsub.s32 %v1340, %v1342
        %v1344 = vrot.slane %v1322, %v1343
        %v1346 = vunpack.c.l.s4 1966171168
        %v1347 = vunpack.c.0.s8 %v1346
        %v1348 = vlaneseq
        %v1349 = vshrl.u32 %v1348, 7
        %v1350 = vsub.s32 %v1347, %v1349
        %v1351 = vrot.slane %v1323, %v1350
        %v1352 = vcombine.high %v1330, %v1330
        %v1353 = vcombine.high %v1337, %v1337
        %v1354 = vcombine.high %v1344, %v1344
        %v1355 = vcombine.high %v1351, %v1351
        %v1356 = vcombine.high %v268, %v268
        %v1358 = vunpack.c.l.s4 1966171168
        %v1359 = vunpack.c.0.s8 %v1358
        %v1360 = vlaneseq
        %v1361 = vshrl.u32 %v1360, 7
        %v1362 = vsub.s32 %v1359, %v1361
        %v1363 = vrot.slane %v268, %v1362
        %v1365 = vunpack.c.l.s4 1966171168
        %v1366 = vunpack.c.0.s8 %v1365
        %v1367 = vlaneseq
        %v1368 = vshrl.u32 %v1367, 7
        %v1369 = vsub.s32 %v1366, %v1368
        %v1370 = vrot.slane %v1356, %v1369
        %v1371 = vcombine.high %v1363, %v1363
        %v1372 = vcombine.high %v1370, %v1370
        %v1374 = vunpack.c.l.s4 1966171168
        %v1375 = vunpack.c.0.s8 %v1374
        %v1376 = vlaneseq
        %v1377 = vshrl.u32 %v1376, 7
        %v1378 = vsub.s32 %v1375, %v1377
        %v1379 = vrot.slane %v1363, %v1378
        %v1381 = vunpack.c.l.s4 1966171168
        %v1382 = vunpack.c.0.s8 %v1381
        %v1383 = vlaneseq
        %v1384 = vshrl.u32 %v1383, 7
        %v1385 = vsub.s32 %v1382, %v1384
        %v1386 = vrot.slane %v1370, %v1385
        %v1388 = vunpack.c.l.s4 1966171168
        %v1389 = vunpack.c.0.s8 %v1388
        %v1390 = vlaneseq
        %v1391 = vshrl.u32 %v1390, 7
        %v1392 = vsub.s32 %v1389, %v1391
        %v1393 = vrot.slane %v1371, %v1392
        %v1395 = vunpack.c.l.s4 1966171168
        %v1396 = vunpack.c.0.s8 %v1395
        %v1397 = vlaneseq
        %v1398 = vshrl.u32 %v1397, 7
        %v1399 = vsub.s32 %v1396, %v1398
        %v1400 = vrot.slane %v1372, %v1399
        %v1401 = vcombine.high %v1379, %v1379
        %v1402 = vcombine.high %v1386, %v1386
        %v1403 = vcombine.high %v1393, %v1393
        %v1404 = vcombine.high %v1400, %v1400
        %v1405 = vcombine.high %v269, %v269
        %v1407 = vunpack.c.l.s4 1966171168
        %v1408 = vunpack.c.0.s8 %v1407
        %v1409 = vlaneseq
        %v1410 = vshrl.u32 %v1409, 7
        %v1411 = vsub.s32 %v1408, %v1410
        %v1412 = vrot.slane %v269, %v1411
        %v1414 = vunpack.c.l.s4 1966171168
        %v1415 = vunpack.c.0.s8 %v1414
        %v1416 = vlaneseq
        %v1417 = vshrl.u32 %v1416, 7
        %v1418 = vsub.s32 %v1415, %v1417
        %v1419 = vrot.slane %v1405, %v1418
        %v1420 = vcombine.high %v1412, %v1412
        %v1421 = vcombine.high %v1419, %v1419
        %v1423 = vunpack.c.l.s4 1966171168
        %v1424 = vunpack.c.0.s8 %v1423
        %v1425 = vlaneseq
        %v1426 = vshrl.u32 %v1425, 7
        %v1427 = vsub.s32 %v1424, %v1426
        %v1428 = vrot.slane %v1412, %v1427
        %v1430 = vunpack.c.l.s4 1966171168
        %v1431 = vunpack.c.0.s8 %v1430
        %v1432 = vlaneseq
        %v1433 = vshrl.u32 %v1432, 7
        %v1434 = vsub.s32 %v1431, %v1433
        %v1435 = vrot.slane %v1419, %v1434
        %v1437 = vunpack.c.l.s4 1966171168
        %v1438 = vunpack.c.0.s8 %v1437
        %v1439 = vlaneseq
        %v1440 = vshrl.u32 %v1439, 7
        %v1441 = vsub.s32 %v1438, %v1440
        %v1442 = vrot.slane %v1420, %v1441
        %v1444 = vunpack.c.l.s4 1966171168
        %v1445 = vunpack.c.0.s8 %v1444
        %v1446 = vlaneseq
        %v1447 = vshrl.u32 %v1446, 7
        %v1448 = vsub.s32 %v1445, %v1447
        %v1449 = vrot.slane %v1421, %v1448
        %v1450 = vcombine.high %v1428, %v1428
        %v1451 = vcombine.high %v1435, %v1435
        %v1452 = vcombine.high %v1442, %v1442
        %v1453 = vcombine.high %v1449, %v1449
        %v1454 = vcombine.high %v270, %v270
        %v1456 = vunpack.c.l.s4 1966171168
        %v1457 = vunpack.c.0.s8 %v1456
        %v1458 = vlaneseq
        %v1459 = vshrl.u32 %v1458, 7
        %v1460 = vsub.s32 %v1457, %v1459
        %v1461 = vrot.slane %v270, %v1460
        %v1463 = vunpack.c.l.s4 1966171168
        %v1464 = vunpack.c.0.s8 %v1463
        %v1465 = vlaneseq
        %v1466 = vshrl.u32 %v1465, 7
        %v1467 = vsub.s32 %v1464, %v1466
        %v1468 = vrot.slane %v1454, %v1467
        %v1469 = vcombine.high %v1461, %v1461
        %v1470 = vcombine.high %v1468, %v1468
        %v1472 = vunpack.c.l.s4 1966171168
        %v1473 = vunpack.c.0.s8 %v1472
        %v1474 = vlaneseq
        %v1475 = vshrl.u32 %v1474, 7
        %v1476 = vsub.s32 %v1473, %v1475
        %v1477 = vrot.slane %v1461, %v1476
        %v1479 = vunpack.c.l.s4 1966171168
        %v1480 = vunpack.c.0.s8 %v1479
        %v1481 = vlaneseq
        %v1482 = vshrl.u32 %v1481, 7
        %v1483 = vsub.s32 %v1480, %v1482
        %v1484 = vrot.slane %v1468, %v1483
        %v1486 = vunpack.c.l.s4 1966171168
        %v1487 = vunpack.c.0.s8 %v1486
        %v1488 = vlaneseq
        %v1489 = vshrl.u32 %v1488, 7
        %v1490 = vsub.s32 %v1487, %v1489
        %v1491 = vrot.slane %v1469, %v1490
        %v1493 = vunpack.c.l.s4 1966171168
        %v1494 = vunpack.c.0.s8 %v1493
        %v1495 = vlaneseq
        %v1496 = vshrl.u32 %v1495, 7
        %v1497 = vsub.s32 %v1494, %v1496
        %v1498 = vrot.slane %v1470, %v1497
        %v1499 = vcombine.high %v1477, %v1477
        %v1500 = vcombine.high %v1484, %v1484
        %v1501 = vcombine.high %v1491, %v1491
        %v1502 = vcombine.high %v1498, %v1498
        %v1503 = vcombine.high %v271, %v271
        %v1505 = vunpack.c.l.s4 1966171168
        %v1506 = vunpack.c.0.s8 %v1505
        %v1507 = vlaneseq
        %v1508 = vshrl.u32 %v1507, 7
        %v1509 = vsub.s32 %v1506, %v1508
        %v1510 = vrot.slane %v271, %v1509
        %v1512 = vunpack.c.l.s4 1966171168
        %v1513 = vunpack.c.0.s8 %v1512
        %v1514 = vlaneseq
        %v1515 = vshrl.u32 %v1514, 7
        %v1516 = vsub.s32 %v1513, %v1515
        %v1517 = vrot.slane %v1503, %v1516
        %v1518 = vcombine.high %v1510, %v1510
        %v1519 = vcombine.high %v1517, %v1517
        %v1521 = vunpack.c.l.s4 1966171168
        %v1522 = vunpack.c.0.s8 %v1521
        %v1523 = vlaneseq
        %v1524 = vshrl.u32 %v1523, 7
        %v1525 = vsub.s32 %v1522, %v1524
        %v1526 = vrot.slane %v1510, %v1525
        %v1528 = vunpack.c.l.s4 1966171168
        %v1529 = vunpack.c.0.s8 %v1528
        %v1530 = vlaneseq
        %v1531 = vshrl.u32 %v1530, 7
        %v1532 = vsub.s32 %v1529, %v1531
        %v1533 = vrot.slane %v1517, %v1532
        %v1535 = vunpack.c.l.s4 1966171168
        %v1536 = vunpack.c.0.s8 %v1535
        %v1537 = vlaneseq
        %v1538 = vshrl.u32 %v1537, 7
        %v1539 = vsub.s32 %v1536, %v1538
        %v1540 = vrot.slane %v1518, %v1539
        %v1542 = vunpack.c.l.s4 1966171168
        %v1543 = vunpack.c.0.s8 %v1542
        %v1544 = vlaneseq
        %v1545 = vshrl.u32 %v1544, 7
        %v1546 = vsub.s32 %v1543, %v1545
        %v1547 = vrot.slane %v1519, %v1546
        %v1548 = vcombine.high %v1526, %v1526
        %v1549 = vcombine.high %v1533, %v1533
        %v1550 = vcombine.high %v1540, %v1540
        %v1551 = vcombine.high %v1547, %v1547
        %v1552 = vcombine.high %v272, %v272
        %v1554 = vunpack.c.l.s4 1966171168
        %v1555 = vunpack.c.0.s8 %v1554
        %v1556 = vlaneseq
        %v1557 = vshrl.u32 %v1556, 7
        %v1558 = vsub.s32 %v1555, %v1557
        %v1559 = vrot.slane %v272, %v1558
        %v1561 = vunpack.c.l.s4 1966171168
        %v1562 = vunpack.c.0.s8 %v1561
        %v1563 = vlaneseq
        %v1564 = vshrl.u32 %v1563, 7
        %v1565 = vsub.s32 %v1562, %v1564
        %v1566 = vrot.slane %v1552, %v1565
        %v1567 = vcombine.high %v1559, %v1559
        %v1568 = vcombine.high %v1566, %v1566
        %v1570 = vunpack.c.l.s4 1966171168
        %v1571 = vunpack.c.0.s8 %v1570
        %v1572 = vlaneseq
        %v1573 = vshrl.u32 %v1572, 7
        %v1574 = vsub.s32 %v1571, %v1573
        %v1575 = vrot.slane %v1559, %v1574
        %v1577 = vunpack.c.l.s4 1966171168
        %v1578 = vunpack.c.0.s8 %v1577
        %v1579 = vlaneseq
        %v1580 = vshrl.u32 %v1579, 7
        %v1581 = vsub.s32 %v1578, %v1580
        %v1582 = vrot.slane %v1566, %v1581
        %v1584 = vunpack.c.l.s4 1966171168
        %v1585 = vunpack.c.0.s8 %v1584
        %v1586 = vlaneseq
        %v1587 = vshrl.u32 %v1586, 7
        %v1588 = vsub.s32 %v1585, %v1587
        %v1589 = vrot.slane %v1567, %v1588
        %v1591 = vunpack.c.l.s4 1966171168
        %v1592 = vunpack.c.0.s8 %v1591
        %v1593 = vlaneseq
        %v1594 = vshrl.u32 %v1593, 7
        %v1595 = vsub.s32 %v1592, %v1594
        %v1596 = vrot.slane %v1568, %v1595
        %v1597 = vcombine.high %v1575, %v1575
        %v1598 = vcombine.high %v1582, %v1582
        %v1599 = vcombine.high %v1589, %v1589
        %v1600 = vcombine.high %v1596, %v1596
        %v1601 = vcombine.high %v273, %v273
        %v1603 = vunpack.c.l.s4 1966171168
        %v1604 = vunpack.c.0.s8 %v1603
        %v1605 = vlaneseq
        %v1606 = vshrl.u32 %v1605, 7
        %v1607 = vsub.s32 %v1604, %v1606
        %v1608 = vrot.slane %v273, %v1607
        %v1610 = vunpack.c.l.s4 1966171168
        %v1611 = vunpack.c.0.s8 %v1610
        %v1612 = vlaneseq
        %v1613 = vshrl.u32 %v1612, 7
        %v1614 = vsub.s32 %v1611, %v1613
        %v1615 = vrot.slane %v1601, %v1614
        %v1616 = vcombine.high %v1608, %v1608
        %v1617 = vcombine.high %v1615, %v1615
        %v1619 = vunpack.c.l.s4 1966171168
        %v1620 = vunpack.c.0.s8 %v1619
        %v1621 = vlaneseq
        %v1622 = vshrl.u32 %v1621, 7
        %v1623 = vsub.s32 %v1620, %v1622
        %v1624 = vrot.slane %v1608, %v1623
        %v1626 = vunpack.c.l.s4 1966171168
        %v1627 = vunpack.c.0.s8 %v1626
        %v1628 = vlaneseq
        %v1629 = vshrl.u32 %v1628, 7
        %v1630 = vsub.s32 %v1627, %v1629
        %v1631 = vrot.slane %v1615, %v1630
        %v1633 = vunpack.c.l.s4 1966171168
        %v1634 = vunpack.c.0.s8 %v1633
        %v1635 = vlaneseq
        %v1636 = vshrl.u32 %v1635, 7
        %v1637 = vsub.s32 %v1634, %v1636
        %v1638 = vrot.slane %v1616, %v1637
        %v1640 = vunpack.c.l.s4 1966171168
        %v1641 = vunpack.c.0.s8 %v1640
        %v1642 = vlaneseq
        %v1643 = vshrl.u32 %v1642, 7
        %v1644 = vsub.s32 %v1641, %v1643
        %v1645 = vrot.slane %v1617, %v1644
        %v1646 = vcombine.high %v1624, %v1624
        %v1647 = vcombine.high %v1631, %v1631
        %v1648 = vcombine.high %v1638, %v1638
        %v1649 = vcombine.high %v1645, %v1645
        %v1650 = vcombine.high %v274, %v274
        %v1652 = vunpack.c.l.s4 1966171168
        %v1653 = vunpack.c.0.s8 %v1652
        %v1654 = vlaneseq
        %v1655 = vshrl.u32 %v1654, 7
        %v1656 = vsub.s32 %v1653, %v1655
        %v1657 = vrot.slane %v274, %v1656
        %v1659 = vunpack.c.l.s4 1966171168
        %v1660 = vunpack.c.0.s8 %v1659
        %v1661 = vlaneseq
        %v1662 = vshrl.u32 %v1661, 7
        %v1663 = vsub.s32 %v1660, %v1662
        %v1664 = vrot.slane %v1650, %v1663
        %v1665 = vcombine.high %v1657, %v1657
        %v1666 = vcombine.high %v1664, %v1664
        %v1668 = vunpack.c.l.s4 1966171168
        %v1669 = vunpack.c.0.s8 %v1668
        %v1670 = vlaneseq
        %v1671 = vshrl.u32 %v1670, 7
        %v1672 = vsub.s32 %v1669, %v1671
        %v1673 = vrot.slane %v1657, %v1672
        %v1675 = vunpack.c.l.s4 1966171168
        %v1676 = vunpack.c.0.s8 %v1675
        %v1677 = vlaneseq
        %v1678 = vshrl.u32 %v1677, 7
        %v1679 = vsub.s32 %v1676, %v1678
        %v1680 = vrot.slane %v1664, %v1679
        %v1682 = vunpack.c.l.s4 1966171168
        %v1683 = vunpack.c.0.s8 %v1682
        %v1684 = vlaneseq
        %v1685 = vshrl.u32 %v1684, 7
        %v1686 = vsub.s32 %v1683, %v1685
        %v1687 = vrot.slane %v1665, %v1686
        %v1689 = vunpack.c.l.s4 1966171168
        %v1690 = vunpack.c.0.s8 %v1689
        %v1691 = vlaneseq
        %v1692 = vshrl.u32 %v1691, 7
        %v1693 = vsub.s32 %v1690, %v1692
        %v1694 = vrot.slane %v1666, %v1693
        %v1695 = vcombine.high %v1673, %v1673
        %v1696 = vcombine.high %v1680, %v1680
        %v1697 = vcombine.high %v1687, %v1687
        %v1698 = vcombine.high %v1694, %v1694
        %v2787 = vunpack.c.l.b16 %v275
        %v2788 = vunpack.c.h.b16 %v275
        %v2789 = vunpack.c.l.b16 %v276
        %v2790 = vunpack.c.h.b16 %v276
        %v2791 = vunpack.c.l.b16 %v277
        %v2792 = vunpack.c.h.b16 %v277
        %v2793 = vunpack.c.l.b16 %v278
        %v2794 = vunpack.c.h.b16 %v278
        %v2795 = vunpack.c.l.b16 %v279
        %v2796 = vunpack.c.h.b16 %v279
        %v2797 = vunpack.c.l.b16 %v280
        %v2798 = vunpack.c.h.b16 %v280
        %v2799 = vunpack.c.l.b16 %v281
        %v2800 = vunpack.c.h.b16 %v281
        %v2801 = vunpack.c.l.b16 %v282
        %v2802 = vunpack.c.h.b16 %v282
        %v2803 = vunpack.c.l.b16 %v283
        %v2804 = vunpack.c.h.b16 %v283
        %v2805 = vunpack.c.l.b16 %v284
        %v2806 = vunpack.c.h.b16 %v284
        %v2807 = vunpack.c.l.b16 %v285
        %v2808 = vunpack.c.h.b16 %v285
        %v2809 = vunpack.c.l.b16 %v286
        %v2810 = vunpack.c.h.b16 %v286
        %v2811 = vunpack.c.l.b16 %v287
        %v2812 = vunpack.c.h.b16 %v287
        %v2813 = vunpack.c.l.b16 %v288
        %v2814 = vunpack.c.h.b16 %v288
        %v2815 = vunpack.c.l.b16 %v289
        %v2816 = vunpack.c.h.b16 %v289
        %v2817 = vunpack.c.l.b16 %v290
        %v2818 = vunpack.c.h.b16 %v290
        %v2819 = vunpack.c.l.b16 %v291
        %v2820 = vunpack.c.h.b16 %v291
        %v2821 = vunpack.c.l.b16 %v292
        %v2822 = vunpack.c.h.b16 %v292
        %v2823 = vunpack.c.l.b16 %v293
        %v2824 = vunpack.c.h.b16 %v293
        %v2825 = vunpack.c.l.b16 %v294
        %v2826 = vunpack.c.h.b16 %v294
        %v2827 = vunpack.c.l.b16 %v295
        %v2828 = vunpack.c.h.b16 %v295
        %v2829 = vunpack.c.l.b16 %v296
        %v2830 = vunpack.c.h.b16 %v296
        %v2831 = vunpack.c.l.b16 %v297
        %v2832 = vunpack.c.h.b16 %v297
        %v2833 = vunpack.c.l.b16 %v298
        %v2834 = vunpack.c.h.b16 %v298
        %v2835 = vunpack.c.l.b16 %v299
        %v2836 = vunpack.c.h.b16 %v299
        %v2837 = vunpack.c.l.b16 %v300
        %v2838 = vunpack.c.h.b16 %v300
        %v2839 = vunpack.c.l.b16 %v301
        %v2840 = vunpack.c.h.b16 %v301
        %v2841 = vunpack.c.l.b16 %v302
        %v2842 = vunpack.c.h.b16 %v302
        %v2843 = vunpack.c.l.b16 %v303
        %v2844 = vunpack.c.h.b16 %v303
        %v2845 = vunpack.c.l.b16 %v304
        %v2846 = vunpack.c.h.b16 %v304
        %v2847 = vunpack.c.l.b16 %v305
        %v2848 = vunpack.c.h.b16 %v305
        %v2849 = vunpack.c.l.b16 %v306
        %v2850 = vunpack.c.h.b16 %v306
        %v2851 = vunpack.c.l.b16 %v307
        %v2852 = vunpack.c.h.b16 %v307
        %v2853 = vunpack.c.l.b16 %v308
        %v2854 = vunpack.c.h.b16 %v308
        %v2855 = vunpack.c.l.b16 %v309
        %v2856 = vunpack.c.h.b16 %v309
        %v2857 = vunpack.c.l.b16 %v310
        %v2858 = vunpack.c.h.b16 %v310
        %v2859 = vunpack.c.l.b16 %v311
        %v2860 = vunpack.c.h.b16 %v311
        %v2861 = vunpack.c.l.b16 %v312
        %v2862 = vunpack.c.h.b16 %v312
        %v2863 = vunpack.c.l.b16 %v313
        %v2864 = vunpack.c.h.b16 %v313
        %v2865 = vunpack.c.l.b16 %v314
        %v2866 = vunpack.c.h.b16 %v314
        %v2867 = vunpack.c.l.b16 %v315
        %v2868 = vunpack.c.h.b16 %v315
        %v2869 = vunpack.c.l.b16 %v316
        %v2870 = vunpack.c.h.b16 %v316
        %v2871 = vunpack.c.l.b16 %v317
        %v2872 = vunpack.c.h.b16 %v317
        %v2873 = vunpack.c.l.b16 %v318
        %v2874 = vunpack.c.h.b16 %v318
        %v2875 = vunpack.c.l.b16 %v319
        %v2876 = vunpack.c.h.b16 %v319
        %v2877 = vunpack.c.l.b16 %v320
        %v2878 = vunpack.c.h.b16 %v320
        %v2879 = vunpack.c.l.b16 %v321
        %v2880 = vunpack.c.h.b16 %v321
        %v2881 = vunpack.c.l.b16 %v322
        %v2882 = vunpack.c.h.b16 %v322
        %v2883 = vunpack.c.l.b16 %v323
        %v2884 = vunpack.c.h.b16 %v323
        %v2885 = vunpack.c.l.b16 %v324
        %v2886 = vunpack.c.h.b16 %v324
        %v2887 = vunpack.c.l.b16 %v325
        %v2888 = vunpack.c.h.b16 %v325
        %v2889 = vunpack.c.l.b16 %v326
        %v2890 = vunpack.c.h.b16 %v326
        %v2891 = vunpack.c.l.b16 %v327
        %v2892 = vunpack.c.h.b16 %v327
        %v2893 = vunpack.c.l.b16 %v328
        %v2894 = vunpack.c.h.b16 %v328
        %v2895 = vunpack.c.l.b16 %v329
        %v2896 = vunpack.c.h.b16 %v329
        %v2897 = vunpack.c.l.b16 %v330
        %v2898 = vunpack.c.h.b16 %v330
        %v2899 = vunpack.c.l.b16 %v331
        %v2900 = vunpack.c.h.b16 %v331
        %v2901 = vunpack.c.l.b16 %v332
        %v2902 = vunpack.c.h.b16 %v332
        %v2903 = vunpack.c.l.b16 %v333
        %v2904 = vunpack.c.h.b16 %v333
        %v2905 = vunpack.c.l.b16 %v334
        %v2906 = vunpack.c.h.b16 %v334
        %v2907 = vunpack.c.l.b16 %v335
        %v2908 = vunpack.c.h.b16 %v335
        %v2909 = vunpack.c.l.b16 %v336
        %v2910 = vunpack.c.h.b16 %v336
        %v2911 = vunpack.c.l.b16 %v337
        %v2912 = vunpack.c.h.b16 %v337
        %v2913 = vunpack.c.l.b16 %v338
        %v2914 = vunpack.c.h.b16 %v338
        %v2915 = vunpack.c.l.b16 %v339
        %v2916 = vunpack.c.h.b16 %v339
        %v2917 = vunpack.c.l.b16 %v340
        %v2918 = vunpack.c.h.b16 %v340
        %v2919 = vunpack.c.l.b16 %v341
        %v2920 = vunpack.c.h.b16 %v341
        %v2921 = vunpack.c.l.b16 %v342
        %v2922 = vunpack.c.h.b16 %v342
        %v2923 = vunpack.c.l.b16 %v343
        %v2924 = vunpack.c.h.b16 %v343
        %v2925 = vunpack.c.l.b16 %v344
        %v2926 = vunpack.c.h.b16 %v344
        %v2927 = vunpack.c.l.b16 %v345
        %v2928 = vunpack.c.h.b16 %v345
        %v2929 = vunpack.c.l.b16 %v346
        %v2930 = vunpack.c.h.b16 %v346
        %v2931 = vunpack.c.l.b16 %v347
        %v2932 = vunpack.c.h.b16 %v347
        %v2933 = vunpack.c.l.b16 %v348
        %v2934 = vunpack.c.h.b16 %v348
        %v2935 = vunpack.c.l.b16 %v349
        %v2936 = vunpack.c.h.b16 %v349
        %v2937 = vunpack.c.l.b16 %v350
        %v2938 = vunpack.c.h.b16 %v350
        %v2939 = vunpack.c.l.b16 %v351
        %v2940 = vunpack.c.h.b16 %v351
        %v2941 = vunpack.c.l.b16 %v352
        %v2942 = vunpack.c.h.b16 %v352
        %v2943 = vunpack.c.l.b16 %v353
        %v2944 = vunpack.c.h.b16 %v353
        %v2945 = vunpack.c.l.b16 %v354
        %v2946 = vunpack.c.h.b16 %v354
        %v2947 = vunpack.c.l.b16 %v355
        %v2948 = vunpack.c.h.b16 %v355
        %v2949 = vunpack.c.l.b16 %v356
        %v2950 = vunpack.c.h.b16 %v356
        %v2951 = vunpack.c.l.b16 %v357
        %v2952 = vunpack.c.h.b16 %v357
        %v2953 = vunpack.c.l.b16 %v358
        %v2954 = vunpack.c.h.b16 %v358
        %v2955 = vunpack.c.l.b16 %v359
        %v2956 = vunpack.c.h.b16 %v359
        %v2957 = vunpack.c.l.b16 %v360
        %v2958 = vunpack.c.h.b16 %v360
        %v2959 = vunpack.c.l.b16 %v361
        %v2960 = vunpack.c.h.b16 %v361
        %v2961 = vunpack.c.l.b16 %v362
        %v2962 = vunpack.c.h.b16 %v362
        %v2963 = vunpack.c.l.b16 %v363
        %v2964 = vunpack.c.h.b16 %v363
        %v2965 = vunpack.c.l.b16 %v364
        %v2966 = vunpack.c.h.b16 %v364
        %v2967 = vunpack.c.l.b16 %v365
        %v2968 = vunpack.c.h.b16 %v365
        %v2969 = vunpack.c.l.b16 %v366
        %v2970 = vunpack.c.h.b16 %v366
        %v2971 = vunpack.c.l.b16 %v367
        %v2972 = vunpack.c.h.b16 %v367
        %v2973 = vunpack.c.l.b16 %v368
        %v2974 = vunpack.c.h.b16 %v368
        %v2975 = vunpack.c.l.b16 %v369
        %v2976 = vunpack.c.h.b16 %v369
        %v2977 = vunpack.c.l.b16 %v370
        %v2978 = vunpack.c.h.b16 %v370
        %v2979 = vunpack.c.l.b16 %v371
        %v2980 = vunpack.c.h.b16 %v371
        %v2981 = vunpack.c.l.b16 %v372
        %v2982 = vunpack.c.h.b16 %v372
        %v2983 = vunpack.c.l.b16 %v373
        %v2984 = vunpack.c.h.b16 %v373
        %v2985 = vunpack.c.l.b16 %v374
        %v2986 = vunpack.c.h.b16 %v374
        %v2987 = vunpack.c.l.b16 %v375
        %v2988 = vunpack.c.h.b16 %v375
        %v2989 = vunpack.c.l.b16 %v376
        %v2990 = vunpack.c.h.b16 %v376
        %v2991 = vunpack.c.l.b16 %v377
        %v2992 = vunpack.c.h.b16 %v377
        %v2993 = vunpack.c.l.b16 %v378
        %v2994 = vunpack.c.h.b16 %v378
        %v2995 = vunpack.c.l.b16 %v379
        %v2996 = vunpack.c.h.b16 %v379
        %v2997 = vunpack.c.l.b16 %v380
        %v2998 = vunpack.c.h.b16 %v380
        %v2999 = vunpack.c.l.b16 %v381
        %v3000 = vunpack.c.h.b16 %v381
        %v3001 = vunpack.c.l.b16 %v382
        %v3002 = vunpack.c.h.b16 %v382
        %v3003 = vunpack.c.l.b16 %v383
        %v3004 = vunpack.c.h.b16 %v383
        %v3005 = vunpack.c.l.b16 %v384
        %v3006 = vunpack.c.h.b16 %v384
        %v3007 = vunpack.c.l.b16 %v385
        %v3008 = vunpack.c.h.b16 %v385
        %v3009 = vunpack.c.l.b16 %v386
        %v3010 = vunpack.c.h.b16 %v386
        %v3011 = vunpack.c.l.b16 %v387
        %v3012 = vunpack.c.h.b16 %v387
        %v3013 = vunpack.c.l.b16 %v388
        %v3014 = vunpack.c.h.b16 %v388
        %v3015 = vunpack.c.l.b16 %v389
        %v3016 = vunpack.c.h.b16 %v389
        %v3017 = vunpack.c.l.b16 %v390
        %v3018 = vunpack.c.h.b16 %v390
        %v3019 = vunpack.c.l.b16 %v391
        %v3020 = vunpack.c.h.b16 %v391
        %v3021 = vunpack.c.l.b16 %v392
        %v3022 = vunpack.c.h.b16 %v392
        %v3023 = vunpack.c.l.b16 %v393
        %v3024 = vunpack.c.h.b16 %v393
        %v3025 = vunpack.c.l.b16 %v394
        %v3026 = vunpack.c.h.b16 %v394
        %v3027 = vunpack.c.l.b16 %v395
        %v3028 = vunpack.c.h.b16 %v395
        %v3029 = vunpack.c.l.b16 %v396
        %v3030 = vunpack.c.h.b16 %v396
        %v3031 = vunpack.c.l.b16 %v397
        %v3032 = vunpack.c.h.b16 %v397
        %v3033 = vunpack.c.l.b16 %v398
        %v3034 = vunpack.c.h.b16 %v398
        %v3035 = vunpack.c.l.b16 %v399
        %v3036 = vunpack.c.h.b16 %v399
        %v3037 = vunpack.c.l.b16 %v400
        %v3038 = vunpack.c.h.b16 %v400
        %v3039 = vunpack.c.l.b16 %v401
        %v3040 = vunpack.c.h.b16 %v401
        %v3041 = vunpack.c.l.b16 %v402
        %v3042 = vunpack.c.h.b16 %v402
        %v3043 = vunpack.c.l.b16 %v403
        %v3044 = vunpack.c.h.b16 %v403
        %v3045 = vunpack.c.l.b16 %v404
        %v3046 = vunpack.c.h.b16 %v404
        %v3047 = vunpack.c.l.b16 %v405
        %v3048 = vunpack.c.h.b16 %v405
        %v3049 = vunpack.c.l.b16 %v406
        %v3050 = vunpack.c.h.b16 %v406
        %v3051 = vunpack.c.l.b16 %v407
        %v3052 = vunpack.c.h.b16 %v407
        %v3053 = vunpack.c.l.b16 %v408
        %v3054 = vunpack.c.h.b16 %v408
        %v3055 = vunpack.c.l.b16 %v409
        %v3056 = vunpack.c.h.b16 %v409
        %v3057 = vunpack.c.l.b16 %v410
        %v3058 = vunpack.c.h.b16 %v410
        %v3059 = vunpack.c.l.b16 %v411
        %v3060 = vunpack.c.h.b16 %v411
        %v3061 = vunpack.c.l.b16 %v412
        %v3062 = vunpack.c.h.b16 %v412
        %v3063 = vunpack.c.l.b16 %v413
        %v3064 = vunpack.c.h.b16 %v413
        %v3065 = vunpack.c.l.b16 %v414
        %v3066 = vunpack.c.h.b16 %v414
        %v3067 = vunpack.c.l.b16 %v415
        %v3068 = vunpack.c.h.b16 %v415
        %v3069 = vunpack.c.l.b16 %v416
        %v3070 = vunpack.c.h.b16 %v416
        %v3071 = vunpack.c.l.b16 %v417
        %v3072 = vunpack.c.h.b16 %v417
        %v3073 = vunpack.c.l.b16 %v418
        %v3074 = vunpack.c.h.b16 %v418
        %v3075 = vunpack.c.l.b16 %v419
        %v3076 = vunpack.c.h.b16 %v419
        %v3077 = vunpack.c.l.b16 %v420
        %v3078 = vunpack.c.h.b16 %v420
        %v3079 = vunpack.c.l.b16 %v421
        %v3080 = vunpack.c.h.b16 %v421
        %v3081 = vunpack.c.l.b16 %v422
        %v3082 = vunpack.c.h.b16 %v422
        %v3083 = vunpack.c.l.b16 %v423
        %v3084 = vunpack.c.h.b16 %v423
        %v3085 = vunpack.c.l.b16 %v424
        %v3086 = vunpack.c.h.b16 %v424
        %v3087 = vunpack.c.l.b16 %v425
        %v3088 = vunpack.c.h.b16 %v425
        %v3089 = vunpack.c.l.b16 %v426
        %v3090 = vunpack.c.h.b16 %v426
        %v3091 = vunpack.c.l.b16 %v427
        %v3092 = vunpack.c.h.b16 %v427
        %v3093 = vunpack.c.l.b16 %v428
        %v3094 = vunpack.c.h.b16 %v428
        %v3095 = vunpack.c.l.b16 %v429
        %v3096 = vunpack.c.h.b16 %v429
        %v3097 = vunpack.c.l.b16 %v430
        %v3098 = vunpack.c.h.b16 %v430
        %v3099 = vunpack.c.l.b16 %v431
        %v3100 = vunpack.c.h.b16 %v431
        %v3101 = vunpack.c.l.b16 %v432
        %v3102 = vunpack.c.h.b16 %v432
        %v3103 = vunpack.c.l.b16 %v433
        %v3104 = vunpack.c.h.b16 %v433
        %v3105 = vunpack.c.l.b16 %v434
        %v3106 = vunpack.c.h.b16 %v434
        %v3107 = vunpack.c.l.b16 %v435
        %v3108 = vunpack.c.h.b16 %v435
        %v3109 = vunpack.c.l.b16 %v436
        %v3110 = vunpack.c.h.b16 %v436
        %v3111 = vunpack.c.l.b16 %v437
        %v3112 = vunpack.c.h.b16 %v437
        %v3113 = vunpack.c.l.b16 %v438
        %v3114 = vunpack.c.h.b16 %v438
        %v3115 = vunpack.c.l.b16 %v439
        %v3116 = vunpack.c.h.b16 %v439
        %v3117 = vunpack.c.l.b16 %v440
        %v3118 = vunpack.c.h.b16 %v440
        %v3119 = vunpack.c.l.b16 %v441
        %v3120 = vunpack.c.h.b16 %v441
        %v3121 = vunpack.c.l.b16 %v442
        %v3122 = vunpack.c.h.b16 %v442
        %v3123 = vunpack.c.l.b16 %v443
        %v3124 = vunpack.c.h.b16 %v443
        %v3125 = vunpack.c.l.b16 %v444
        %v3126 = vunpack.c.h.b16 %v444
        %v3127 = vunpack.c.l.b16 %v445
        %v3128 = vunpack.c.h.b16 %v445
        %v3129 = vunpack.c.l.b16 %v446
        %v3130 = vunpack.c.h.b16 %v446
        %v3131 = vunpack.c.l.b16 %v447
        %v3132 = vunpack.c.h.b16 %v447
        %v3133 = vunpack.c.l.b16 %v448
        %v3134 = vunpack.c.h.b16 %v448
        %v3135 = vunpack.c.l.b16 %v449
        %v3136 = vunpack.c.h.b16 %v449
        %v3137 = vunpack.c.l.b16 %v450
        %v3138 = vunpack.c.h.b16 %v450
        %v3139 = vunpack.c.l.b16 %v451
        %v3140 = vunpack.c.h.b16 %v451
        %v3141 = vunpack.c.l.b16 %v452
        %v3142 = vunpack.c.h.b16 %v452
        %v3143 = vunpack.c.l.b16 %v453
        %v3144 = vunpack.c.h.b16 %v453
        %v3145 = vunpack.c.l.b16 %v454
        %v3146 = vunpack.c.h.b16 %v454
        %v3147 = vunpack.c.l.b16 %v455
        %v3148 = vunpack.c.h.b16 %v455
        %v3149 = vunpack.c.l.b16 %v456
        %v3150 = vunpack.c.h.b16 %v456
        %v3151 = vunpack.c.l.b16 %v457
        %v3152 = vunpack.c.h.b16 %v457
        %v3153 = vunpack.c.l.b16 %v458
        %v3154 = vunpack.c.h.b16 %v458
        %v3155 = vunpack.c.l.b16 %v459
        %v3156 = vunpack.c.h.b16 %v459
        %v3157 = vunpack.c.l.b16 %v460
        %v3158 = vunpack.c.h.b16 %v460
        %v3159 = vunpack.c.l.b16 %v461
        %v3160 = vunpack.c.h.b16 %v461
        %v3161 = vunpack.c.l.b16 %v462
        %v3162 = vunpack.c.h.b16 %v462
        %v3163 = vunpack.c.l.b16 %v463
        %v3164 = vunpack.c.h.b16 %v463
        %v3165 = vunpack.c.l.b16 %v464
        %v3166 = vunpack.c.h.b16 %v464
        %v3167 = vunpack.c.l.b16 %v465
        %v3168 = vunpack.c.h.b16 %v465
        %v3169 = vunpack.c.l.b16 %v466
        %v3170 = vunpack.c.h.b16 %v466
        %v3171 = vunpack.c.l.b16 %v467
        %v3172 = vunpack.c.h.b16 %v467
        %v3173 = vunpack.c.l.b16 %v468
        %v3174 = vunpack.c.h.b16 %v468
        %v3175 = vunpack.c.l.b16 %v469
        %v3176 = vunpack.c.h.b16 %v469
        %v3177 = vunpack.c.l.b16 %v470
        %v3178 = vunpack.c.h.b16 %v470
        %v3179 = vunpack.c.l.b16 %v471
        %v3180 = vunpack.c.h.b16 %v471
        %v3181 = vunpack.c.l.b16 %v472
        %v3182 = vunpack.c.h.b16 %v472
        %v3183 = vunpack.c.l.b16 %v473
        %v3184 = vunpack.c.h.b16 %v473
        %v3185 = vunpack.c.l.b16 %v474
        %v3186 = vunpack.c.h.b16 %v474
        %v3187 = vunpack.c.l.b16 %v475
        %v3188 = vunpack.c.h.b16 %v475
        %v3189 = vunpack.c.l.b16 %v476
        %v3190 = vunpack.c.h.b16 %v476
        %v3191 = vunpack.c.l.b16 %v477
        %v3192 = vunpack.c.h.b16 %v477
        %v3193 = vunpack.c.l.b16 %v478
        %v3194 = vunpack.c.h.b16 %v478
        %v3195 = vunpack.c.l.b16 %v479
        %v3196 = vunpack.c.h.b16 %v479
        %v3197 = vunpack.c.l.b16 %v480
        %v3198 = vunpack.c.h.b16 %v480
        %v3199 = vunpack.c.l.b16 %v481
        %v3200 = vunpack.c.h.b16 %v481
        %v3201 = vunpack.c.l.b16 %v482
        %v3202 = vunpack.c.h.b16 %v482
        %v3203 = vunpack.c.l.b16 %v483
        %v3204 = vunpack.c.h.b16 %v483
        %v3205 = vunpack.c.l.b16 %v484
        %v3206 = vunpack.c.h.b16 %v484
        %v3207 = vunpack.c.l.b16 %v485
        %v3208 = vunpack.c.h.b16 %v485
        %v3209 = vunpack.c.l.b16 %v486
        %v3210 = vunpack.c.h.b16 %v486
        %v3211 = vunpack.c.l.b16 %v487
        %v3212 = vunpack.c.h.b16 %v487
        %v3213 = vunpack.c.l.b16 %v488
        %v3214 = vunpack.c.h.b16 %v488
        %v3215 = vunpack.c.l.b16 %v489
        %v3216 = vunpack.c.h.b16 %v489
        %v3217 = vunpack.c.l.b16 %v490
        %v3218 = vunpack.c.h.b16 %v490
        %v3219 = vunpack.c.l.b16 %v491
        %v3220 = vunpack.c.h.b16 %v491
        %v3221 = vunpack.c.l.b16 %v492
        %v3222 = vunpack.c.h.b16 %v492
        %v3223 = vunpack.c.l.b16 %v493
        %v3224 = vunpack.c.h.b16 %v493
        %v3225 = vunpack.c.l.b16 %v494
        %v3226 = vunpack.c.h.b16 %v494
        %v3227 = vunpack.c.l.b16 %v495
        %v3228 = vunpack.c.h.b16 %v495
        %v3229 = vunpack.c.l.b16 %v496
        %v3230 = vunpack.c.h.b16 %v496
        %v3231 = vunpack.c.l.b16 %v497
        %v3232 = vunpack.c.h.b16 %v497
        %v3233 = vunpack.c.l.b16 %v498
        %v3234 = vunpack.c.h.b16 %v498
        %v3235 = vunpack.c.l.b16 %v499
        %v3236 = vunpack.c.h.b16 %v499
        %v3237 = vunpack.c.l.b16 %v500
        %v3238 = vunpack.c.h.b16 %v500
        %v3239 = vunpack.c.l.b16 %v501
        %v3240 = vunpack.c.h.b16 %v501
        %v3241 = vunpack.c.l.b16 %v502
        %v3242 = vunpack.c.h.b16 %v502
        %v3243 = vunpack.c.l.b16 %v503
        %v3244 = vunpack.c.h.b16 %v503
        %v3245 = vunpack.c.l.b16 %v504
        %v3246 = vunpack.c.h.b16 %v504
        %v3247 = vunpack.c.l.b16 %v505
        %v3248 = vunpack.c.h.b16 %v505
        %v3249 = vunpack.c.l.b16 %v506
        %v3250 = vunpack.c.h.b16 %v506
        %v3251 = vunpack.c.l.b16 %v507
        %v3252 = vunpack.c.h.b16 %v507
        %v3253 = vunpack.c.l.b16 %v508
        %v3254 = vunpack.c.h.b16 %v508
        %v3255 = vunpack.c.l.b16 %v509
        %v3256 = vunpack.c.h.b16 %v509
        %v3257 = vunpack.c.l.b16 %v510
        %v3258 = vunpack.c.h.b16 %v510
        %v3259 = vunpack.c.l.b16 %v511
        %v3260 = vunpack.c.h.b16 %v511
        %v3261 = vunpack.c.l.b16 %v512
        %v3262 = vunpack.c.h.b16 %v512
        %v3263 = vunpack.c.l.b16 %v513
        %v3264 = vunpack.c.h.b16 %v513
        %v3265 = vunpack.c.l.b16 %v514
        %v3266 = vunpack.c.h.b16 %v514
        %v3267 = vunpack.c.l.b16 %v515
        %v3268 = vunpack.c.h.b16 %v515
        %v3269 = vunpack.c.l.b16 %v516
        %v3270 = vunpack.c.h.b16 %v516
        %v3271 = vunpack.c.l.b16 %v517
        %v3272 = vunpack.c.h.b16 %v517
        %v3273 = vunpack.c.l.b16 %v518
        %v3274 = vunpack.c.h.b16 %v518
        %v3275 = vunpack.c.l.b16 %v519
        %v3276 = vunpack.c.h.b16 %v519
        %v3277 = vunpack.c.l.b16 %v520
        %v3278 = vunpack.c.h.b16 %v520
        %v3279 = vunpack.c.l.b16 %v521
        %v3280 = vunpack.c.h.b16 %v521
        %v3281 = vunpack.c.l.b16 %v522
        %v3282 = vunpack.c.h.b16 %v522
        %v3283 = vunpack.c.l.b16 %v523
        %v3284 = vunpack.c.h.b16 %v523
        %v3285 = vunpack.c.l.b16 %v524
        %v3286 = vunpack.c.h.b16 %v524
        %v3287 = vunpack.c.l.b16 %v525
        %v3288 = vunpack.c.h.b16 %v525
        %v3289 = vunpack.c.l.b16 %v526
        %v3290 = vunpack.c.h.b16 %v526
        %v3291 = vunpack.c.l.b16 %v527
        %v3292 = vunpack.c.h.b16 %v527
        %v3293 = vunpack.c.l.b16 %v528
        %v3294 = vunpack.c.h.b16 %v528
        %v3295 = vunpack.c.l.b16 %v529
        %v3296 = vunpack.c.h.b16 %v529
        %v3297 = vunpack.c.l.b16 %v530
        %v3298 = vunpack.c.h.b16 %v530
        %v3299 = vunpack.c.l.b16 %v531
        %v3300 = vunpack.c.h.b16 %v531
        %v3301 = vunpack.c.l.b16 %v532
        %v3302 = vunpack.c.h.b16 %v532
        %v3303 = vunpack.c.l.b16 %v533
        %v3304 = vunpack.c.h.b16 %v533
        %v3305 = vunpack.c.l.b16 %v534
        %v3306 = vunpack.c.h.b16 %v534
        %v3307 = vunpack.c.l.b16 %v535
        %v3308 = vunpack.c.h.b16 %v535
        %v3309 = vunpack.c.l.b16 %v536
        %v3310 = vunpack.c.h.b16 %v536
        %v3311 = vunpack.c.l.b16 %v537
        %v3312 = vunpack.c.h.b16 %v537
        %v3313 = vunpack.c.l.b16 %v538
        %v3314 = vunpack.c.h.b16 %v538
        %v3315 = vunpack.c.l.b16 %v539
        %v3316 = vunpack.c.h.b16 %v539
        %v3317 = vunpack.c.l.b16 %v540
        %v3318 = vunpack.c.h.b16 %v540
        %v3319 = vunpack.c.l.b16 %v541
        %v3320 = vunpack.c.h.b16 %v541
        %v3321 = vunpack.c.l.b16 %v542
        %v3322 = vunpack.c.h.b16 %v542
        %v3323 = vunpack.c.l.b16 %v543
        %v3324 = vunpack.c.h.b16 %v543
        %v3325 = vunpack.c.l.b16 %v544
        %v3326 = vunpack.c.h.b16 %v544
        %v3327 = vunpack.c.l.b16 %v545
        %v3328 = vunpack.c.h.b16 %v545
        %v3329 = vunpack.c.l.b16 %v546
        %v3330 = vunpack.c.h.b16 %v546
        %v3331 = vunpack.c.l.b16 %v547
        %v3332 = vunpack.c.h.b16 %v547
        %v3333 = vunpack.c.l.b16 %v548
        %v3334 = vunpack.c.h.b16 %v548
        %v3335 = vunpack.c.l.b16 %v549
        %v3336 = vunpack.c.h.b16 %v549
        %v3337 = vunpack.c.l.b16 %v550
        %v3338 = vunpack.c.h.b16 %v550
        %v3339 = vunpack.c.l.b16 %v551
        %v3340 = vunpack.c.h.b16 %v551
        %v3341 = vunpack.c.l.b16 %v552
        %v3342 = vunpack.c.h.b16 %v552
        %v3343 = vunpack.c.l.b16 %v553
        %v3344 = vunpack.c.h.b16 %v553
        %v3345 = vunpack.c.l.b16 %v554
        %v3346 = vunpack.c.h.b16 %v554
        %v3347 = vunpack.c.l.b16 %v555
        %v3348 = vunpack.c.h.b16 %v555
        %v3349 = vunpack.c.l.b16 %v556
        %v3350 = vunpack.c.h.b16 %v556
        %v3351 = vunpack.c.l.b16 %v557
        %v3352 = vunpack.c.h.b16 %v557
        %v3353 = vunpack.c.l.b16 %v558
        %v3354 = vunpack.c.h.b16 %v558
        %v3355 = vunpack.c.l.b16 %v559
        %v3356 = vunpack.c.h.b16 %v559
        %v3357 = vunpack.c.l.b16 %v560
        %v3358 = vunpack.c.h.b16 %v560
        %v3359 = vunpack.c.l.b16 %v561
        %v3360 = vunpack.c.h.b16 %v561
        %v3361 = vunpack.c.l.b16 %v562
        %v3362 = vunpack.c.h.b16 %v562
        %v3363 = vunpack.c.l.b16 %v563
        %v3364 = vunpack.c.h.b16 %v563
        %v3365 = vunpack.c.l.b16 %v564
        %v3366 = vunpack.c.h.b16 %v564
        %v3367 = vunpack.c.l.b16 %v565
        %v3368 = vunpack.c.h.b16 %v565
        %v3369 = vunpack.c.l.b16 %v566
        %v3370 = vunpack.c.h.b16 %v566
        %v3371 = vunpack.c.l.b16 %v567
        %v3372 = vunpack.c.h.b16 %v567
        %v3373 = vunpack.c.l.b16 %v568
        %v3374 = vunpack.c.h.b16 %v568
        %v3375 = vunpack.c.l.b16 %v569
        %v3376 = vunpack.c.h.b16 %v569
        %v3377 = vunpack.c.l.b16 %v570
        %v3378 = vunpack.c.h.b16 %v570
        %v3379 = vunpack.c.l.b16 %v571
        %v3380 = vunpack.c.h.b16 %v571
        %v3381 = vunpack.c.l.b16 %v572
        %v3382 = vunpack.c.h.b16 %v572
        %v3383 = vunpack.c.l.b16 %v573
        %v3384 = vunpack.c.h.b16 %v573
        %v3385 = vunpack.c.l.b16 %v574
        %v3386 = vunpack.c.h.b16 %v574
        %v3387 = vunpack.c.l.b16 %v575
        %v3388 = vunpack.c.h.b16 %v575
        %v3389 = vunpack.c.l.b16 %v576
        %v3390 = vunpack.c.h.b16 %v576
        %v3391 = vunpack.c.l.b16 %v577
        %v3392 = vunpack.c.h.b16 %v577
        %v3393 = vunpack.c.l.b16 %v578
        %v3394 = vunpack.c.h.b16 %v578
        %v3395 = vunpack.c.l.b16 %v579
        %v3396 = vunpack.c.h.b16 %v579
        %v3397 = vunpack.c.l.b16 %v580
        %v3398 = vunpack.c.h.b16 %v580
        %v3399 = vunpack.c.l.b16 %v581
        %v3400 = vunpack.c.h.b16 %v581
        %v3401 = vunpack.c.l.b16 %v582
        %v3402 = vunpack.c.h.b16 %v582
        %v3403 = vunpack.c.l.b16 %v583
        %v3404 = vunpack.c.h.b16 %v583
        %v3405 = vunpack.c.l.b16 %v584
        %v3406 = vunpack.c.h.b16 %v584
        %v3407 = vunpack.c.l.b16 %v585
        %v3408 = vunpack.c.h.b16 %v585
        %v3409 = vunpack.c.l.b16 %v586
        %v3410 = vunpack.c.h.b16 %v586
        %v3411 = vunpack.c.l.b16 %v587
        %v3412 = vunpack.c.h.b16 %v587
        %v3413 = vunpack.c.l.b16 %v588
        %v3414 = vunpack.c.h.b16 %v588
        %v3415 = vunpack.c.l.b16 %v589
        %v3416 = vunpack.c.h.b16 %v589
        %v3417 = vunpack.c.l.b16 %v590
        %v3418 = vunpack.c.h.b16 %v590
        %v3419 = vunpack.c.l.b16 %v591
        %v3420 = vunpack.c.h.b16 %v591
        %v3421 = vunpack.c.l.b16 %v592
        %v3422 = vunpack.c.h.b16 %v592
        %v3423 = vunpack.c.l.b16 %v593
        %v3424 = vunpack.c.h.b16 %v593
        %v3425 = vunpack.c.l.b16 %v594
        %v3426 = vunpack.c.h.b16 %v594
        %v3427 = vunpack.c.l.b16 %v595
        %v3428 = vunpack.c.h.b16 %v595
        %v3429 = vunpack.c.l.b16 %v596
        %v3430 = vunpack.c.h.b16 %v596
        %v3431 = vunpack.c.l.b16 %v597
        %v3432 = vunpack.c.h.b16 %v597
        %v3433 = vunpack.c.l.b16 %v598
        %v3434 = vunpack.c.h.b16 %v598
        %v3435 = vunpack.c.l.b16 %v599
        %v3436 = vunpack.c.h.b16 %v599
        %v3437 = vunpack.c.l.b16 %v600
        %v3438 = vunpack.c.h.b16 %v600
        %v3439 = vunpack.c.l.b16 %v601
        %v3440 = vunpack.c.h.b16 %v601
        %v3441 = vunpack.c.l.b16 %v602
        %v3442 = vunpack.c.h.b16 %v602
        %v3443 = vunpack.c.l.b16 %v603
        %v3444 = vunpack.c.h.b16 %v603
        %v3445 = vunpack.c.l.b16 %v604
        %v3446 = vunpack.c.h.b16 %v604
        %v3447 = vunpack.c.l.b16 %v605
        %v3448 = vunpack.c.h.b16 %v605
        %v3449 = vunpack.c.l.b16 %v606
        %v3450 = vunpack.c.h.b16 %v606
        %v3451 = vunpack.c.l.b16 %v607
        %v3452 = vunpack.c.h.b16 %v607
        %v3453 = vunpack.c.l.b16 %v608
        %v3454 = vunpack.c.h.b16 %v608
        %v3455 = vunpack.c.l.b16 %v609
        %v3456 = vunpack.c.h.b16 %v609
        %v3457 = vunpack.c.l.b16 %v610
        %v3458 = vunpack.c.h.b16 %v610
        %v3459 = vunpack.c.l.b16 %v611
        %v3460 = vunpack.c.h.b16 %v611
        %v3461 = vunpack.c.l.b16 %v612
        %v3462 = vunpack.c.h.b16 %v612
        %v3463 = vunpack.c.l.b16 %v613
        %v3464 = vunpack.c.h.b16 %v613
        %v3465 = vunpack.c.l.b16 %v614
        %v3466 = vunpack.c.h.b16 %v614
        %v3467 = vunpack.c.l.b16 %v615
        %v3468 = vunpack.c.h.b16 %v615
        %v3469 = vunpack.c.l.b16 %v616
        %v3470 = vunpack.c.h.b16 %v616
        %v3471 = vunpack.c.l.b16 %v617
        %v3472 = vunpack.c.h.b16 %v617
        %v3473 = vunpack.c.l.b16 %v618
        %v3474 = vunpack.c.h.b16 %v618
        %v3475 = vunpack.c.l.b16 %v619
        %v3476 = vunpack.c.h.b16 %v619
        %v3477 = vunpack.c.l.b16 %v620
        %v3478 = vunpack.c.h.b16 %v620
        %v3479 = vunpack.c.l.b16 %v621
        %v3480 = vunpack.c.h.b16 %v621
        %v3481 = vunpack.c.l.b16 %v622
        %v3482 = vunpack.c.h.b16 %v622
        %v3483 = vunpack.c.l.b16 %v623
        %v3484 = vunpack.c.h.b16 %v623
        %v3485 = vunpack.c.l.b16 %v624
        %v3486 = vunpack.c.h.b16 %v624
        %v3487 = vunpack.c.l.b16 %v625
        %v3488 = vunpack.c.h.b16 %v625
        %v3489 = vunpack.c.l.b16 %v626
        %v3490 = vunpack.c.h.b16 %v626
        %v3491 = vunpack.c.l.b16 %v627
        %v3492 = vunpack.c.h.b16 %v627
        %v3493 = vunpack.c.l.b16 %v628
        %v3494 = vunpack.c.h.b16 %v628
        %v3495 = vunpack.c.l.b16 %v629
        %v3496 = vunpack.c.h.b16 %v629
        %v3497 = vunpack.c.l.b16 %v630
        %v3498 = vunpack.c.h.b16 %v630
        %v3499 = vunpack.c.l.b16 %v631
        %v3500 = vunpack.c.h.b16 %v631
        %v3501 = vunpack.c.l.b16 %v632
        %v3502 = vunpack.c.h.b16 %v632
        %v3503 = vunpack.c.l.b16 %v633
        %v3504 = vunpack.c.h.b16 %v633
        %v3505 = vunpack.c.l.b16 %v634
        %v3506 = vunpack.c.h.b16 %v634
        %v3507 = vunpack.c.l.b16 %v635
        %v3508 = vunpack.c.h.b16 %v635
        %v3509 = vunpack.c.l.b16 %v636
        %v3510 = vunpack.c.h.b16 %v636
        %v3511 = vunpack.c.l.b16 %v637
        %v3512 = vunpack.c.h.b16 %v637
        %v3513 = vunpack.c.l.b16 %v638
        %v3514 = vunpack.c.h.b16 %v638
        %v3515 = vunpack.c.l.b16 %v639
        %v3516 = vunpack.c.h.b16 %v639
        %v3517 = vunpack.c.l.b16 %v640
        %v3518 = vunpack.c.h.b16 %v640
        %v3519 = vunpack.c.l.b16 %v641
        %v3520 = vunpack.c.h.b16 %v641
        %v3521 = vunpack.c.l.b16 %v642
        %v3522 = vunpack.c.h.b16 %v642
        %v3523 = vunpack.c.l.b16 %v643
        %v3524 = vunpack.c.h.b16 %v643
        %v3525 = vunpack.c.l.b16 %v644
        %v3526 = vunpack.c.h.b16 %v644
        %v3527 = vunpack.c.l.b16 %v645
        %v3528 = vunpack.c.h.b16 %v645
        %v3529 = vunpack.c.l.b16 %v646
        %v3530 = vunpack.c.h.b16 %v646
        %v3531 = vunpack.c.l.b16 %v647
        %v3532 = vunpack.c.h.b16 %v647
        %v3533 = vunpack.c.l.b16 %v648
        %v3534 = vunpack.c.h.b16 %v648
        %v3535 = vunpack.c.l.b16 %v649
        %v3536 = vunpack.c.h.b16 %v649
        %v3537 = vunpack.c.l.b16 %v650
        %v3538 = vunpack.c.h.b16 %v650
        %v3539 = vunpack.c.l.b16 %v651
        %v3540 = vunpack.c.h.b16 %v651
        %v3541 = vunpack.c.l.b16 %v652
        %v3542 = vunpack.c.h.b16 %v652
        %v3543 = vunpack.c.l.b16 %v653
        %v3544 = vunpack.c.h.b16 %v653
        %v3545 = vunpack.c.l.b16 %v654
        %v3546 = vunpack.c.h.b16 %v654
        %v3547 = vunpack.c.l.b16 %v655
        %v3548 = vunpack.c.h.b16 %v655
        %v3549 = vunpack.c.l.b16 %v656
        %v3550 = vunpack.c.h.b16 %v656
        %v3551 = vunpack.c.l.b16 %v657
        %v3552 = vunpack.c.h.b16 %v657
        %v3553 = vunpack.c.l.b16 %v658
        %v3554 = vunpack.c.h.b16 %v658
        %v3555 = vunpack.c.l.b16 %v659
        %v3556 = vunpack.c.h.b16 %v659
        %v3557 = vunpack.c.l.b16 %v660
        %v3558 = vunpack.c.h.b16 %v660
        %v3559 = vunpack.c.l.b16 %v661
        %v3560 = vunpack.c.h.b16 %v661
        %v3561 = vunpack.c.l.b16 %v662
        %v3562 = vunpack.c.h.b16 %v662
        %v3563 = vunpack.c.l.b16 %v663
        %v3564 = vunpack.c.h.b16 %v663
        %v3565 = vunpack.c.l.b16 %v664
        %v3566 = vunpack.c.h.b16 %v664
        %v3567 = vunpack.c.l.b16 %v665
        %v3568 = vunpack.c.h.b16 %v665
        %v3569 = vunpack.c.l.b16 %v666
        %v3570 = vunpack.c.h.b16 %v666
        %v3571 = vunpack.c.l.b16 %v667
        %v3572 = vunpack.c.h.b16 %v667
        %v3573 = vunpack.c.l.b16 %v668
        %v3574 = vunpack.c.h.b16 %v668
        %v3575 = vunpack.c.l.b16 %v669
        %v3576 = vunpack.c.h.b16 %v669
        %v3577 = vunpack.c.l.b16 %v670
        %v3578 = vunpack.c.h.b16 %v670
        %v3579 = vunpack.c.l.b16 %v671
        %v3580 = vunpack.c.h.b16 %v671
        %v3581 = vunpack.c.l.b16 %v672
        %v3582 = vunpack.c.h.b16 %v672
        %v3583 = vunpack.c.l.b16 %v673
        %v3584 = vunpack.c.h.b16 %v673
        %v3585 = vunpack.c.l.b16 %v674
        %v3586 = vunpack.c.h.b16 %v674
        %v3587 = vunpack.c.l.b16 %v675
        %v3588 = vunpack.c.h.b16 %v675
        %v3589 = vunpack.c.l.b16 %v676
        %v3590 = vunpack.c.h.b16 %v676
        %v3591 = vunpack.c.l.b16 %v677
        %v3592 = vunpack.c.h.b16 %v677
        %v3593 = vunpack.c.l.b16 %v678
        %v3594 = vunpack.c.h.b16 %v678
        %v3595 = vunpack.c.l.b16 %v679
        %v3596 = vunpack.c.h.b16 %v679
        %v3597 = vunpack.c.l.b16 %v680
        %v3598 = vunpack.c.h.b16 %v680
        %v3599 = vunpack.c.l.b16 %v681
        %v3600 = vunpack.c.h.b16 %v681
        %v3601 = vunpack.c.l.b16 %v682
        %v3602 = vunpack.c.h.b16 %v682
        %v3603 = vunpack.c.l.b16 %v683
        %v3604 = vunpack.c.h.b16 %v683
        %v3605 = vunpack.c.l.b16 %v684
        %v3606 = vunpack.c.h.b16 %v684
        %v3607 = vunpack.c.l.b16 %v685
        %v3608 = vunpack.c.h.b16 %v685
        %v3609 = vunpack.c.l.b16 %v686
        %v3610 = vunpack.c.h.b16 %v686
        %v3611 = vunpack.c.l.b16 %v687
        %v3612 = vunpack.c.h.b16 %v687
        %v3613 = vunpack.c.l.b16 %v688
        %v3614 = vunpack.c.h.b16 %v688
        %v3615 = vunpack.c.l.b16 %v689
        %v3616 = vunpack.c.h.b16 %v689
        %v3617 = vunpack.c.l.b16 %v690
        %v3618 = vunpack.c.h.b16 %v690
        %v3619 = vunpack.c.l.b16 %v691
        %v3620 = vunpack.c.h.b16 %v691
        %v3621 = vunpack.c.l.b16 %v692
        %v3622 = vunpack.c.h.b16 %v692
        %v3623 = vunpack.c.l.b16 %v693
        %v3624 = vunpack.c.h.b16 %v693
        %v3625 = vunpack.c.l.b16 %v694
        %v3626 = vunpack.c.h.b16 %v694
        %v3627 = vunpack.c.l.b16 %v695
        %v3628 = vunpack.c.h.b16 %v695
        %v3629 = vunpack.c.l.b16 %v696
        %v3630 = vunpack.c.h.b16 %v696
        %v3631 = vunpack.c.l.b16 %v697
        %v3632 = vunpack.c.h.b16 %v697
        %v3633 = vunpack.c.l.b16 %v698
        %v3634 = vunpack.c.h.b16 %v698
        %v3635 = vunpack.c.l.b16 %v699
        %v3636 = vunpack.c.h.b16 %v699
        %v3637 = vunpack.c.l.b16 %v700
        %v3638 = vunpack.c.h.b16 %v700
        %v3639 = vunpack.c.l.b16 %v701
        %v3640 = vunpack.c.h.b16 %v701
        %v3641 = vunpack.c.l.b16 %v702
        %v3642 = vunpack.c.h.b16 %v702
        %v3643 = vunpack.c.l.b16 %v703
        %v3644 = vunpack.c.h.b16 %v703
        %v3645 = vunpack.c.l.b16 %v704
        %v3646 = vunpack.c.h.b16 %v704
        %v3647 = vunpack.c.l.b16 %v705
        %v3648 = vunpack.c.h.b16 %v705
        %v3649 = vunpack.c.l.b16 %v706
        %v3650 = vunpack.c.h.b16 %v706
        %v3651 = vunpack.c.l.b16 %v707
        %v3652 = vunpack.c.h.b16 %v707
        %v3653 = vunpack.c.l.b16 %v708
        %v3654 = vunpack.c.h.b16 %v708
        %v3655 = vunpack.c.l.b16 %v709
        %v3656 = vunpack.c.h.b16 %v709
        %v3657 = vunpack.c.l.b16 %v710
        %v3658 = vunpack.c.h.b16 %v710
        %v3659 = vunpack.c.l.b16 %v711
        %v3660 = vunpack.c.h.b16 %v711
        %v3661 = vunpack.c.l.b16 %v712
        %v3662 = vunpack.c.h.b16 %v712
        %v3663 = vunpack.c.l.b16 %v713
        %v3664 = vunpack.c.h.b16 %v713
        %v3665 = vunpack.c.l.b16 %v714
        %v3666 = vunpack.c.h.b16 %v714
        %v3667 = vunpack.c.l.b16 %v715
        %v3668 = vunpack.c.h.b16 %v715
        %v3669 = vunpack.c.l.b16 %v716
        %v3670 = vunpack.c.h.b16 %v716
        %v3671 = vunpack.c.l.b16 %v717
        %v3672 = vunpack.c.h.b16 %v717
        %v3673 = vunpack.c.l.b16 %v718
        %v3674 = vunpack.c.h.b16 %v718
        %v3675 = vunpack.c.l.b16 %v719
        %v3676 = vunpack.c.h.b16 %v719
        %v3677 = vunpack.c.l.b16 %v720
        %v3678 = vunpack.c.h.b16 %v720
        %v3679 = vunpack.c.l.b16 %v721
        %v3680 = vunpack.c.h.b16 %v721
        %v3681 = vunpack.c.l.b16 %v722
        %v3682 = vunpack.c.h.b16 %v722
        %v3683 = vunpack.c.l.b16 %v723
        %v3684 = vunpack.c.h.b16 %v723
        %v3685 = vunpack.c.l.b16 %v724
        %v3686 = vunpack.c.h.b16 %v724
        %v3687 = vunpack.c.l.b16 %v725
        %v3688 = vunpack.c.h.b16 %v725
        %v3689 = vunpack.c.l.b16 %v726
        %v3690 = vunpack.c.h.b16 %v726
        %v3691 = vunpack.c.l.b16 %v727
        %v3692 = vunpack.c.h.b16 %v727
        %v3693 = vunpack.c.l.b16 %v728
        %v3694 = vunpack.c.h.b16 %v728
        %v3695 = vunpack.c.l.b16 %v729
        %v3696 = vunpack.c.h.b16 %v729
        %v3697 = vunpack.c.l.b16 %v730
        %v3698 = vunpack.c.h.b16 %v730
        %v3699 = vunpack.c.l.b16 %v731
        %v3700 = vunpack.c.h.b16 %v731
        %v3701 = vunpack.c.l.b16 %v732
        %v3702 = vunpack.c.h.b16 %v732
        %v3703 = vunpack.c.l.b16 %v733
        %v3704 = vunpack.c.h.b16 %v733
        %v3705 = vunpack.c.l.b16 %v734
        %v3706 = vunpack.c.h.b16 %v734
        %v3707 = vunpack.c.l.b16 %v735
        %v3708 = vunpack.c.h.b16 %v735
        %v3709 = vunpack.c.l.b16 %v736
        %v3710 = vunpack.c.h.b16 %v736
        %v3711 = vunpack.c.l.b16 %v737
        %v3712 = vunpack.c.h.b16 %v737
        %v3713 = vunpack.c.l.b16 %v738
        %v3714 = vunpack.c.h.b16 %v738
        %v3715 = vunpack.c.l.b16 %v739
        %v3716 = vunpack.c.h.b16 %v739
        %v3717 = vunpack.c.l.b16 %v740
        %v3718 = vunpack.c.h.b16 %v740
        %v3719 = vunpack.c.l.b16 %v741
        %v3720 = vunpack.c.h.b16 %v741
        %v3721 = vunpack.c.l.b16 %v742
        %v3722 = vunpack.c.h.b16 %v742
        %v3723 = vunpack.c.l.b16 %v743
        %v3724 = vunpack.c.h.b16 %v743
        %v3725 = vunpack.c.l.b16 %v744
        %v3726 = vunpack.c.h.b16 %v744
        %v3727 = vunpack.c.l.b16 %v745
        %v3728 = vunpack.c.h.b16 %v745
        %v3729 = vunpack.c.l.b16 %v746
        %v3730 = vunpack.c.h.b16 %v746
        %v3731 = vunpack.c.l.b16 %v747
        %v3732 = vunpack.c.h.b16 %v747
        %v3733 = vunpack.c.l.b16 %v748
        %v3734 = vunpack.c.h.b16 %v748
        %v3735 = vunpack.c.l.b16 %v749
        %v3736 = vunpack.c.h.b16 %v749
        %v3737 = vunpack.c.l.b16 %v750
        %v3738 = vunpack.c.h.b16 %v750
        %v3739 = vunpack.c.l.b16 %v751
        %v3740 = vunpack.c.h.b16 %v751
        %v3741 = vunpack.c.l.b16 %v752
        %v3742 = vunpack.c.h.b16 %v752
        %v3743 = vunpack.c.l.b16 %v753
        %v3744 = vunpack.c.h.b16 %v753
        %v3745 = vunpack.c.l.b16 %v754
        %v3746 = vunpack.c.h.b16 %v754
        %v3747 = vunpack.c.l.b16 %v755
        %v3748 = vunpack.c.h.b16 %v755
        %v3749 = vunpack.c.l.b16 %v756
        %v3750 = vunpack.c.h.b16 %v756
        %v3751 = vunpack.c.l.b16 %v757
        %v3752 = vunpack.c.h.b16 %v757
        %v3753 = vunpack.c.l.b16 %v758
        %v3754 = vunpack.c.h.b16 %v758
        %v3755 = vunpack.c.l.b16 %v759
        %v3756 = vunpack.c.h.b16 %v759
        %v3757 = vunpack.c.l.b16 %v760
        %v3758 = vunpack.c.h.b16 %v760
        %v3759 = vunpack.c.l.b16 %v761
        %v3760 = vunpack.c.h.b16 %v761
        %v3761 = vunpack.c.l.b16 %v762
        %v3762 = vunpack.c.h.b16 %v762
        %v3763 = vunpack.c.l.b16 %v763
        %v3764 = vunpack.c.h.b16 %v763
        %v3765 = vunpack.c.l.b16 %v764
        %v3766 = vunpack.c.h.b16 %v764
        %v3767 = vunpack.c.l.b16 %v765
        %v3768 = vunpack.c.h.b16 %v765
        %v3769 = vunpack.c.l.b16 %v766
        %v3770 = vunpack.c.h.b16 %v766
        %v3771 = vunpack.c.l.b16 %v767
        %v3772 = vunpack.c.h.b16 %v767
        %v3773 = vunpack.c.l.b16 %v768
        %v3774 = vunpack.c.h.b16 %v768
        %v3775 = vunpack.c.l.b16 %v769
        %v3776 = vunpack.c.h.b16 %v769
        %v3777 = vunpack.c.l.b16 %v770
        %v3778 = vunpack.c.h.b16 %v770
        %v3779 = vunpack.c.l.b16 %v771
        %v3780 = vunpack.c.h.b16 %v771
        %v3781 = vunpack.c.l.b16 %v772
        %v3782 = vunpack.c.h.b16 %v772
        %v3783 = vunpack.c.l.b16 %v773
        %v3784 = vunpack.c.h.b16 %v773
        %v3785 = vunpack.c.l.b16 %v774
        %v3786 = vunpack.c.h.b16 %v774
        %v3787 = vunpack.c.l.b16 %v775
        %v3788 = vunpack.c.h.b16 %v775
        %v3789 = vunpack.c.l.b16 %v776
        %v3790 = vunpack.c.h.b16 %v776
        %v3791 = vunpack.c.l.b16 %v777
        %v3792 = vunpack.c.h.b16 %v777
        %v3793 = vunpack.c.l.b16 %v778
        %v3794 = vunpack.c.h.b16 %v778
        %v3795 = vunpack.c.l.b16 %v779
        %v3796 = vunpack.c.h.b16 %v779
        %v3797 = vunpack.c.l.b16 %v780
        %v3798 = vunpack.c.h.b16 %v780
        %v3799 = vunpack.c.l.b16 %v781
        %v3800 = vunpack.c.h.b16 %v781
        %v3801 = vunpack.c.l.b16 %v782
        %v3802 = vunpack.c.h.b16 %v782
        %v3803 = vunpack.c.l.b16 %v783
        %v3804 = vunpack.c.h.b16 %v783
        %v3805 = vunpack.c.l.b16 %v784
        %v3806 = vunpack.c.h.b16 %v784
        %v3807 = vunpack.c.l.b16 %v785
        %v3808 = vunpack.c.h.b16 %v785
        %v3809 = vunpack.c.l.b16 %v786
        %v3810 = vunpack.c.h.b16 %v786
        %v3811 = vunpack.c.l.b16 %v787
        %v3812 = vunpack.c.h.b16 %v787
        %v3813 = vunpack.c.l.b16 %v788
        %v3814 = vunpack.c.h.b16 %v788
        %v3815 = vunpack.c.l.b16 %v789
        %v3816 = vunpack.c.h.b16 %v789
        %v3817 = vunpack.c.l.b16 %v790
        %v3818 = vunpack.c.h.b16 %v790
        %v3819 = vunpack.c.l.b16 %v791
        %v3820 = vunpack.c.h.b16 %v791
        %v3821 = vunpack.c.l.b16 %v792
        %v3822 = vunpack.c.h.b16 %v792
        %v3823 = vunpack.c.l.b16 %v793
        %v3824 = vunpack.c.h.b16 %v793
        %v3825 = vunpack.c.l.b16 %v794
        %v3826 = vunpack.c.h.b16 %v794
        %v3827 = vunpack.c.l.b16 %v795
        %v3828 = vunpack.c.h.b16 %v795
        %v3829 = vunpack.c.l.b16 %v796
        %v3830 = vunpack.c.h.b16 %v796
        %v3831 = vunpack.c.l.b16 %v797
        %v3832 = vunpack.c.h.b16 %v797
        %v3833 = vunpack.c.l.b16 %v798
        %v3834 = vunpack.c.h.b16 %v798
        %v3835 = vunpack.c.l.b16 %v799
        %v3836 = vunpack.c.h.b16 %v799
        %v3837 = vunpack.c.l.b16 %v800
        %v3838 = vunpack.c.h.b16 %v800
        %v3839 = vunpack.c.l.b16 %v801
        %v3840 = vunpack.c.h.b16 %v801
        %v3841 = vunpack.c.l.b16 %v802
        %v3842 = vunpack.c.h.b16 %v802
        %v3843 = vunpack.c.l.b16 %v803
        %v3844 = vunpack.c.h.b16 %v803
        %v3845 = vunpack.c.l.b16 %v804
        %v3846 = vunpack.c.h.b16 %v804
        %v3847 = vunpack.c.l.b16 %v805
        %v3848 = vunpack.c.h.b16 %v805
        %v3849 = vunpack.c.l.b16 %v806
        %v3850 = vunpack.c.h.b16 %v806
        %v3851 = vunpack.c.l.b16 %v807
        %v3852 = vunpack.c.h.b16 %v807
        %v3853 = vunpack.c.l.b16 %v808
        %v3854 = vunpack.c.h.b16 %v808
        %v3855 = vunpack.c.l.b16 %v809
        %v3856 = vunpack.c.h.b16 %v809
        %v3857 = vunpack.c.l.b16 %v810
        %v3858 = vunpack.c.h.b16 %v810
        %v3859 = vunpack.c.l.b16 %v811
        %v3860 = vunpack.c.h.b16 %v811
        %v3861 = vunpack.c.l.b16 %v812
        %v3862 = vunpack.c.h.b16 %v812
        %v3863 = vunpack.c.l.b16 %v813
        %v3864 = vunpack.c.h.b16 %v813
        %v3865 = vunpack.c.l.b16 %v814
        %v3866 = vunpack.c.h.b16 %v814
        %v3867 = vunpack.c.l.b16 %v815
        %v3868 = vunpack.c.h.b16 %v815
        %v3869 = vunpack.c.l.b16 %v816
        %v3870 = vunpack.c.h.b16 %v816
        %v3871 = vunpack.c.l.b16 %v817
        %v3872 = vunpack.c.h.b16 %v817
        %v3873 = vunpack.c.l.b16 %v818
        %v3874 = vunpack.c.h.b16 %v818
        %v3875 = vunpack.c.l.b16 %v819
        %v3876 = vunpack.c.h.b16 %v819
        %v3877 = vunpack.c.l.b16 %v820
        %v3878 = vunpack.c.h.b16 %v820
        %v3879 = vunpack.c.l.b16 %v821
        %v3880 = vunpack.c.h.b16 %v821
        %v3881 = vunpack.c.l.b16 %v822
        %v3882 = vunpack.c.h.b16 %v822
        %v3883 = vunpack.c.l.b16 %v823
        %v3884 = vunpack.c.h.b16 %v823
        %v3885 = vunpack.c.l.b16 %v824
        %v3886 = vunpack.c.h.b16 %v824
        %v3887 = vunpack.c.l.b16 %v825
        %v3888 = vunpack.c.h.b16 %v825
        %v3889 = vunpack.c.l.b16 %v826
        %v3890 = vunpack.c.h.b16 %v826
        %v3891 = vunpack.c.l.b16 %v827
        %v3892 = vunpack.c.h.b16 %v827
        %v3893 = vunpack.c.l.b16 %v828
        %v3894 = vunpack.c.h.b16 %v828
        %v3895 = vunpack.c.l.b16 %v829
        %v3896 = vunpack.c.h.b16 %v829
        %v3897 = vunpack.c.l.b16 %v830
        %v3898 = vunpack.c.h.b16 %v830
        %v3899 = vunpack.c.l.b16 %v831
        %v3900 = vunpack.c.h.b16 %v831
        %v3901 = vunpack.c.l.b16 %v832
        %v3902 = vunpack.c.h.b16 %v832
        %v3903 = vunpack.c.l.b16 %v833
        %v3904 = vunpack.c.h.b16 %v833
        %v3905 = vunpack.c.l.b16 %v834
        %v3906 = vunpack.c.h.b16 %v834
        %v3907 = vunpack.c.l.b16 %v835
        %v3908 = vunpack.c.h.b16 %v835
        %v3909 = vunpack.c.l.b16 %v836
        %v3910 = vunpack.c.h.b16 %v836
        %v3911 = vunpack.c.l.b16 %v837
        %v3912 = vunpack.c.h.b16 %v837
        %v3913 = vunpack.c.l.b16 %v838
        %v3914 = vunpack.c.h.b16 %v838
        %v3915 = vunpack.c.l.b16 %v839
        %v3916 = vunpack.c.h.b16 %v839
        %v3917 = vunpack.c.l.b16 %v840
        %v3918 = vunpack.c.h.b16 %v840
        %v3919 = vunpack.c.l.b16 %v841
        %v3920 = vunpack.c.h.b16 %v841
        %v3921 = vunpack.c.l.b16 %v842
        %v3922 = vunpack.c.h.b16 %v842
        %v3923 = vunpack.c.l.b16 %v843
        %v3924 = vunpack.c.h.b16 %v843
        %v3925 = vunpack.c.l.b16 %v844
        %v3926 = vunpack.c.h.b16 %v844
        %v3927 = vunpack.c.l.b16 %v845
        %v3928 = vunpack.c.h.b16 %v845
        %v3929 = vunpack.c.l.b16 %v846
        %v3930 = vunpack.c.h.b16 %v846
        %v3931 = vunpack.c.l.b16 %v847
        %v3932 = vunpack.c.h.b16 %v847
        %v3933 = vunpack.c.l.b16 %v848
        %v3934 = vunpack.c.h.b16 %v848
        %v3935 = vunpack.c.l.b16 %v849
        %v3936 = vunpack.c.h.b16 %v849
        %v3937 = vunpack.c.l.b16 %v850
        %v3938 = vunpack.c.h.b16 %v850
        %v3939 = vunpack.c.l.b16 %v851
        %v3940 = vunpack.c.h.b16 %v851
        %v3941 = vunpack.c.l.b16 %v852
        %v3942 = vunpack.c.h.b16 %v852
        %v3943 = vunpack.c.l.b16 %v853
        %v3944 = vunpack.c.h.b16 %v853
        %v3945 = vunpack.c.l.b16 %v854
        %v3946 = vunpack.c.h.b16 %v854
        %v3947 = vunpack.c.l.b16 %v855
        %v3948 = vunpack.c.h.b16 %v855
        %v3949 = vunpack.c.l.b16 %v856
        %v3950 = vunpack.c.h.b16 %v856
        %v3951 = vunpack.c.l.b16 %v857
        %v3952 = vunpack.c.h.b16 %v857
        %v3953 = vunpack.c.l.b16 %v858
        %v3954 = vunpack.c.h.b16 %v858
        %v3955 = vunpack.c.l.b16 %v859
        %v3956 = vunpack.c.h.b16 %v859
        %v3957 = vunpack.c.l.b16 %v860
        %v3958 = vunpack.c.h.b16 %v860
        %v3959 = vunpack.c.l.b16 %v861
        %v3960 = vunpack.c.h.b16 %v861
        %v3961 = vunpack.c.l.b16 %v862
        %v3962 = vunpack.c.h.b16 %v862
        %v3963 = vunpack.c.l.b16 %v863
        %v3964 = vunpack.c.h.b16 %v863
        %v3965 = vunpack.c.l.b16 %v864
        %v3966 = vunpack.c.h.b16 %v864
        %v3967 = vunpack.c.l.b16 %v865
        %v3968 = vunpack.c.h.b16 %v865
        %v3969 = vunpack.c.l.b16 %v866
        %v3970 = vunpack.c.h.b16 %v866
        %v3971 = vunpack.c.l.b16 %v867
        %v3972 = vunpack.c.h.b16 %v867
        %v3973 = vunpack.c.l.b16 %v868
        %v3974 = vunpack.c.h.b16 %v868
        %v3975 = vunpack.c.l.b16 %v869
        %v3976 = vunpack.c.h.b16 %v869
        %v3977 = vunpack.c.l.b16 %v870
        %v3978 = vunpack.c.h.b16 %v870
        %v3979 = vunpack.c.l.b16 %v871
        %v3980 = vunpack.c.h.b16 %v871
        %v3981 = vunpack.c.l.b16 %v872
        %v3982 = vunpack.c.h.b16 %v872
        %v3983 = vunpack.c.l.b16 %v873
        %v3984 = vunpack.c.h.b16 %v873
        %v3985 = vunpack.c.l.b16 %v874
        %v3986 = vunpack.c.h.b16 %v874
        %v3987 = vunpack.c.l.b16 %v875
        %v3988 = vunpack.c.h.b16 %v875
        %v3989 = vunpack.c.l.b16 %v876
        %v3990 = vunpack.c.h.b16 %v876
        %v3991 = vunpack.c.l.b16 %v877
        %v3992 = vunpack.c.h.b16 %v877
        %v3993 = vunpack.c.l.b16 %v878
        %v3994 = vunpack.c.h.b16 %v878
        %v3995 = vunpack.c.l.b16 %v879
        %v3996 = vunpack.c.h.b16 %v879
        %v3997 = vunpack.c.l.b16 %v880
        %v3998 = vunpack.c.h.b16 %v880
        %v3999 = vunpack.c.l.b16 %v881
        %v4000 = vunpack.c.h.b16 %v881
        %v4001 = vunpack.c.l.b16 %v882
        %v4002 = vunpack.c.h.b16 %v882
        %v4003 = vunpack.c.l.b16 %v883
        %v4004 = vunpack.c.h.b16 %v883
        %v4005 = vunpack.c.l.b16 %v884
        %v4006 = vunpack.c.h.b16 %v884
        %v4007 = vunpack.c.l.b16 %v885
        %v4008 = vunpack.c.h.b16 %v885
        %v4009 = vunpack.c.l.b16 %v886
        %v4010 = vunpack.c.h.b16 %v886
        %v4011 = vunpack.c.l.b16 %v887
        %v4012 = vunpack.c.h.b16 %v887
        %v4013 = vunpack.c.l.b16 %v888
        %v4014 = vunpack.c.h.b16 %v888
        %v4015 = vunpack.c.l.b16 %v889
        %v4016 = vunpack.c.h.b16 %v889
        %v4017 = vunpack.c.l.b16 %v890
        %v4018 = vunpack.c.h.b16 %v890
        %v4019 = vunpack.c.l.b16 %v891
        %v4020 = vunpack.c.h.b16 %v891
        %v4021 = vunpack.c.l.b16 %v892
        %v4022 = vunpack.c.h.b16 %v892
        %v4023 = vunpack.c.l.b16 %v893
        %v4024 = vunpack.c.h.b16 %v893
        %v4025 = vunpack.c.l.b16 %v894
        %v4026 = vunpack.c.h.b16 %v894
        %v4027 = vunpack.c.l.b16 %v895
        %v4028 = vunpack.c.h.b16 %v895
        %v4029 = vunpack.c.l.b16 %v896
        %v4030 = vunpack.c.h.b16 %v896
        %v4031 = vunpack.c.l.b16 %v897
        %v4032 = vunpack.c.h.b16 %v897
        %v4033 = vunpack.c.l.b16 %v898
        %v4034 = vunpack.c.h.b16 %v898
        %v4035 = vunpack.c.l.b16 %v899
        %v4036 = vunpack.c.h.b16 %v899
        %v4037 = vunpack.c.l.b16 %v900
        %v4038 = vunpack.c.h.b16 %v900
        %v4039 = vunpack.c.l.b16 %v901
        %v4040 = vunpack.c.h.b16 %v901
        %v4041 = vunpack.c.l.b16 %v902
        %v4042 = vunpack.c.h.b16 %v902
        %v4043 = vunpack.c.l.b16 %v903
        %v4044 = vunpack.c.h.b16 %v903
        %v4045 = vunpack.c.l.b16 %v904
        %v4046 = vunpack.c.h.b16 %v904
        %v4047 = vunpack.c.l.b16 %v905
        %v4048 = vunpack.c.h.b16 %v905
        %v4049 = vunpack.c.l.b16 %v906
        %v4050 = vunpack.c.h.b16 %v906
        %v4051 = vunpack.c.l.b16 %v907
        %v4052 = vunpack.c.h.b16 %v907
        %v4053 = vunpack.c.l.b16 %v908
        %v4054 = vunpack.c.h.b16 %v908
        %v4055 = vunpack.c.l.b16 %v909
        %v4056 = vunpack.c.h.b16 %v909
        %v4057 = vunpack.c.l.b16 %v910
        %v4058 = vunpack.c.h.b16 %v910
        %v4059 = vunpack.c.l.b16 %v911
        %v4060 = vunpack.c.h.b16 %v911
        %v4061 = vunpack.c.l.b16 %v912
        %v4062 = vunpack.c.h.b16 %v912
        %v4063 = vunpack.c.l.b16 %v913
        %v4064 = vunpack.c.h.b16 %v913
        %v4065 = vunpack.c.l.b16 %v914
        %v4066 = vunpack.c.h.b16 %v914
        %v4067 = vunpack.c.l.b16 %v915
        %v4068 = vunpack.c.h.b16 %v915
        %v4069 = vunpack.c.l.b16 %v916
        %v4070 = vunpack.c.h.b16 %v916
        %v4071 = vunpack.c.l.b16 %v917
        %v4072 = vunpack.c.h.b16 %v917
        %v4073 = vunpack.c.l.b16 %v918
        %v4074 = vunpack.c.h.b16 %v918
        %v4075 = vunpack.c.l.b16 %v919
        %v4076 = vunpack.c.h.b16 %v919
        %v4077 = vunpack.c.l.b16 %v920
        %v4078 = vunpack.c.h.b16 %v920
        %v4079 = vunpack.c.l.b16 %v921
        %v4080 = vunpack.c.h.b16 %v921
        %v4081 = vunpack.c.l.b16 %v922
        %v4082 = vunpack.c.h.b16 %v922
        %v4083 = vunpack.c.l.b16 %v923
        %v4084 = vunpack.c.h.b16 %v923
        %v4085 = vunpack.c.l.b16 %v924
        %v4086 = vunpack.c.h.b16 %v924
        %v4087 = vunpack.c.l.b16 %v925
        %v4088 = vunpack.c.h.b16 %v925
        %v4089 = vunpack.c.l.b16 %v926
        %v4090 = vunpack.c.h.b16 %v926
        %v4091 = vunpack.c.l.b16 %v927
        %v4092 = vunpack.c.h.b16 %v927
        %v4093 = vunpack.c.l.b16 %v928
        %v4094 = vunpack.c.h.b16 %v928
        %v4095 = vunpack.c.l.b16 %v929
        %v4096 = vunpack.c.h.b16 %v929
        %v4097 = vunpack.c.l.b16 %v930
        %v4098 = vunpack.c.h.b16 %v930
        %v4099 = vunpack.c.l.b16 %v931
        %v4100 = vunpack.c.h.b16 %v931
        %v4101 = vunpack.c.l.b16 %v932
        %v4102 = vunpack.c.h.b16 %v932
        %v4103 = vunpack.c.l.b16 %v933
        %v4104 = vunpack.c.h.b16 %v933
        %v4105 = vunpack.c.l.b16 %v934
        %v4106 = vunpack.c.h.b16 %v934
        %v4107 = vunpack.c.l.b16 %v935
        %v4108 = vunpack.c.h.b16 %v935
        %v4109 = vunpack.c.l.b16 %v936
        %v4110 = vunpack.c.h.b16 %v936
        %v4111 = vunpack.c.l.b16 %v937
        %v4112 = vunpack.c.h.b16 %v937
        %v4113 = vunpack.c.l.b16 %v938
        %v4114 = vunpack.c.h.b16 %v938
        %v4115 = vunpack.c.l.b16 %v939
        %v4116 = vunpack.c.h.b16 %v939
        %v4117 = vunpack.c.l.b16 %v940
        %v4118 = vunpack.c.h.b16 %v940
        %v4119 = vunpack.c.l.b16 %v941
        %v4120 = vunpack.c.h.b16 %v941
        %v4121 = vunpack.c.l.b16 %v942
        %v4122 = vunpack.c.h.b16 %v942
        %v4123 = vunpack.c.l.b16 %v943
        %v4124 = vunpack.c.h.b16 %v943
        %v4125 = vunpack.c.l.b16 %v944
        %v4126 = vunpack.c.h.b16 %v944
        %v4127 = vunpack.c.l.b16 %v945
        %v4128 = vunpack.c.h.b16 %v945
        %v4129 = vunpack.c.l.b16 %v946
        %v4130 = vunpack.c.h.b16 %v946
        %v4131 = vunpack.c.l.b16 %v947
        %v4132 = vunpack.c.h.b16 %v947
        %v4133 = vunpack.c.l.b16 %v948
        %v4134 = vunpack.c.h.b16 %v948
        %v4135 = vunpack.c.l.b16 %v949
        %v4136 = vunpack.c.h.b16 %v949
        %v4137 = vunpack.c.l.b16 %v950
        %v4138 = vunpack.c.h.b16 %v950
        %v4139 = vunpack.c.l.b16 %v951
        %v4140 = vunpack.c.h.b16 %v951
        %v4141 = vunpack.c.l.b16 %v952
        %v4142 = vunpack.c.h.b16 %v952
        %v4143 = vunpack.c.l.b16 %v953
        %v4144 = vunpack.c.h.b16 %v953
        %v4145 = vunpack.c.l.b16 %v954
        %v4146 = vunpack.c.h.b16 %v954
        %v4147 = vunpack.c.l.b16 %v955
        %v4148 = vunpack.c.h.b16 %v955
        %v4149 = vunpack.c.l.b16 %v956
        %v4150 = vunpack.c.h.b16 %v956
        %v4151 = vunpack.c.l.b16 %v957
        %v4152 = vunpack.c.h.b16 %v957
        %v4153 = vunpack.c.l.b16 %v958
        %v4154 = vunpack.c.h.b16 %v958
        %v4155 = vunpack.c.l.b16 %v959
        %v4156 = vunpack.c.h.b16 %v959
        %v4157 = vunpack.c.l.b16 %v960
        %v4158 = vunpack.c.h.b16 %v960
        %v4159 = vunpack.c.l.b16 %v961
        %v4160 = vunpack.c.h.b16 %v961
        %v4161 = vunpack.c.l.b16 %v962
        %v4162 = vunpack.c.h.b16 %v962
        %v4163 = vunpack.c.l.b16 %v963
        %v4164 = vunpack.c.h.b16 %v963
        %v4165 = vunpack.c.l.b16 %v964
        %v4166 = vunpack.c.h.b16 %v964
        %v4167 = vunpack.c.l.b16 %v965
        %v4168 = vunpack.c.h.b16 %v965
        %v4169 = vunpack.c.l.b16 %v966
        %v4170 = vunpack.c.h.b16 %v966
        %v4171 = vunpack.c.l.b16 %v967
        %v4172 = vunpack.c.h.b16 %v967
        %v4173 = vunpack.c.l.b16 %v968
        %v4174 = vunpack.c.h.b16 %v968
        %v4175 = vunpack.c.l.b16 %v969
        %v4176 = vunpack.c.h.b16 %v969
        %v4177 = vunpack.c.l.b16 %v970
        %v4178 = vunpack.c.h.b16 %v970
        %v4179 = vunpack.c.l.b16 %v971
        %v4180 = vunpack.c.h.b16 %v971
        %v4181 = vunpack.c.l.b16 %v972
        %v4182 = vunpack.c.h.b16 %v972
        %v4183 = vunpack.c.l.b16 %v973
        %v4184 = vunpack.c.h.b16 %v973
        %v4185 = vunpack.c.l.b16 %v974
        %v4186 = vunpack.c.h.b16 %v974
        %v4187 = vunpack.c.l.b16 %v975
        %v4188 = vunpack.c.h.b16 %v975
        %v4189 = vunpack.c.l.b16 %v976
        %v4190 = vunpack.c.h.b16 %v976
        %v4191 = vunpack.c.l.b16 %v977
        %v4192 = vunpack.c.h.b16 %v977
        %v4193 = vunpack.c.l.b16 %v978
        %v4194 = vunpack.c.h.b16 %v978
        %v4195 = vunpack.c.l.b16 %v979
        %v4196 = vunpack.c.h.b16 %v979
        %v4197 = vunpack.c.l.b16 %v980
        %v4198 = vunpack.c.h.b16 %v980
        %v4199 = vunpack.c.l.b16 %v981
        %v4200 = vunpack.c.h.b16 %v981
        %v4201 = vunpack.c.l.b16 %v982
        %v4202 = vunpack.c.h.b16 %v982
        %v4203 = vunpack.c.l.b16 %v983
        %v4204 = vunpack.c.h.b16 %v983
        %v4205 = vunpack.c.l.b16 %v984
        %v4206 = vunpack.c.h.b16 %v984
        %v4207 = vunpack.c.l.b16 %v985
        %v4208 = vunpack.c.h.b16 %v985
        %v4209 = vunpack.c.l.b16 %v986
        %v4210 = vunpack.c.h.b16 %v986
        %v4211 = vunpack.c.l.b16 %v987
        %v4212 = vunpack.c.h.b16 %v987
        %v4213 = vunpack.c.l.b16 %v988
        %v4214 = vunpack.c.h.b16 %v988
        %v4215 = vunpack.c.l.b16 %v989
        %v4216 = vunpack.c.h.b16 %v989
        %v4217 = vunpack.c.l.b16 %v990
        %v4218 = vunpack.c.h.b16 %v990
        %v4219 = vunpack.c.l.b16 %v991
        %v4220 = vunpack.c.h.b16 %v991
        %v4221 = vunpack.c.l.b16 %v992
        %v4222 = vunpack.c.h.b16 %v992
        %v4223 = vunpack.c.l.b16 %v993
        %v4224 = vunpack.c.h.b16 %v993
        %v4225 = vunpack.c.l.b16 %v994
        %v4226 = vunpack.c.h.b16 %v994
        %v4227 = vunpack.c.l.b16 %v995
        %v4228 = vunpack.c.h.b16 %v995
        %v4229 = vunpack.c.l.b16 %v996
        %v4230 = vunpack.c.h.b16 %v996
        %v4231 = vunpack.c.l.b16 %v997
        %v4232 = vunpack.c.h.b16 %v997
        %v4233 = vunpack.c.l.b16 %v998
        %v4234 = vunpack.c.h.b16 %v998
        %v4235 = vunpack.c.l.b16 %v999
        %v4236 = vunpack.c.h.b16 %v999
        %v4237 = vunpack.c.l.b16 %v1000
        %v4238 = vunpack.c.h.b16 %v1000
        %v4239 = vunpack.c.l.b16 %v1001
        %v4240 = vunpack.c.h.b16 %v1001
        %v4241 = vunpack.c.l.b16 %v1002
        %v4242 = vunpack.c.h.b16 %v1002
        %v4243 = vunpack.c.l.b16 %v1003
        %v4244 = vunpack.c.h.b16 %v1003
        %v4245 = vunpack.c.l.b16 %v1004
        %v4246 = vunpack.c.h.b16 %v1004
        %v4247 = vunpack.c.l.b16 %v1005
        %v4248 = vunpack.c.h.b16 %v1005
        %v4249 = vunpack.c.l.b16 %v1006
        %v4250 = vunpack.c.h.b16 %v1006
        %v4251 = vunpack.c.l.b16 %v1007
        %v4252 = vunpack.c.h.b16 %v1007
        %v4253 = vunpack.c.l.b16 %v1008
        %v4254 = vunpack.c.h.b16 %v1008
        %v4255 = vunpack.c.l.b16 %v1009
        %v4256 = vunpack.c.h.b16 %v1009
        %v4257 = vunpack.c.l.b16 %v1010
        %v4258 = vunpack.c.h.b16 %v1010
        %v4259 = vunpack.c.l.b16 %v1011
        %v4260 = vunpack.c.h.b16 %v1011
        %v4261 = vunpack.c.l.b16 %v1012
        %v4262 = vunpack.c.h.b16 %v1012
        %v4263 = vunpack.c.l.b16 %v1013
        %v4264 = vunpack.c.h.b16 %v1013
        %v4265 = vunpack.c.l.b16 %v1014
        %v4266 = vunpack.c.h.b16 %v1014
        %v4267 = vunpack.c.l.b16 %v1015
        %v4268 = vunpack.c.h.b16 %v1015
        %v4269 = vunpack.c.l.b16 %v1016
        %v4270 = vunpack.c.h.b16 %v1016
        %v4271 = vunpack.c.l.b16 %v1017
        %v4272 = vunpack.c.h.b16 %v1017
        %v4273 = vunpack.c.l.b16 %v1018
        %v4274 = vunpack.c.h.b16 %v1018
        %v4275 = vunpack.c.l.b16 %v1019
        %v4276 = vunpack.c.h.b16 %v1019
        %v4277 = vunpack.c.l.b16 %v1020
        %v4278 = vunpack.c.h.b16 %v1020
        %v4279 = vunpack.c.l.b16 %v1021
        %v4280 = vunpack.c.h.b16 %v1021
        %v4281 = vunpack.c.l.b16 %v1022
        %v4282 = vunpack.c.h.b16 %v1022
        %v4283 = vunpack.c.l.b16 %v1023
        %v4284 = vunpack.c.h.b16 %v1023
        %v4285 = vunpack.c.l.b16 %v1024
        %v4286 = vunpack.c.h.b16 %v1024
        %v4287 = vunpack.c.l.b16 %v1025
        %v4288 = vunpack.c.h.b16 %v1025
        %v4289 = vunpack.c.l.b16 %v1026
        %v4290 = vunpack.c.h.b16 %v1026
        %v4291 = vunpack.c.l.b16 %v1027
        %v4292 = vunpack.c.h.b16 %v1027
        %v4293 = vunpack.c.l.b16 %v1028
        %v4294 = vunpack.c.h.b16 %v1028
        %v4295 = vunpack.c.l.b16 %v1029
        %v4296 = vunpack.c.h.b16 %v1029
        %v4297 = vunpack.c.l.b16 %v1030
        %v4298 = vunpack.c.h.b16 %v1030
        %v4299 = vunpack.c.l.b16 %v1031
        %v4300 = vunpack.c.h.b16 %v1031
        %v4301 = vunpack.c.l.b16 %v1032
        %v4302 = vunpack.c.h.b16 %v1032
        %v4303 = vunpack.c.l.b16 %v1033
        %v4304 = vunpack.c.h.b16 %v1033
        %v4305 = vunpack.c.l.b16 %v1034
        %v4306 = vunpack.c.h.b16 %v1034
        %v4307 = vunpack.c.l.b16 %v1035
        %v4308 = vunpack.c.h.b16 %v1035
        %v4309 = vunpack.c.l.b16 %v1036
        %v4310 = vunpack.c.h.b16 %v1036
        %v4311 = vunpack.c.l.b16 %v1037
        %v4312 = vunpack.c.h.b16 %v1037
        %v4313 = vunpack.c.l.b16 %v1038
        %v4314 = vunpack.c.h.b16 %v1038
        %v4315 = vunpack.c.l.b16 %v1039
        %v4316 = vunpack.c.h.b16 %v1039
        %v4317 = vunpack.c.l.b16 %v1040
        %v4318 = vunpack.c.h.b16 %v1040
        %v4319 = vunpack.c.l.b16 %v1041
        %v4320 = vunpack.c.h.b16 %v1041
        %v4321 = vunpack.c.l.b16 %v1042
        %v4322 = vunpack.c.h.b16 %v1042
        %v4323 = vunpack.c.l.b16 %v1043
        %v4324 = vunpack.c.h.b16 %v1043
        %v4325 = vunpack.c.l.b16 %v1044
        %v4326 = vunpack.c.h.b16 %v1044
        %v4327 = vunpack.c.l.b16 %v1045
        %v4328 = vunpack.c.h.b16 %v1045
        %v4329 = vunpack.c.l.b16 %v1046
        %v4330 = vunpack.c.h.b16 %v1046
        %v4331 = vunpack.c.l.b16 %v1047
        %v4332 = vunpack.c.h.b16 %v1047
        %v4333 = vunpack.c.l.b16 %v1048
        %v4334 = vunpack.c.h.b16 %v1048
        %v4335 = vunpack.c.l.b16 %v1049
        %v4336 = vunpack.c.h.b16 %v1049
        %v4337 = vunpack.c.l.b16 %v1050
        %v4338 = vunpack.c.h.b16 %v1050
        %v4339 = vunpack.c.l.b16 %v1051
        %v4340 = vunpack.c.h.b16 %v1051
        %v4341 = vunpack.c.l.b16 %v1052
        %v4342 = vunpack.c.h.b16 %v1052
        %v4343 = vunpack.c.l.b16 %v1053
        %v4344 = vunpack.c.h.b16 %v1053
        %v4345 = vunpack.c.l.b16 %v1054
        %v4346 = vunpack.c.h.b16 %v1054
        %v4347 = vunpack.c.l.b16 %v1055
        %v4348 = vunpack.c.h.b16 %v1055
        %v4349 = vunpack.c.l.b16 %v1056
        %v4350 = vunpack.c.h.b16 %v1056
        %v4351 = vunpack.c.l.b16 %v1057
        %v4352 = vunpack.c.h.b16 %v1057
        %v4353 = vunpack.c.l.b16 %v1058
        %v4354 = vunpack.c.h.b16 %v1058
        %v4355 = vunpack.c.l.b16 %v1059
        %v4356 = vunpack.c.h.b16 %v1059
        %v4357 = vunpack.c.l.b16 %v1060
        %v4358 = vunpack.c.h.b16 %v1060
        %v4359 = vunpack.c.l.b16 %v1061
        %v4360 = vunpack.c.h.b16 %v1061
        %v4361 = vunpack.c.l.b16 %v1062
        %v4362 = vunpack.c.h.b16 %v1062
        %v4363 = vunpack.c.l.b16 %v1063
        %v4364 = vunpack.c.h.b16 %v1063
        %v4365 = vunpack.c.l.b16 %v1064
        %v4366 = vunpack.c.h.b16 %v1064
        %v4367 = vunpack.c.l.b16 %v1065
        %v4368 = vunpack.c.h.b16 %v1065
        %v4369 = vunpack.c.l.b16 %v1066
        %v4370 = vunpack.c.h.b16 %v1066
        %v4371 = vunpack.c.l.b16 %v1067
        %v4372 = vunpack.c.h.b16 %v1067
        %v4373 = vunpack.c.l.b16 %v1068
        %v4374 = vunpack.c.h.b16 %v1068
        %v4375 = vunpack.c.l.b16 %v1069
        %v4376 = vunpack.c.h.b16 %v1069
        %v4377 = vunpack.c.l.b16 %v1070
        %v4378 = vunpack.c.h.b16 %v1070
        %v4379 = vunpack.c.l.b16 %v1071
        %v4380 = vunpack.c.h.b16 %v1071
        %v4381 = vunpack.c.l.b16 %v1072
        %v4382 = vunpack.c.h.b16 %v1072
        %v4383 = vunpack.c.l.b16 %v1073
        %v4384 = vunpack.c.h.b16 %v1073
        %v4385 = vunpack.c.l.b16 %v1074
        %v4386 = vunpack.c.h.b16 %v1074
        %v4387 = vunpack.c.l.b16 %v1075
        %v4388 = vunpack.c.h.b16 %v1075
        %v4389 = vunpack.c.l.b16 %v1076
        %v4390 = vunpack.c.h.b16 %v1076
        %v4391 = vunpack.c.l.b16 %v1077
        %v4392 = vunpack.c.h.b16 %v1077
        %v4393 = vunpack.c.l.b16 %v1078
        %v4394 = vunpack.c.h.b16 %v1078
        %v4395 = vunpack.c.l.b16 %v1079
        %v4396 = vunpack.c.h.b16 %v1079
        %v4397 = vunpack.c.l.b16 %v1080
        %v4398 = vunpack.c.h.b16 %v1080
        %v4399 = vunpack.c.l.b16 %v1081
        %v4400 = vunpack.c.h.b16 %v1081
        %v4401 = vunpack.c.l.b16 %v1082
        %v4402 = vunpack.c.h.b16 %v1082
        %v4403 = vunpack.c.l.b16 %v1083
        %v4404 = vunpack.c.h.b16 %v1083
        %v4405 = vunpack.c.l.b16 %v1084
        %v4406 = vunpack.c.h.b16 %v1084
        %v4407 = vunpack.c.l.b16 %v1085
        %v4408 = vunpack.c.h.b16 %v1085
        %v4409 = vunpack.c.l.b16 %v1086
        %v4410 = vunpack.c.h.b16 %v1086
        %v4411 = vunpack.c.l.b16 %v1087
        %v4412 = vunpack.c.h.b16 %v1087
        %v4413 = vunpack.c.l.b16 %v1088
        %v4414 = vunpack.c.h.b16 %v1088
        %v4415 = vunpack.c.l.b16 %v1089
        %v4416 = vunpack.c.h.b16 %v1089
        %v4417 = vunpack.c.l.b16 %v1090
        %v4418 = vunpack.c.h.b16 %v1090
        %v4419 = vunpack.c.l.b16 %v1091
        %v4420 = vunpack.c.h.b16 %v1091
        %v4421 = vunpack.c.l.b16 %v1092
        %v4422 = vunpack.c.h.b16 %v1092
        %v4423 = vunpack.c.l.b16 %v1093
        %v4424 = vunpack.c.h.b16 %v1093
        %v4425 = vunpack.c.l.b16 %v1094
        %v4426 = vunpack.c.h.b16 %v1094
        %v4427 = vunpack.c.l.b16 %v1095
        %v4428 = vunpack.c.h.b16 %v1095
        %v4429 = vunpack.c.l.b16 %v1096
        %v4430 = vunpack.c.h.b16 %v1096
        %v4431 = vunpack.c.l.b16 %v1097
        %v4432 = vunpack.c.h.b16 %v1097
        %v4433 = vunpack.c.l.b16 %v1098
        %v4434 = vunpack.c.h.b16 %v1098
        %v4435 = vunpack.c.l.b16 %v1099
        %v4436 = vunpack.c.h.b16 %v1099
        %v4437 = vunpack.c.l.b16 %v1100
        %v4438 = vunpack.c.h.b16 %v1100
        %v4439 = vunpack.c.l.b16 %v1101
        %v4440 = vunpack.c.h.b16 %v1101
        %v4441 = vunpack.c.l.b16 %v1102
        %v4442 = vunpack.c.h.b16 %v1102
        %v4443 = vunpack.c.l.b16 %v1103
        %v4444 = vunpack.c.h.b16 %v1103
        %v4445 = vunpack.c.l.b16 %v1104
        %v4446 = vunpack.c.h.b16 %v1104
        %v4447 = vunpack.c.l.b16 %v1105
        %v4448 = vunpack.c.h.b16 %v1105
        %v4449 = vunpack.c.l.b16 %v1106
        %v4450 = vunpack.c.h.b16 %v1106
        %v4451 = vunpack.c.l.b16 %v1107
        %v4452 = vunpack.c.h.b16 %v1107
        %v4453 = vunpack.c.l.b16 %v1108
        %v4454 = vunpack.c.h.b16 %v1108
        %v4455 = vunpack.c.l.b16 %v1109
        %v4456 = vunpack.c.h.b16 %v1109
        %v4457 = vunpack.c.l.b16 %v1110
        %v4458 = vunpack.c.h.b16 %v1110
        %v4459 = vunpack.c.l.b16 %v1111
        %v4460 = vunpack.c.h.b16 %v1111
        %v4461 = vunpack.c.l.b16 %v1112
        %v4462 = vunpack.c.h.b16 %v1112
        %v4463 = vunpack.c.l.b16 %v1113
        %v4464 = vunpack.c.h.b16 %v1113
        %v4465 = vunpack.c.l.b16 %v1114
        %v4466 = vunpack.c.h.b16 %v1114
        %v4467 = vunpack.c.l.b16 %v1115
        %v4468 = vunpack.c.h.b16 %v1115
        %v4469 = vunpack.c.l.b16 %v1116
        %v4470 = vunpack.c.h.b16 %v1116
        %v4471 = vunpack.c.l.b16 %v1117
        %v4472 = vunpack.c.h.b16 %v1117
        %v4473 = vunpack.c.l.b16 %v1118
        %v4474 = vunpack.c.h.b16 %v1118
        %v4475 = vunpack.c.l.b16 %v1119
        %v4476 = vunpack.c.h.b16 %v1119
        %v4477 = vunpack.c.l.b16 %v1120
        %v4478 = vunpack.c.h.b16 %v1120
        %v4479 = vunpack.c.l.b16 %v1121
        %v4480 = vunpack.c.h.b16 %v1121
        %v4481 = vunpack.c.l.b16 %v1122
        %v4482 = vunpack.c.h.b16 %v1122
        %v4483 = vunpack.c.l.b16 %v1123
        %v4484 = vunpack.c.h.b16 %v1123
        %v4485 = vunpack.c.l.b16 %v1124
        %v4486 = vunpack.c.h.b16 %v1124
        %v4487 = vunpack.c.l.b16 %v1125
        %v4488 = vunpack.c.h.b16 %v1125
        %v4489 = vunpack.c.l.b16 %v1126
        %v4490 = vunpack.c.h.b16 %v1126
        %v4491 = vunpack.c.l.b16 %v1127
        %v4492 = vunpack.c.h.b16 %v1127
        %v4493 = vunpack.c.l.b16 %v1128
        %v4494 = vunpack.c.h.b16 %v1128
        %v4495 = vunpack.c.l.b16 %v1129
        %v4496 = vunpack.c.h.b16 %v1129
        %v4497 = vunpack.c.l.b16 %v1130
        %v4498 = vunpack.c.h.b16 %v1130
        %v4499 = vunpack.c.l.b16 %v1131
        %v4500 = vunpack.c.h.b16 %v1131
        %v4501 = vunpack.c.l.b16 %v1132
        %v4502 = vunpack.c.h.b16 %v1132
        %v4503 = vunpack.c.l.b16 %v1133
        %v4504 = vunpack.c.h.b16 %v1133
        %v4505 = vunpack.c.l.b16 %v1134
        %v4506 = vunpack.c.h.b16 %v1134
        %v4507 = vunpack.c.l.b16 %v1135
        %v4508 = vunpack.c.h.b16 %v1135
        %v4509 = vunpack.c.l.b16 %v1136
        %v4510 = vunpack.c.h.b16 %v1136
        %v4511 = vunpack.c.l.b16 %v1137
        %v4512 = vunpack.c.h.b16 %v1137
        %v4513 = vunpack.c.l.b16 %v1138
        %v4514 = vunpack.c.h.b16 %v1138
        %v4515 = vunpack.c.l.b16 %v1139
        %v4516 = vunpack.c.h.b16 %v1139
        %v4517 = vunpack.c.l.b16 %v1140
        %v4518 = vunpack.c.h.b16 %v1140
        %v4519 = vunpack.c.l.b16 %v1141
        %v4520 = vunpack.c.h.b16 %v1141
        %v4521 = vunpack.c.l.b16 %v1142
        %v4522 = vunpack.c.h.b16 %v1142
        %v4523 = vunpack.c.l.b16 %v1143
        %v4524 = vunpack.c.h.b16 %v1143
        %v4525 = vunpack.c.l.b16 %v1144
        %v4526 = vunpack.c.h.b16 %v1144
        %v4527 = vunpack.c.l.b16 %v1145
        %v4528 = vunpack.c.h.b16 %v1145
        %v4529 = vunpack.c.l.b16 %v1146
        %v4530 = vunpack.c.h.b16 %v1146
        %v4531 = vunpack.c.l.b16 %v1147
        %v4532 = vunpack.c.h.b16 %v1147
        %v4533 = vunpack.c.l.b16 %v1148
        %v4534 = vunpack.c.h.b16 %v1148
        %v4535 = vunpack.c.l.b16 %v1149
        %v4536 = vunpack.c.h.b16 %v1149
        %v4537 = vunpack.c.l.b16 %v1150
        %v4538 = vunpack.c.h.b16 %v1150
        %v4539 = vunpack.c.l.b16 %v1151
        %v4540 = vunpack.c.h.b16 %v1151
        %v4541 = vunpack.c.l.b16 %v1152
        %v4542 = vunpack.c.h.b16 %v1152
        %v4543 = vunpack.c.l.b16 %v1153
        %v4544 = vunpack.c.h.b16 %v1153
        %v4545 = vunpack.c.l.b16 %v1154
        %v4546 = vunpack.c.h.b16 %v1154
        %v4547 = vunpack.c.l.b16 %v1155
        %v4548 = vunpack.c.h.b16 %v1155
        %v4549 = vunpack.c.l.b16 %v1156
        %v4550 = vunpack.c.h.b16 %v1156
        %v4551 = vunpack.c.l.b16 %v1157
        %v4552 = vunpack.c.h.b16 %v1157
        %v4553 = vunpack.c.l.b16 %v1158
        %v4554 = vunpack.c.h.b16 %v1158
        %v4555 = vunpack.c.l.b16 %v1159
        %v4556 = vunpack.c.h.b16 %v1159
        %v4557 = vunpack.c.l.b16 %v1160
        %v4558 = vunpack.c.h.b16 %v1160
        %v4559 = vunpack.c.l.b16 %v1161
        %v4560 = vunpack.c.h.b16 %v1161
        %v4561 = vunpack.c.l.b16 %v1162
        %v4562 = vunpack.c.h.b16 %v1162
        %v4563 = vunpack.c.l.b16 %v1163
        %v4564 = vunpack.c.h.b16 %v1163
        %v4565 = vunpack.c.l.b16 %v1164
        %v4566 = vunpack.c.h.b16 %v1164
        %v4567 = vunpack.c.l.b16 %v1165
        %v4568 = vunpack.c.h.b16 %v1165
        %v4569 = vunpack.c.l.b16 %v1166
        %v4570 = vunpack.c.h.b16 %v1166
        %v4571 = vunpack.c.l.b16 %v1167
        %v4572 = vunpack.c.h.b16 %v1167
        %v4573 = vunpack.c.l.b16 %v1168
        %v4574 = vunpack.c.h.b16 %v1168
        %v4575 = vunpack.c.l.b16 %v1169
        %v4576 = vunpack.c.h.b16 %v1169
        %v4577 = vunpack.c.l.b16 %v1170
        %v4578 = vunpack.c.h.b16 %v1170
        %v4579 = vunpack.c.l.b16 %v1171
        %v4580 = vunpack.c.h.b16 %v1171
        %v4581 = vunpack.c.l.b16 %v1172
        %v4582 = vunpack.c.h.b16 %v1172
        %v4583 = vunpack.c.l.b16 %v1173
        %v4584 = vunpack.c.h.b16 %v1173
        %v4585 = vunpack.c.l.b16 %v1174
        %v4586 = vunpack.c.h.b16 %v1174
        %v4587 = vunpack.c.l.b16 %v1175
        %v4588 = vunpack.c.h.b16 %v1175
        %v4589 = vunpack.c.l.b16 %v1176
        %v4590 = vunpack.c.h.b16 %v1176
        %v4591 = vunpack.c.l.b16 %v1177
        %v4592 = vunpack.c.h.b16 %v1177
        %v4593 = vunpack.c.l.b16 %v1178
        %v4594 = vunpack.c.h.b16 %v1178
        %v4595 = vunpack.c.l.b16 %v1179
        %v4596 = vunpack.c.h.b16 %v1179
        %v4597 = vunpack.c.l.b16 %v1180
        %v4598 = vunpack.c.h.b16 %v1180
        %v4599 = vunpack.c.l.b16 %v1181
        %v4600 = vunpack.c.h.b16 %v1181
        %v4601 = vunpack.c.l.b16 %v1182
        %v4602 = vunpack.c.h.b16 %v1182
        %v4603 = vunpack.c.l.b16 %v1183
        %v4604 = vunpack.c.h.b16 %v1183
        %v4605 = vunpack.c.l.b16 %v1184
        %v4606 = vunpack.c.h.b16 %v1184
        %v4607 = vunpack.c.l.b16 %v1185
        %v4608 = vunpack.c.h.b16 %v1185
        %v4609 = vunpack.c.l.b16 %v1186
        %v4610 = vunpack.c.h.b16 %v1186
        %v4611 = vunpack.c.l.b16 %v1187
        %v4612 = vunpack.c.h.b16 %v1187
        %v4613 = vunpack.c.l.b16 %v1188
        %v4614 = vunpack.c.h.b16 %v1188
        %v4615 = vunpack.c.l.b16 %v1189
        %v4616 = vunpack.c.h.b16 %v1189
        %v4617 = vunpack.c.l.b16 %v1190
        %v4618 = vunpack.c.h.b16 %v1190
        %v4619 = vunpack.c.l.b16 %v1191
        %v4620 = vunpack.c.h.b16 %v1191
        %v4621 = vunpack.c.l.b16 %v1192
        %v4622 = vunpack.c.h.b16 %v1192
        %v4623 = vunpack.c.l.b16 %v1193
        %v4624 = vunpack.c.h.b16 %v1193
        %v4625 = vunpack.c.l.b16 %v1194
        %v4626 = vunpack.c.h.b16 %v1194
        %v4627 = vunpack.c.l.b16 %v1195
        %v4628 = vunpack.c.h.b16 %v1195
        %v4629 = vunpack.c.l.b16 %v1196
        %v4630 = vunpack.c.h.b16 %v1196
        %v4631 = vunpack.c.l.b16 %v1197
        %v4632 = vunpack.c.h.b16 %v1197
        %v4633 = vunpack.c.l.b16 %v1198
        %v4634 = vunpack.c.h.b16 %v1198
        %v4635 = vunpack.c.l.b16 %v1199
        %v4636 = vunpack.c.h.b16 %v1199
        %v4637 = vunpack.c.l.b16 %v1200
        %v4638 = vunpack.c.h.b16 %v1200
        %v4639 = vunpack.c.l.b16 %v1201
        %v4640 = vunpack.c.h.b16 %v1201
        %v4641 = vunpack.c.l.b16 %v1202
        %v4642 = vunpack.c.h.b16 %v1202
        %v4643 = vunpack.c.l.b16 %v1203
        %v4644 = vunpack.c.h.b16 %v1203
        %v4645 = vunpack.c.l.b16 %v1204
        %v4646 = vunpack.c.h.b16 %v1204
        %v4647 = vunpack.c.l.b16 %v1205
        %v4648 = vunpack.c.h.b16 %v1205
        %v4649 = vunpack.c.l.b16 %v1206
        %v4650 = vunpack.c.h.b16 %v1206
        %v4651 = vunpack.c.l.b16 %v1207
        %v4652 = vunpack.c.h.b16 %v1207
        %v4653 = vunpack.c.l.b16 %v1208
        %v4654 = vunpack.c.h.b16 %v1208
        %v4655 = vunpack.c.l.b16 %v1209
        %v4656 = vunpack.c.h.b16 %v1209
        %v4657 = vunpack.c.l.b16 %v1210
        %v4658 = vunpack.c.h.b16 %v1210
        %v4659 = vunpack.c.l.b16 %v1211
        %v4660 = vunpack.c.h.b16 %v1211
        %v4661 = vunpack.c.l.b16 %v1212
        %v4662 = vunpack.c.h.b16 %v1212
        %v4663 = vunpack.c.l.b16 %v1213
        %v4664 = vunpack.c.h.b16 %v1213
        %v4665 = vunpack.c.l.b16 %v1214
        %v4666 = vunpack.c.h.b16 %v1214
        %v4667 = vunpack.c.l.b16 %v1215
        %v4668 = vunpack.c.h.b16 %v1215
        %v4669 = vunpack.c.l.b16 %v1216
        %v4670 = vunpack.c.h.b16 %v1216
        %v4671 = vunpack.c.l.b16 %v1217
        %v4672 = vunpack.c.h.b16 %v1217
        %v4673 = vunpack.c.l.b16 %v1218
        %v4674 = vunpack.c.h.b16 %v1218
        %v4675 = vunpack.c.l.b16 %v1219
        %v4676 = vunpack.c.h.b16 %v1219
        %v4677 = vunpack.c.l.b16 %v1220
        %v4678 = vunpack.c.h.b16 %v1220
        %v4679 = vunpack.c.l.b16 %v1221
        %v4680 = vunpack.c.h.b16 %v1221
        %v4681 = vunpack.c.l.b16 %v1222
        %v4682 = vunpack.c.h.b16 %v1222
        %v4683 = vunpack.c.l.b16 %v1223
        %v4684 = vunpack.c.h.b16 %v1223
        %v4685 = vunpack.c.l.b16 %v1224
        %v4686 = vunpack.c.h.b16 %v1224
        %v4687 = vunpack.c.l.b16 %v1225
        %v4688 = vunpack.c.h.b16 %v1225
        %v4689 = vunpack.c.l.b16 %v1226
        %v4690 = vunpack.c.h.b16 %v1226
        %v4691 = vunpack.c.l.b16 %v1227
        %v4692 = vunpack.c.h.b16 %v1227
        %v4693 = vunpack.c.l.b16 %v1228
        %v4694 = vunpack.c.h.b16 %v1228
        %v4695 = vunpack.c.l.b16 %v1229
        %v4696 = vunpack.c.h.b16 %v1229
        %v4697 = vunpack.c.l.b16 %v1230
        %v4698 = vunpack.c.h.b16 %v1230
        %v4699 = vunpack.c.l.b16 %v1231
        %v4700 = vunpack.c.h.b16 %v1231
        %v4701 = vunpack.c.l.b16 %v1232
        %v4702 = vunpack.c.h.b16 %v1232
        %v4703 = vunpack.c.l.b16 %v1233
        %v4704 = vunpack.c.h.b16 %v1233
        %v4705 = vunpack.c.l.b16 %v1234
        %v4706 = vunpack.c.h.b16 %v1234
        %v4707 = vunpack.c.l.b16 %v1235
        %v4708 = vunpack.c.h.b16 %v1235
        %v4709 = vunpack.c.l.b16 %v1236
        %v4710 = vunpack.c.h.b16 %v1236
        %v4711 = vunpack.c.l.b16 %v1237
        %v4712 = vunpack.c.h.b16 %v1237
        %v4713 = vunpack.c.l.b16 %v1238
        %v4714 = vunpack.c.h.b16 %v1238
        %v4715 = vunpack.c.l.b16 %v1239
        %v4716 = vunpack.c.h.b16 %v1239
        %v4717 = vunpack.c.l.b16 %v1240
        %v4718 = vunpack.c.h.b16 %v1240
        %v4719 = vunpack.c.l.b16 %v1241
        %v4720 = vunpack.c.h.b16 %v1241
        %v4721 = vunpack.c.l.b16 %v1242
        %v4722 = vunpack.c.h.b16 %v1242
        %v4723 = vunpack.c.l.b16 %v1243
        %v4724 = vunpack.c.h.b16 %v1243
        %v4725 = vunpack.c.l.b16 %v1244
        %v4726 = vunpack.c.h.b16 %v1244
        %v4727 = vunpack.c.l.b16 %v1245
        %v4728 = vunpack.c.h.b16 %v1245
        %v4729 = vunpack.c.l.b16 %v1246
        %v4730 = vunpack.c.h.b16 %v1246
        %v4731 = vunpack.c.l.b16 %v1247
        %v4732 = vunpack.c.h.b16 %v1247
        %v4733 = vunpack.c.l.b16 %v1248
        %v4734 = vunpack.c.h.b16 %v1248
        %v4735 = vunpack.c.l.b16 %v1249
        %v4736 = vunpack.c.h.b16 %v1249
        %v4737 = vunpack.c.l.b16 %v1250
        %v4738 = vunpack.c.h.b16 %v1250
        %v4739 = vunpack.c.l.b16 %v1251
        %v4740 = vunpack.c.h.b16 %v1251
        %v4741 = vunpack.c.l.b16 %v1252
        %v4742 = vunpack.c.h.b16 %v1252
        %v4743 = vunpack.c.l.b16 %v1253
        %v4744 = vunpack.c.h.b16 %v1253
        %v4745 = vunpack.c.l.b16 %v1254
        %v4746 = vunpack.c.h.b16 %v1254
        %v4747 = vunpack.c.l.b16 %v1255
        %v4748 = vunpack.c.h.b16 %v1255
        %v4749 = vunpack.c.l.b16 %v1256
        %v4750 = vunpack.c.h.b16 %v1256
        %v4751 = vunpack.c.l.b16 %v1257
        %v4752 = vunpack.c.h.b16 %v1257
        %v4753 = vunpack.c.l.b16 %v1258
        %v4754 = vunpack.c.h.b16 %v1258
        %v4755 = vunpack.c.l.b16 %v1259
        %v4756 = vunpack.c.h.b16 %v1259
        %v4757 = vunpack.c.l.b16 %v1260
        %v4758 = vunpack.c.h.b16 %v1260
        %v4759 = vunpack.c.l.b16 %v1261
        %v4760 = vunpack.c.h.b16 %v1261
        %v4761 = vunpack.c.l.b16 %v1262
        %v4762 = vunpack.c.h.b16 %v1262
        %v4763 = vunpack.c.l.b16 %v1263
        %v4764 = vunpack.c.h.b16 %v1263
        %v4765 = vunpack.c.l.b16 %v1264
        %v4766 = vunpack.c.h.b16 %v1264
        %v4767 = vunpack.c.l.b16 %v1265
        %v4768 = vunpack.c.h.b16 %v1265
        %v4769 = vunpack.c.l.b16 %v1266
        %v4770 = vunpack.c.h.b16 %v1266
        %v4771 = vunpack.c.l.b16 %v1267
        %v4772 = vunpack.c.h.b16 %v1267
        %v4773 = vunpack.c.l.b16 %v1268
        %v4774 = vunpack.c.h.b16 %v1268
        %v4775 = vunpack.c.l.b16 %v1269
        %v4776 = vunpack.c.h.b16 %v1269
        %v4777 = vunpack.c.l.b16 %v1270
        %v4778 = vunpack.c.h.b16 %v1270
        %v4779 = vunpack.c.l.b16 %v1271
        %v4780 = vunpack.c.h.b16 %v1271
        %v4781 = vunpack.c.l.b16 %v1272
        %v4782 = vunpack.c.h.b16 %v1272
        %v4783 = vunpack.c.l.b16 %v1273
        %v4784 = vunpack.c.h.b16 %v1273
        %v4785 = vunpack.c.l.b16 %v1274
        %v4786 = vunpack.c.h.b16 %v1274
        %v4787 = vunpack.c.l.b16 %v1275
        %v4788 = vunpack.c.h.b16 %v1275
        %v4789 = vunpack.c.l.b16 %v1276
        %v4790 = vunpack.c.h.b16 %v1276
        %v4791 = vunpack.c.l.b16 %v1277
        %v4792 = vunpack.c.h.b16 %v1277
        %v4793 = vunpack.c.l.b16 %v1278
        %v4794 = vunpack.c.h.b16 %v1278
        %v4795 = vunpack.c.l.b16 %v1279
        %v4796 = vunpack.c.h.b16 %v1279
        %v4797 = vunpack.c.l.b16 %v1280
        %v4798 = vunpack.c.h.b16 %v1280
        %v4799 = vunpack.c.l.b16 %v1281
        %v4800 = vunpack.c.h.b16 %v1281
        %v4801 = vunpack.c.l.b16 %v1282
        %v4802 = vunpack.c.h.b16 %v1282
        %v4803 = vunpack.c.l.b16 %v1283
        %v4804 = vunpack.c.h.b16 %v1283
        %v4805 = vunpack.c.l.b16 %v1284
        %v4806 = vunpack.c.h.b16 %v1284
        %v4807 = vunpack.c.l.b16 %v1285
        %v4808 = vunpack.c.h.b16 %v1285
        %v4809 = vunpack.c.l.b16 %v1286
        %v4810 = vunpack.c.h.b16 %v1286
        %v4811 = vunpack.c.l.b16 %v1287
        %v4812 = vunpack.c.h.b16 %v1287
        %v4813 = vunpack.c.l.b16 %v1288
        %v4814 = vunpack.c.h.b16 %v1288
        %v4815 = vunpack.c.l.b16 %v1289
        %v4816 = vunpack.c.h.b16 %v1289
        %v4817 = vunpack.c.l.b16 %v1290
        %v4818 = vunpack.c.h.b16 %v1290
        %v4819 = vunpack.c.l.b16 %v1291
        %v4820 = vunpack.c.h.b16 %v1291
        %v4821 = vunpack.c.l.b16 %v1292
        %v4822 = vunpack.c.h.b16 %v1292
        %v4823 = vunpack.c.l.b16 %v1293
        %v4824 = vunpack.c.h.b16 %v1293
        %v4825 = vunpack.c.l.b16 %v1294
        %v4826 = vunpack.c.h.b16 %v1294
        %v4827 = vunpack.c.l.b16 %v1295
        %v4828 = vunpack.c.h.b16 %v1295
        %v4829 = vunpack.c.l.b16 %v1296
        %v4830 = vunpack.c.h.b16 %v1296
        %v4831 = vunpack.c.l.b16 %v1297
        %v4832 = vunpack.c.h.b16 %v1297
        %v4833 = vunpack.c.l.b16 %v1298
        %v4834 = vunpack.c.h.b16 %v1298
        %v4835 = vpack.c.b16 %v2789, %v2787
        %v4836 = vpack.c.b16 %v2790, %v2788
        %v4837 = vpack.c.b16 %v2793, %v2791
        %v4838 = vpack.c.b16 %v2794, %v2792
        %v4839 = vpack.c.b16 %v2797, %v2795
        %v4840 = vpack.c.b16 %v2798, %v2796
        %v4841 = vpack.c.b16 %v2801, %v2799
        %v4842 = vpack.c.b16 %v2802, %v2800
        %v4843 = vpack.c.b16 %v2805, %v2803
        %v4844 = vpack.c.b16 %v2806, %v2804
        %v4845 = vpack.c.b16 %v2809, %v2807
        %v4846 = vpack.c.b16 %v2810, %v2808
        %v4847 = vpack.c.b16 %v2813, %v2811
        %v4848 = vpack.c.b16 %v2814, %v2812
        %v4849 = vpack.c.b16 %v2817, %v2815
        %v4850 = vpack.c.b16 %v2818, %v2816
        %v4851 = vpack.c.b16 %v2821, %v2819
        %v4852 = vpack.c.b16 %v2822, %v2820
        %v4853 = vpack.c.b16 %v2825, %v2823
        %v4854 = vpack.c.b16 %v2826, %v2824
        %v4855 = vpack.c.b16 %v2829, %v2827
        %v4856 = vpack.c.b16 %v2830, %v2828
        %v4857 = vpack.c.b16 %v2833, %v2831
        %v4858 = vpack.c.b16 %v2834, %v2832
        %v4859 = vpack.c.b16 %v2837, %v2835
        %v4860 = vpack.c.b16 %v2838, %v2836
        %v4861 = vpack.c.b16 %v2841, %v2839
        %v4862 = vpack.c.b16 %v2842, %v2840
        %v4863 = vpack.c.b16 %v2845, %v2843
        %v4864 = vpack.c.b16 %v2846, %v2844
        %v4865 = vpack.c.b16 %v2849, %v2847
        %v4866 = vpack.c.b16 %v2850, %v2848
        %v4867 = vpack.c.b16 %v2853, %v2851
        %v4868 = vpack.c.b16 %v2854, %v2852
        %v4869 = vpack.c.b16 %v2857, %v2855
        %v4870 = vpack.c.b16 %v2858, %v2856
        %v4871 = vpack.c.b16 %v2861, %v2859
        %v4872 = vpack.c.b16 %v2862, %v2860
        %v4873 = vpack.c.b16 %v2865, %v2863
        %v4874 = vpack.c.b16 %v2866, %v2864
        %v4875 = vpack.c.b16 %v2869, %v2867
        %v4876 = vpack.c.b16 %v2870, %v2868
        %v4877 = vpack.c.b16 %v2873, %v2871
        %v4878 = vpack.c.b16 %v2874, %v2872
        %v4879 = vpack.c.b16 %v2877, %v2875
        %v4880 = vpack.c.b16 %v2878, %v2876
        %v4881 = vpack.c.b16 %v2881, %v2879
        %v4882 = vpack.c.b16 %v2882, %v2880
        %v4883 = vpack.c.b16 %v2885, %v2883
        %v4884 = vpack.c.b16 %v2886, %v2884
        %v4885 = vpack.c.b16 %v2889, %v2887
        %v4886 = vpack.c.b16 %v2890, %v2888
        %v4887 = vpack.c.b16 %v2893, %v2891
        %v4888 = vpack.c.b16 %v2894, %v2892
        %v4889 = vpack.c.b16 %v2897, %v2895
        %v4890 = vpack.c.b16 %v2898, %v2896
        %v4891 = vpack.c.b16 %v2901, %v2899
        %v4892 = vpack.c.b16 %v2902, %v2900
        %v4893 = vpack.c.b16 %v2905, %v2903
        %v4894 = vpack.c.b16 %v2906, %v2904
        %v4895 = vpack.c.b16 %v2909, %v2907
        %v4896 = vpack.c.b16 %v2910, %v2908
        %v4897 = vpack.c.b16 %v2913, %v2911
        %v4898 = vpack.c.b16 %v2914, %v2912
        %v4899 = vpack.c.b16 %v2917, %v2915
        %v4900 = vpack.c.b16 %v2918, %v2916
        %v4901 = vpack.c.b16 %v2921, %v2919
        %v4902 = vpack.c.b16 %v2922, %v2920
        %v4903 = vpack.c.b16 %v2925, %v2923
        %v4904 = vpack.c.b16 %v2926, %v2924
        %v4905 = vpack.c.b16 %v2929, %v2927
        %v4906 = vpack.c.b16 %v2930, %v2928
        %v4907 = vpack.c.b16 %v2933, %v2931
        %v4908 = vpack.c.b16 %v2934, %v2932
        %v4909 = vpack.c.b16 %v2937, %v2935
        %v4910 = vpack.c.b16 %v2938, %v2936
        %v4911 = vpack.c.b16 %v2941, %v2939
        %v4912 = vpack.c.b16 %v2942, %v2940
        %v4913 = vpack.c.b16 %v2945, %v2943
        %v4914 = vpack.c.b16 %v2946, %v2944
        %v4915 = vpack.c.b16 %v2949, %v2947
        %v4916 = vpack.c.b16 %v2950, %v2948
        %v4917 = vpack.c.b16 %v2953, %v2951
        %v4918 = vpack.c.b16 %v2954, %v2952
        %v4919 = vpack.c.b16 %v2957, %v2955
        %v4920 = vpack.c.b16 %v2958, %v2956
        %v4921 = vpack.c.b16 %v2961, %v2959
        %v4922 = vpack.c.b16 %v2962, %v2960
        %v4923 = vpack.c.b16 %v2965, %v2963
        %v4924 = vpack.c.b16 %v2966, %v2964
        %v4925 = vpack.c.b16 %v2969, %v2967
        %v4926 = vpack.c.b16 %v2970, %v2968
        %v4927 = vpack.c.b16 %v2973, %v2971
        %v4928 = vpack.c.b16 %v2974, %v2972
        %v4929 = vpack.c.b16 %v2977, %v2975
        %v4930 = vpack.c.b16 %v2978, %v2976
        %v4931 = vpack.c.b16 %v2981, %v2979
        %v4932 = vpack.c.b16 %v2982, %v2980
        %v4933 = vpack.c.b16 %v2985, %v2983
        %v4934 = vpack.c.b16 %v2986, %v2984
        %v4935 = vpack.c.b16 %v2989, %v2987
        %v4936 = vpack.c.b16 %v2990, %v2988
        %v4937 = vpack.c.b16 %v2993, %v2991
        %v4938 = vpack.c.b16 %v2994, %v2992
        %v4939 = vpack.c.b16 %v2997, %v2995
        %v4940 = vpack.c.b16 %v2998, %v2996
        %v4941 = vpack.c.b16 %v3001, %v2999
        %v4942 = vpack.c.b16 %v3002, %v3000
        %v4943 = vpack.c.b16 %v3005, %v3003
        %v4944 = vpack.c.b16 %v3006, %v3004
        %v4945 = vpack.c.b16 %v3009, %v3007
        %v4946 = vpack.c.b16 %v3010, %v3008
        %v4947 = vpack.c.b16 %v3013, %v3011
        %v4948 = vpack.c.b16 %v3014, %v3012
        %v4949 = vpack.c.b16 %v3017, %v3015
        %v4950 = vpack.c.b16 %v3018, %v3016
        %v4951 = vpack.c.b16 %v3021, %v3019
        %v4952 = vpack.c.b16 %v3022, %v3020
        %v4953 = vpack.c.b16 %v3025, %v3023
        %v4954 = vpack.c.b16 %v3026, %v3024
        %v4955 = vpack.c.b16 %v3029, %v3027
        %v4956 = vpack.c.b16 %v3030, %v3028
        %v4957 = vpack.c.b16 %v3033, %v3031
        %v4958 = vpack.c.b16 %v3034, %v3032
        %v4959 = vpack.c.b16 %v3037, %v3035
        %v4960 = vpack.c.b16 %v3038, %v3036
        %v4961 = vpack.c.b16 %v3041, %v3039
        %v4962 = vpack.c.b16 %v3042, %v3040
        %v4963 = vpack.c.b16 %v3045, %v3043
        %v4964 = vpack.c.b16 %v3046, %v3044
        %v4965 = vpack.c.b16 %v3049, %v3047
        %v4966 = vpack.c.b16 %v3050, %v3048
        %v4967 = vpack.c.b16 %v3053, %v3051
        %v4968 = vpack.c.b16 %v3054, %v3052
        %v4969 = vpack.c.b16 %v3057, %v3055
        %v4970 = vpack.c.b16 %v3058, %v3056
        %v4971 = vpack.c.b16 %v3061, %v3059
        %v4972 = vpack.c.b16 %v3062, %v3060
        %v4973 = vpack.c.b16 %v3065, %v3063
        %v4974 = vpack.c.b16 %v3066, %v3064
        %v4975 = vpack.c.b16 %v3069, %v3067
        %v4976 = vpack.c.b16 %v3070, %v3068
        %v4977 = vpack.c.b16 %v3073, %v3071
        %v4978 = vpack.c.b16 %v3074, %v3072
        %v4979 = vpack.c.b16 %v3077, %v3075
        %v4980 = vpack.c.b16 %v3078, %v3076
        %v4981 = vpack.c.b16 %v3081, %v3079
        %v4982 = vpack.c.b16 %v3082, %v3080
        %v4983 = vpack.c.b16 %v3085, %v3083
        %v4984 = vpack.c.b16 %v3086, %v3084
        %v4985 = vpack.c.b16 %v3089, %v3087
        %v4986 = vpack.c.b16 %v3090, %v3088
        %v4987 = vpack.c.b16 %v3093, %v3091
        %v4988 = vpack.c.b16 %v3094, %v3092
        %v4989 = vpack.c.b16 %v3097, %v3095
        %v4990 = vpack.c.b16 %v3098, %v3096
        %v4991 = vpack.c.b16 %v3101, %v3099
        %v4992 = vpack.c.b16 %v3102, %v3100
        %v4993 = vpack.c.b16 %v3105, %v3103
        %v4994 = vpack.c.b16 %v3106, %v3104
        %v4995 = vpack.c.b16 %v3109, %v3107
        %v4996 = vpack.c.b16 %v3110, %v3108
        %v4997 = vpack.c.b16 %v3113, %v3111
        %v4998 = vpack.c.b16 %v3114, %v3112
        %v4999 = vpack.c.b16 %v3117, %v3115
        %v5000 = vpack.c.b16 %v3118, %v3116
        %v5001 = vpack.c.b16 %v3121, %v3119
        %v5002 = vpack.c.b16 %v3122, %v3120
        %v5003 = vpack.c.b16 %v3125, %v3123
        %v5004 = vpack.c.b16 %v3126, %v3124
        %v5005 = vpack.c.b16 %v3129, %v3127
        %v5006 = vpack.c.b16 %v3130, %v3128
        %v5007 = vpack.c.b16 %v3133, %v3131
        %v5008 = vpack.c.b16 %v3134, %v3132
        %v5009 = vpack.c.b16 %v3137, %v3135
        %v5010 = vpack.c.b16 %v3138, %v3136
        %v5011 = vpack.c.b16 %v3141, %v3139
        %v5012 = vpack.c.b16 %v3142, %v3140
        %v5013 = vpack.c.b16 %v3145, %v3143
        %v5014 = vpack.c.b16 %v3146, %v3144
        %v5015 = vpack.c.b16 %v3149, %v3147
        %v5016 = vpack.c.b16 %v3150, %v3148
        %v5017 = vpack.c.b16 %v3153, %v3151
        %v5018 = vpack.c.b16 %v3154, %v3152
        %v5019 = vpack.c.b16 %v3157, %v3155
        %v5020 = vpack.c.b16 %v3158, %v3156
        %v5021 = vpack.c.b16 %v3161, %v3159
        %v5022 = vpack.c.b16 %v3162, %v3160
        %v5023 = vpack.c.b16 %v3165, %v3163
        %v5024 = vpack.c.b16 %v3166, %v3164
        %v5025 = vpack.c.b16 %v3169, %v3167
        %v5026 = vpack.c.b16 %v3170, %v3168
        %v5027 = vpack.c.b16 %v3173, %v3171
        %v5028 = vpack.c.b16 %v3174, %v3172
        %v5029 = vpack.c.b16 %v3177, %v3175
        %v5030 = vpack.c.b16 %v3178, %v3176
        %v5031 = vpack.c.b16 %v3181, %v3179
        %v5032 = vpack.c.b16 %v3182, %v3180
        %v5033 = vpack.c.b16 %v3185, %v3183
        %v5034 = vpack.c.b16 %v3186, %v3184
        %v5035 = vpack.c.b16 %v3189, %v3187
        %v5036 = vpack.c.b16 %v3190, %v3188
        %v5037 = vpack.c.b16 %v3193, %v3191
        %v5038 = vpack.c.b16 %v3194, %v3192
        %v5039 = vpack.c.b16 %v3197, %v3195
        %v5040 = vpack.c.b16 %v3198, %v3196
        %v5041 = vpack.c.b16 %v3201, %v3199
        %v5042 = vpack.c.b16 %v3202, %v3200
        %v5043 = vpack.c.b16 %v3205, %v3203
        %v5044 = vpack.c.b16 %v3206, %v3204
        %v5045 = vpack.c.b16 %v3209, %v3207
        %v5046 = vpack.c.b16 %v3210, %v3208
        %v5047 = vpack.c.b16 %v3213, %v3211
        %v5048 = vpack.c.b16 %v3214, %v3212
        %v5049 = vpack.c.b16 %v3217, %v3215
        %v5050 = vpack.c.b16 %v3218, %v3216
        %v5051 = vpack.c.b16 %v3221, %v3219
        %v5052 = vpack.c.b16 %v3222, %v3220
        %v5053 = vpack.c.b16 %v3225, %v3223
        %v5054 = vpack.c.b16 %v3226, %v3224
        %v5055 = vpack.c.b16 %v3229, %v3227
        %v5056 = vpack.c.b16 %v3230, %v3228
        %v5057 = vpack.c.b16 %v3233, %v3231
        %v5058 = vpack.c.b16 %v3234, %v3232
        %v5059 = vpack.c.b16 %v3237, %v3235
        %v5060 = vpack.c.b16 %v3238, %v3236
        %v5061 = vpack.c.b16 %v3241, %v3239
        %v5062 = vpack.c.b16 %v3242, %v3240
        %v5063 = vpack.c.b16 %v3245, %v3243
        %v5064 = vpack.c.b16 %v3246, %v3244
        %v5065 = vpack.c.b16 %v3249, %v3247
        %v5066 = vpack.c.b16 %v3250, %v3248
        %v5067 = vpack.c.b16 %v3253, %v3251
        %v5068 = vpack.c.b16 %v3254, %v3252
        %v5069 = vpack.c.b16 %v3257, %v3255
        %v5070 = vpack.c.b16 %v3258, %v3256
        %v5071 = vpack.c.b16 %v3261, %v3259
        %v5072 = vpack.c.b16 %v3262, %v3260
        %v5073 = vpack.c.b16 %v3265, %v3263
        %v5074 = vpack.c.b16 %v3266, %v3264
        %v5075 = vpack.c.b16 %v3269, %v3267
        %v5076 = vpack.c.b16 %v3270, %v3268
        %v5077 = vpack.c.b16 %v3273, %v3271
        %v5078 = vpack.c.b16 %v3274, %v3272
        %v5079 = vpack.c.b16 %v3277, %v3275
        %v5080 = vpack.c.b16 %v3278, %v3276
        %v5081 = vpack.c.b16 %v3281, %v3279
        %v5082 = vpack.c.b16 %v3282, %v3280
        %v5083 = vpack.c.b16 %v3285, %v3283
        %v5084 = vpack.c.b16 %v3286, %v3284
        %v5085 = vpack.c.b16 %v3289, %v3287
        %v5086 = vpack.c.b16 %v3290, %v3288
        %v5087 = vpack.c.b16 %v3293, %v3291
        %v5088 = vpack.c.b16 %v3294, %v3292
        %v5089 = vpack.c.b16 %v3297, %v3295
        %v5090 = vpack.c.b16 %v3298, %v3296
        %v5091 = vpack.c.b16 %v3301, %v3299
        %v5092 = vpack.c.b16 %v3302, %v3300
        %v5093 = vpack.c.b16 %v3305, %v3303
        %v5094 = vpack.c.b16 %v3306, %v3304
        %v5095 = vpack.c.b16 %v3309, %v3307
        %v5096 = vpack.c.b16 %v3310, %v3308
        %v5097 = vpack.c.b16 %v3313, %v3311
        %v5098 = vpack.c.b16 %v3314, %v3312
        %v5099 = vpack.c.b16 %v3317, %v3315
        %v5100 = vpack.c.b16 %v3318, %v3316
        %v5101 = vpack.c.b16 %v3321, %v3319
        %v5102 = vpack.c.b16 %v3322, %v3320
        %v5103 = vpack.c.b16 %v3325, %v3323
        %v5104 = vpack.c.b16 %v3326, %v3324
        %v5105 = vpack.c.b16 %v3329, %v3327
        %v5106 = vpack.c.b16 %v3330, %v3328
        %v5107 = vpack.c.b16 %v3333, %v3331
        %v5108 = vpack.c.b16 %v3334, %v3332
        %v5109 = vpack.c.b16 %v3337, %v3335
        %v5110 = vpack.c.b16 %v3338, %v3336
        %v5111 = vpack.c.b16 %v3341, %v3339
        %v5112 = vpack.c.b16 %v3342, %v3340
        %v5113 = vpack.c.b16 %v3345, %v3343
        %v5114 = vpack.c.b16 %v3346, %v3344
        %v5115 = vpack.c.b16 %v3349, %v3347
        %v5116 = vpack.c.b16 %v3350, %v3348
        %v5117 = vpack.c.b16 %v3353, %v3351
        %v5118 = vpack.c.b16 %v3354, %v3352
        %v5119 = vpack.c.b16 %v3357, %v3355
        %v5120 = vpack.c.b16 %v3358, %v3356
        %v5121 = vpack.c.b16 %v3361, %v3359
        %v5122 = vpack.c.b16 %v3362, %v3360
        %v5123 = vpack.c.b16 %v3365, %v3363
        %v5124 = vpack.c.b16 %v3366, %v3364
        %v5125 = vpack.c.b16 %v3369, %v3367
        %v5126 = vpack.c.b16 %v3370, %v3368
        %v5127 = vpack.c.b16 %v3373, %v3371
        %v5128 = vpack.c.b16 %v3374, %v3372
        %v5129 = vpack.c.b16 %v3377, %v3375
        %v5130 = vpack.c.b16 %v3378, %v3376
        %v5131 = vpack.c.b16 %v3381, %v3379
        %v5132 = vpack.c.b16 %v3382, %v3380
        %v5133 = vpack.c.b16 %v3385, %v3383
        %v5134 = vpack.c.b16 %v3386, %v3384
        %v5135 = vpack.c.b16 %v3389, %v3387
        %v5136 = vpack.c.b16 %v3390, %v3388
        %v5137 = vpack.c.b16 %v3393, %v3391
        %v5138 = vpack.c.b16 %v3394, %v3392
        %v5139 = vpack.c.b16 %v3397, %v3395
        %v5140 = vpack.c.b16 %v3398, %v3396
        %v5141 = vpack.c.b16 %v3401, %v3399
        %v5142 = vpack.c.b16 %v3402, %v3400
        %v5143 = vpack.c.b16 %v3405, %v3403
        %v5144 = vpack.c.b16 %v3406, %v3404
        %v5145 = vpack.c.b16 %v3409, %v3407
        %v5146 = vpack.c.b16 %v3410, %v3408
        %v5147 = vpack.c.b16 %v3413, %v3411
        %v5148 = vpack.c.b16 %v3414, %v3412
        %v5149 = vpack.c.b16 %v3417, %v3415
        %v5150 = vpack.c.b16 %v3418, %v3416
        %v5151 = vpack.c.b16 %v3421, %v3419
        %v5152 = vpack.c.b16 %v3422, %v3420
        %v5153 = vpack.c.b16 %v3425, %v3423
        %v5154 = vpack.c.b16 %v3426, %v3424
        %v5155 = vpack.c.b16 %v3429, %v3427
        %v5156 = vpack.c.b16 %v3430, %v3428
        %v5157 = vpack.c.b16 %v3433, %v3431
        %v5158 = vpack.c.b16 %v3434, %v3432
        %v5159 = vpack.c.b16 %v3437, %v3435
        %v5160 = vpack.c.b16 %v3438, %v3436
        %v5161 = vpack.c.b16 %v3441, %v3439
        %v5162 = vpack.c.b16 %v3442, %v3440
        %v5163 = vpack.c.b16 %v3445, %v3443
        %v5164 = vpack.c.b16 %v3446, %v3444
        %v5165 = vpack.c.b16 %v3449, %v3447
        %v5166 = vpack.c.b16 %v3450, %v3448
        %v5167 = vpack.c.b16 %v3453, %v3451
        %v5168 = vpack.c.b16 %v3454, %v3452
        %v5169 = vpack.c.b16 %v3457, %v3455
        %v5170 = vpack.c.b16 %v3458, %v3456
        %v5171 = vpack.c.b16 %v3461, %v3459
        %v5172 = vpack.c.b16 %v3462, %v3460
        %v5173 = vpack.c.b16 %v3465, %v3463
        %v5174 = vpack.c.b16 %v3466, %v3464
        %v5175 = vpack.c.b16 %v3469, %v3467
        %v5176 = vpack.c.b16 %v3470, %v3468
        %v5177 = vpack.c.b16 %v3473, %v3471
        %v5178 = vpack.c.b16 %v3474, %v3472
        %v5179 = vpack.c.b16 %v3477, %v3475
        %v5180 = vpack.c.b16 %v3478, %v3476
        %v5181 = vpack.c.b16 %v3481, %v3479
        %v5182 = vpack.c.b16 %v3482, %v3480
        %v5183 = vpack.c.b16 %v3485, %v3483
        %v5184 = vpack.c.b16 %v3486, %v3484
        %v5185 = vpack.c.b16 %v3489, %v3487
        %v5186 = vpack.c.b16 %v3490, %v3488
        %v5187 = vpack.c.b16 %v3493, %v3491
        %v5188 = vpack.c.b16 %v3494, %v3492
        %v5189 = vpack.c.b16 %v3497, %v3495
        %v5190 = vpack.c.b16 %v3498, %v3496
        %v5191 = vpack.c.b16 %v3501, %v3499
        %v5192 = vpack.c.b16 %v3502, %v3500
        %v5193 = vpack.c.b16 %v3505, %v3503
        %v5194 = vpack.c.b16 %v3506, %v3504
        %v5195 = vpack.c.b16 %v3509, %v3507
        %v5196 = vpack.c.b16 %v3510, %v3508
        %v5197 = vpack.c.b16 %v3513, %v3511
        %v5198 = vpack.c.b16 %v3514, %v3512
        %v5199 = vpack.c.b16 %v3517, %v3515
        %v5200 = vpack.c.b16 %v3518, %v3516
        %v5201 = vpack.c.b16 %v3521, %v3519
        %v5202 = vpack.c.b16 %v3522, %v3520
        %v5203 = vpack.c.b16 %v3525, %v3523
        %v5204 = vpack.c.b16 %v3526, %v3524
        %v5205 = vpack.c.b16 %v3529, %v3527
        %v5206 = vpack.c.b16 %v3530, %v3528
        %v5207 = vpack.c.b16 %v3533, %v3531
        %v5208 = vpack.c.b16 %v3534, %v3532
        %v5209 = vpack.c.b16 %v3537, %v3535
        %v5210 = vpack.c.b16 %v3538, %v3536
        %v5211 = vpack.c.b16 %v3541, %v3539
        %v5212 = vpack.c.b16 %v3542, %v3540
        %v5213 = vpack.c.b16 %v3545, %v3543
        %v5214 = vpack.c.b16 %v3546, %v3544
        %v5215 = vpack.c.b16 %v3549, %v3547
        %v5216 = vpack.c.b16 %v3550, %v3548
        %v5217 = vpack.c.b16 %v3553, %v3551
        %v5218 = vpack.c.b16 %v3554, %v3552
        %v5219 = vpack.c.b16 %v3557, %v3555
        %v5220 = vpack.c.b16 %v3558, %v3556
        %v5221 = vpack.c.b16 %v3561, %v3559
        %v5222 = vpack.c.b16 %v3562, %v3560
        %v5223 = vpack.c.b16 %v3565, %v3563
        %v5224 = vpack.c.b16 %v3566, %v3564
        %v5225 = vpack.c.b16 %v3569, %v3567
        %v5226 = vpack.c.b16 %v3570, %v3568
        %v5227 = vpack.c.b16 %v3573, %v3571
        %v5228 = vpack.c.b16 %v3574, %v3572
        %v5229 = vpack.c.b16 %v3577, %v3575
        %v5230 = vpack.c.b16 %v3578, %v3576
        %v5231 = vpack.c.b16 %v3581, %v3579
        %v5232 = vpack.c.b16 %v3582, %v3580
        %v5233 = vpack.c.b16 %v3585, %v3583
        %v5234 = vpack.c.b16 %v3586, %v3584
        %v5235 = vpack.c.b16 %v3589, %v3587
        %v5236 = vpack.c.b16 %v3590, %v3588
        %v5237 = vpack.c.b16 %v3593, %v3591
        %v5238 = vpack.c.b16 %v3594, %v3592
        %v5239 = vpack.c.b16 %v3597, %v3595
        %v5240 = vpack.c.b16 %v3598, %v3596
        %v5241 = vpack.c.b16 %v3601, %v3599
        %v5242 = vpack.c.b16 %v3602, %v3600
        %v5243 = vpack.c.b16 %v3605, %v3603
        %v5244 = vpack.c.b16 %v3606, %v3604
        %v5245 = vpack.c.b16 %v3609, %v3607
        %v5246 = vpack.c.b16 %v3610, %v3608
        %v5247 = vpack.c.b16 %v3613, %v3611
        %v5248 = vpack.c.b16 %v3614, %v3612
        %v5249 = vpack.c.b16 %v3617, %v3615
        %v5250 = vpack.c.b16 %v3618, %v3616
        %v5251 = vpack.c.b16 %v3621, %v3619
        %v5252 = vpack.c.b16 %v3622, %v3620
        %v5253 = vpack.c.b16 %v3625, %v3623
        %v5254 = vpack.c.b16 %v3626, %v3624
        %v5255 = vpack.c.b16 %v3629, %v3627
        %v5256 = vpack.c.b16 %v3630, %v3628
        %v5257 = vpack.c.b16 %v3633, %v3631
        %v5258 = vpack.c.b16 %v3634, %v3632
        %v5259 = vpack.c.b16 %v3637, %v3635
        %v5260 = vpack.c.b16 %v3638, %v3636
        %v5261 = vpack.c.b16 %v3641, %v3639
        %v5262 = vpack.c.b16 %v3642, %v3640
        %v5263 = vpack.c.b16 %v3645, %v3643
        %v5264 = vpack.c.b16 %v3646, %v3644
        %v5265 = vpack.c.b16 %v3649, %v3647
        %v5266 = vpack.c.b16 %v3650, %v3648
        %v5267 = vpack.c.b16 %v3653, %v3651
        %v5268 = vpack.c.b16 %v3654, %v3652
        %v5269 = vpack.c.b16 %v3657, %v3655
        %v5270 = vpack.c.b16 %v3658, %v3656
        %v5271 = vpack.c.b16 %v3661, %v3659
        %v5272 = vpack.c.b16 %v3662, %v3660
        %v5273 = vpack.c.b16 %v3665, %v3663
        %v5274 = vpack.c.b16 %v3666, %v3664
        %v5275 = vpack.c.b16 %v3669, %v3667
        %v5276 = vpack.c.b16 %v3670, %v3668
        %v5277 = vpack.c.b16 %v3673, %v3671
        %v5278 = vpack.c.b16 %v3674, %v3672
        %v5279 = vpack.c.b16 %v3677, %v3675
        %v5280 = vpack.c.b16 %v3678, %v3676
        %v5281 = vpack.c.b16 %v3681, %v3679
        %v5282 = vpack.c.b16 %v3682, %v3680
        %v5283 = vpack.c.b16 %v3685, %v3683
        %v5284 = vpack.c.b16 %v3686, %v3684
        %v5285 = vpack.c.b16 %v3689, %v3687
        %v5286 = vpack.c.b16 %v3690, %v3688
        %v5287 = vpack.c.b16 %v3693, %v3691
        %v5288 = vpack.c.b16 %v3694, %v3692
        %v5289 = vpack.c.b16 %v3697, %v3695
        %v5290 = vpack.c.b16 %v3698, %v3696
        %v5291 = vpack.c.b16 %v3701, %v3699
        %v5292 = vpack.c.b16 %v3702, %v3700
        %v5293 = vpack.c.b16 %v3705, %v3703
        %v5294 = vpack.c.b16 %v3706, %v3704
        %v5295 = vpack.c.b16 %v3709, %v3707
        %v5296 = vpack.c.b16 %v3710, %v3708
        %v5297 = vpack.c.b16 %v3713, %v3711
        %v5298 = vpack.c.b16 %v3714, %v3712
        %v5299 = vpack.c.b16 %v3717, %v3715
        %v5300 = vpack.c.b16 %v3718, %v3716
        %v5301 = vpack.c.b16 %v3721, %v3719
        %v5302 = vpack.c.b16 %v3722, %v3720
        %v5303 = vpack.c.b16 %v3725, %v3723
        %v5304 = vpack.c.b16 %v3726, %v3724
        %v5305 = vpack.c.b16 %v3729, %v3727
        %v5306 = vpack.c.b16 %v3730, %v3728
        %v5307 = vpack.c.b16 %v3733, %v3731
        %v5308 = vpack.c.b16 %v3734, %v3732
        %v5309 = vpack.c.b16 %v3737, %v3735
        %v5310 = vpack.c.b16 %v3738, %v3736
        %v5311 = vpack.c.b16 %v3741, %v3739
        %v5312 = vpack.c.b16 %v3742, %v3740
        %v5313 = vpack.c.b16 %v3745, %v3743
        %v5314 = vpack.c.b16 %v3746, %v3744
        %v5315 = vpack.c.b16 %v3749, %v3747
        %v5316 = vpack.c.b16 %v3750, %v3748
        %v5317 = vpack.c.b16 %v3753, %v3751
        %v5318 = vpack.c.b16 %v3754, %v3752
        %v5319 = vpack.c.b16 %v3757, %v3755
        %v5320 = vpack.c.b16 %v3758, %v3756
        %v5321 = vpack.c.b16 %v3761, %v3759
        %v5322 = vpack.c.b16 %v3762, %v3760
        %v5323 = vpack.c.b16 %v3765, %v3763
        %v5324 = vpack.c.b16 %v3766, %v3764
        %v5325 = vpack.c.b16 %v3769, %v3767
        %v5326 = vpack.c.b16 %v3770, %v3768
        %v5327 = vpack.c.b16 %v3773, %v3771
        %v5328 = vpack.c.b16 %v3774, %v3772
        %v5329 = vpack.c.b16 %v3777, %v3775
        %v5330 = vpack.c.b16 %v3778, %v3776
        %v5331 = vpack.c.b16 %v3781, %v3779
        %v5332 = vpack.c.b16 %v3782, %v3780
        %v5333 = vpack.c.b16 %v3785, %v3783
        %v5334 = vpack.c.b16 %v3786, %v3784
        %v5335 = vpack.c.b16 %v3789, %v3787
        %v5336 = vpack.c.b16 %v3790, %v3788
        %v5337 = vpack.c.b16 %v3793, %v3791
        %v5338 = vpack.c.b16 %v3794, %v3792
        %v5339 = vpack.c.b16 %v3797, %v3795
        %v5340 = vpack.c.b16 %v3798, %v3796
        %v5341 = vpack.c.b16 %v3801, %v3799
        %v5342 = vpack.c.b16 %v3802, %v3800
        %v5343 = vpack.c.b16 %v3805, %v3803
        %v5344 = vpack.c.b16 %v3806, %v3804
        %v5345 = vpack.c.b16 %v3809, %v3807
        %v5346 = vpack.c.b16 %v3810, %v3808
        %v5347 = vpack.c.b16 %v3813, %v3811
        %v5348 = vpack.c.b16 %v3814, %v3812
        %v5349 = vpack.c.b16 %v3817, %v3815
        %v5350 = vpack.c.b16 %v3818, %v3816
        %v5351 = vpack.c.b16 %v3821, %v3819
        %v5352 = vpack.c.b16 %v3822, %v3820
        %v5353 = vpack.c.b16 %v3825, %v3823
        %v5354 = vpack.c.b16 %v3826, %v3824
        %v5355 = vpack.c.b16 %v3829, %v3827
        %v5356 = vpack.c.b16 %v3830, %v3828
        %v5357 = vpack.c.b16 %v3833, %v3831
        %v5358 = vpack.c.b16 %v3834, %v3832
        %v5359 = vpack.c.b16 %v3837, %v3835
        %v5360 = vpack.c.b16 %v3838, %v3836
        %v5361 = vpack.c.b16 %v3841, %v3839
        %v5362 = vpack.c.b16 %v3842, %v3840
        %v5363 = vpack.c.b16 %v3845, %v3843
        %v5364 = vpack.c.b16 %v3846, %v3844
        %v5365 = vpack.c.b16 %v3849, %v3847
        %v5366 = vpack.c.b16 %v3850, %v3848
        %v5367 = vpack.c.b16 %v3853, %v3851
        %v5368 = vpack.c.b16 %v3854, %v3852
        %v5369 = vpack.c.b16 %v3857, %v3855
        %v5370 = vpack.c.b16 %v3858, %v3856
        %v5371 = vpack.c.b16 %v3861, %v3859
        %v5372 = vpack.c.b16 %v3862, %v3860
        %v5373 = vpack.c.b16 %v3865, %v3863
        %v5374 = vpack.c.b16 %v3866, %v3864
        %v5375 = vpack.c.b16 %v3869, %v3867
        %v5376 = vpack.c.b16 %v3870, %v3868
        %v5377 = vpack.c.b16 %v3873, %v3871
        %v5378 = vpack.c.b16 %v3874, %v3872
        %v5379 = vpack.c.b16 %v3877, %v3875
        %v5380 = vpack.c.b16 %v3878, %v3876
        %v5381 = vpack.c.b16 %v3881, %v3879
        %v5382 = vpack.c.b16 %v3882, %v3880
        %v5383 = vpack.c.b16 %v3885, %v3883
        %v5384 = vpack.c.b16 %v3886, %v3884
        %v5385 = vpack.c.b16 %v3889, %v3887
        %v5386 = vpack.c.b16 %v3890, %v3888
        %v5387 = vpack.c.b16 %v3893, %v3891
        %v5388 = vpack.c.b16 %v3894, %v3892
        %v5389 = vpack.c.b16 %v3897, %v3895
        %v5390 = vpack.c.b16 %v3898, %v3896
        %v5391 = vpack.c.b16 %v3901, %v3899
        %v5392 = vpack.c.b16 %v3902, %v3900
        %v5393 = vpack.c.b16 %v3905, %v3903
        %v5394 = vpack.c.b16 %v3906, %v3904
        %v5395 = vpack.c.b16 %v3909, %v3907
        %v5396 = vpack.c.b16 %v3910, %v3908
        %v5397 = vpack.c.b16 %v3913, %v3911
        %v5398 = vpack.c.b16 %v3914, %v3912
        %v5399 = vpack.c.b16 %v3917, %v3915
        %v5400 = vpack.c.b16 %v3918, %v3916
        %v5401 = vpack.c.b16 %v3921, %v3919
        %v5402 = vpack.c.b16 %v3922, %v3920
        %v5403 = vpack.c.b16 %v3925, %v3923
        %v5404 = vpack.c.b16 %v3926, %v3924
        %v5405 = vpack.c.b16 %v3929, %v3927
        %v5406 = vpack.c.b16 %v3930, %v3928
        %v5407 = vpack.c.b16 %v3933, %v3931
        %v5408 = vpack.c.b16 %v3934, %v3932
        %v5409 = vpack.c.b16 %v3937, %v3935
        %v5410 = vpack.c.b16 %v3938, %v3936
        %v5411 = vpack.c.b16 %v3941, %v3939
        %v5412 = vpack.c.b16 %v3942, %v3940
        %v5413 = vpack.c.b16 %v3945, %v3943
        %v5414 = vpack.c.b16 %v3946, %v3944
        %v5415 = vpack.c.b16 %v3949, %v3947
        %v5416 = vpack.c.b16 %v3950, %v3948
        %v5417 = vpack.c.b16 %v3953, %v3951
        %v5418 = vpack.c.b16 %v3954, %v3952
        %v5419 = vpack.c.b16 %v3957, %v3955
        %v5420 = vpack.c.b16 %v3958, %v3956
        %v5421 = vpack.c.b16 %v3961, %v3959
        %v5422 = vpack.c.b16 %v3962, %v3960
        %v5423 = vpack.c.b16 %v3965, %v3963
        %v5424 = vpack.c.b16 %v3966, %v3964
        %v5425 = vpack.c.b16 %v3969, %v3967
        %v5426 = vpack.c.b16 %v3970, %v3968
        %v5427 = vpack.c.b16 %v3973, %v3971
        %v5428 = vpack.c.b16 %v3974, %v3972
        %v5429 = vpack.c.b16 %v3977, %v3975
        %v5430 = vpack.c.b16 %v3978, %v3976
        %v5431 = vpack.c.b16 %v3981, %v3979
        %v5432 = vpack.c.b16 %v3982, %v3980
        %v5433 = vpack.c.b16 %v3985, %v3983
        %v5434 = vpack.c.b16 %v3986, %v3984
        %v5435 = vpack.c.b16 %v3989, %v3987
        %v5436 = vpack.c.b16 %v3990, %v3988
        %v5437 = vpack.c.b16 %v3993, %v3991
        %v5438 = vpack.c.b16 %v3994, %v3992
        %v5439 = vpack.c.b16 %v3997, %v3995
        %v5440 = vpack.c.b16 %v3998, %v3996
        %v5441 = vpack.c.b16 %v4001, %v3999
        %v5442 = vpack.c.b16 %v4002, %v4000
        %v5443 = vpack.c.b16 %v4005, %v4003
        %v5444 = vpack.c.b16 %v4006, %v4004
        %v5445 = vpack.c.b16 %v4009, %v4007
        %v5446 = vpack.c.b16 %v4010, %v4008
        %v5447 = vpack.c.b16 %v4013, %v4011
        %v5448 = vpack.c.b16 %v4014, %v4012
        %v5449 = vpack.c.b16 %v4017, %v4015
        %v5450 = vpack.c.b16 %v4018, %v4016
        %v5451 = vpack.c.b16 %v4021, %v4019
        %v5452 = vpack.c.b16 %v4022, %v4020
        %v5453 = vpack.c.b16 %v4025, %v4023
        %v5454 = vpack.c.b16 %v4026, %v4024
        %v5455 = vpack.c.b16 %v4029, %v4027
        %v5456 = vpack.c.b16 %v4030, %v4028
        %v5457 = vpack.c.b16 %v4033, %v4031
        %v5458 = vpack.c.b16 %v4034, %v4032
        %v5459 = vpack.c.b16 %v4037, %v4035
        %v5460 = vpack.c.b16 %v4038, %v4036
        %v5461 = vpack.c.b16 %v4041, %v4039
        %v5462 = vpack.c.b16 %v4042, %v4040
        %v5463 = vpack.c.b16 %v4045, %v4043
        %v5464 = vpack.c.b16 %v4046, %v4044
        %v5465 = vpack.c.b16 %v4049, %v4047
        %v5466 = vpack.c.b16 %v4050, %v4048
        %v5467 = vpack.c.b16 %v4053, %v4051
        %v5468 = vpack.c.b16 %v4054, %v4052
        %v5469 = vpack.c.b16 %v4057, %v4055
        %v5470 = vpack.c.b16 %v4058, %v4056
        %v5471 = vpack.c.b16 %v4061, %v4059
        %v5472 = vpack.c.b16 %v4062, %v4060
        %v5473 = vpack.c.b16 %v4065, %v4063
        %v5474 = vpack.c.b16 %v4066, %v4064
        %v5475 = vpack.c.b16 %v4069, %v4067
        %v5476 = vpack.c.b16 %v4070, %v4068
        %v5477 = vpack.c.b16 %v4073, %v4071
        %v5478 = vpack.c.b16 %v4074, %v4072
        %v5479 = vpack.c.b16 %v4077, %v4075
        %v5480 = vpack.c.b16 %v4078, %v4076
        %v5481 = vpack.c.b16 %v4081, %v4079
        %v5482 = vpack.c.b16 %v4082, %v4080
        %v5483 = vpack.c.b16 %v4085, %v4083
        %v5484 = vpack.c.b16 %v4086, %v4084
        %v5485 = vpack.c.b16 %v4089, %v4087
        %v5486 = vpack.c.b16 %v4090, %v4088
        %v5487 = vpack.c.b16 %v4093, %v4091
        %v5488 = vpack.c.b16 %v4094, %v4092
        %v5489 = vpack.c.b16 %v4097, %v4095
        %v5490 = vpack.c.b16 %v4098, %v4096
        %v5491 = vpack.c.b16 %v4101, %v4099
        %v5492 = vpack.c.b16 %v4102, %v4100
        %v5493 = vpack.c.b16 %v4105, %v4103
        %v5494 = vpack.c.b16 %v4106, %v4104
        %v5495 = vpack.c.b16 %v4109, %v4107
        %v5496 = vpack.c.b16 %v4110, %v4108
        %v5497 = vpack.c.b16 %v4113, %v4111
        %v5498 = vpack.c.b16 %v4114, %v4112
        %v5499 = vpack.c.b16 %v4117, %v4115
        %v5500 = vpack.c.b16 %v4118, %v4116
        %v5501 = vpack.c.b16 %v4121, %v4119
        %v5502 = vpack.c.b16 %v4122, %v4120
        %v5503 = vpack.c.b16 %v4125, %v4123
        %v5504 = vpack.c.b16 %v4126, %v4124
        %v5505 = vpack.c.b16 %v4129, %v4127
        %v5506 = vpack.c.b16 %v4130, %v4128
        %v5507 = vpack.c.b16 %v4133, %v4131
        %v5508 = vpack.c.b16 %v4134, %v4132
        %v5509 = vpack.c.b16 %v4137, %v4135
        %v5510 = vpack.c.b16 %v4138, %v4136
        %v5511 = vpack.c.b16 %v4141, %v4139
        %v5512 = vpack.c.b16 %v4142, %v4140
        %v5513 = vpack.c.b16 %v4145, %v4143
        %v5514 = vpack.c.b16 %v4146, %v4144
        %v5515 = vpack.c.b16 %v4149, %v4147
        %v5516 = vpack.c.b16 %v4150, %v4148
        %v5517 = vpack.c.b16 %v4153, %v4151
        %v5518 = vpack.c.b16 %v4154, %v4152
        %v5519 = vpack.c.b16 %v4157, %v4155
        %v5520 = vpack.c.b16 %v4158, %v4156
        %v5521 = vpack.c.b16 %v4161, %v4159
        %v5522 = vpack.c.b16 %v4162, %v4160
        %v5523 = vpack.c.b16 %v4165, %v4163
        %v5524 = vpack.c.b16 %v4166, %v4164
        %v5525 = vpack.c.b16 %v4169, %v4167
        %v5526 = vpack.c.b16 %v4170, %v4168
        %v5527 = vpack.c.b16 %v4173, %v4171
        %v5528 = vpack.c.b16 %v4174, %v4172
        %v5529 = vpack.c.b16 %v4177, %v4175
        %v5530 = vpack.c.b16 %v4178, %v4176
        %v5531 = vpack.c.b16 %v4181, %v4179
        %v5532 = vpack.c.b16 %v4182, %v4180
        %v5533 = vpack.c.b16 %v4185, %v4183
        %v5534 = vpack.c.b16 %v4186, %v4184
        %v5535 = vpack.c.b16 %v4189, %v4187
        %v5536 = vpack.c.b16 %v4190, %v4188
        %v5537 = vpack.c.b16 %v4193, %v4191
        %v5538 = vpack.c.b16 %v4194, %v4192
        %v5539 = vpack.c.b16 %v4197, %v4195
        %v5540 = vpack.c.b16 %v4198, %v4196
        %v5541 = vpack.c.b16 %v4201, %v4199
        %v5542 = vpack.c.b16 %v4202, %v4200
        %v5543 = vpack.c.b16 %v4205, %v4203
        %v5544 = vpack.c.b16 %v4206, %v4204
        %v5545 = vpack.c.b16 %v4209, %v4207
        %v5546 = vpack.c.b16 %v4210, %v4208
        %v5547 = vpack.c.b16 %v4213, %v4211
        %v5548 = vpack.c.b16 %v4214, %v4212
        %v5549 = vpack.c.b16 %v4217, %v4215
        %v5550 = vpack.c.b16 %v4218, %v4216
        %v5551 = vpack.c.b16 %v4221, %v4219
        %v5552 = vpack.c.b16 %v4222, %v4220
        %v5553 = vpack.c.b16 %v4225, %v4223
        %v5554 = vpack.c.b16 %v4226, %v4224
        %v5555 = vpack.c.b16 %v4229, %v4227
        %v5556 = vpack.c.b16 %v4230, %v4228
        %v5557 = vpack.c.b16 %v4233, %v4231
        %v5558 = vpack.c.b16 %v4234, %v4232
        %v5559 = vpack.c.b16 %v4237, %v4235
        %v5560 = vpack.c.b16 %v4238, %v4236
        %v5561 = vpack.c.b16 %v4241, %v4239
        %v5562 = vpack.c.b16 %v4242, %v4240
        %v5563 = vpack.c.b16 %v4245, %v4243
        %v5564 = vpack.c.b16 %v4246, %v4244
        %v5565 = vpack.c.b16 %v4249, %v4247
        %v5566 = vpack.c.b16 %v4250, %v4248
        %v5567 = vpack.c.b16 %v4253, %v4251
        %v5568 = vpack.c.b16 %v4254, %v4252
        %v5569 = vpack.c.b16 %v4257, %v4255
        %v5570 = vpack.c.b16 %v4258, %v4256
        %v5571 = vpack.c.b16 %v4261, %v4259
        %v5572 = vpack.c.b16 %v4262, %v4260
        %v5573 = vpack.c.b16 %v4265, %v4263
        %v5574 = vpack.c.b16 %v4266, %v4264
        %v5575 = vpack.c.b16 %v4269, %v4267
        %v5576 = vpack.c.b16 %v4270, %v4268
        %v5577 = vpack.c.b16 %v4273, %v4271
        %v5578 = vpack.c.b16 %v4274, %v4272
        %v5579 = vpack.c.b16 %v4277, %v4275
        %v5580 = vpack.c.b16 %v4278, %v4276
        %v5581 = vpack.c.b16 %v4281, %v4279
        %v5582 = vpack.c.b16 %v4282, %v4280
        %v5583 = vpack.c.b16 %v4285, %v4283
        %v5584 = vpack.c.b16 %v4286, %v4284
        %v5585 = vpack.c.b16 %v4289, %v4287
        %v5586 = vpack.c.b16 %v4290, %v4288
        %v5587 = vpack.c.b16 %v4293, %v4291
        %v5588 = vpack.c.b16 %v4294, %v4292
        %v5589 = vpack.c.b16 %v4297, %v4295
        %v5590 = vpack.c.b16 %v4298, %v4296
        %v5591 = vpack.c.b16 %v4301, %v4299
        %v5592 = vpack.c.b16 %v4302, %v4300
        %v5593 = vpack.c.b16 %v4305, %v4303
        %v5594 = vpack.c.b16 %v4306, %v4304
        %v5595 = vpack.c.b16 %v4309, %v4307
        %v5596 = vpack.c.b16 %v4310, %v4308
        %v5597 = vpack.c.b16 %v4313, %v4311
        %v5598 = vpack.c.b16 %v4314, %v4312
        %v5599 = vpack.c.b16 %v4317, %v4315
        %v5600 = vpack.c.b16 %v4318, %v4316
        %v5601 = vpack.c.b16 %v4321, %v4319
        %v5602 = vpack.c.b16 %v4322, %v4320
        %v5603 = vpack.c.b16 %v4325, %v4323
        %v5604 = vpack.c.b16 %v4326, %v4324
        %v5605 = vpack.c.b16 %v4329, %v4327
        %v5606 = vpack.c.b16 %v4330, %v4328
        %v5607 = vpack.c.b16 %v4333, %v4331
        %v5608 = vpack.c.b16 %v4334, %v4332
        %v5609 = vpack.c.b16 %v4337, %v4335
        %v5610 = vpack.c.b16 %v4338, %v4336
        %v5611 = vpack.c.b16 %v4341, %v4339
        %v5612 = vpack.c.b16 %v4342, %v4340
        %v5613 = vpack.c.b16 %v4345, %v4343
        %v5614 = vpack.c.b16 %v4346, %v4344
        %v5615 = vpack.c.b16 %v4349, %v4347
        %v5616 = vpack.c.b16 %v4350, %v4348
        %v5617 = vpack.c.b16 %v4353, %v4351
        %v5618 = vpack.c.b16 %v4354, %v4352
        %v5619 = vpack.c.b16 %v4357, %v4355
        %v5620 = vpack.c.b16 %v4358, %v4356
        %v5621 = vpack.c.b16 %v4361, %v4359
        %v5622 = vpack.c.b16 %v4362, %v4360
        %v5623 = vpack.c.b16 %v4365, %v4363
        %v5624 = vpack.c.b16 %v4366, %v4364
        %v5625 = vpack.c.b16 %v4369, %v4367
        %v5626 = vpack.c.b16 %v4370, %v4368
        %v5627 = vpack.c.b16 %v4373, %v4371
        %v5628 = vpack.c.b16 %v4374, %v4372
        %v5629 = vpack.c.b16 %v4377, %v4375
        %v5630 = vpack.c.b16 %v4378, %v4376
        %v5631 = vpack.c.b16 %v4381, %v4379
        %v5632 = vpack.c.b16 %v4382, %v4380
        %v5633 = vpack.c.b16 %v4385, %v4383
        %v5634 = vpack.c.b16 %v4386, %v4384
        %v5635 = vpack.c.b16 %v4389, %v4387
        %v5636 = vpack.c.b16 %v4390, %v4388
        %v5637 = vpack.c.b16 %v4393, %v4391
        %v5638 = vpack.c.b16 %v4394, %v4392
        %v5639 = vpack.c.b16 %v4397, %v4395
        %v5640 = vpack.c.b16 %v4398, %v4396
        %v5641 = vpack.c.b16 %v4401, %v4399
        %v5642 = vpack.c.b16 %v4402, %v4400
        %v5643 = vpack.c.b16 %v4405, %v4403
        %v5644 = vpack.c.b16 %v4406, %v4404
        %v5645 = vpack.c.b16 %v4409, %v4407
        %v5646 = vpack.c.b16 %v4410, %v4408
        %v5647 = vpack.c.b16 %v4413, %v4411
        %v5648 = vpack.c.b16 %v4414, %v4412
        %v5649 = vpack.c.b16 %v4417, %v4415
        %v5650 = vpack.c.b16 %v4418, %v4416
        %v5651 = vpack.c.b16 %v4421, %v4419
        %v5652 = vpack.c.b16 %v4422, %v4420
        %v5653 = vpack.c.b16 %v4425, %v4423
        %v5654 = vpack.c.b16 %v4426, %v4424
        %v5655 = vpack.c.b16 %v4429, %v4427
        %v5656 = vpack.c.b16 %v4430, %v4428
        %v5657 = vpack.c.b16 %v4433, %v4431
        %v5658 = vpack.c.b16 %v4434, %v4432
        %v5659 = vpack.c.b16 %v4437, %v4435
        %v5660 = vpack.c.b16 %v4438, %v4436
        %v5661 = vpack.c.b16 %v4441, %v4439
        %v5662 = vpack.c.b16 %v4442, %v4440
        %v5663 = vpack.c.b16 %v4445, %v4443
        %v5664 = vpack.c.b16 %v4446, %v4444
        %v5665 = vpack.c.b16 %v4449, %v4447
        %v5666 = vpack.c.b16 %v4450, %v4448
        %v5667 = vpack.c.b16 %v4453, %v4451
        %v5668 = vpack.c.b16 %v4454, %v4452
        %v5669 = vpack.c.b16 %v4457, %v4455
        %v5670 = vpack.c.b16 %v4458, %v4456
        %v5671 = vpack.c.b16 %v4461, %v4459
        %v5672 = vpack.c.b16 %v4462, %v4460
        %v5673 = vpack.c.b16 %v4465, %v4463
        %v5674 = vpack.c.b16 %v4466, %v4464
        %v5675 = vpack.c.b16 %v4469, %v4467
        %v5676 = vpack.c.b16 %v4470, %v4468
        %v5677 = vpack.c.b16 %v4473, %v4471
        %v5678 = vpack.c.b16 %v4474, %v4472
        %v5679 = vpack.c.b16 %v4477, %v4475
        %v5680 = vpack.c.b16 %v4478, %v4476
        %v5681 = vpack.c.b16 %v4481, %v4479
        %v5682 = vpack.c.b16 %v4482, %v4480
        %v5683 = vpack.c.b16 %v4485, %v4483
        %v5684 = vpack.c.b16 %v4486, %v4484
        %v5685 = vpack.c.b16 %v4489, %v4487
        %v5686 = vpack.c.b16 %v4490, %v4488
        %v5687 = vpack.c.b16 %v4493, %v4491
        %v5688 = vpack.c.b16 %v4494, %v4492
        %v5689 = vpack.c.b16 %v4497, %v4495
        %v5690 = vpack.c.b16 %v4498, %v4496
        %v5691 = vpack.c.b16 %v4501, %v4499
        %v5692 = vpack.c.b16 %v4502, %v4500
        %v5693 = vpack.c.b16 %v4505, %v4503
        %v5694 = vpack.c.b16 %v4506, %v4504
        %v5695 = vpack.c.b16 %v4509, %v4507
        %v5696 = vpack.c.b16 %v4510, %v4508
        %v5697 = vpack.c.b16 %v4513, %v4511
        %v5698 = vpack.c.b16 %v4514, %v4512
        %v5699 = vpack.c.b16 %v4517, %v4515
        %v5700 = vpack.c.b16 %v4518, %v4516
        %v5701 = vpack.c.b16 %v4521, %v4519
        %v5702 = vpack.c.b16 %v4522, %v4520
        %v5703 = vpack.c.b16 %v4525, %v4523
        %v5704 = vpack.c.b16 %v4526, %v4524
        %v5705 = vpack.c.b16 %v4529, %v4527
        %v5706 = vpack.c.b16 %v4530, %v4528
        %v5707 = vpack.c.b16 %v4533, %v4531
        %v5708 = vpack.c.b16 %v4534, %v4532
        %v5709 = vpack.c.b16 %v4537, %v4535
        %v5710 = vpack.c.b16 %v4538, %v4536
        %v5711 = vpack.c.b16 %v4541, %v4539
        %v5712 = vpack.c.b16 %v4542, %v4540
        %v5713 = vpack.c.b16 %v4545, %v4543
        %v5714 = vpack.c.b16 %v4546, %v4544
        %v5715 = vpack.c.b16 %v4549, %v4547
        %v5716 = vpack.c.b16 %v4550, %v4548
        %v5717 = vpack.c.b16 %v4553, %v4551
        %v5718 = vpack.c.b16 %v4554, %v4552
        %v5719 = vpack.c.b16 %v4557, %v4555
        %v5720 = vpack.c.b16 %v4558, %v4556
        %v5721 = vpack.c.b16 %v4561, %v4559
        %v5722 = vpack.c.b16 %v4562, %v4560
        %v5723 = vpack.c.b16 %v4565, %v4563
        %v5724 = vpack.c.b16 %v4566, %v4564
        %v5725 = vpack.c.b16 %v4569, %v4567
        %v5726 = vpack.c.b16 %v4570, %v4568
        %v5727 = vpack.c.b16 %v4573, %v4571
        %v5728 = vpack.c.b16 %v4574, %v4572
        %v5729 = vpack.c.b16 %v4577, %v4575
        %v5730 = vpack.c.b16 %v4578, %v4576
        %v5731 = vpack.c.b16 %v4581, %v4579
        %v5732 = vpack.c.b16 %v4582, %v4580
        %v5733 = vpack.c.b16 %v4585, %v4583
        %v5734 = vpack.c.b16 %v4586, %v4584
        %v5735 = vpack.c.b16 %v4589, %v4587
        %v5736 = vpack.c.b16 %v4590, %v4588
        %v5737 = vpack.c.b16 %v4593, %v4591
        %v5738 = vpack.c.b16 %v4594, %v4592
        %v5739 = vpack.c.b16 %v4597, %v4595
        %v5740 = vpack.c.b16 %v4598, %v4596
        %v5741 = vpack.c.b16 %v4601, %v4599
        %v5742 = vpack.c.b16 %v4602, %v4600
        %v5743 = vpack.c.b16 %v4605, %v4603
        %v5744 = vpack.c.b16 %v4606, %v4604
        %v5745 = vpack.c.b16 %v4609, %v4607
        %v5746 = vpack.c.b16 %v4610, %v4608
        %v5747 = vpack.c.b16 %v4613, %v4611
        %v5748 = vpack.c.b16 %v4614, %v4612
        %v5749 = vpack.c.b16 %v4617, %v4615
        %v5750 = vpack.c.b16 %v4618, %v4616
        %v5751 = vpack.c.b16 %v4621, %v4619
        %v5752 = vpack.c.b16 %v4622, %v4620
        %v5753 = vpack.c.b16 %v4625, %v4623
        %v5754 = vpack.c.b16 %v4626, %v4624
        %v5755 = vpack.c.b16 %v4629, %v4627
        %v5756 = vpack.c.b16 %v4630, %v4628
        %v5757 = vpack.c.b16 %v4633, %v4631
        %v5758 = vpack.c.b16 %v4634, %v4632
        %v5759 = vpack.c.b16 %v4637, %v4635
        %v5760 = vpack.c.b16 %v4638, %v4636
        %v5761 = vpack.c.b16 %v4641, %v4639
        %v5762 = vpack.c.b16 %v4642, %v4640
        %v5763 = vpack.c.b16 %v4645, %v4643
        %v5764 = vpack.c.b16 %v4646, %v4644
        %v5765 = vpack.c.b16 %v4649, %v4647
        %v5766 = vpack.c.b16 %v4650, %v4648
        %v5767 = vpack.c.b16 %v4653, %v4651
        %v5768 = vpack.c.b16 %v4654, %v4652
        %v5769 = vpack.c.b16 %v4657, %v4655
        %v5770 = vpack.c.b16 %v4658, %v4656
        %v5771 = vpack.c.b16 %v4661, %v4659
        %v5772 = vpack.c.b16 %v4662, %v4660
        %v5773 = vpack.c.b16 %v4665, %v4663
        %v5774 = vpack.c.b16 %v4666, %v4664
        %v5775 = vpack.c.b16 %v4669, %v4667
        %v5776 = vpack.c.b16 %v4670, %v4668
        %v5777 = vpack.c.b16 %v4673, %v4671
        %v5778 = vpack.c.b16 %v4674, %v4672
        %v5779 = vpack.c.b16 %v4677, %v4675
        %v5780 = vpack.c.b16 %v4678, %v4676
        %v5781 = vpack.c.b16 %v4681, %v4679
        %v5782 = vpack.c.b16 %v4682, %v4680
        %v5783 = vpack.c.b16 %v4685, %v4683
        %v5784 = vpack.c.b16 %v4686, %v4684
        %v5785 = vpack.c.b16 %v4689, %v4687
        %v5786 = vpack.c.b16 %v4690, %v4688
        %v5787 = vpack.c.b16 %v4693, %v4691
        %v5788 = vpack.c.b16 %v4694, %v4692
        %v5789 = vpack.c.b16 %v4697, %v4695
        %v5790 = vpack.c.b16 %v4698, %v4696
        %v5791 = vpack.c.b16 %v4701, %v4699
        %v5792 = vpack.c.b16 %v4702, %v4700
        %v5793 = vpack.c.b16 %v4705, %v4703
        %v5794 = vpack.c.b16 %v4706, %v4704
        %v5795 = vpack.c.b16 %v4709, %v4707
        %v5796 = vpack.c.b16 %v4710, %v4708
        %v5797 = vpack.c.b16 %v4713, %v4711
        %v5798 = vpack.c.b16 %v4714, %v4712
        %v5799 = vpack.c.b16 %v4717, %v4715
        %v5800 = vpack.c.b16 %v4718, %v4716
        %v5801 = vpack.c.b16 %v4721, %v4719
        %v5802 = vpack.c.b16 %v4722, %v4720
        %v5803 = vpack.c.b16 %v4725, %v4723
        %v5804 = vpack.c.b16 %v4726, %v4724
        %v5805 = vpack.c.b16 %v4729, %v4727
        %v5806 = vpack.c.b16 %v4730, %v4728
        %v5807 = vpack.c.b16 %v4733, %v4731
        %v5808 = vpack.c.b16 %v4734, %v4732
        %v5809 = vpack.c.b16 %v4737, %v4735
        %v5810 = vpack.c.b16 %v4738, %v4736
        %v5811 = vpack.c.b16 %v4741, %v4739
        %v5812 = vpack.c.b16 %v4742, %v4740
        %v5813 = vpack.c.b16 %v4745, %v4743
        %v5814 = vpack.c.b16 %v4746, %v4744
        %v5815 = vpack.c.b16 %v4749, %v4747
        %v5816 = vpack.c.b16 %v4750, %v4748
        %v5817 = vpack.c.b16 %v4753, %v4751
        %v5818 = vpack.c.b16 %v4754, %v4752
        %v5819 = vpack.c.b16 %v4757, %v4755
        %v5820 = vpack.c.b16 %v4758, %v4756
        %v5821 = vpack.c.b16 %v4761, %v4759
        %v5822 = vpack.c.b16 %v4762, %v4760
        %v5823 = vpack.c.b16 %v4765, %v4763
        %v5824 = vpack.c.b16 %v4766, %v4764
        %v5825 = vpack.c.b16 %v4769, %v4767
        %v5826 = vpack.c.b16 %v4770, %v4768
        %v5827 = vpack.c.b16 %v4773, %v4771
        %v5828 = vpack.c.b16 %v4774, %v4772
        %v5829 = vpack.c.b16 %v4777, %v4775
        %v5830 = vpack.c.b16 %v4778, %v4776
        %v5831 = vpack.c.b16 %v4781, %v4779
        %v5832 = vpack.c.b16 %v4782, %v4780
        %v5833 = vpack.c.b16 %v4785, %v4783
        %v5834 = vpack.c.b16 %v4786, %v4784
        %v5835 = vpack.c.b16 %v4789, %v4787
        %v5836 = vpack.c.b16 %v4790, %v4788
        %v5837 = vpack.c.b16 %v4793, %v4791
        %v5838 = vpack.c.b16 %v4794, %v4792
        %v5839 = vpack.c.b16 %v4797, %v4795
        %v5840 = vpack.c.b16 %v4798, %v4796
        %v5841 = vpack.c.b16 %v4801, %v4799
        %v5842 = vpack.c.b16 %v4802, %v4800
        %v5843 = vpack.c.b16 %v4805, %v4803
        %v5844 = vpack.c.b16 %v4806, %v4804
        %v5845 = vpack.c.b16 %v4809, %v4807
        %v5846 = vpack.c.b16 %v4810, %v4808
        %v5847 = vpack.c.b16 %v4813, %v4811
        %v5848 = vpack.c.b16 %v4814, %v4812
        %v5849 = vpack.c.b16 %v4817, %v4815
        %v5850 = vpack.c.b16 %v4818, %v4816
        %v5851 = vpack.c.b16 %v4821, %v4819
        %v5852 = vpack.c.b16 %v4822, %v4820
        %v5853 = vpack.c.b16 %v4825, %v4823
        %v5854 = vpack.c.b16 %v4826, %v4824
        %v5855 = vpack.c.b16 %v4829, %v4827
        %v5856 = vpack.c.b16 %v4830, %v4828
        %v5857 = vpack.c.b16 %v4833, %v4831
        %v5858 = vpack.c.b16 %v4834, %v4832
        %6883 = vmatprep.subr.bf16.mxu0 %v4836
        %6884 = vmatpush1.bf16.msra.mxu0 %v4835
        %6885 = vmatprep.subr.bf16.mxu0 %v4838
        %6886 = vmatpush1.bf16.msra.mxu0 %v4837
        %6887 = vmatprep.subr.bf16.mxu0 %v4840
        %6888 = vmatpush1.bf16.msra.mxu0 %v4839
        %6889 = vmatprep.subr.bf16.mxu0 %v4842
        %6890 = vmatpush1.bf16.msra.mxu0 %v4841
        %6891 = vmatprep.subr.bf16.mxu0 %v4844
        %6892 = vmatpush1.bf16.msra.mxu0 %v4843
        %6893 = vmatprep.subr.bf16.mxu0 %v4846
        %6894 = vmatpush1.bf16.msra.mxu0 %v4845
        %6895 = vmatprep.subr.bf16.mxu0 %v4848
        %6896 = vmatpush1.bf16.msra.mxu0 %v4847
        %6897 = vmatprep.subr.bf16.mxu0 %v4850
        %6898 = vmatpush1.bf16.msra.mxu0 %v4849
        %6899 = vmatprep.subr.bf16.mxu0 %v4852
        %6900 = vmatpush1.bf16.msra.mxu0 %v4851
        %6901 = vmatprep.subr.bf16.mxu0 %v4854
        %6902 = vmatpush1.bf16.msra.mxu0 %v4853
        %6903 = vmatprep.subr.bf16.mxu0 %v4856
        %6904 = vmatpush1.bf16.msra.mxu0 %v4855
        %6905 = vmatprep.subr.bf16.mxu0 %v4858
        %6906 = vmatpush1.bf16.msra.mxu0 %v4857
        %6907 = vmatprep.subr.bf16.mxu0 %v4860
        %6908 = vmatpush1.bf16.msra.mxu0 %v4859
        %6909 = vmatprep.subr.bf16.mxu0 %v4862
        %6910 = vmatpush1.bf16.msra.mxu0 %v4861
        %6911 = vmatprep.subr.bf16.mxu0 %v4864
        %6912 = vmatpush1.bf16.msra.mxu0 %v4863
        %6913 = vmatprep.subr.bf16.mxu0 %v4866
        %6914 = vmatpush1.bf16.msra.mxu0 %v4865
        %6915 = vmatprep.mubr.bf16.mxu0 %v1344
        %6916 = vmatmul.mubr.bf16.gmra.mrb[0].mxu0 %v1330
        %v6917 = vpop.f32.mrb[0].mxu0
        %v6918 = vadd.f32 0.0, %v6917
        %v6919 = vpop.f32.mrb[0].mxu0
        %v6920 = vadd.f32 0.0, %v6919
        %v6921 = vpop.f32.mrb[0].mxu0
        %v6922 = vpop.f32.mrb[0].mxu0
        %6923 = vdwg.mxu0
        %6924 = vmatprep.subr.bf16.mxu0 %v4868
        %6925 = vmatpush1.bf16.msra.mxu0 %v4867
        %6926 = vmatprep.subr.bf16.mxu0 %v4870
        %6927 = vmatpush1.bf16.msra.mxu0 %v4869
        %6928 = vmatprep.subr.bf16.mxu0 %v4872
        %6929 = vmatpush1.bf16.msra.mxu0 %v4871
        %6930 = vmatprep.subr.bf16.mxu0 %v4874
        %6931 = vmatpush1.bf16.msra.mxu0 %v4873
        %6932 = vmatprep.subr.bf16.mxu0 %v4876
        %6933 = vmatpush1.bf16.msra.mxu0 %v4875
        %6934 = vmatprep.subr.bf16.mxu0 %v4878
        %6935 = vmatpush1.bf16.msra.mxu0 %v4877
        %6936 = vmatprep.subr.bf16.mxu0 %v4880
        %6937 = vmatpush1.bf16.msra.mxu0 %v4879
        %6938 = vmatprep.subr.bf16.mxu0 %v4882
        %6939 = vmatpush1.bf16.msra.mxu0 %v4881
        %6940 = vmatprep.subr.bf16.mxu0 %v4884
        %6941 = vmatpush1.bf16.msra.mxu0 %v4883
        %6942 = vmatprep.subr.bf16.mxu0 %v4886
        %6943 = vmatpush1.bf16.msra.mxu0 %v4885
        %6944 = vmatprep.subr.bf16.mxu0 %v4888
        %6945 = vmatpush1.bf16.msra.mxu0 %v4887
        %6946 = vmatprep.subr.bf16.mxu0 %v4890
        %6947 = vmatpush1.bf16.msra.mxu0 %v4889
        %6948 = vmatprep.subr.bf16.mxu0 %v4892
        %6949 = vmatpush1.bf16.msra.mxu0 %v4891
        %6950 = vmatprep.subr.bf16.mxu0 %v4894
        %6951 = vmatpush1.bf16.msra.mxu0 %v4893
        %6952 = vmatprep.subr.bf16.mxu0 %v4896
        %6953 = vmatpush1.bf16.msra.mxu0 %v4895
        %6954 = vmatprep.subr.bf16.mxu0 %v4898
        %6955 = vmatpush1.bf16.msra.mxu0 %v4897
        %6956 = vmatprep.mubr.bf16.mxu0 %v1354
        %6957 = vmatmul.mubr.bf16.gmra.mrb[0].mxu0 %v1352
        %v6958 = vpop.f32.mrb[0].mxu0
        %v6959 = vadd.f32 %v6918, %v6958
        %v6960 = vpop.f32.mrb[0].mxu0
        %v6961 = vadd.f32 %v6920, %v6960
        %v6962 = vpop.f32.mrb[0].mxu0
        %v6963 = vpop.f32.mrb[0].mxu0
        %6964 = vdwg.mxu0
        %6965 = vmatprep.subr.bf16.mxu0 %v4900
        %6966 = vmatpush1.bf16.msra.mxu0 %v4899
        %6967 = vmatprep.subr.bf16.mxu0 %v4902
        %6968 = vmatpush1.bf16.msra.mxu0 %v4901
        %6969 = vmatprep.subr.bf16.mxu0 %v4904
        %6970 = vmatpush1.bf16.msra.mxu0 %v4903
        %6971 = vmatprep.subr.bf16.mxu0 %v4906
        %6972 = vmatpush1.bf16.msra.mxu0 %v4905
        %6973 = vmatprep.subr.bf16.mxu0 %v4908
        %6974 = vmatpush1.bf16.msra.mxu0 %v4907
        %6975 = vmatprep.subr.bf16.mxu0 %v4910
        %6976 = vmatpush1.bf16.msra.mxu0 %v4909
        %6977 = vmatprep.subr.bf16.mxu0 %v4912
        %6978 = vmatpush1.bf16.msra.mxu0 %v4911
        %6979 = vmatprep.subr.bf16.mxu0 %v4914
        %6980 = vmatpush1.bf16.msra.mxu0 %v4913
        %6981 = vmatprep.subr.bf16.mxu0 %v4916
        %6982 = vmatpush1.bf16.msra.mxu0 %v4915
        %6983 = vmatprep.subr.bf16.mxu0 %v4918
        %6984 = vmatpush1.bf16.msra.mxu0 %v4917
        %6985 = vmatprep.subr.bf16.mxu0 %v4920
        %6986 = vmatpush1.bf16.msra.mxu0 %v4919
        %6987 = vmatprep.subr.bf16.mxu0 %v4922
        %6988 = vmatpush1.bf16.msra.mxu0 %v4921
        %6989 = vmatprep.subr.bf16.mxu0 %v4924
        %6990 = vmatpush1.bf16.msra.mxu0 %v4923
        %6991 = vmatprep.subr.bf16.mxu0 %v4926
        %6992 = vmatpush1.bf16.msra.mxu0 %v4925
        %6993 = vmatprep.subr.bf16.mxu0 %v4928
        %6994 = vmatpush1.bf16.msra.mxu0 %v4927
        %6995 = vmatprep.subr.bf16.mxu0 %v4930
        %6996 = vmatpush1.bf16.msra.mxu0 %v4929
        %6997 = vmatprep.mubr.bf16.mxu0 %v1351
        %6998 = vmatmul.mubr.bf16.gmra.mrb[0].mxu0 %v1337
        %v6999 = vpop.f32.mrb[0].mxu0
        %v7000 = vadd.f32 %v6959, %v6999
        %v7001 = vpop.f32.mrb[0].mxu0
        %v7002 = vadd.f32 %v6961, %v7001
        %v7003 = vpop.f32.mrb[0].mxu0
        %v7004 = vpop.f32.mrb[0].mxu0
        %7005 = vdwg.mxu0
        %7006 = vmatprep.subr.bf16.mxu0 %v4932
        %7007 = vmatpush1.bf16.msra.mxu0 %v4931
        %7008 = vmatprep.subr.bf16.mxu0 %v4934
        %7009 = vmatpush1.bf16.msra.mxu0 %v4933
        %7010 = vmatprep.subr.bf16.mxu0 %v4936
        %7011 = vmatpush1.bf16.msra.mxu0 %v4935
        %7012 = vmatprep.subr.bf16.mxu0 %v4938
        %7013 = vmatpush1.bf16.msra.mxu0 %v4937
        %7014 = vmatprep.subr.bf16.mxu0 %v4940
        %7015 = vmatpush1.bf16.msra.mxu0 %v4939
        %7016 = vmatprep.subr.bf16.mxu0 %v4942
        %7017 = vmatpush1.bf16.msra.mxu0 %v4941
        %7018 = vmatprep.subr.bf16.mxu0 %v4944
        %7019 = vmatpush1.bf16.msra.mxu0 %v4943
        %7020 = vmatprep.subr.bf16.mxu0 %v4946
        %7021 = vmatpush1.bf16.msra.mxu0 %v4945
        %7022 = vmatprep.subr.bf16.mxu0 %v4948
        %7023 = vmatpush1.bf16.msra.mxu0 %v4947
        %7024 = vmatprep.subr.bf16.mxu0 %v4950
        %7025 = vmatpush1.bf16.msra.mxu0 %v4949
        %7026 = vmatprep.subr.bf16.mxu0 %v4952
        %7027 = vmatpush1.bf16.msra.mxu0 %v4951
        %7028 = vmatprep.subr.bf16.mxu0 %v4954
        %7029 = vmatpush1.bf16.msra.mxu0 %v4953
        %7030 = vmatprep.subr.bf16.mxu0 %v4956
        %7031 = vmatpush1.bf16.msra.mxu0 %v4955
        %7032 = vmatprep.subr.bf16.mxu0 %v4958
        %7033 = vmatpush1.bf16.msra.mxu0 %v4957
        %7034 = vmatprep.subr.bf16.mxu0 %v4960
        %7035 = vmatpush1.bf16.msra.mxu0 %v4959
        %7036 = vmatprep.subr.bf16.mxu0 %v4962
        %7037 = vmatpush1.bf16.msra.mxu0 %v4961
        %7038 = vmatprep.mubr.bf16.mxu0 %v1355
        %7039 = vmatmul.mubr.bf16.gmra.mrb[0].mxu0 %v1353
        %v7040 = vpop.f32.mrb[0].mxu0
        %v7041 = vadd.f32 %v7000, %v7040
        %v7042 = vpop.f32.mrb[0].mxu0
        %v7043 = vadd.f32 %v7002, %v7042
        %v7044 = vpop.f32.mrb[0].mxu0
        %v7045 = vpop.f32.mrb[0].mxu0
        %7046 = vdwg.mxu0
        %7047 = vmatprep.subr.bf16.mxu0 %v4964
        %7048 = vmatpush1.bf16.msra.mxu0 %v4963
        %7049 = vmatprep.subr.bf16.mxu0 %v4966
        %7050 = vmatpush1.bf16.msra.mxu0 %v4965
        %7051 = vmatprep.subr.bf16.mxu0 %v4968
        %7052 = vmatpush1.bf16.msra.mxu0 %v4967
        %7053 = vmatprep.subr.bf16.mxu0 %v4970
        %7054 = vmatpush1.bf16.msra.mxu0 %v4969
        %7055 = vmatprep.subr.bf16.mxu0 %v4972
        %7056 = vmatpush1.bf16.msra.mxu0 %v4971
        %7057 = vmatprep.subr.bf16.mxu0 %v4974
        %7058 = vmatpush1.bf16.msra.mxu0 %v4973
        %7059 = vmatprep.subr.bf16.mxu0 %v4976
        %7060 = vmatpush1.bf16.msra.mxu0 %v4975
        %7061 = vmatprep.subr.bf16.mxu0 %v4978
        %7062 = vmatpush1.bf16.msra.mxu0 %v4977
        %7063 = vmatprep.subr.bf16.mxu0 %v4980
        %7064 = vmatpush1.bf16.msra.mxu0 %v4979
        %7065 = vmatprep.subr.bf16.mxu0 %v4982
        %7066 = vmatpush1.bf16.msra.mxu0 %v4981
        %7067 = vmatprep.subr.bf16.mxu0 %v4984
        %7068 = vmatpush1.bf16.msra.mxu0 %v4983
        %7069 = vmatprep.subr.bf16.mxu0 %v4986
        %7070 = vmatpush1.bf16.msra.mxu0 %v4985
        %7071 = vmatprep.subr.bf16.mxu0 %v4988
        %7072 = vmatpush1.bf16.msra.mxu0 %v4987
        %7073 = vmatprep.subr.bf16.mxu0 %v4990
        %7074 = vmatpush1.bf16.msra.mxu0 %v4989
        %7075 = vmatprep.subr.bf16.mxu0 %v4992
        %7076 = vmatpush1.bf16.msra.mxu0 %v4991
        %7077 = vmatprep.subr.bf16.mxu0 %v4994
        %7078 = vmatpush1.bf16.msra.mxu0 %v4993
        %7079 = vmatprep.mubr.bf16.mxu0 %v1393
        %7080 = vmatmul.mubr.bf16.gmra.mrb[0].mxu0 %v1379
        %v7081 = vpop.f32.mrb[0].mxu0
        %v7082 = vadd.f32 %v7041, %v7081
        %v7083 = vpop.f32.mrb[0].mxu0
        %v7084 = vadd.f32 %v7043, %v7083
        %v7085 = vpop.f32.mrb[0].mxu0
        %v7086 = vpop.f32.mrb[0].mxu0
        %7087 = vdwg.mxu0
        %7088 = vmatprep.subr.bf16.mxu0 %v4996
        %7089 = vmatpush1.bf16.msra.mxu0 %v4995
        %7090 = vmatprep.subr.bf16.mxu0 %v4998
        %7091 = vmatpush1.bf16.msra.mxu0 %v4997
        %7092 = vmatprep.subr.bf16.mxu0 %v5000
        %7093 = vmatpush1.bf16.msra.mxu0 %v4999
        %7094 = vmatprep.subr.bf16.mxu0 %v5002
        %7095 = vmatpush1.bf16.msra.mxu0 %v5001
        %7096 = vmatprep.subr.bf16.mxu0 %v5004
        %7097 = vmatpush1.bf16.msra.mxu0 %v5003
        %7098 = vmatprep.subr.bf16.mxu0 %v5006
        %7099 = vmatpush1.bf16.msra.mxu0 %v5005
        %7100 = vmatprep.subr.bf16.mxu0 %v5008
        %7101 = vmatpush1.bf16.msra.mxu0 %v5007
        %7102 = vmatprep.subr.bf16.mxu0 %v5010
        %7103 = vmatpush1.bf16.msra.mxu0 %v5009
        %7104 = vmatprep.subr.bf16.mxu0 %v5012
        %7105 = vmatpush1.bf16.msra.mxu0 %v5011
        %7106 = vmatprep.subr.bf16.mxu0 %v5014
        %7107 = vmatpush1.bf16.msra.mxu0 %v5013
        %7108 = vmatprep.subr.bf16.mxu0 %v5016
        %7109 = vmatpush1.bf16.msra.mxu0 %v5015
        %7110 = vmatprep.subr.bf16.mxu0 %v5018
        %7111 = vmatpush1.bf16.msra.mxu0 %v5017
        %7112 = vmatprep.subr.bf16.mxu0 %v5020
        %7113 = vmatpush1.bf16.msra.mxu0 %v5019
        %7114 = vmatprep.subr.bf16.mxu0 %v5022
        %7115 = vmatpush1.bf16.msra.mxu0 %v5021
        %7116 = vmatprep.subr.bf16.mxu0 %v5024
        %7117 = vmatpush1.bf16.msra.mxu0 %v5023
        %7118 = vmatprep.subr.bf16.mxu0 %v5026
        %7119 = vmatpush1.bf16.msra.mxu0 %v5025
        %7120 = vmatprep.mubr.bf16.mxu0 %v1403
        %7121 = vmatmul.mubr.bf16.gmra.mrb[0].mxu0 %v1401
        %v7122 = vpop.f32.mrb[0].mxu0
        %v7123 = vadd.f32 %v7082, %v7122
        %v7124 = vpop.f32.mrb[0].mxu0
        %v7125 = vadd.f32 %v7084, %v7124
        %v7126 = vpop.f32.mrb[0].mxu0
        %v7127 = vpop.f32.mrb[0].mxu0
        %7128 = vdwg.mxu0
        %7129 = vmatprep.subr.bf16.mxu0 %v5028
        %7130 = vmatpush1.bf16.msra.mxu0 %v5027
        %7131 = vmatprep.subr.bf16.mxu0 %v5030
        %7132 = vmatpush1.bf16.msra.mxu0 %v5029
        %7133 = vmatprep.subr.bf16.mxu0 %v5032
        %7134 = vmatpush1.bf16.msra.mxu0 %v5031
        %7135 = vmatprep.subr.bf16.mxu0 %v5034
        %7136 = vmatpush1.bf16.msra.mxu0 %v5033
        %7137 = vmatprep.subr.bf16.mxu0 %v5036
        %7138 = vmatpush1.bf16.msra.mxu0 %v5035
        %7139 = vmatprep.subr.bf16.mxu0 %v5038
        %7140 = vmatpush1.bf16.msra.mxu0 %v5037
        %7141 = vmatprep.subr.bf16.mxu0 %v5040
        %7142 = vmatpush1.bf16.msra.mxu0 %v5039
        %7143 = vmatprep.subr.bf16.mxu0 %v5042
        %7144 = vmatpush1.bf16.msra.mxu0 %v5041
        %7145 = vmatprep.subr.bf16.mxu0 %v5044
        %7146 = vmatpush1.bf16.msra.mxu0 %v5043
        %7147 = vmatprep.subr.bf16.mxu0 %v5046
        %7148 = vmatpush1.bf16.msra.mxu0 %v5045
        %7149 = vmatprep.subr.bf16.mxu0 %v5048
        %7150 = vmatpush1.bf16.msra.mxu0 %v5047
        %7151 = vmatprep.subr.bf16.mxu0 %v5050
        %7152 = vmatpush1.bf16.msra.mxu0 %v5049
        %7153 = vmatprep.subr.bf16.mxu0 %v5052
        %7154 = vmatpush1.bf16.msra.mxu0 %v5051
        %7155 = vmatprep.subr.bf16.mxu0 %v5054
        %7156 = vmatpush1.bf16.msra.mxu0 %v5053
        %7157 = vmatprep.subr.bf16.mxu0 %v5056
        %7158 = vmatpush1.bf16.msra.mxu0 %v5055
        %7159 = vmatprep.subr.bf16.mxu0 %v5058
        %7160 = vmatpush1.bf16.msra.mxu0 %v5057
        %7161 = vmatprep.mubr.bf16.mxu0 %v1400
        %7162 = vmatmul.mubr.bf16.gmra.mrb[0].mxu0 %v1386
        %v7163 = vpop.f32.mrb[0].mxu0
        %v7164 = vadd.f32 %v7123, %v7163
        %v7165 = vpop.f32.mrb[0].mxu0
        %v7166 = vadd.f32 %v7125, %v7165
        %v7167 = vpop.f32.mrb[0].mxu0
        %v7168 = vpop.f32.mrb[0].mxu0
        %7169 = vdwg.mxu0
        %7170 = vmatprep.subr.bf16.mxu0 %v5060
        %7171 = vmatpush1.bf16.msra.mxu0 %v5059
        %7172 = vmatprep.subr.bf16.mxu0 %v5062
        %7173 = vmatpush1.bf16.msra.mxu0 %v5061
        %7174 = vmatprep.subr.bf16.mxu0 %v5064
        %7175 = vmatpush1.bf16.msra.mxu0 %v5063
        %7176 = vmatprep.subr.bf16.mxu0 %v5066
        %7177 = vmatpush1.bf16.msra.mxu0 %v5065
        %7178 = vmatprep.subr.bf16.mxu0 %v5068
        %7179 = vmatpush1.bf16.msra.mxu0 %v5067
        %7180 = vmatprep.subr.bf16.mxu0 %v5070
        %7181 = vmatpush1.bf16.msra.mxu0 %v5069
        %7182 = vmatprep.subr.bf16.mxu0 %v5072
        %7183 = vmatpush1.bf16.msra.mxu0 %v5071
        %7184 = vmatprep.subr.bf16.mxu0 %v5074
        %7185 = vmatpush1.bf16.msra.mxu0 %v5073
        %7186 = vmatprep.subr.bf16.mxu0 %v5076
        %7187 = vmatpush1.bf16.msra.mxu0 %v5075
        %7188 = vmatprep.subr.bf16.mxu0 %v5078
        %7189 = vmatpush1.bf16.msra.mxu0 %v5077
        %7190 = vmatprep.subr.bf16.mxu0 %v5080
        %7191 = vmatpush1.bf16.msra.mxu0 %v5079
        %7192 = vmatprep.subr.bf16.mxu0 %v5082
        %7193 = vmatpush1.bf16.msra.mxu0 %v5081
        %7194 = vmatprep.subr.bf16.mxu0 %v5084
        %7195 = vmatpush1.bf16.msra.mxu0 %v5083
        %7196 = vmatprep.subr.bf16.mxu0 %v5086
        %7197 = vmatpush1.bf16.msra.mxu0 %v5085
        %7198 = vmatprep.subr.bf16.mxu0 %v5088
        %7199 = vmatpush1.bf16.msra.mxu0 %v5087
        %7200 = vmatprep.subr.bf16.mxu0 %v5090
        %7201 = vmatpush1.bf16.msra.mxu0 %v5089
        %7202 = vmatprep.mubr.bf16.mxu0 %v1404
        %7203 = vmatmul.mubr.bf16.gmra.mrb[0].mxu0 %v1402
        %v7204 = vpop.f32.mrb[0].mxu0
        %v7205 = vadd.f32 %v7164, %v7204
        %v7206 = vpop.f32.mrb[0].mxu0
        %v7207 = vadd.f32 %v7166, %v7206
        %v7208 = vpop.f32.mrb[0].mxu0
        %v7209 = vpop.f32.mrb[0].mxu0
        %7210 = vdwg.mxu0
        %7211 = vmatprep.subr.bf16.mxu0 %v5092
        %7212 = vmatpush1.bf16.msra.mxu0 %v5091
        %7213 = vmatprep.subr.bf16.mxu0 %v5094
        %7214 = vmatpush1.bf16.msra.mxu0 %v5093
        %7215 = vmatprep.subr.bf16.mxu0 %v5096
        %7216 = vmatpush1.bf16.msra.mxu0 %v5095
        %7217 = vmatprep.subr.bf16.mxu0 %v5098
        %7218 = vmatpush1.bf16.msra.mxu0 %v5097
        %7219 = vmatprep.subr.bf16.mxu0 %v5100
        %7220 = vmatpush1.bf16.msra.mxu0 %v5099
        %7221 = vmatprep.subr.bf16.mxu0 %v5102
        %7222 = vmatpush1.bf16.msra.mxu0 %v5101
        %7223 = vmatprep.subr.bf16.mxu0 %v5104
        %7224 = vmatpush1.bf16.msra.mxu0 %v5103
        %7225 = vmatprep.subr.bf16.mxu0 %v5106
        %7226 = vmatpush1.bf16.msra.mxu0 %v5105
        %7227 = vmatprep.subr.bf16.mxu0 %v5108
        %7228 = vmatpush1.bf16.msra.mxu0 %v5107
        %7229 = vmatprep.subr.bf16.mxu0 %v5110
        %7230 = vmatpush1.bf16.msra.mxu0 %v5109
        %7231 = vmatprep.subr.bf16.mxu0 %v5112
        %7232 = vmatpush1.bf16.msra.mxu0 %v5111
        %7233 = vmatprep.subr.bf16.mxu0 %v5114
        %7234 = vmatpush1.bf16.msra.mxu0 %v5113
        %7235 = vmatprep.subr.bf16.mxu0 %v5116
        %7236 = vmatpush1.bf16.msra.mxu0 %v5115
        %7237 = vmatprep.subr.bf16.mxu0 %v5118
        %7238 = vmatpush1.bf16.msra.mxu0 %v5117
        %7239 = vmatprep.subr.bf16.mxu0 %v5120
        %7240 = vmatpush1.bf16.msra.mxu0 %v5119
        %7241 = vmatprep.subr.bf16.mxu0 %v5122
        %7242 = vmatpush1.bf16.msra.mxu0 %v5121
        %7243 = vmatprep.mubr.bf16.mxu0 %v1442
        %7244 = vmatmul.mubr.bf16.gmra.mrb[0].mxu0 %v1428
        %v7245 = vpop.f32.mrb[0].mxu0
        %v7246 = vadd.f32 %v7205, %v7245
        %v7247 = vpop.f32.mrb[0].mxu0
        %v7248 = vadd.f32 %v7207, %v7247
        %v7249 = vpop.f32.mrb[0].mxu0
        %v7250 = vpop.f32.mrb[0].mxu0
        %7251 = vdwg.mxu0
        %7252 = vmatprep.subr.bf16.mxu0 %v5124
        %7253 = vmatpush1.bf16.msra.mxu0 %v5123
        %7254 = vmatprep.subr.bf16.mxu0 %v5126
        %7255 = vmatpush1.bf16.msra.mxu0 %v5125
        %7256 = vmatprep.subr.bf16.mxu0 %v5128
        %7257 = vmatpush1.bf16.msra.mxu0 %v5127
        %7258 = vmatprep.subr.bf16.mxu0 %v5130
        %7259 = vmatpush1.bf16.msra.mxu0 %v5129
        %7260 = vmatprep.subr.bf16.mxu0 %v5132
        %7261 = vmatpush1.bf16.msra.mxu0 %v5131
        %7262 = vmatprep.subr.bf16.mxu0 %v5134
        %7263 = vmatpush1.bf16.msra.mxu0 %v5133
        %7264 = vmatprep.subr.bf16.mxu0 %v5136
        %7265 = vmatpush1.bf16.msra.mxu0 %v5135
        %7266 = vmatprep.subr.bf16.mxu0 %v5138
        %7267 = vmatpush1.bf16.msra.mxu0 %v5137
        %7268 = vmatprep.subr.bf16.mxu0 %v5140
        %7269 = vmatpush1.bf16.msra.mxu0 %v5139
        %7270 = vmatprep.subr.bf16.mxu0 %v5142
        %7271 = vmatpush1.bf16.msra.mxu0 %v5141
        %7272 = vmatprep.subr.bf16.mxu0 %v5144
        %7273 = vmatpush1.bf16.msra.mxu0 %v5143
        %7274 = vmatprep.subr.bf16.mxu0 %v5146
        %7275 = vmatpush1.bf16.msra.mxu0 %v5145
        %7276 = vmatprep.subr.bf16.mxu0 %v5148
        %7277 = vmatpush1.bf16.msra.mxu0 %v5147
        %7278 = vmatprep.subr.bf16.mxu0 %v5150
        %7279 = vmatpush1.bf16.msra.mxu0 %v5149
        %7280 = vmatprep.subr.bf16.mxu0 %v5152
        %7281 = vmatpush1.bf16.msra.mxu0 %v5151
        %7282 = vmatprep.subr.bf16.mxu0 %v5154
        %7283 = vmatpush1.bf16.msra.mxu0 %v5153
        %7284 = vmatprep.mubr.bf16.mxu0 %v1452
        %7285 = vmatmul.mubr.bf16.gmra.mrb[0].mxu0 %v1450
        %v7286 = vpop.f32.mrb[0].mxu0
        %v7287 = vadd.f32 %v7246, %v7286
        %v7288 = vpop.f32.mrb[0].mxu0
        %v7289 = vadd.f32 %v7248, %v7288
        %v7290 = vpop.f32.mrb[0].mxu0
        %v7291 = vpop.f32.mrb[0].mxu0
        %7292 = vdwg.mxu0
        %7293 = vmatprep.subr.bf16.mxu0 %v5156
        %7294 = vmatpush1.bf16.msra.mxu0 %v5155
        %7295 = vmatprep.subr.bf16.mxu0 %v5158
        %7296 = vmatpush1.bf16.msra.mxu0 %v5157
        %7297 = vmatprep.subr.bf16.mxu0 %v5160
        %7298 = vmatpush1.bf16.msra.mxu0 %v5159
        %7299 = vmatprep.subr.bf16.mxu0 %v5162
        %7300 = vmatpush1.bf16.msra.mxu0 %v5161
        %7301 = vmatprep.subr.bf16.mxu0 %v5164
        %7302 = vmatpush1.bf16.msra.mxu0 %v5163
        %7303 = vmatprep.subr.bf16.mxu0 %v5166
        %7304 = vmatpush1.bf16.msra.mxu0 %v5165
        %7305 = vmatprep.subr.bf16.mxu0 %v5168
        %7306 = vmatpush1.bf16.msra.mxu0 %v5167
        %7307 = vmatprep.subr.bf16.mxu0 %v5170
        %7308 = vmatpush1.bf16.msra.mxu0 %v5169
        %7309 = vmatprep.subr.bf16.mxu0 %v5172
        %7310 = vmatpush1.bf16.msra.mxu0 %v5171
        %7311 = vmatprep.subr.bf16.mxu0 %v5174
        %7312 = vmatpush1.bf16.msra.mxu0 %v5173
        %7313 = vmatprep.subr.bf16.mxu0 %v5176
        %7314 = vmatpush1.bf16.msra.mxu0 %v5175
        %7315 = vmatprep.subr.bf16.mxu0 %v5178
        %7316 = vmatpush1.bf16.msra.mxu0 %v5177
        %7317 = vmatprep.subr.bf16.mxu0 %v5180
        %7318 = vmatpush1.bf16.msra.mxu0 %v5179
        %7319 = vmatprep.subr.bf16.mxu0 %v5182
        %7320 = vmatpush1.bf16.msra.mxu0 %v5181
        %7321 = vmatprep.subr.bf16.mxu0 %v5184
        %7322 = vmatpush1.bf16.msra.mxu0 %v5183
        %7323 = vmatprep.subr.bf16.mxu0 %v5186
        %7324 = vmatpush1.bf16.msra.mxu0 %v5185
        %7325 = vmatprep.mubr.bf16.mxu0 %v1449
        %7326 = vmatmul.mubr.bf16.gmra.mrb[0].mxu0 %v1435
        %v7327 = vpop.f32.mrb[0].mxu0
        %v7328 = vadd.f32 %v7287, %v7327
        %v7329 = vpop.f32.mrb[0].mxu0
        %v7330 = vadd.f32 %v7289, %v7329
        %v7331 = vpop.f32.mrb[0].mxu0
        %v7332 = vpop.f32.mrb[0].mxu0
        %7333 = vdwg.mxu0
        %7334 = vmatprep.subr.bf16.mxu0 %v5188
        %7335 = vmatpush1.bf16.msra.mxu0 %v5187
        %7336 = vmatprep.subr.bf16.mxu0 %v5190
        %7337 = vmatpush1.bf16.msra.mxu0 %v5189
        %7338 = vmatprep.subr.bf16.mxu0 %v5192
        %7339 = vmatpush1.bf16.msra.mxu0 %v5191
        %7340 = vmatprep.subr.bf16.mxu0 %v5194
        %7341 = vmatpush1.bf16.msra.mxu0 %v5193
        %7342 = vmatprep.subr.bf16.mxu0 %v5196
        %7343 = vmatpush1.bf16.msra.mxu0 %v5195
        %7344 = vmatprep.subr.bf16.mxu0 %v5198
        %7345 = vmatpush1.bf16.msra.mxu0 %v5197
        %7346 = vmatprep.subr.bf16.mxu0 %v5200
        %7347 = vmatpush1.bf16.msra.mxu0 %v5199
        %7348 = vmatprep.subr.bf16.mxu0 %v5202
        %7349 = vmatpush1.bf16.msra.mxu0 %v5201
        %7350 = vmatprep.subr.bf16.mxu0 %v5204
        %7351 = vmatpush1.bf16.msra.mxu0 %v5203
        %7352 = vmatprep.subr.bf16.mxu0 %v5206
        %7353 = vmatpush1.bf16.msra.mxu0 %v5205
        %7354 = vmatprep.subr.bf16.mxu0 %v5208
        %7355 = vmatpush1.bf16.msra.mxu0 %v5207
        %7356 = vmatprep.subr.bf16.mxu0 %v5210
        %7357 = vmatpush1.bf16.msra.mxu0 %v5209
        %7358 = vmatprep.subr.bf16.mxu0 %v5212
        %7359 = vmatpush1.bf16.msra.mxu0 %v5211
        %7360 = vmatprep.subr.bf16.mxu0 %v5214
        %7361 = vmatpush1.bf16.msra.mxu0 %v5213
        %7362 = vmatprep.subr.bf16.mxu0 %v5216
        %7363 = vmatpush1.bf16.msra.mxu0 %v5215
        %7364 = vmatprep.subr.bf16.mxu0 %v5218
        %7365 = vmatpush1.bf16.msra.mxu0 %v5217
        %7366 = vmatprep.mubr.bf16.mxu0 %v1453
        %7367 = vmatmul.mubr.bf16.gmra.mrb[0].mxu0 %v1451
        %v7368 = vpop.f32.mrb[0].mxu0
        %v7369 = vadd.f32 %v7328, %v7368
        %v7370 = vpop.f32.mrb[0].mxu0
        %v7371 = vadd.f32 %v7330, %v7370
        %v7372 = vpop.f32.mrb[0].mxu0
        %v7373 = vpop.f32.mrb[0].mxu0
        %7374 = vdwg.mxu0
        %7375 = vmatprep.subr.bf16.mxu0 %v5220
        %7376 = vmatpush1.bf16.msra.mxu0 %v5219
        %7377 = vmatprep.subr.bf16.mxu0 %v5222
        %7378 = vmatpush1.bf16.msra.mxu0 %v5221
        %7379 = vmatprep.subr.bf16.mxu0 %v5224
        %7380 = vmatpush1.bf16.msra.mxu0 %v5223
        %7381 = vmatprep.subr.bf16.mxu0 %v5226
        %7382 = vmatpush1.bf16.msra.mxu0 %v5225
        %7383 = vmatprep.subr.bf16.mxu0 %v5228
        %7384 = vmatpush1.bf16.msra.mxu0 %v5227
        %7385 = vmatprep.subr.bf16.mxu0 %v5230
        %7386 = vmatpush1.bf16.msra.mxu0 %v5229
        %7387 = vmatprep.subr.bf16.mxu0 %v5232
        %7388 = vmatpush1.bf16.msra.mxu0 %v5231
        %7389 = vmatprep.subr.bf16.mxu0 %v5234
        %7390 = vmatpush1.bf16.msra.mxu0 %v5233
        %7391 = vmatprep.subr.bf16.mxu0 %v5236
        %7392 = vmatpush1.bf16.msra.mxu0 %v5235
        %7393 = vmatprep.subr.bf16.mxu0 %v5238
        %7394 = vmatpush1.bf16.msra.mxu0 %v5237
        %7395 = vmatprep.subr.bf16.mxu0 %v5240
        %7396 = vmatpush1.bf16.msra.mxu0 %v5239
        %7397 = vmatprep.subr.bf16.mxu0 %v5242
        %7398 = vmatpush1.bf16.msra.mxu0 %v5241
        %7399 = vmatprep.subr.bf16.mxu0 %v5244
        %7400 = vmatpush1.bf16.msra.mxu0 %v5243
        %7401 = vmatprep.subr.bf16.mxu0 %v5246
        %7402 = vmatpush1.bf16.msra.mxu0 %v5245
        %7403 = vmatprep.subr.bf16.mxu0 %v5248
        %7404 = vmatpush1.bf16.msra.mxu0 %v5247
        %7405 = vmatprep.subr.bf16.mxu0 %v5250
        %7406 = vmatpush1.bf16.msra.mxu0 %v5249
        %7407 = vmatprep.mubr.bf16.mxu0 %v1491
        %7408 = vmatmul.mubr.bf16.gmra.mrb[0].mxu0 %v1477
        %v7409 = vpop.f32.mrb[0].mxu0
        %v7410 = vadd.f32 %v7369, %v7409
        %v7411 = vpop.f32.mrb[0].mxu0
        %v7412 = vadd.f32 %v7371, %v7411
        %v7413 = vpop.f32.mrb[0].mxu0
        %v7414 = vpop.f32.mrb[0].mxu0
        %7415 = vdwg.mxu0
        %7416 = vmatprep.subr.bf16.mxu0 %v5252
        %7417 = vmatpush1.bf16.msra.mxu0 %v5251
        %7418 = vmatprep.subr.bf16.mxu0 %v5254
        %7419 = vmatpush1.bf16.msra.mxu0 %v5253
        %7420 = vmatprep.subr.bf16.mxu0 %v5256
        %7421 = vmatpush1.bf16.msra.mxu0 %v5255
        %7422 = vmatprep.subr.bf16.mxu0 %v5258
        %7423 = vmatpush1.bf16.msra.mxu0 %v5257
        %7424 = vmatprep.subr.bf16.mxu0 %v5260
        %7425 = vmatpush1.bf16.msra.mxu0 %v5259
        %7426 = vmatprep.subr.bf16.mxu0 %v5262
        %7427 = vmatpush1.bf16.msra.mxu0 %v5261
        %7428 = vmatprep.subr.bf16.mxu0 %v5264
        %7429 = vmatpush1.bf16.msra.mxu0 %v5263
        %7430 = vmatprep.subr.bf16.mxu0 %v5266
        %7431 = vmatpush1.bf16.msra.mxu0 %v5265
        %7432 = vmatprep.subr.bf16.mxu0 %v5268
        %7433 = vmatpush1.bf16.msra.mxu0 %v5267
        %7434 = vmatprep.subr.bf16.mxu0 %v5270
        %7435 = vmatpush1.bf16.msra.mxu0 %v5269
        %7436 = vmatprep.subr.bf16.mxu0 %v5272
        %7437 = vmatpush1.bf16.msra.mxu0 %v5271
        %7438 = vmatprep.subr.bf16.mxu0 %v5274
        %7439 = vmatpush1.bf16.msra.mxu0 %v5273
        %7440 = vmatprep.subr.bf16.mxu0 %v5276
        %7441 = vmatpush1.bf16.msra.mxu0 %v5275
        %7442 = vmatprep.subr.bf16.mxu0 %v5278
        %7443 = vmatpush1.bf16.msra.mxu0 %v5277
        %7444 = vmatprep.subr.bf16.mxu0 %v5280
        %7445 = vmatpush1.bf16.msra.mxu0 %v5279
        %7446 = vmatprep.subr.bf16.mxu0 %v5282
        %7447 = vmatpush1.bf16.msra.mxu0 %v5281
        %7448 = vmatprep.mubr.bf16.mxu0 %v1501
        %7449 = vmatmul.mubr.bf16.gmra.mrb[0].mxu0 %v1499
        %v7450 = vpop.f32.mrb[0].mxu0
        %v7451 = vadd.f32 %v7410, %v7450
        %v7452 = vpop.f32.mrb[0].mxu0
        %v7453 = vadd.f32 %v7412, %v7452
        %v7454 = vpop.f32.mrb[0].mxu0
        %v7455 = vpop.f32.mrb[0].mxu0
        %7456 = vdwg.mxu0
        %7457 = vmatprep.subr.bf16.mxu0 %v5284
        %7458 = vmatpush1.bf16.msra.mxu0 %v5283
        %7459 = vmatprep.subr.bf16.mxu0 %v5286
        %7460 = vmatpush1.bf16.msra.mxu0 %v5285
        %7461 = vmatprep.subr.bf16.mxu0 %v5288
        %7462 = vmatpush1.bf16.msra.mxu0 %v5287
        %7463 = vmatprep.subr.bf16.mxu0 %v5290
        %7464 = vmatpush1.bf16.msra.mxu0 %v5289
        %7465 = vmatprep.subr.bf16.mxu0 %v5292
        %7466 = vmatpush1.bf16.msra.mxu0 %v5291
        %7467 = vmatprep.subr.bf16.mxu0 %v5294
        %7468 = vmatpush1.bf16.msra.mxu0 %v5293
        %7469 = vmatprep.subr.bf16.mxu0 %v5296
        %7470 = vmatpush1.bf16.msra.mxu0 %v5295
        %7471 = vmatprep.subr.bf16.mxu0 %v5298
        %7472 = vmatpush1.bf16.msra.mxu0 %v5297
        %7473 = vmatprep.subr.bf16.mxu0 %v5300
        %7474 = vmatpush1.bf16.msra.mxu0 %v5299
        %7475 = vmatprep.subr.bf16.mxu0 %v5302
        %7476 = vmatpush1.bf16.msra.mxu0 %v5301
        %7477 = vmatprep.subr.bf16.mxu0 %v5304
        %7478 = vmatpush1.bf16.msra.mxu0 %v5303
        %7479 = vmatprep.subr.bf16.mxu0 %v5306
        %7480 = vmatpush1.bf16.msra.mxu0 %v5305
        %7481 = vmatprep.subr.bf16.mxu0 %v5308
        %7482 = vmatpush1.bf16.msra.mxu0 %v5307
        %7483 = vmatprep.subr.bf16.mxu0 %v5310
        %7484 = vmatpush1.bf16.msra.mxu0 %v5309
        %7485 = vmatprep.subr.bf16.mxu0 %v5312
        %7486 = vmatpush1.bf16.msra.mxu0 %v5311
        %7487 = vmatprep.subr.bf16.mxu0 %v5314
        %7488 = vmatpush1.bf16.msra.mxu0 %v5313
        %7489 = vmatprep.mubr.bf16.mxu0 %v1498
        %7490 = vmatmul.mubr.bf16.gmra.mrb[0].mxu0 %v1484
        %v7491 = vpop.f32.mrb[0].mxu0
        %v7492 = vadd.f32 %v7451, %v7491
        %v7493 = vpop.f32.mrb[0].mxu0
        %v7494 = vadd.f32 %v7453, %v7493
        %v7495 = vpop.f32.mrb[0].mxu0
        %v7496 = vpop.f32.mrb[0].mxu0
        %7497 = vdwg.mxu0
        %7498 = vmatprep.subr.bf16.mxu0 %v5316
        %7499 = vmatpush1.bf16.msra.mxu0 %v5315
        %7500 = vmatprep.subr.bf16.mxu0 %v5318
        %7501 = vmatpush1.bf16.msra.mxu0 %v5317
        %7502 = vmatprep.subr.bf16.mxu0 %v5320
        %7503 = vmatpush1.bf16.msra.mxu0 %v5319
        %7504 = vmatprep.subr.bf16.mxu0 %v5322
        %7505 = vmatpush1.bf16.msra.mxu0 %v5321
        %7506 = vmatprep.subr.bf16.mxu0 %v5324
        %7507 = vmatpush1.bf16.msra.mxu0 %v5323
        %7508 = vmatprep.subr.bf16.mxu0 %v5326
        %7509 = vmatpush1.bf16.msra.mxu0 %v5325
        %7510 = vmatprep.subr.bf16.mxu0 %v5328
        %7511 = vmatpush1.bf16.msra.mxu0 %v5327
        %7512 = vmatprep.subr.bf16.mxu0 %v5330
        %7513 = vmatpush1.bf16.msra.mxu0 %v5329
        %7514 = vmatprep.subr.bf16.mxu0 %v5332
        %7515 = vmatpush1.bf16.msra.mxu0 %v5331
        %7516 = vmatprep.subr.bf16.mxu0 %v5334
        %7517 = vmatpush1.bf16.msra.mxu0 %v5333
        %7518 = vmatprep.subr.bf16.mxu0 %v5336
        %7519 = vmatpush1.bf16.msra.mxu0 %v5335
        %7520 = vmatprep.subr.bf16.mxu0 %v5338
        %7521 = vmatpush1.bf16.msra.mxu0 %v5337
        %7522 = vmatprep.subr.bf16.mxu0 %v5340
        %7523 = vmatpush1.bf16.msra.mxu0 %v5339
        %7524 = vmatprep.subr.bf16.mxu0 %v5342
        %7525 = vmatpush1.bf16.msra.mxu0 %v5341
        %7526 = vmatprep.subr.bf16.mxu0 %v5344
        %7527 = vmatpush1.bf16.msra.mxu0 %v5343
        %7528 = vmatprep.subr.bf16.mxu0 %v5346
        %7529 = vmatpush1.bf16.msra.mxu0 %v5345
        %7530 = vmatprep.mubr.bf16.mxu0 %v1502
        %7531 = vmatmul.mubr.bf16.gmra.mrb[0].mxu0 %v1500
        %v7532 = vpop.f32.mrb[0].mxu0
        %v7533 = vadd.f32 %v7492, %v7532
        %v7534 = vpop.f32.mrb[0].mxu0
        %v7535 = vadd.f32 %v7494, %v7534
        %v7536 = vpop.f32.mrb[0].mxu0
        %v7537 = vpop.f32.mrb[0].mxu0
        %7538 = vdwg.mxu0
        %7539 = vmatprep.subr.bf16.mxu0 %v5348
        %7540 = vmatpush1.bf16.msra.mxu0 %v5347
        %7541 = vmatprep.subr.bf16.mxu0 %v5350
        %7542 = vmatpush1.bf16.msra.mxu0 %v5349
        %7543 = vmatprep.subr.bf16.mxu0 %v5352
        %7544 = vmatpush1.bf16.msra.mxu0 %v5351
        %7545 = vmatprep.subr.bf16.mxu0 %v5354
        %7546 = vmatpush1.bf16.msra.mxu0 %v5353
        %7547 = vmatprep.subr.bf16.mxu0 %v5356
        %7548 = vmatpush1.bf16.msra.mxu0 %v5355
        %7549 = vmatprep.subr.bf16.mxu0 %v5358
        %7550 = vmatpush1.bf16.msra.mxu0 %v5357
        %7551 = vmatprep.subr.bf16.mxu0 %v5360
        %7552 = vmatpush1.bf16.msra.mxu0 %v5359
        %7553 = vmatprep.subr.bf16.mxu0 %v5362
        %7554 = vmatpush1.bf16.msra.mxu0 %v5361
        %7555 = vmatprep.subr.bf16.mxu0 %v5364
        %7556 = vmatpush1.bf16.msra.mxu0 %v5363
        %7557 = vmatprep.subr.bf16.mxu0 %v5366
        %7558 = vmatpush1.bf16.msra.mxu0 %v5365
        %7559 = vmatprep.subr.bf16.mxu0 %v5368
        %7560 = vmatpush1.bf16.msra.mxu0 %v5367
        %7561 = vmatprep.subr.bf16.mxu0 %v5370
        %7562 = vmatpush1.bf16.msra.mxu0 %v5369
        %7563 = vmatprep.subr.bf16.mxu0 %v5372
        %7564 = vmatpush1.bf16.msra.mxu0 %v5371
        %7565 = vmatprep.subr.bf16.mxu0 %v5374
        %7566 = vmatpush1.bf16.msra.mxu0 %v5373
        %7567 = vmatprep.subr.bf16.mxu0 %v5376
        %7568 = vmatpush1.bf16.msra.mxu0 %v5375
        %7569 = vmatprep.subr.bf16.mxu0 %v5378
        %7570 = vmatpush1.bf16.msra.mxu0 %v5377
        %7571 = vmatprep.mubr.bf16.mxu0 %v1540
        %7572 = vmatmul.mubr.bf16.gmra.mrb[0].mxu0 %v1526
        %v7573 = vpop.f32.mrb[0].mxu0
        %v7574 = vadd.f32 %v7533, %v7573
        %v7575 = vpop.f32.mrb[0].mxu0
        %v7576 = vadd.f32 %v7535, %v7575
        %v7577 = vpop.f32.mrb[0].mxu0
        %v7578 = vpop.f32.mrb[0].mxu0
        %7579 = vdwg.mxu0
        %7580 = vmatprep.subr.bf16.mxu0 %v5380
        %7581 = vmatpush1.bf16.msra.mxu0 %v5379
        %7582 = vmatprep.subr.bf16.mxu0 %v5382
        %7583 = vmatpush1.bf16.msra.mxu0 %v5381
        %7584 = vmatprep.subr.bf16.mxu0 %v5384
        %7585 = vmatpush1.bf16.msra.mxu0 %v5383
        %7586 = vmatprep.subr.bf16.mxu0 %v5386
        %7587 = vmatpush1.bf16.msra.mxu0 %v5385
        %7588 = vmatprep.subr.bf16.mxu0 %v5388
        %7589 = vmatpush1.bf16.msra.mxu0 %v5387
        %7590 = vmatprep.subr.bf16.mxu0 %v5390
        %7591 = vmatpush1.bf16.msra.mxu0 %v5389
        %7592 = vmatprep.subr.bf16.mxu0 %v5392
        %7593 = vmatpush1.bf16.msra.mxu0 %v5391
        %7594 = vmatprep.subr.bf16.mxu0 %v5394
        %7595 = vmatpush1.bf16.msra.mxu0 %v5393
        %7596 = vmatprep.subr.bf16.mxu0 %v5396
        %7597 = vmatpush1.bf16.msra.mxu0 %v5395
        %7598 = vmatprep.subr.bf16.mxu0 %v5398
        %7599 = vmatpush1.bf16.msra.mxu0 %v5397
        %7600 = vmatprep.subr.bf16.mxu0 %v5400
        %7601 = vmatpush1.bf16.msra.mxu0 %v5399
        %7602 = vmatprep.subr.bf16.mxu0 %v5402
        %7603 = vmatpush1.bf16.msra.mxu0 %v5401
        %7604 = vmatprep.subr.bf16.mxu0 %v5404
        %7605 = vmatpush1.bf16.msra.mxu0 %v5403
        %7606 = vmatprep.subr.bf16.mxu0 %v5406
        %7607 = vmatpush1.bf16.msra.mxu0 %v5405
        %7608 = vmatprep.subr.bf16.mxu0 %v5408
        %7609 = vmatpush1.bf16.msra.mxu0 %v5407
        %7610 = vmatprep.subr.bf16.mxu0 %v5410
        %7611 = vmatpush1.bf16.msra.mxu0 %v5409
        %7612 = vmatprep.mubr.bf16.mxu0 %v1550
        %7613 = vmatmul.mubr.bf16.gmra.mrb[0].mxu0 %v1548
        %v7614 = vpop.f32.mrb[0].mxu0
        %v7615 = vadd.f32 %v7574, %v7614
        %v7616 = vpop.f32.mrb[0].mxu0
        %v7617 = vadd.f32 %v7576, %v7616
        %v7618 = vpop.f32.mrb[0].mxu0
        %v7619 = vpop.f32.mrb[0].mxu0
        %7620 = vdwg.mxu0
        %7621 = vmatprep.subr.bf16.mxu0 %v5412
        %7622 = vmatpush1.bf16.msra.mxu0 %v5411
        %7623 = vmatprep.subr.bf16.mxu0 %v5414
        %7624 = vmatpush1.bf16.msra.mxu0 %v5413
        %7625 = vmatprep.subr.bf16.mxu0 %v5416
        %7626 = vmatpush1.bf16.msra.mxu0 %v5415
        %7627 = vmatprep.subr.bf16.mxu0 %v5418
        %7628 = vmatpush1.bf16.msra.mxu0 %v5417
        %7629 = vmatprep.subr.bf16.mxu0 %v5420
        %7630 = vmatpush1.bf16.msra.mxu0 %v5419
        %7631 = vmatprep.subr.bf16.mxu0 %v5422
        %7632 = vmatpush1.bf16.msra.mxu0 %v5421
        %7633 = vmatprep.subr.bf16.mxu0 %v5424
        %7634 = vmatpush1.bf16.msra.mxu0 %v5423
        %7635 = vmatprep.subr.bf16.mxu0 %v5426
        %7636 = vmatpush1.bf16.msra.mxu0 %v5425
        %7637 = vmatprep.subr.bf16.mxu0 %v5428
        %7638 = vmatpush1.bf16.msra.mxu0 %v5427
        %7639 = vmatprep.subr.bf16.mxu0 %v5430
        %7640 = vmatpush1.bf16.msra.mxu0 %v5429
        %7641 = vmatprep.subr.bf16.mxu0 %v5432
        %7642 = vmatpush1.bf16.msra.mxu0 %v5431
        %7643 = vmatprep.subr.bf16.mxu0 %v5434
        %7644 = vmatpush1.bf16.msra.mxu0 %v5433
        %7645 = vmatprep.subr.bf16.mxu0 %v5436
        %7646 = vmatpush1.bf16.msra.mxu0 %v5435
        %7647 = vmatprep.subr.bf16.mxu0 %v5438
        %7648 = vmatpush1.bf16.msra.mxu0 %v5437
        %7649 = vmatprep.subr.bf16.mxu0 %v5440
        %7650 = vmatpush1.bf16.msra.mxu0 %v5439
        %7651 = vmatprep.subr.bf16.mxu0 %v5442
        %7652 = vmatpush1.bf16.msra.mxu0 %v5441
        %7653 = vmatprep.mubr.bf16.mxu0 %v1547
        %7654 = vmatmul.mubr.bf16.gmra.mrb[0].mxu0 %v1533
        %v7655 = vpop.f32.mrb[0].mxu0
        %v7656 = vadd.f32 %v7615, %v7655
        %v7657 = vpop.f32.mrb[0].mxu0
        %v7658 = vadd.f32 %v7617, %v7657
        %v7659 = vpop.f32.mrb[0].mxu0
        %v7660 = vpop.f32.mrb[0].mxu0
        %7661 = vdwg.mxu0
        %7662 = vmatprep.subr.bf16.mxu0 %v5444
        %7663 = vmatpush1.bf16.msra.mxu0 %v5443
        %7664 = vmatprep.subr.bf16.mxu0 %v5446
        %7665 = vmatpush1.bf16.msra.mxu0 %v5445
        %7666 = vmatprep.subr.bf16.mxu0 %v5448
        %7667 = vmatpush1.bf16.msra.mxu0 %v5447
        %7668 = vmatprep.subr.bf16.mxu0 %v5450
        %7669 = vmatpush1.bf16.msra.mxu0 %v5449
        %7670 = vmatprep.subr.bf16.mxu0 %v5452
        %7671 = vmatpush1.bf16.msra.mxu0 %v5451
        %7672 = vmatprep.subr.bf16.mxu0 %v5454
        %7673 = vmatpush1.bf16.msra.mxu0 %v5453
        %7674 = vmatprep.subr.bf16.mxu0 %v5456
        %7675 = vmatpush1.bf16.msra.mxu0 %v5455
        %7676 = vmatprep.subr.bf16.mxu0 %v5458
        %7677 = vmatpush1.bf16.msra.mxu0 %v5457
        %7678 = vmatprep.subr.bf16.mxu0 %v5460
        %7679 = vmatpush1.bf16.msra.mxu0 %v5459
        %7680 = vmatprep.subr.bf16.mxu0 %v5462
        %7681 = vmatpush1.bf16.msra.mxu0 %v5461
        %7682 = vmatprep.subr.bf16.mxu0 %v5464
        %7683 = vmatpush1.bf16.msra.mxu0 %v5463
        %7684 = vmatprep.subr.bf16.mxu0 %v5466
        %7685 = vmatpush1.bf16.msra.mxu0 %v5465
        %7686 = vmatprep.subr.bf16.mxu0 %v5468
        %7687 = vmatpush1.bf16.msra.mxu0 %v5467
        %7688 = vmatprep.subr.bf16.mxu0 %v5470
        %7689 = vmatpush1.bf16.msra.mxu0 %v5469
        %7690 = vmatprep.subr.bf16.mxu0 %v5472
        %7691 = vmatpush1.bf16.msra.mxu0 %v5471
        %7692 = vmatprep.subr.bf16.mxu0 %v5474
        %7693 = vmatpush1.bf16.msra.mxu0 %v5473
        %7694 = vmatprep.mubr.bf16.mxu0 %v1551
        %7695 = vmatmul.mubr.bf16.gmra.mrb[0].mxu0 %v1549
        %v7696 = vpop.f32.mrb[0].mxu0
        %v7697 = vadd.f32 %v7656, %v7696
        %v7698 = vpop.f32.mrb[0].mxu0
        %v7699 = vadd.f32 %v7658, %v7698
        %v7700 = vpop.f32.mrb[0].mxu0
        %v7701 = vpop.f32.mrb[0].mxu0
        %7702 = vdwg.mxu0
        %7703 = vmatprep.subr.bf16.mxu0 %v5476
        %7704 = vmatpush1.bf16.msra.mxu0 %v5475
        %7705 = vmatprep.subr.bf16.mxu0 %v5478
        %7706 = vmatpush1.bf16.msra.mxu0 %v5477
        %7707 = vmatprep.subr.bf16.mxu0 %v5480
        %7708 = vmatpush1.bf16.msra.mxu0 %v5479
        %7709 = vmatprep.subr.bf16.mxu0 %v5482
        %7710 = vmatpush1.bf16.msra.mxu0 %v5481
        %7711 = vmatprep.subr.bf16.mxu0 %v5484
        %7712 = vmatpush1.bf16.msra.mxu0 %v5483
        %7713 = vmatprep.subr.bf16.mxu0 %v5486
        %7714 = vmatpush1.bf16.msra.mxu0 %v5485
        %7715 = vmatprep.subr.bf16.mxu0 %v5488
        %7716 = vmatpush1.bf16.msra.mxu0 %v5487
        %7717 = vmatprep.subr.bf16.mxu0 %v5490
        %7718 = vmatpush1.bf16.msra.mxu0 %v5489
        %7719 = vmatprep.subr.bf16.mxu0 %v5492
        %7720 = vmatpush1.bf16.msra.mxu0 %v5491
        %7721 = vmatprep.subr.bf16.mxu0 %v5494
        %7722 = vmatpush1.bf16.msra.mxu0 %v5493
        %7723 = vmatprep.subr.bf16.mxu0 %v5496
        %7724 = vmatpush1.bf16.msra.mxu0 %v5495
        %7725 = vmatprep.subr.bf16.mxu0 %v5498
        %7726 = vmatpush1.bf16.msra.mxu0 %v5497
        %7727 = vmatprep.subr.bf16.mxu0 %v5500
        %7728 = vmatpush1.bf16.msra.mxu0 %v5499
        %7729 = vmatprep.subr.bf16.mxu0 %v5502
        %7730 = vmatpush1.bf16.msra.mxu0 %v5501
        %7731 = vmatprep.subr.bf16.mxu0 %v5504
        %7732 = vmatpush1.bf16.msra.mxu0 %v5503
        %7733 = vmatprep.subr.bf16.mxu0 %v5506
        %7734 = vmatpush1.bf16.msra.mxu0 %v5505
        %7735 = vmatprep.mubr.bf16.mxu0 %v1589
        %7736 = vmatmul.mubr.bf16.gmra.mrb[0].mxu0 %v1575
        %v7737 = vpop.f32.mrb[0].mxu0
        %v7738 = vadd.f32 %v7697, %v7737
        %v7739 = vpop.f32.mrb[0].mxu0
        %v7740 = vadd.f32 %v7699, %v7739
        %v7741 = vpop.f32.mrb[0].mxu0
        %v7742 = vpop.f32.mrb[0].mxu0
        %7743 = vdwg.mxu0
        %7744 = vmatprep.subr.bf16.mxu0 %v5508
        %7745 = vmatpush1.bf16.msra.mxu0 %v5507
        %7746 = vmatprep.subr.bf16.mxu0 %v5510
        %7747 = vmatpush1.bf16.msra.mxu0 %v5509
        %7748 = vmatprep.subr.bf16.mxu0 %v5512
        %7749 = vmatpush1.bf16.msra.mxu0 %v5511
        %7750 = vmatprep.subr.bf16.mxu0 %v5514
        %7751 = vmatpush1.bf16.msra.mxu0 %v5513
        %7752 = vmatprep.subr.bf16.mxu0 %v5516
        %7753 = vmatpush1.bf16.msra.mxu0 %v5515
        %7754 = vmatprep.subr.bf16.mxu0 %v5518
        %7755 = vmatpush1.bf16.msra.mxu0 %v5517
        %7756 = vmatprep.subr.bf16.mxu0 %v5520
        %7757 = vmatpush1.bf16.msra.mxu0 %v5519
        %7758 = vmatprep.subr.bf16.mxu0 %v5522
        %7759 = vmatpush1.bf16.msra.mxu0 %v5521
        %7760 = vmatprep.subr.bf16.mxu0 %v5524
        %7761 = vmatpush1.bf16.msra.mxu0 %v5523
        %7762 = vmatprep.subr.bf16.mxu0 %v5526
        %7763 = vmatpush1.bf16.msra.mxu0 %v5525
        %7764 = vmatprep.subr.bf16.mxu0 %v5528
        %7765 = vmatpush1.bf16.msra.mxu0 %v5527
        %7766 = vmatprep.subr.bf16.mxu0 %v5530
        %7767 = vmatpush1.bf16.msra.mxu0 %v5529
        %7768 = vmatprep.subr.bf16.mxu0 %v5532
        %7769 = vmatpush1.bf16.msra.mxu0 %v5531
        %7770 = vmatprep.subr.bf16.mxu0 %v5534
        %7771 = vmatpush1.bf16.msra.mxu0 %v5533
        %7772 = vmatprep.subr.bf16.mxu0 %v5536
        %7773 = vmatpush1.bf16.msra.mxu0 %v5535
        %7774 = vmatprep.subr.bf16.mxu0 %v5538
        %7775 = vmatpush1.bf16.msra.mxu0 %v5537
        %7776 = vmatprep.mubr.bf16.mxu0 %v1599
        %7777 = vmatmul.mubr.bf16.gmra.mrb[0].mxu0 %v1597
        %v7778 = vpop.f32.mrb[0].mxu0
        %v7779 = vadd.f32 %v7738, %v7778
        %v7780 = vpop.f32.mrb[0].mxu0
        %v7781 = vadd.f32 %v7740, %v7780
        %v7782 = vpop.f32.mrb[0].mxu0
        %v7783 = vpop.f32.mrb[0].mxu0
        %7784 = vdwg.mxu0
        %7785 = vmatprep.subr.bf16.mxu0 %v5540
        %7786 = vmatpush1.bf16.msra.mxu0 %v5539
        %7787 = vmatprep.subr.bf16.mxu0 %v5542
        %7788 = vmatpush1.bf16.msra.mxu0 %v5541
        %7789 = vmatprep.subr.bf16.mxu0 %v5544
        %7790 = vmatpush1.bf16.msra.mxu0 %v5543
        %7791 = vmatprep.subr.bf16.mxu0 %v5546
        %7792 = vmatpush1.bf16.msra.mxu0 %v5545
        %7793 = vmatprep.subr.bf16.mxu0 %v5548
        %7794 = vmatpush1.bf16.msra.mxu0 %v5547
        %7795 = vmatprep.subr.bf16.mxu0 %v5550
        %7796 = vmatpush1.bf16.msra.mxu0 %v5549
        %7797 = vmatprep.subr.bf16.mxu0 %v5552
        %7798 = vmatpush1.bf16.msra.mxu0 %v5551
        %7799 = vmatprep.subr.bf16.mxu0 %v5554
        %7800 = vmatpush1.bf16.msra.mxu0 %v5553
        %7801 = vmatprep.subr.bf16.mxu0 %v5556
        %7802 = vmatpush1.bf16.msra.mxu0 %v5555
        %7803 = vmatprep.subr.bf16.mxu0 %v5558
        %7804 = vmatpush1.bf16.msra.mxu0 %v5557
        %7805 = vmatprep.subr.bf16.mxu0 %v5560
        %7806 = vmatpush1.bf16.msra.mxu0 %v5559
        %7807 = vmatprep.subr.bf16.mxu0 %v5562
        %7808 = vmatpush1.bf16.msra.mxu0 %v5561
        %7809 = vmatprep.subr.bf16.mxu0 %v5564
        %7810 = vmatpush1.bf16.msra.mxu0 %v5563
        %7811 = vmatprep.subr.bf16.mxu0 %v5566
        %7812 = vmatpush1.bf16.msra.mxu0 %v5565
        %7813 = vmatprep.subr.bf16.mxu0 %v5568
        %7814 = vmatpush1.bf16.msra.mxu0 %v5567
        %7815 = vmatprep.subr.bf16.mxu0 %v5570
        %7816 = vmatpush1.bf16.msra.mxu0 %v5569
        %7817 = vmatprep.mubr.bf16.mxu0 %v1596
        %7818 = vmatmul.mubr.bf16.gmra.mrb[0].mxu0 %v1582
        %v7819 = vpop.f32.mrb[0].mxu0
        %v7820 = vadd.f32 %v7779, %v7819
        %v7821 = vpop.f32.mrb[0].mxu0
        %v7822 = vadd.f32 %v7781, %v7821
        %v7823 = vpop.f32.mrb[0].mxu0
        %v7824 = vpop.f32.mrb[0].mxu0
        %7825 = vdwg.mxu0
        %7826 = vmatprep.subr.bf16.mxu0 %v5572
        %7827 = vmatpush1.bf16.msra.mxu0 %v5571
        %7828 = vmatprep.subr.bf16.mxu0 %v5574
        %7829 = vmatpush1.bf16.msra.mxu0 %v5573
        %7830 = vmatprep.subr.bf16.mxu0 %v5576
        %7831 = vmatpush1.bf16.msra.mxu0 %v5575
        %7832 = vmatprep.subr.bf16.mxu0 %v5578
        %7833 = vmatpush1.bf16.msra.mxu0 %v5577
        %7834 = vmatprep.subr.bf16.mxu0 %v5580
        %7835 = vmatpush1.bf16.msra.mxu0 %v5579
        %7836 = vmatprep.subr.bf16.mxu0 %v5582
        %7837 = vmatpush1.bf16.msra.mxu0 %v5581
        %7838 = vmatprep.subr.bf16.mxu0 %v5584
        %7839 = vmatpush1.bf16.msra.mxu0 %v5583
        %7840 = vmatprep.subr.bf16.mxu0 %v5586
        %7841 = vmatpush1.bf16.msra.mxu0 %v5585
        %7842 = vmatprep.subr.bf16.mxu0 %v5588
        %7843 = vmatpush1.bf16.msra.mxu0 %v5587
        %7844 = vmatprep.subr.bf16.mxu0 %v5590
        %7845 = vmatpush1.bf16.msra.mxu0 %v5589
        %7846 = vmatprep.subr.bf16.mxu0 %v5592
        %7847 = vmatpush1.bf16.msra.mxu0 %v5591
        %7848 = vmatprep.subr.bf16.mxu0 %v5594
        %7849 = vmatpush1.bf16.msra.mxu0 %v5593
        %7850 = vmatprep.subr.bf16.mxu0 %v5596
        %7851 = vmatpush1.bf16.msra.mxu0 %v5595
        %7852 = vmatprep.subr.bf16.mxu0 %v5598
        %7853 = vmatpush1.bf16.msra.mxu0 %v5597
        %7854 = vmatprep.subr.bf16.mxu0 %v5600
        %7855 = vmatpush1.bf16.msra.mxu0 %v5599
        %7856 = vmatprep.subr.bf16.mxu0 %v5602
        %7857 = vmatpush1.bf16.msra.mxu0 %v5601
        %7858 = vmatprep.mubr.bf16.mxu0 %v1600
        %7859 = vmatmul.mubr.bf16.gmra.mrb[0].mxu0 %v1598
        %v7860 = vpop.f32.mrb[0].mxu0
        %v7861 = vadd.f32 %v7820, %v7860
        %v7862 = vpop.f32.mrb[0].mxu0
        %v7863 = vadd.f32 %v7822, %v7862
        %v7864 = vpop.f32.mrb[0].mxu0
        %v7865 = vpop.f32.mrb[0].mxu0
        %7866 = vdwg.mxu0
        %7867 = vmatprep.subr.bf16.mxu0 %v5604
        %7868 = vmatpush1.bf16.msra.mxu0 %v5603
        %7869 = vmatprep.subr.bf16.mxu0 %v5606
        %7870 = vmatpush1.bf16.msra.mxu0 %v5605
        %7871 = vmatprep.subr.bf16.mxu0 %v5608
        %7872 = vmatpush1.bf16.msra.mxu0 %v5607
        %7873 = vmatprep.subr.bf16.mxu0 %v5610
        %7874 = vmatpush1.bf16.msra.mxu0 %v5609
        %7875 = vmatprep.subr.bf16.mxu0 %v5612
        %7876 = vmatpush1.bf16.msra.mxu0 %v5611
        %7877 = vmatprep.subr.bf16.mxu0 %v5614
        %7878 = vmatpush1.bf16.msra.mxu0 %v5613
        %7879 = vmatprep.subr.bf16.mxu0 %v5616
        %7880 = vmatpush1.bf16.msra.mxu0 %v5615
        %7881 = vmatprep.subr.bf16.mxu0 %v5618
        %7882 = vmatpush1.bf16.msra.mxu0 %v5617
        %7883 = vmatprep.subr.bf16.mxu0 %v5620
        %7884 = vmatpush1.bf16.msra.mxu0 %v5619
        %7885 = vmatprep.subr.bf16.mxu0 %v5622
        %7886 = vmatpush1.bf16.msra.mxu0 %v5621
        %7887 = vmatprep.subr.bf16.mxu0 %v5624
        %7888 = vmatpush1.bf16.msra.mxu0 %v5623
        %7889 = vmatprep.subr.bf16.mxu0 %v5626
        %7890 = vmatpush1.bf16.msra.mxu0 %v5625
        %7891 = vmatprep.subr.bf16.mxu0 %v5628
        %7892 = vmatpush1.bf16.msra.mxu0 %v5627
        %7893 = vmatprep.subr.bf16.mxu0 %v5630
        %7894 = vmatpush1.bf16.msra.mxu0 %v5629
        %7895 = vmatprep.subr.bf16.mxu0 %v5632
        %7896 = vmatpush1.bf16.msra.mxu0 %v5631
        %7897 = vmatprep.subr.bf16.mxu0 %v5634
        %7898 = vmatpush1.bf16.msra.mxu0 %v5633
        %7899 = vmatprep.mubr.bf16.mxu0 %v1638
        %7900 = vmatmul.mubr.bf16.gmra.mrb[0].mxu0 %v1624
        %v7901 = vpop.f32.mrb[0].mxu0
        %v7902 = vadd.f32 %v7861, %v7901
        %v7903 = vpop.f32.mrb[0].mxu0
        %v7904 = vadd.f32 %v7863, %v7903
        %v7905 = vpop.f32.mrb[0].mxu0
        %v7906 = vpop.f32.mrb[0].mxu0
        %7907 = vdwg.mxu0
        %7908 = vmatprep.subr.bf16.mxu0 %v5636
        %7909 = vmatpush1.bf16.msra.mxu0 %v5635
        %7910 = vmatprep.subr.bf16.mxu0 %v5638
        %7911 = vmatpush1.bf16.msra.mxu0 %v5637
        %7912 = vmatprep.subr.bf16.mxu0 %v5640
        %7913 = vmatpush1.bf16.msra.mxu0 %v5639
        %7914 = vmatprep.subr.bf16.mxu0 %v5642
        %7915 = vmatpush1.bf16.msra.mxu0 %v5641
        %7916 = vmatprep.subr.bf16.mxu0 %v5644
        %7917 = vmatpush1.bf16.msra.mxu0 %v5643
        %7918 = vmatprep.subr.bf16.mxu0 %v5646
        %7919 = vmatpush1.bf16.msra.mxu0 %v5645
        %7920 = vmatprep.subr.bf16.mxu0 %v5648
        %7921 = vmatpush1.bf16.msra.mxu0 %v5647
        %7922 = vmatprep.subr.bf16.mxu0 %v5650
        %7923 = vmatpush1.bf16.msra.mxu0 %v5649
        %7924 = vmatprep.subr.bf16.mxu0 %v5652
        %7925 = vmatpush1.bf16.msra.mxu0 %v5651
        %7926 = vmatprep.subr.bf16.mxu0 %v5654
        %7927 = vmatpush1.bf16.msra.mxu0 %v5653
        %7928 = vmatprep.subr.bf16.mxu0 %v5656
        %7929 = vmatpush1.bf16.msra.mxu0 %v5655
        %7930 = vmatprep.subr.bf16.mxu0 %v5658
        %7931 = vmatpush1.bf16.msra.mxu0 %v5657
        %7932 = vmatprep.subr.bf16.mxu0 %v5660
        %7933 = vmatpush1.bf16.msra.mxu0 %v5659
        %7934 = vmatprep.subr.bf16.mxu0 %v5662
        %7935 = vmatpush1.bf16.msra.mxu0 %v5661
        %7936 = vmatprep.subr.bf16.mxu0 %v5664
        %7937 = vmatpush1.bf16.msra.mxu0 %v5663
        %7938 = vmatprep.subr.bf16.mxu0 %v5666
        %7939 = vmatpush1.bf16.msra.mxu0 %v5665
        %7940 = vmatprep.mubr.bf16.mxu0 %v1648
        %7941 = vmatmul.mubr.bf16.gmra.mrb[0].mxu0 %v1646
        %v7942 = vpop.f32.mrb[0].mxu0
        %v7943 = vadd.f32 %v7902, %v7942
        %v7944 = vpop.f32.mrb[0].mxu0
        %v7945 = vadd.f32 %v7904, %v7944
        %v7946 = vpop.f32.mrb[0].mxu0
        %v7947 = vpop.f32.mrb[0].mxu0
        %7948 = vdwg.mxu0
        %7949 = vmatprep.subr.bf16.mxu0 %v5668
        %7950 = vmatpush1.bf16.msra.mxu0 %v5667
        %7951 = vmatprep.subr.bf16.mxu0 %v5670
        %7952 = vmatpush1.bf16.msra.mxu0 %v5669
        %7953 = vmatprep.subr.bf16.mxu0 %v5672
        %7954 = vmatpush1.bf16.msra.mxu0 %v5671
        %7955 = vmatprep.subr.bf16.mxu0 %v5674
        %7956 = vmatpush1.bf16.msra.mxu0 %v5673
        %7957 = vmatprep.subr.bf16.mxu0 %v5676
        %7958 = vmatpush1.bf16.msra.mxu0 %v5675
        %7959 = vmatprep.subr.bf16.mxu0 %v5678
        %7960 = vmatpush1.bf16.msra.mxu0 %v5677
        %7961 = vmatprep.subr.bf16.mxu0 %v5680
        %7962 = vmatpush1.bf16.msra.mxu0 %v5679
        %7963 = vmatprep.subr.bf16.mxu0 %v5682
        %7964 = vmatpush1.bf16.msra.mxu0 %v5681
        %7965 = vmatprep.subr.bf16.mxu0 %v5684
        %7966 = vmatpush1.bf16.msra.mxu0 %v5683
        %7967 = vmatprep.subr.bf16.mxu0 %v5686
        %7968 = vmatpush1.bf16.msra.mxu0 %v5685
        %7969 = vmatprep.subr.bf16.mxu0 %v5688
        %7970 = vmatpush1.bf16.msra.mxu0 %v5687
        %7971 = vmatprep.subr.bf16.mxu0 %v5690
        %7972 = vmatpush1.bf16.msra.mxu0 %v5689
        %7973 = vmatprep.subr.bf16.mxu0 %v5692
        %7974 = vmatpush1.bf16.msra.mxu0 %v5691
        %7975 = vmatprep.subr.bf16.mxu0 %v5694
        %7976 = vmatpush1.bf16.msra.mxu0 %v5693
        %7977 = vmatprep.subr.bf16.mxu0 %v5696
        %7978 = vmatpush1.bf16.msra.mxu0 %v5695
        %7979 = vmatprep.subr.bf16.mxu0 %v5698
        %7980 = vmatpush1.bf16.msra.mxu0 %v5697
        %7981 = vmatprep.mubr.bf16.mxu0 %v1645
        %7982 = vmatmul.mubr.bf16.gmra.mrb[0].mxu0 %v1631
        %v7983 = vpop.f32.mrb[0].mxu0
        %v7984 = vadd.f32 %v7943, %v7983
        %v7985 = vpop.f32.mrb[0].mxu0
        %v7986 = vadd.f32 %v7945, %v7985
        %v7987 = vpop.f32.mrb[0].mxu0
        %v7988 = vpop.f32.mrb[0].mxu0
        %7989 = vdwg.mxu0
        %7990 = vmatprep.subr.bf16.mxu0 %v5700
        %7991 = vmatpush1.bf16.msra.mxu0 %v5699
        %7992 = vmatprep.subr.bf16.mxu0 %v5702
        %7993 = vmatpush1.bf16.msra.mxu0 %v5701
        %7994 = vmatprep.subr.bf16.mxu0 %v5704
        %7995 = vmatpush1.bf16.msra.mxu0 %v5703
        %7996 = vmatprep.subr.bf16.mxu0 %v5706
        %7997 = vmatpush1.bf16.msra.mxu0 %v5705
        %7998 = vmatprep.subr.bf16.mxu0 %v5708
        %7999 = vmatpush1.bf16.msra.mxu0 %v5707
        %8000 = vmatprep.subr.bf16.mxu0 %v5710
        %8001 = vmatpush1.bf16.msra.mxu0 %v5709
        %8002 = vmatprep.subr.bf16.mxu0 %v5712
        %8003 = vmatpush1.bf16.msra.mxu0 %v5711
        %8004 = vmatprep.subr.bf16.mxu0 %v5714
        %8005 = vmatpush1.bf16.msra.mxu0 %v5713
        %8006 = vmatprep.subr.bf16.mxu0 %v5716
        %8007 = vmatpush1.bf16.msra.mxu0 %v5715
        %8008 = vmatprep.subr.bf16.mxu0 %v5718
        %8009 = vmatpush1.bf16.msra.mxu0 %v5717
        %8010 = vmatprep.subr.bf16.mxu0 %v5720
        %8011 = vmatpush1.bf16.msra.mxu0 %v5719
        %8012 = vmatprep.subr.bf16.mxu0 %v5722
        %8013 = vmatpush1.bf16.msra.mxu0 %v5721
        %8014 = vmatprep.subr.bf16.mxu0 %v5724
        %8015 = vmatpush1.bf16.msra.mxu0 %v5723
        %8016 = vmatprep.subr.bf16.mxu0 %v5726
        %8017 = vmatpush1.bf16.msra.mxu0 %v5725
        %8018 = vmatprep.subr.bf16.mxu0 %v5728
        %8019 = vmatpush1.bf16.msra.mxu0 %v5727
        %8020 = vmatprep.subr.bf16.mxu0 %v5730
        %8021 = vmatpush1.bf16.msra.mxu0 %v5729
        %8022 = vmatprep.mubr.bf16.mxu0 %v1649
        %8023 = vmatmul.mubr.bf16.gmra.mrb[0].mxu0 %v1647
        %v8024 = vpop.f32.mrb[0].mxu0
        %v8025 = vadd.f32 %v7984, %v8024
        %v8026 = vpop.f32.mrb[0].mxu0
        %v8027 = vadd.f32 %v7986, %v8026
        %v8028 = vpop.f32.mrb[0].mxu0
        %v8029 = vpop.f32.mrb[0].mxu0
        %8030 = vdwg.mxu0
        %8031 = vmatprep.subr.bf16.mxu0 %v5732
        %8032 = vmatpush1.bf16.msra.mxu0 %v5731
        %8033 = vmatprep.subr.bf16.mxu0 %v5734
        %8034 = vmatpush1.bf16.msra.mxu0 %v5733
        %8035 = vmatprep.subr.bf16.mxu0 %v5736
        %8036 = vmatpush1.bf16.msra.mxu0 %v5735
        %8037 = vmatprep.subr.bf16.mxu0 %v5738
        %8038 = vmatpush1.bf16.msra.mxu0 %v5737
        %8039 = vmatprep.subr.bf16.mxu0 %v5740
        %8040 = vmatpush1.bf16.msra.mxu0 %v5739
        %8041 = vmatprep.subr.bf16.mxu0 %v5742
        %8042 = vmatpush1.bf16.msra.mxu0 %v5741
        %8043 = vmatprep.subr.bf16.mxu0 %v5744
        %8044 = vmatpush1.bf16.msra.mxu0 %v5743
        %8045 = vmatprep.subr.bf16.mxu0 %v5746
        %8046 = vmatpush1.bf16.msra.mxu0 %v5745
        %8047 = vmatprep.subr.bf16.mxu0 %v5748
        %8048 = vmatpush1.bf16.msra.mxu0 %v5747
        %8049 = vmatprep.subr.bf16.mxu0 %v5750
        %8050 = vmatpush1.bf16.msra.mxu0 %v5749
        %8051 = vmatprep.subr.bf16.mxu0 %v5752
        %8052 = vmatpush1.bf16.msra.mxu0 %v5751
        %8053 = vmatprep.subr.bf16.mxu0 %v5754
        %8054 = vmatpush1.bf16.msra.mxu0 %v5753
        %8055 = vmatprep.subr.bf16.mxu0 %v5756
        %8056 = vmatpush1.bf16.msra.mxu0 %v5755
        %8057 = vmatprep.subr.bf16.mxu0 %v5758
        %8058 = vmatpush1.bf16.msra.mxu0 %v5757
        %8059 = vmatprep.subr.bf16.mxu0 %v5760
        %8060 = vmatpush1.bf16.msra.mxu0 %v5759
        %8061 = vmatprep.subr.bf16.mxu0 %v5762
        %8062 = vmatpush1.bf16.msra.mxu0 %v5761
        %8063 = vmatprep.mubr.bf16.mxu0 %v1687
        %8064 = vmatmul.mubr.bf16.gmra.mrb[0].mxu0 %v1673
        %v8065 = vpop.f32.mrb[0].mxu0
        %v8066 = vadd.f32 %v8025, %v8065
        %v8067 = vpop.f32.mrb[0].mxu0
        %v8068 = vadd.f32 %v8027, %v8067
        %v8069 = vpop.f32.mrb[0].mxu0
        %v8070 = vpop.f32.mrb[0].mxu0
        %8071 = vdwg.mxu0
        %8072 = vmatprep.subr.bf16.mxu0 %v5764
        %8073 = vmatpush1.bf16.msra.mxu0 %v5763
        %8074 = vmatprep.subr.bf16.mxu0 %v5766
        %8075 = vmatpush1.bf16.msra.mxu0 %v5765
        %8076 = vmatprep.subr.bf16.mxu0 %v5768
        %8077 = vmatpush1.bf16.msra.mxu0 %v5767
        %8078 = vmatprep.subr.bf16.mxu0 %v5770
        %8079 = vmatpush1.bf16.msra.mxu0 %v5769
        %8080 = vmatprep.subr.bf16.mxu0 %v5772
        %8081 = vmatpush1.bf16.msra.mxu0 %v5771
        %8082 = vmatprep.subr.bf16.mxu0 %v5774
        %8083 = vmatpush1.bf16.msra.mxu0 %v5773
        %8084 = vmatprep.subr.bf16.mxu0 %v5776
        %8085 = vmatpush1.bf16.msra.mxu0 %v5775
        %8086 = vmatprep.subr.bf16.mxu0 %v5778
        %8087 = vmatpush1.bf16.msra.mxu0 %v5777
        %8088 = vmatprep.subr.bf16.mxu0 %v5780
        %8089 = vmatpush1.bf16.msra.mxu0 %v5779
        %8090 = vmatprep.subr.bf16.mxu0 %v5782
        %8091 = vmatpush1.bf16.msra.mxu0 %v5781
        %8092 = vmatprep.subr.bf16.mxu0 %v5784
        %8093 = vmatpush1.bf16.msra.mxu0 %v5783
        %8094 = vmatprep.subr.bf16.mxu0 %v5786
        %8095 = vmatpush1.bf16.msra.mxu0 %v5785
        %8096 = vmatprep.subr.bf16.mxu0 %v5788
        %8097 = vmatpush1.bf16.msra.mxu0 %v5787
        %8098 = vmatprep.subr.bf16.mxu0 %v5790
        %8099 = vmatpush1.bf16.msra.mxu0 %v5789
        %8100 = vmatprep.subr.bf16.mxu0 %v5792
        %8101 = vmatpush1.bf16.msra.mxu0 %v5791
        %8102 = vmatprep.subr.bf16.mxu0 %v5794
        %8103 = vmatpush1.bf16.msra.mxu0 %v5793
        %8104 = vmatprep.mubr.bf16.mxu0 %v1697
        %8105 = vmatmul.mubr.bf16.gmra.mrb[0].mxu0 %v1695
        %v8106 = vpop.f32.mrb[0].mxu0
        %v8107 = vadd.f32 %v8066, %v8106
        %v8108 = vpop.f32.mrb[0].mxu0
        %v8109 = vadd.f32 %v8068, %v8108
        %v8110 = vpop.f32.mrb[0].mxu0
        %v8111 = vpop.f32.mrb[0].mxu0
        %8112 = vdwg.mxu0
        %8113 = vmatprep.subr.bf16.mxu0 %v5796
        %8114 = vmatpush1.bf16.msra.mxu0 %v5795
        %8115 = vmatprep.subr.bf16.mxu0 %v5798
        %8116 = vmatpush1.bf16.msra.mxu0 %v5797
        %8117 = vmatprep.subr.bf16.mxu0 %v5800
        %8118 = vmatpush1.bf16.msra.mxu0 %v5799
        %8119 = vmatprep.subr.bf16.mxu0 %v5802
        %8120 = vmatpush1.bf16.msra.mxu0 %v5801
        %8121 = vmatprep.subr.bf16.mxu0 %v5804
        %8122 = vmatpush1.bf16.msra.mxu0 %v5803
        %8123 = vmatprep.subr.bf16.mxu0 %v5806
        %8124 = vmatpush1.bf16.msra.mxu0 %v5805
        %8125 = vmatprep.subr.bf16.mxu0 %v5808
        %8126 = vmatpush1.bf16.msra.mxu0 %v5807
        %8127 = vmatprep.subr.bf16.mxu0 %v5810
        %8128 = vmatpush1.bf16.msra.mxu0 %v5809
        %8129 = vmatprep.subr.bf16.mxu0 %v5812
        %8130 = vmatpush1.bf16.msra.mxu0 %v5811
        %8131 = vmatprep.subr.bf16.mxu0 %v5814
        %8132 = vmatpush1.bf16.msra.mxu0 %v5813
        %8133 = vmatprep.subr.bf16.mxu0 %v5816
        %8134 = vmatpush1.bf16.msra.mxu0 %v5815
        %8135 = vmatprep.subr.bf16.mxu0 %v5818
        %8136 = vmatpush1.bf16.msra.mxu0 %v5817
        %8137 = vmatprep.subr.bf16.mxu0 %v5820
        %8138 = vmatpush1.bf16.msra.mxu0 %v5819
        %8139 = vmatprep.subr.bf16.mxu0 %v5822
        %8140 = vmatpush1.bf16.msra.mxu0 %v5821
        %8141 = vmatprep.subr.bf16.mxu0 %v5824
        %8142 = vmatpush1.bf16.msra.mxu0 %v5823
        %8143 = vmatprep.subr.bf16.mxu0 %v5826
        %8144 = vmatpush1.bf16.msra.mxu0 %v5825
        %8145 = vmatprep.mubr.bf16.mxu0 %v1694
        %8146 = vmatmul.mubr.bf16.gmra.mrb[0].mxu0 %v1680
        %v8147 = vpop.f32.mrb[0].mxu0
        %v8148 = vadd.f32 %v8107, %v8147
        %v8149 = vpop.f32.mrb[0].mxu0
        %v8150 = vadd.f32 %v8109, %v8149
        %v8151 = vpop.f32.mrb[0].mxu0
        %v8152 = vpop.f32.mrb[0].mxu0
        %8153 = vdwg.mxu0
        %8154 = vmatprep.subr.bf16.mxu0 %v5828
        %8155 = vmatpush1.bf16.msra.mxu0 %v5827
        %8156 = vmatprep.subr.bf16.mxu0 %v5830
        %8157 = vmatpush1.bf16.msra.mxu0 %v5829
        %8158 = vmatprep.subr.bf16.mxu0 %v5832
        %8159 = vmatpush1.bf16.msra.mxu0 %v5831
        %8160 = vmatprep.subr.bf16.mxu0 %v5834
        %8161 = vmatpush1.bf16.msra.mxu0 %v5833
        %8162 = vmatprep.subr.bf16.mxu0 %v5836
        %8163 = vmatpush1.bf16.msra.mxu0 %v5835
        %8164 = vmatprep.subr.bf16.mxu0 %v5838
        %8165 = vmatpush1.bf16.msra.mxu0 %v5837
        %8166 = vmatprep.subr.bf16.mxu0 %v5840
        %8167 = vmatpush1.bf16.msra.mxu0 %v5839
        %8168 = vmatprep.subr.bf16.mxu0 %v5842
        %8169 = vmatpush1.bf16.msra.mxu0 %v5841
        %8170 = vmatprep.subr.bf16.mxu0 %v5844
        %8171 = vmatpush1.bf16.msra.mxu0 %v5843
        %8172 = vmatprep.subr.bf16.mxu0 %v5846
        %8173 = vmatpush1.bf16.msra.mxu0 %v5845
        %8174 = vmatprep.subr.bf16.mxu0 %v5848
        %8175 = vmatpush1.bf16.msra.mxu0 %v5847
        %8176 = vmatprep.subr.bf16.mxu0 %v5850
        %8177 = vmatpush1.bf16.msra.mxu0 %v5849
        %8178 = vmatprep.subr.bf16.mxu0 %v5852
        %8179 = vmatpush1.bf16.msra.mxu0 %v5851
        %8180 = vmatprep.subr.bf16.mxu0 %v5854
        %8181 = vmatpush1.bf16.msra.mxu0 %v5853
        %8182 = vmatprep.subr.bf16.mxu0 %v5856
        %8183 = vmatpush1.bf16.msra.mxu0 %v5855
        %8184 = vmatprep.subr.bf16.mxu0 %v5858
        %8185 = vmatpush1.bf16.msra.mxu0 %v5857
        %8186 = vmatprep.mubr.bf16.mxu0 %v1698
        %8187 = vmatmul.mubr.bf16.gmra.mrb[0].mxu0 %v1696
        %v8188 = vpop.f32.mrb[0].mxu0
        %v8189 = vadd.f32 %v8148, %v8188
        %v8190 = vpop.f32.mrb[0].mxu0
        %v8191 = vadd.f32 %v8150, %v8190
        %v8192 = vpop.f32.mrb[0].mxu0
        %v8193 = vpop.f32.mrb[0].mxu0
        %8194 = vdwg.mxu0
        %v8197 = vcombine.low %v8189, %v8191
        %v8199 = vunpack.c.l.s4 1983009808
        %v8200 = vunpack.c.0.s8 %v8199
        %v8201 = vlaneseq
        %v8202 = vshrl.u32 %v8201, 7
        %v8203 = vsub.s32 %v8200, %v8202
        %v8204 = vrot.slane %v8197, %v8203
        %v8206 = vadd.f32 %v266, %v8204
        %8207 = vst [vmem:[#allocation7] sm:$0xf] %v8206
        // Predicated region
        $region45: #{simple_encoder_forward.5} parent=31 // pred_check
          %p8208 = pneg %p124
        $region46: #{simple_encoder_forward.5} parent=31 // pred_check_branch
          %8210 = sbr.rel (%p8208) target = $region48
        $region47: #{simple_encoder_forward.5} parent=31 // pred_region
          %s8212 = ssub.s32 64, 64
          %8213 = vsyncadd [#allocation4], %s8212
          %s8214 = smul.addr %s23, 2
          %s8215 = smul.addr %s8214, 32
          %s8216 = scalar_lea.hbm %s3, %s8215
          %s8218 = sshll.u32 [#allocation7], 4
          %s8219 = int_to_ptr.vmem [resolvable:$true] %s8218
          %8221 = dma.vmem_to_hbm [thread:$0]  %s8219, 64, %s8216, [#allocation4]
        $region48: #{simple_encoder_forward.5} parent=31 // pred_fallthru
          _
        // Predicated region
        $region49: #{simple_encoder_forward.5} parent=31 // pred_check
          %p8222 = pneg %p124
        $region50: #{simple_encoder_forward.5} parent=31 // pred_check_branch
          %8224 = sbr.rel (%p8222) target = $region52
        $region51: #{simple_encoder_forward.5} parent=31 // pred_region
          %8225 = dma.done [#allocation4], 64
        $region52: #{simple_encoder_forward.5} parent=31 // pred_fallthru
          _
      $region32: #{simple_encoder_forward.5} parent=5 // pred_fallthru
        _
      %p8226 = scmp.le.s32.totalorder 2, %s14
      // Predicated region
      $region53: #{simple_encoder_forward.5} parent=5 // pred_check
        %p8227 = pneg %p8226
      $region54: #{simple_encoder_forward.5} parent=5 // pred_check_branch
        %8229 = sbr.rel (%p8227) target = $region56
      $region55: #{simple_encoder_forward.5} parent=5 // pred_region
        %s8230 = ssub.s32 %s14, 2
      $region56: #{simple_encoder_forward.5} parent=5 // pred_fallthru
        _
    $region6: #{simple_encoder_forward.5} parent=1 // loop_footer
      %s18 = sadd.s32 1, %s14
    $region7: #{simple_encoder_forward.5} parent=1 // loop_footer_branch
      %13 = sbr.rel target = $region3
    $region8: #{simple_encoder_forward.5} parent=1 // loop_exit
      _
    %8231 = vsyncpa [#allocation3], 1
    %s8232 = scalar_lea.sflag [#allocation3], 1
    %8233 = vsyncpa %s8232, 1
    %8234 = vsyncpa [#allocation6], 1
    %8235 = vsyncpa [#allocation4], 1
    %s8236 = scalar_lea.sflag [#allocation4], 1
    %8237 = vsyncpa %s8236, 1

</llo_original>
